<compile_context>
chip_gen: v5e
topology: v5e:2x2
jax: 0.10.0
libtpu: 0.0.40
codegen_flags: <defaults>
</compile_context>

<pallas_src>
import math

import jax
import jax.numpy as jnp
from jax.experimental import pallas as pl
from jax.experimental.pallas import tpu as pltpu

# ---- model hyper-parameters (small, synthetic) ----
D_MODEL = 32
N_HEADS = 4
D_K = D_MODEL // N_HEADS
D_FF = 64
N_LAYERS = 2
SRC_VOCAB = 16
TGT_VOCAB = 16
V_PAD = 128                       # lane-dense generator width
LN_EPS = 1e-6
ATTN_SCALE = 1.0 / math.sqrt(D_K)
NEG_INF = -1e9

# matrix-slab row indices
Q_ENC = 0                         # encoder self-attn qkv/wo rows [0, L)
Q_DSELF = N_LAYERS                # decoder self-attn rows [L, 2L)
Q_DCROSS = 2 * N_LAYERS           # decoder cross-attn rows [2L, 3L)
F_ENC = 0                         # encoder ffn rows [0, L)
F_DEC = N_LAYERS                  # decoder ffn rows [L, 2L)


# ---------------------------------------------------------------------
# "vector slab": every LN gain/bias and every bias vector, one row each,
# padded to 128 lanes.  Kernel and wrapper share this layout registry.
# ---------------------------------------------------------------------
def _build_vec_layout():
    rows = []

    def add(name, width):
        rows.append((name, width))

    for l in range(N_LAYERS):
        add(f"e_ln1_g{l}", D_MODEL); add(f"e_ln1_b{l}", D_MODEL)
        add(f"e_bqkv{l}", 3 * D_MODEL)
        add(f"e_bo{l}", D_MODEL)
        add(f"e_ln2_g{l}", D_MODEL); add(f"e_ln2_b{l}", D_MODEL)
        add(f"e_b1{l}", D_FF)
        add(f"e_b2{l}", D_MODEL)
    for l in range(N_LAYERS):
        add(f"d_ln1_g{l}", D_MODEL); add(f"d_ln1_b{l}", D_MODEL)
        add(f"d_bqkv_s{l}", 3 * D_MODEL)
        add(f"d_bo_s{l}", D_MODEL)
        add(f"d_ln2_g{l}", D_MODEL); add(f"d_ln2_b{l}", D_MODEL)
        add(f"d_bqkv_c{l}", 3 * D_MODEL)
        add(f"d_bo_c{l}", D_MODEL)
        add(f"d_ln3_g{l}", D_MODEL); add(f"d_ln3_b{l}", D_MODEL)
        add(f"d_b1{l}", D_FF)
        add(f"d_b2{l}", D_MODEL)
    add("enc_norm_g", D_MODEL); add("enc_norm_b", D_MODEL)
    add("dec_norm_g", D_MODEL); add("dec_norm_b", D_MODEL)
    add("gen_b", V_PAD)
    index = {name: (i, w) for i, (name, w) in enumerate(rows)}
    return rows, index


VEC_ROWS, VEC_INDEX = _build_vec_layout()
N_VEC_ROWS = len(VEC_ROWS)


# =====================================================================
# One fused kernel: full encoder + decoder + generator
# =====================================================================
def _fused_kernel(src_x_ref, tgt_x_ref, src_m_ref, tgt_m_ref,
                  qkv_ref, wo_ref, w1_ref, w2_ref, genw_ref, vec_ref,
                  out_ref):

    def vrow(name):
        r, w = VEC_INDEX[name]
        return vec_ref[r:r + 1, :w]                    # (1, w), static slice

    def layer_norm(x, gname, bname):
        # Annotated-Transformer LayerNorm: unbiased std, g*(x-mean)/(std+eps)+b
        g = vrow(gname)
        b = vrow(bname)
        mean = jnp.mean(x, axis=-1, keepdims=True)
        xc = x - mean
        var = jnp.sum(xc * xc, axis=-1, keepdims=True) * (1.0 / (D_MODEL - 1))
        inv = pl.reciprocal(jnp.sqrt(var) + LN_EPS, approx=True)
        return g * (xc * inv) + b

    def split_heads(t):
        # (S, D) -> (H, S, D_K): static 8-lane slices + concat along the major dim
        return jnp.stack([t[:, h * D_K:(h + 1) * D_K] for h in range(N_HEADS)],
                         axis=0)

    def mha(x_q, x_kv, wqkv, bqkv, wo_h, bo, mask_add, self_attn):
        """x_q:(Sq,D) x_kv:(Sk,D) wqkv:(D,3D) wo_h:(H,Dk,D) mask_add:(1,Sk)|(Sq,Sk)."""
        if self_attn:
            qkv = jnp.dot(x_q, wqkv, preferred_element_type=jnp.float32) + bqkv
            q = qkv[:, :D_MODEL]
            k = qkv[:, D_MODEL:2 * D_MODEL]
            v = qkv[:, 2 * D_MODEL:]
        else:   # cross attention: q from decoder state, k/v from encoder memory
            q = jnp.dot(x_q, wqkv[:, :D_MODEL],
                        preferred_element_type=jnp.float32) + bqkv[:, :D_MODEL]
            kv = jnp.dot(x_kv, wqkv[:, D_MODEL:],
                         preferred_element_type=jnp.float32) + bqkv[:, D_MODEL:]
            k = kv[:, :D_MODEL]
            v = kv[:, D_MODEL:]

        q = q * ATTN_SCALE                              # fold 1/sqrt(d_k) into q
        qh = split_heads(q)                             # (H, Sq, Dk)
        kh = split_heads(k)                             # (H, Sk, Dk)
        vh = split_heads(v)                             # (H, Sk, Dk)

        s = jnp.einsum('hqd,hkd->hqk', qh, kh,
                       preferred_element_type=jnp.float32)        # (H, Sq, Sk)
        s = s + mask_add                                 # additive {0,-1e9} mask
        smax = jnp.max(s, axis=-1, keepdims=True)
        p = jnp.exp(s - smax)
        p = p * pl.reciprocal(jnp.sum(p, axis=-1, keepdims=True), approx=True)

        oh = jnp.einsum('hqk,hkd->hqd', p, vh,
                        preferred_element_type=jnp.float32)       # (H, Sq, Dk)
        # concat-heads @ Wo  ==  sum_h  oh[h] @ Wo[h]  (one batched einsum + sum)
        o = jnp.einsum('hqd,hdo->hqo', oh, wo_h,
                       preferred_element_type=jnp.float32)        # (H, Sq, D)
        return jnp.sum(o, axis=0) + bo

    def ffn(x, w1, b1, w2, b2):
        h = jnp.maximum(jnp.dot(x, w1, preferred_element_type=jnp.float32) + b1,
                        0.0)
        return jnp.dot(h, w2, preferred_element_type=jnp.float32) + b2

    bb = src_x_ref.shape[0]
    gen_w = genw_ref[...]
    gen_b = vrow("gen_b")

    for bi in range(bb):                                # static batch loop
        src_m = src_m_ref[bi]                           # (1, Ss)  additive mask
        tgt_m = tgt_m_ref[bi]                           # (St, St) additive mask

        # ---------------- encoder stack ----------------
        x = src_x_ref[bi]                               # (Ss, D)
        for l in range(N_LAYERS):
            nx = layer_norm(x, f"e_ln1_g{l}", f"e_ln1_b{l}")
            x = x + mha(nx, nx, qkv_ref[Q_ENC + l], vrow(f"e_bqkv{l}"),
                        wo_ref[Q_ENC + l], vrow(f"e_bo{l}"), src_m, True)
            nx = layer_norm(x, f"e_ln2_g{l}", f"e_ln2_b{l}")
            x = x + ffn(nx, w1_ref[F_ENC + l], vrow(f"e_b1{l}"),
                        w2_ref[F_ENC + l], vrow(f"e_b2{l}"))
        memory = layer_norm(x, "enc_norm_g", "enc_norm_b")

        # ---------------- decoder stack ----------------
        y = tgt_x_ref[bi]                               # (St, D)
        for l in range(N_LAYERS):
            ny = layer_norm(y, f"d_ln1_g{l}", f"d_ln1_b{l}")
            y = y + mha(ny, ny, qkv_ref[Q_DSELF + l], vrow(f"d_bqkv_s{l}"),
                        wo_ref[Q_DSELF + l], vrow(f"d_bo_s{l}"), tgt_m, True)
            ny = layer_norm(y, f"d_ln2_g{l}", f"d_ln2_b{l}")
            y = y + mha(ny, memory, qkv_ref[Q_DCROSS + l], vrow(f"d_bqkv_c{l}"),
                        wo_ref[Q_DCROSS + l], vrow(f"d_bo_c{l}"), src_m, False)
            ny = layer_norm(y, f"d_ln3_g{l}", f"d_ln3_b{l}")
            y = y + ffn(ny, w1_ref[F_DEC + l], vrow(f"d_b1{l}"),
                        w2_ref[F_DEC + l], vrow(f"d_b2{l}"))
        y = layer_norm(y, "dec_norm_g", "dec_norm_b")

        # ---- generator: Linear + log_softmax (lane-dense, vocab padded to 128;
        #      padded bias is -1e9 so padded columns vanish in the log-sum-exp) ----
        z = jnp.dot(y, gen_w, preferred_element_type=jnp.float32) + gen_b
        zmax = jnp.max(z, axis=-1, keepdims=True)
        zs = z - zmax
        lse = jnp.log(jnp.sum(jnp.exp(zs), axis=-1, keepdims=True))
        out_ref[bi] = (zs - lse).astype(out_ref.dtype)


# =====================================================================
# JAX glue: embeddings, positional encoding, pallas_call wrapper
# =====================================================================
def positional_encoding(seq_len, d_model):
    position = jnp.arange(seq_len, dtype=jnp.float32)[:, None]
    div_term = jnp.exp(jnp.arange(0, d_model, 2, dtype=jnp.float32)
                       * (-math.log(10000.0) / d_model))
    pe = jnp.zeros((seq_len, d_model), jnp.float32)
    pe = pe.at[:, 0::2].set(jnp.sin(position * div_term))
    pe = pe.at[:, 1::2].set(jnp.cos(position * div_term))
    return pe


def embed(emb_table, tokens):
    # lut(x) * sqrt(d_model) + positional encoding (dropout = identity in eval)
    x = emb_table[tokens] * math.sqrt(D_MODEL)
    pe = positional_encoding(tokens.shape[1], D_MODEL)
    return x + pe[None]


def _single_tensorcore_chip():
    # v7x (and v4 megacore) can use a "parallel" batch grid across 2 TCs;
    # v5e / v6e are single-TC, so a batch grid only adds per-step overhead.
    kind = jax.devices()[0].device_kind.lower()
    return not (("v7" in kind) or ("7x" in kind) or ("v4" in kind))


def encoder_decoder_forward(params, src, tgt, src_mask, tgt_mask):
    """generator(decode(encode(src, src_mask), src_mask, tgt, tgt_mask))"""
    src_x = embed(params["src_emb"], src)              # (B, Ss, D)
    tgt_x = embed(params["tgt_emb"], tgt)              # (B, St, D)
    B, Ss, _ = src_x.shape
    St = tgt_x.shape[1]

    # additive masks ({0,-1e9}); masked_fill(mask==0,-1e9) == scores + add_mask here
    src_add = (1.0 - src_mask.astype(jnp.float32)) * NEG_INF    # (B, 1, Ss)
    tgt_add = (1.0 - tgt_mask.astype(jnp.float32)) * NEG_INF    # (B, St, St)

    weights = [params["qkv_slab"], params["wo_slab"], params["w1_slab"],
               params["w2_slab"], params["gen_w"], params["vec_slab"]]

    if _single_tensorcore_chip():
        bb, grid, sem = B, (1,), ("arbitrary",)        # one step, loop batch in-kernel
    else:
        bb, grid, sem = 1, (B,), ("parallel",)         # one batch row per TensorCore

    def wspec(arr):
        nd = arr.ndim
        return pl.BlockSpec(arr.shape, lambda b, _nd=nd: (0,) * _nd)

    in_specs = [
        pl.BlockSpec((bb, Ss, D_MODEL), lambda b: (b, 0, 0)),
        pl.BlockSpec((bb, St, D_MODEL), lambda b: (b, 0, 0)),
        pl.BlockSpec((bb, 1, Ss), lambda b: (b, 0, 0)),
        pl.BlockSpec((bb, St, St), lambda b: (b, 0, 0)),
    ] + [wspec(w) for w in weights]

    out = pl.pallas_call(
        _fused_kernel,
        out_shape=jax.ShapeDtypeStruct((B, St, V_PAD), jnp.float32),
        grid=grid,
        in_specs=in_specs,
        out_specs=pl.BlockSpec((bb, St, V_PAD), lambda b: (b, 0, 0)),
        compiler_params=pltpu.CompilerParams(dimension_semantics=sem),
    )(src_x, tgt_x, src_add, tgt_add, *weights)

    return out[:, :, :TGT_VOCAB]                       # drop lane padding


# =====================================================================
# Deterministic parameter initialization (packed slabs)
# =====================================================================
def init_params(key):
    ks = jax.random.split(key, 8)
    L = N_LAYERS
    scale = 0.05

    # qkv/wo slab rows: [enc_0, enc_1, dec_self_0, dec_self_1, dec_cross_0, dec_cross_1]
    qkv_slab = jax.random.normal(ks[0], (3 * L, D_MODEL, 3 * D_MODEL),
                                 jnp.float32) * scale
    wo_flat = jax.random.normal(ks[1], (3 * L, D_MODEL, D_MODEL),
                                jnp.float32) * scale
    # pre-split Wo per head wrapper-side: (3L, H, Dk, D)
    wo_slab = wo_flat.reshape(3 * L, N_HEADS, D_K, D_MODEL)

    # ffn slab rows: [enc_0, enc_1, dec_0, dec_1]
    w1_slab = jax.random.normal(ks[2], (2 * L, D_MODEL, D_FF), jnp.float32) * scale
    w2_slab = jax.random.normal(ks[3], (2 * L, D_FF, D_MODEL), jnp.float32) * scale

    # lane-dense generator weight: real vocab in first TGT_VOCAB columns, rest zero
    gen_w = jnp.zeros((D_MODEL, V_PAD), jnp.float32)
    gen_w = gen_w.at[:, :TGT_VOCAB].set(
        jax.random.normal(ks[4], (D_MODEL, TGT_VOCAB), jnp.float32) * scale)

    # vector slab: all LN gains/biases + all bias vectors, one row each
    vec = jnp.zeros((N_VEC_ROWS, V_PAD), jnp.float32)

    def set_row(slab, name, values):
        r, w = VEC_INDEX[name]
        return slab.at[r, :w].set(values)

    ones_d = jnp.ones((D_MODEL,), jnp.float32)
    for l in range(L):
        for nm in (f"e_ln1_g{l}", f"e_ln2_g{l}",
                   f"d_ln1_g{l}", f"d_ln2_g{l}", f"d_ln3_g{l}"):
            vec = set_row(vec, nm, ones_d)
    vec = set_row(vec, "enc_norm_g", ones_d)
    vec = set_row(vec, "dec_norm_g", ones_d)
    # generator bias: zeros on real vocab, -1e9 on padded lanes
    vec = set_row(vec, "gen_b",
                  jnp.concatenate([jnp.zeros((TGT_VOCAB,), jnp.float32),
                                   jnp.full((V_PAD - TGT_VOCAB,), NEG_INF,
                                            jnp.float32)]))

    return {
        "src_emb": jax.random.normal(ks[5], (SRC_VOCAB, D_MODEL), jnp.float32) * 0.1,
        "tgt_emb": jax.random.normal(ks[6], (TGT_VOCAB, D_MODEL), jnp.float32) * 0.1,
        "qkv_slab": qkv_slab,
        "wo_slab": wo_slab,
        "w1_slab": w1_slab,
        "w2_slab": w2_slab,
        "gen_w": gen_w,
        "vec_slab": vec,
    }


# =====================================================================
# Main
# =====================================================================
if __name__ == "__main__":
    key = jax.random.PRNGKey(0)
    pkey, skey, tkey = jax.random.split(key, 3)

    params = init_params(pkey)

    B, S_SRC, S_TGT = 2, 8, 8
    src = jax.random.randint(skey, (B, S_SRC), 0, SRC_VOCAB, dtype=jnp.int32)
    tgt = jax.random.randint(tkey, (B, S_TGT), 0, TGT_VOCAB, dtype=jnp.int32)

    # src_mask: (B, 1, S_src) padding mask (all valid); tgt_mask: causal mask.
    src_mask = jnp.ones((B, 1, S_SRC), jnp.int32)
    subsequent = jnp.tril(jnp.ones((S_TGT, S_TGT), jnp.int32))
    tgt_mask = jnp.broadcast_to(subsequent[None], (B, S_TGT, S_TGT))

    # TODO(synk): dropout layers are identity (eval mode, p effectively 0).
    fwd = jax.jit(encoder_decoder_forward)
    out = fwd(params, src, tgt, src_mask, tgt_mask)
    out = jax.block_until_ready(out)

    assert out.shape == (B, S_TGT, TGT_VOCAB), out.shape
    assert bool(jnp.all(jnp.isfinite(out)))
    # rows of log_softmax must sum to ~1 in prob space
    assert bool(jnp.allclose(jnp.sum(jnp.exp(out), axis=-1), 1.0, atol=1e-4))
    print("KERNEL_OK")
</pallas_src>

<mosaic_0001>
module attributes {stable_mosaic.version = 11 : i64} {
  func.func @_fused_kernel(%arg0: i32, %arg1: memref<2x8x32xf32, #tpu.memory_space<vmem>>, %arg2: memref<2x8x32xf32, #tpu.memory_space<vmem>>, %arg3: memref<2x1x8xf32, #tpu.memory_space<vmem>>, %arg4: memref<2x8x8xf32, #tpu.memory_space<vmem>>, %arg5: memref<6x32x96xf32, #tpu.memory_space<vmem>>, %arg6: memref<6x4x8x32xf32, #tpu.memory_space<vmem>>, %arg7: memref<4x32x64xf32, #tpu.memory_space<vmem>>, %arg8: memref<4x64x32xf32, #tpu.memory_space<vmem>>, %arg9: memref<32x128xf32, #tpu.memory_space<vmem>>, %arg10: memref<45x128xf32, #tpu.memory_space<vmem>>, %arg11: memref<2x8x128xf32, #tpu.memory_space<vmem>>) attributes {dimension_semantics = [#tpu.dimension_semantics<arbitrary>], iteration_bounds = array<i64: 1>, scalar_prefetch = 0 : i64, scratch_operands = 0 : i64, tpu.core_type = #tpu.core_type<tc>, window_params = [{transform_indices = @transform_0, window_bounds = array<i64: 2, 8, 32>}, {transform_indices = @transform_1, window_bounds = array<i64: 2, 8, 32>}, {transform_indices = @transform_2, window_bounds = array<i64: 2, 1, 8>}, {transform_indices = @transform_3, window_bounds = array<i64: 2, 8, 8>}, {pipeline_mode = #tpu.pipeline_mode<synchronous>, transform_indices = @transform_4, window_bounds = array<i64: 6, 32, 96>}, {pipeline_mode = #tpu.pipeline_mode<synchronous>, transform_indices = @transform_5, window_bounds = array<i64: 6, 4, 8, 32>}, {pipeline_mode = #tpu.pipeline_mode<synchronous>, transform_indices = @transform_6, window_bounds = array<i64: 4, 32, 64>}, {pipeline_mode = #tpu.pipeline_mode<synchronous>, transform_indices = @transform_7, window_bounds = array<i64: 4, 64, 32>}, {pipeline_mode = #tpu.pipeline_mode<synchronous>, transform_indices = @transform_8, window_bounds = array<i64: 32, 128>}, {pipeline_mode = #tpu.pipeline_mode<synchronous>, transform_indices = @transform_9, window_bounds = array<i64: 45, 128>}, {transform_indices = @transform_10, window_bounds = array<i64: 2, 8, 128>}]} {
    %c0 = arith.constant 0 : index
    %c0_0 = arith.constant 0 : index
    %0 = vector.load %arg9[%c0, %c0_0] : memref<32x128xf32, #tpu.memory_space<vmem>>, vector<32x128xf32>
    %c44 = arith.constant 44 : index
    %c0_1 = arith.constant 0 : index
    %1 = vector.load %arg10[%c44, %c0_1] : memref<45x128xf32, #tpu.memory_space<vmem>>, vector<1x128xf32>
    %c0_2 = arith.constant 0 : index
    %c0_3 = arith.constant 0 : index
    %c0_4 = arith.constant 0 : index
    %2 = vector.load %arg3[%c0_2, %c0_3, %c0_4] : memref<2x1x8xf32, #tpu.memory_space<vmem>>, vector<1x1x8xf32>
    %3 = vector.shape_cast %2 : vector<1x1x8xf32> to vector<1x8xf32>
    %c0_5 = arith.constant 0 : index
    %c0_6 = arith.constant 0 : index
    %c0_7 = arith.constant 0 : index
    %4 = vector.load %arg4[%c0_5, %c0_6, %c0_7] : memref<2x8x8xf32, #tpu.memory_space<vmem>>, vector<1x8x8xf32>
    %5 = vector.shape_cast %4 : vector<1x8x8xf32> to vector<8x8xf32>
    %c0_8 = arith.constant 0 : index
    %c0_9 = arith.constant 0 : index
    %c0_10 = arith.constant 0 : index
    %6 = vector.load %arg1[%c0_8, %c0_9, %c0_10] : memref<2x8x32xf32, #tpu.memory_space<vmem>>, vector<1x8x32xf32>
    %7 = vector.shape_cast %6 : vector<1x8x32xf32> to vector<8x32xf32>
    %c0_11 = arith.constant 0 : index
    %c0_12 = arith.constant 0 : index
    %8 = vector.load %arg10[%c0_11, %c0_12] : memref<45x128xf32, #tpu.memory_space<vmem>>, vector<1x32xf32>
    %c1 = arith.constant 1 : index
    %c0_13 = arith.constant 0 : index
    %9 = vector.load %arg10[%c1, %c0_13] : memref<45x128xf32, #tpu.memory_space<vmem>>, vector<1x32xf32>
    %cst = arith.constant dense<0.000000e+00> : vector<8xf32>
    %10 = vector.multi_reduction <add>, %7, %cst [1] : vector<8x32xf32> to vector<8xf32>
    %11 = vector.shape_cast %10 : vector<8xf32> to vector<8x1xf32>
    %cst_14 = arith.constant 3.200000e+01 : f32
    %12 = vector.broadcast %cst_14 : f32 to vector<8x1xf32>
    %13 = arith.divf %11, %12 : vector<8x1xf32>
    %14 = vector.broadcast %13 : vector<8x1xf32> to vector<8x32xf32>
    %15 = arith.subf %7, %14 : vector<8x32xf32>
    %16 = arith.mulf %15, %15 : vector<8x32xf32>
    %cst_15 = arith.constant dense<0.000000e+00> : vector<8xf32>
    %17 = vector.multi_reduction <add>, %16, %cst_15 [1] : vector<8x32xf32> to vector<8xf32>
    %18 = vector.shape_cast %17 : vector<8xf32> to vector<8x1xf32>
    %cst_16 = arith.constant 0.0322580636 : f32
    %19 = vector.broadcast %cst_16 : f32 to vector<8x1xf32>
    %20 = arith.mulf %18, %19 : vector<8x1xf32>
    %21 = math.sqrt %20 : vector<8x1xf32>
    %cst_17 = arith.constant 9.99999997E-7 : f32
    %22 = vector.broadcast %cst_17 : f32 to vector<8x1xf32>
    %23 = arith.addf %21, %22 : vector<8x1xf32>
    %24 = tpu.reciprocal %23 {approx = true} : vector<8x1xf32> -> vector<8x1xf32>
    %25 = vector.broadcast %24 : vector<8x1xf32> to vector<8x32xf32>
    %26 = arith.mulf %15, %25 : vector<8x32xf32>
    %27 = vector.broadcast %8 : vector<1x32xf32> to vector<8x32xf32>
    %28 = arith.mulf %27, %26 : vector<8x32xf32>
    %29 = vector.broadcast %9 : vector<1x32xf32> to vector<8x32xf32>
    %30 = arith.addf %28, %29 : vector<8x32xf32>
    %c0_18 = arith.constant 0 : index
    %c0_19 = arith.constant 0 : index
    %c0_20 = arith.constant 0 : index
    %31 = vector.load %arg5[%c0_18, %c0_19, %c0_20] : memref<6x32x96xf32, #tpu.memory_space<vmem>>, vector<1x32x96xf32>
    %32 = vector.shape_cast %31 : vector<1x32x96xf32> to vector<32x96xf32>
    %c2 = arith.constant 2 : index
    %c0_21 = arith.constant 0 : index
    %33 = vector.load %arg10[%c2, %c0_21] : memref<45x128xf32, #tpu.memory_space<vmem>>, vector<1x96xf32>
    %c0_22 = arith.constant 0 : index
    %c0_23 = arith.constant 0 : index
    %c0_24 = arith.constant 0 : index
    %c0_25 = arith.constant 0 : index
    %34 = vector.load %arg6[%c0_22, %c0_23, %c0_24, %c0_25] : memref<6x4x8x32xf32, #tpu.memory_space<vmem>>, vector<1x4x8x32xf32>
    %35 = vector.shape_cast %34 : vector<1x4x8x32xf32> to vector<4x8x32xf32>
    %c3 = arith.constant 3 : index
    %c0_26 = arith.constant 0 : index
    %36 = vector.load %arg10[%c3, %c0_26] : memref<45x128xf32, #tpu.memory_space<vmem>>, vector<1x32xf32>
    %cst_27 = arith.constant dense<0.000000e+00> : vector<8x96xf32>
    %37 = tpu.matmul %30, %32, %cst_27 {dimension_numbers = #tpu.dot_dimension_numbers<[1], [0], [0], [1], [0, 0, 1, 1], [], []>} : vector<8x32xf32>, vector<32x96xf32>, vector<8x96xf32> -> vector<8x96xf32>
    %38 = vector.broadcast %33 : vector<1x96xf32> to vector<8x96xf32>
    %39 = arith.addf %37, %38 : vector<8x96xf32>
    %40 = vector.extract_strided_slice %39 {offsets = [0, 0], sizes = [8, 32], strides = [1, 1]} : vector<8x96xf32> to vector<8x32xf32>
    %41 = vector.extract_strided_slice %39 {offsets = [0, 32], sizes = [8, 32], strides = [1, 1]} : vector<8x96xf32> to vector<8x32xf32>
    %42 = vector.extract_strided_slice %39 {offsets = [0, 64], sizes = [8, 32], strides = [1, 1]} : vector<8x96xf32> to vector<8x32xf32>
    %cst_28 = arith.constant 0.353553385 : f32
    %43 = vector.broadcast %cst_28 : f32 to vector<8x32xf32>
    %44 = arith.mulf %40, %43 : vector<8x32xf32>
    %45 = vector.extract_strided_slice %44 {offsets = [0, 0], sizes = [8, 8], strides = [1, 1]} : vector<8x32xf32> to vector<8x8xf32>
    %46 = vector.extract_strided_slice %44 {offsets = [0, 8], sizes = [8, 8], strides = [1, 1]} : vector<8x32xf32> to vector<8x8xf32>
    %47 = vector.extract_strided_slice %44 {offsets = [0, 16], sizes = [8, 8], strides = [1, 1]} : vector<8x32xf32> to vector<8x8xf32>
    %48 = vector.extract_strided_slice %44 {offsets = [0, 24], sizes = [8, 8], strides = [1, 1]} : vector<8x32xf32> to vector<8x8xf32>
    %49 = vector.shape_cast %45 : vector<8x8xf32> to vector<1x8x8xf32>
    %50 = vector.shape_cast %46 : vector<8x8xf32> to vector<1x8x8xf32>
    %51 = vector.shape_cast %47 : vector<8x8xf32> to vector<1x8x8xf32>
    %52 = vector.shape_cast %48 : vector<8x8xf32> to vector<1x8x8xf32>
    %53 = tpu.concatenate %49, %50, %51, %52 in 0 : vector<1x8x8xf32>, vector<1x8x8xf32>, vector<1x8x8xf32>, vector<1x8x8xf32> -> vector<4x8x8xf32>
    %54 = vector.extract_strided_slice %41 {offsets = [0, 0], sizes = [8, 8], strides = [1, 1]} : vector<8x32xf32> to vector<8x8xf32>
    %55 = vector.extract_strided_slice %41 {offsets = [0, 8], sizes = [8, 8], strides = [1, 1]} : vector<8x32xf32> to vector<8x8xf32>
    %56 = vector.extract_strided_slice %41 {offsets = [0, 16], sizes = [8, 8], strides = [1, 1]} : vector<8x32xf32> to vector<8x8xf32>
    %57 = vector.extract_strided_slice %41 {offsets = [0, 24], sizes = [8, 8], strides = [1, 1]} : vector<8x32xf32> to vector<8x8xf32>
    %58 = vector.shape_cast %54 : vector<8x8xf32> to vector<1x8x8xf32>
    %59 = vector.shape_cast %55 : vector<8x8xf32> to vector<1x8x8xf32>
    %60 = vector.shape_cast %56 : vector<8x8xf32> to vector<1x8x8xf32>
    %61 = vector.shape_cast %57 : vector<8x8xf32> to vector<1x8x8xf32>
    %62 = tpu.concatenate %58, %59, %60, %61 in 0 : vector<1x8x8xf32>, vector<1x8x8xf32>, vector<1x8x8xf32>, vector<1x8x8xf32> -> vector<4x8x8xf32>
    %63 = vector.extract_strided_slice %42 {offsets = [0, 0], sizes = [8, 8], strides = [1, 1]} : vector<8x32xf32> to vector<8x8xf32>
    %64 = vector.extract_strided_slice %42 {offsets = [0, 8], sizes = [8, 8], strides = [1, 1]} : vector<8x32xf32> to vector<8x8xf32>
    %65 = vector.extract_strided_slice %42 {offsets = [0, 16], sizes = [8, 8], strides = [1, 1]} : vector<8x32xf32> to vector<8x8xf32>
    %66 = vector.extract_strided_slice %42 {offsets = [0, 24], sizes = [8, 8], strides = [1, 1]} : vector<8x32xf32> to vector<8x8xf32>
    %67 = vector.shape_cast %63 : vector<8x8xf32> to vector<1x8x8xf32>
    %68 = vector.shape_cast %64 : vector<8x8xf32> to vector<1x8x8xf32>
    %69 = vector.shape_cast %65 : vector<8x8xf32> to vector<1x8x8xf32>
    %70 = vector.shape_cast %66 : vector<8x8xf32> to vector<1x8x8xf32>
    %71 = tpu.concatenate %67, %68, %69, %70 in 0 : vector<1x8x8xf32>, vector<1x8x8xf32>, vector<1x8x8xf32>, vector<1x8x8xf32> -> vector<4x8x8xf32>
    "tpu.trace_start"() <{level = 10 : i32, message = "hqd,hkd->hqk"}> : () -> ()
    %cst_29 = arith.constant dense<0.000000e+00> : vector<4x8x8xf32>
    %72 = tpu.matmul %53, %62, %cst_29 {dimension_numbers = #tpu.dot_dimension_numbers<[2], [2], [1], [1], [0, 0, 0, 1, 1, 1], [0], [0]>} : vector<4x8x8xf32>, vector<4x8x8xf32>, vector<4x8x8xf32> -> vector<4x8x8xf32>
    "tpu.trace_stop"() : () -> ()
    %73 = vector.shape_cast %3 : vector<1x8xf32> to vector<1x1x8xf32>
    %74 = vector.broadcast %73 : vector<1x1x8xf32> to vector<4x8x8xf32>
    %75 = arith.addf %72, %74 : vector<4x8x8xf32>
    %cst_30 = arith.constant dense<0xFF800000> : vector<4x8xf32>
    %76 = vector.multi_reduction <maximumf>, %75, %cst_30 [2] : vector<4x8x8xf32> to vector<4x8xf32>
    %77 = vector.shape_cast %76 : vector<4x8xf32> to vector<4x8x1xf32>
    %78 = vector.broadcast %77 : vector<4x8x1xf32> to vector<4x8x8xf32>
    %79 = arith.subf %75, %78 : vector<4x8x8xf32>
    %80 = math.exp %79 : vector<4x8x8xf32>
    %cst_31 = arith.constant dense<0.000000e+00> : vector<4x8xf32>
    %81 = vector.multi_reduction <add>, %80, %cst_31 [2] : vector<4x8x8xf32> to vector<4x8xf32>
    %82 = vector.shape_cast %81 : vector<4x8xf32> to vector<4x8x1xf32>
    %83 = tpu.reciprocal %82 {approx = true} : vector<4x8x1xf32> -> vector<4x8x1xf32>
    %84 = vector.broadcast %83 : vector<4x8x1xf32> to vector<4x8x8xf32>
    %85 = arith.mulf %80, %84 : vector<4x8x8xf32>
    "tpu.trace_start"() <{level = 10 : i32, message = "hqk,hkd->hqd"}> : () -> ()
    %cst_32 = arith.constant dense<0.000000e+00> : vector<4x8x8xf32>
    %86 = tpu.matmul %85, %71, %cst_32 {dimension_numbers = #tpu.dot_dimension_numbers<[2], [1], [1], [2], [0, 0, 0, 1, 1, 2], [0], [0]>} : vector<4x8x8xf32>, vector<4x8x8xf32>, vector<4x8x8xf32> -> vector<4x8x8xf32>
    "tpu.trace_stop"() : () -> ()
    "tpu.trace_start"() <{level = 10 : i32, message = "hqd,hdo->hqo"}> : () -> ()
    %cst_33 = arith.constant dense<0.000000e+00> : vector<4x8x32xf32>
    %87 = tpu.matmul %86, %35, %cst_33 {dimension_numbers = #tpu.dot_dimension_numbers<[2], [1], [1], [2], [0, 0, 0, 1, 1, 2], [0], [0]>} : vector<4x8x8xf32>, vector<4x8x32xf32>, vector<4x8x32xf32> -> vector<4x8x32xf32>
    "tpu.trace_stop"() : () -> ()
    %cst_34 = arith.constant dense<0.000000e+00> : vector<8x32xf32>
    %88 = vector.multi_reduction <add>, %87, %cst_34 [0] : vector<4x8x32xf32> to vector<8x32xf32>
    %89 = vector.broadcast %36 : vector<1x32xf32> to vector<8x32xf32>
    %90 = arith.addf %88, %89 : vector<8x32xf32>
    %91 = arith.addf %7, %90 : vector<8x32xf32>
    %c4 = arith.constant 4 : index
    %c0_35 = arith.constant 0 : index
    %92 = vector.load %arg10[%c4, %c0_35] : memref<45x128xf32, #tpu.memory_space<vmem>>, vector<1x32xf32>
    %c5 = arith.constant 5 : index
    %c0_36 = arith.constant 0 : index
    %93 = vector.load %arg10[%c5, %c0_36] : memref<45x128xf32, #tpu.memory_space<vmem>>, vector<1x32xf32>
    %cst_37 = arith.constant dense<0.000000e+00> : vector<8xf32>
    %94 = vector.multi_reduction <add>, %91, %cst_37 [1] : vector<8x32xf32> to vector<8xf32>
    %95 = vector.shape_cast %94 : vector<8xf32> to vector<8x1xf32>
    %cst_38 = arith.constant 3.200000e+01 : f32
    %96 = vector.broadcast %cst_38 : f32 to vector<8x1xf32>
    %97 = arith.divf %95, %96 : vector<8x1xf32>
    %98 = vector.broadcast %97 : vector<8x1xf32> to vector<8x32xf32>
    %99 = arith.subf %91, %98 : vector<8x32xf32>
    %100 = arith.mulf %99, %99 : vector<8x32xf32>
    %cst_39 = arith.constant dense<0.000000e+00> : vector<8xf32>
    %101 = vector.multi_reduction <add>, %100, %cst_39 [1] : vector<8x32xf32> to vector<8xf32>
    %102 = vector.shape_cast %101 : vector<8xf32> to vector<8x1xf32>
    %cst_40 = arith.constant 0.0322580636 : f32
    %103 = vector.broadcast %cst_40 : f32 to vector<8x1xf32>
    %104 = arith.mulf %102, %103 : vector<8x1xf32>
    %105 = math.sqrt %104 : vector<8x1xf32>
    %cst_41 = arith.constant 9.99999997E-7 : f32
    %106 = vector.broadcast %cst_41 : f32 to vector<8x1xf32>
    %107 = arith.addf %105, %106 : vector<8x1xf32>
    %108 = tpu.reciprocal %107 {approx = true} : vector<8x1xf32> -> vector<8x1xf32>
    %109 = vector.broadcast %108 : vector<8x1xf32> to vector<8x32xf32>
    %110 = arith.mulf %99, %109 : vector<8x32xf32>
    %111 = vector.broadcast %92 : vector<1x32xf32> to vector<8x32xf32>
    %112 = arith.mulf %111, %110 : vector<8x32xf32>
    %113 = vector.broadcast %93 : vector<1x32xf32> to vector<8x32xf32>
    %114 = arith.addf %112, %113 : vector<8x32xf32>
    %c0_42 = arith.constant 0 : index
    %c0_43 = arith.constant 0 : index
    %c0_44 = arith.constant 0 : index
    %115 = vector.load %arg7[%c0_42, %c0_43, %c0_44] : memref<4x32x64xf32, #tpu.memory_space<vmem>>, vector<1x32x64xf32>
    %116 = vector.shape_cast %115 : vector<1x32x64xf32> to vector<32x64xf32>
    %c6 = arith.constant 6 : index
    %c0_45 = arith.constant 0 : index
    %117 = vector.load %arg10[%c6, %c0_45] : memref<45x128xf32, #tpu.memory_space<vmem>>, vector<1x64xf32>
    %c0_46 = arith.constant 0 : index
    %c0_47 = arith.constant 0 : index
    %c0_48 = arith.constant 0 : index
    %118 = vector.load %arg8[%c0_46, %c0_47, %c0_48] : memref<4x64x32xf32, #tpu.memory_space<vmem>>, vector<1x64x32xf32>
    %119 = vector.shape_cast %118 : vector<1x64x32xf32> to vector<64x32xf32>
    %c7 = arith.constant 7 : index
    %c0_49 = arith.constant 0 : index
    %120 = vector.load %arg10[%c7, %c0_49] : memref<45x128xf32, #tpu.memory_space<vmem>>, vector<1x32xf32>
    %cst_50 = arith.constant dense<0.000000e+00> : vector<8x64xf32>
    %121 = tpu.matmul %114, %116, %cst_50 {dimension_numbers = #tpu.dot_dimension_numbers<[1], [0], [0], [1], [0, 0, 1, 1], [], []>} : vector<8x32xf32>, vector<32x64xf32>, vector<8x64xf32> -> vector<8x64xf32>
    %122 = vector.broadcast %117 : vector<1x64xf32> to vector<8x64xf32>
    %123 = arith.addf %121, %122 : vector<8x64xf32>
    %cst_51 = arith.constant 0.000000e+00 : f32
    %124 = vector.broadcast %cst_51 : f32 to vector<8x64xf32>
    %125 = arith.maximumf %123, %124 : vector<8x64xf32>
    %cst_52 = arith.constant dense<0.000000e+00> : vector<8x32xf32>
    %126 = tpu.matmul %125, %119, %cst_52 {dimension_numbers = #tpu.dot_dimension_numbers<[1], [0], [0], [1], [0, 0, 1, 1], [], []>} : vector<8x64xf32>, vector<64x32xf32>, vector<8x32xf32> -> vector<8x32xf32>
    %127 = vector.broadcast %120 : vector<1x32xf32> to vector<8x32xf32>
    %128 = arith.addf %126, %127 : vector<8x32xf32>
    %129 = arith.addf %91, %128 : vector<8x32xf32>
    %c8 = arith.constant 8 : index
    %c0_53 = arith.constant 0 : index
    %130 = vector.load %arg10[%c8, %c0_53] : memref<45x128xf32, #tpu.memory_space<vmem>>, vector<1x32xf32>
    %c9 = arith.constant 9 : index
    %c0_54 = arith.constant 0 : index
    %131 = vector.load %arg10[%c9, %c0_54] : memref<45x128xf32, #tpu.memory_space<vmem>>, vector<1x32xf32>
    %cst_55 = arith.constant dense<0.000000e+00> : vector<8xf32>
    %132 = vector.multi_reduction <add>, %129, %cst_55 [1] : vector<8x32xf32> to vector<8xf32>
    %133 = vector.shape_cast %132 : vector<8xf32> to vector<8x1xf32>
    %cst_56 = arith.constant 3.200000e+01 : f32
    %134 = vector.broadcast %cst_56 : f32 to vector<8x1xf32>
    %135 = arith.divf %133, %134 : vector<8x1xf32>
    %136 = vector.broadcast %135 : vector<8x1xf32> to vector<8x32xf32>
    %137 = arith.subf %129, %136 : vector<8x32xf32>
    %138 = arith.mulf %137, %137 : vector<8x32xf32>
    %cst_57 = arith.constant dense<0.000000e+00> : vector<8xf32>
    %139 = vector.multi_reduction <add>, %138, %cst_57 [1] : vector<8x32xf32> to vector<8xf32>
    %140 = vector.shape_cast %139 : vector<8xf32> to vector<8x1xf32>
    %cst_58 = arith.constant 0.0322580636 : f32
    %141 = vector.broadcast %cst_58 : f32 to vector<8x1xf32>
    %142 = arith.mulf %140, %141 : vector<8x1xf32>
    %143 = math.sqrt %142 : vector<8x1xf32>
    %cst_59 = arith.constant 9.99999997E-7 : f32
    %144 = vector.broadcast %cst_59 : f32 to vector<8x1xf32>
    %145 = arith.addf %143, %144 : vector<8x1xf32>
    %146 = tpu.reciprocal %145 {approx = true} : vector<8x1xf32> -> vector<8x1xf32>
    %147 = vector.broadcast %146 : vector<8x1xf32> to vector<8x32xf32>
    %148 = arith.mulf %137, %147 : vector<8x32xf32>
    %149 = vector.broadcast %130 : vector<1x32xf32> to vector<8x32xf32>
    %150 = arith.mulf %149, %148 : vector<8x32xf32>
    %151 = vector.broadcast %131 : vector<1x32xf32> to vector<8x32xf32>
    %152 = arith.addf %150, %151 : vector<8x32xf32>
    %c1_60 = arith.constant 1 : index
    %c0_61 = arith.constant 0 : index
    %c0_62 = arith.constant 0 : index
    %153 = vector.load %arg5[%c1_60, %c0_61, %c0_62] : memref<6x32x96xf32, #tpu.memory_space<vmem>>, vector<1x32x96xf32>
    %154 = vector.shape_cast %153 : vector<1x32x96xf32> to vector<32x96xf32>
    %c10 = arith.constant 10 : index
    %c0_63 = arith.constant 0 : index
    %155 = vector.load %arg10[%c10, %c0_63] : memref<45x128xf32, #tpu.memory_space<vmem>>, vector<1x96xf32>
    %c1_64 = arith.constant 1 : index
    %c0_65 = arith.constant 0 : index
    %c0_66 = arith.constant 0 : index
    %c0_67 = arith.constant 0 : index
    %156 = vector.load %arg6[%c1_64, %c0_65, %c0_66, %c0_67] : memref<6x4x8x32xf32, #tpu.memory_space<vmem>>, vector<1x4x8x32xf32>
    %157 = vector.shape_cast %156 : vector<1x4x8x32xf32> to vector<4x8x32xf32>
    %c11 = arith.constant 11 : index
    %c0_68 = arith.constant 0 : index
    %158 = vector.load %arg10[%c11, %c0_68] : memref<45x128xf32, #tpu.memory_space<vmem>>, vector<1x32xf32>
    %cst_69 = arith.constant dense<0.000000e+00> : vector<8x96xf32>
    %159 = tpu.matmul %152, %154, %cst_69 {dimension_numbers = #tpu.dot_dimension_numbers<[1], [0], [0], [1], [0, 0, 1, 1], [], []>} : vector<8x32xf32>, vector<32x96xf32>, vector<8x96xf32> -> vector<8x96xf32>
    %160 = vector.broadcast %155 : vector<1x96xf32> to vector<8x96xf32>
    %161 = arith.addf %159, %160 : vector<8x96xf32>
    %162 = vector.extract_strided_slice %161 {offsets = [0, 0], sizes = [8, 32], strides = [1, 1]} : vector<8x96xf32> to vector<8x32xf32>
    %163 = vector.extract_strided_slice %161 {offsets = [0, 32], sizes = [8, 32], strides = [1, 1]} : vector<8x96xf32> to vector<8x32xf32>
    %164 = vector.extract_strided_slice %161 {offsets = [0, 64], sizes = [8, 32], strides = [1, 1]} : vector<8x96xf32> to vector<8x32xf32>
    %cst_70 = arith.constant 0.353553385 : f32
    %165 = vector.broadcast %cst_70 : f32 to vector<8x32xf32>
    %166 = arith.mulf %162, %165 : vector<8x32xf32>
    %167 = vector.extract_strided_slice %166 {offsets = [0, 0], sizes = [8, 8], strides = [1, 1]} : vector<8x32xf32> to vector<8x8xf32>
    %168 = vector.extract_strided_slice %166 {offsets = [0, 8], sizes = [8, 8], strides = [1, 1]} : vector<8x32xf32> to vector<8x8xf32>
    %169 = vector.extract_strided_slice %166 {offsets = [0, 16], sizes = [8, 8], strides = [1, 1]} : vector<8x32xf32> to vector<8x8xf32>
    %170 = vector.extract_strided_slice %166 {offsets = [0, 24], sizes = [8, 8], strides = [1, 1]} : vector<8x32xf32> to vector<8x8xf32>
    %171 = vector.shape_cast %167 : vector<8x8xf32> to vector<1x8x8xf32>
    %172 = vector.shape_cast %168 : vector<8x8xf32> to vector<1x8x8xf32>
    %173 = vector.shape_cast %169 : vector<8x8xf32> to vector<1x8x8xf32>
    %174 = vector.shape_cast %170 : vector<8x8xf32> to vector<1x8x8xf32>
    %175 = tpu.concatenate %171, %172, %173, %174 in 0 : vector<1x8x8xf32>, vector<1x8x8xf32>, vector<1x8x8xf32>, vector<1x8x8xf32> -> vector<4x8x8xf32>
    %176 = vector.extract_strided_slice %163 {offsets = [0, 0], sizes = [8, 8], strides = [1, 1]} : vector<8x32xf32> to vector<8x8xf32>
    %177 = vector.extract_strided_slice %163 {offsets = [0, 8], sizes = [8, 8], strides = [1, 1]} : vector<8x32xf32> to vector<8x8xf32>
    %178 = vector.extract_strided_slice %163 {offsets = [0, 16], sizes = [8, 8], strides = [1, 1]} : vector<8x32xf32> to vector<8x8xf32>
    %179 = vector.extract_strided_slice %163 {offsets = [0, 24], sizes = [8, 8], strides = [1, 1]} : vector<8x32xf32> to vector<8x8xf32>
    %180 = vector.shape_cast %176 : vector<8x8xf32> to vector<1x8x8xf32>
    %181 = vector.shape_cast %177 : vector<8x8xf32> to vector<1x8x8xf32>
    %182 = vector.shape_cast %178 : vector<8x8xf32> to vector<1x8x8xf32>
    %183 = vector.shape_cast %179 : vector<8x8xf32> to vector<1x8x8xf32>
    %184 = tpu.concatenate %180, %181, %182, %183 in 0 : vector<1x8x8xf32>, vector<1x8x8xf32>, vector<1x8x8xf32>, vector<1x8x8xf32> -> vector<4x8x8xf32>
    %185 = vector.extract_strided_slice %164 {offsets = [0, 0], sizes = [8, 8], strides = [1, 1]} : vector<8x32xf32> to vector<8x8xf32>
    %186 = vector.extract_strided_slice %164 {offsets = [0, 8], sizes = [8, 8], strides = [1, 1]} : vector<8x32xf32> to vector<8x8xf32>
    %187 = vector.extract_strided_slice %164 {offsets = [0, 16], sizes = [8, 8], strides = [1, 1]} : vector<8x32xf32> to vector<8x8xf32>
    %188 = vector.extract_strided_slice %164 {offsets = [0, 24], sizes = [8, 8], strides = [1, 1]} : vector<8x32xf32> to vector<8x8xf32>
    %189 = vector.shape_cast %185 : vector<8x8xf32> to vector<1x8x8xf32>
    %190 = vector.shape_cast %186 : vector<8x8xf32> to vector<1x8x8xf32>
    %191 = vector.shape_cast %187 : vector<8x8xf32> to vector<1x8x8xf32>
    %192 = vector.shape_cast %188 : vector<8x8xf32> to vector<1x8x8xf32>
    %193 = tpu.concatenate %189, %190, %191, %192 in 0 : vector<1x8x8xf32>, vector<1x8x8xf32>, vector<1x8x8xf32>, vector<1x8x8xf32> -> vector<4x8x8xf32>
    "tpu.trace_start"() <{level = 10 : i32, message = "hqd,hkd->hqk"}> : () -> ()
    %cst_71 = arith.constant dense<0.000000e+00> : vector<4x8x8xf32>
    %194 = tpu.matmul %175, %184, %cst_71 {dimension_numbers = #tpu.dot_dimension_numbers<[2], [2], [1], [1], [0, 0, 0, 1, 1, 1], [0], [0]>} : vector<4x8x8xf32>, vector<4x8x8xf32>, vector<4x8x8xf32> -> vector<4x8x8xf32>
    "tpu.trace_stop"() : () -> ()
    %195 = vector.shape_cast %3 : vector<1x8xf32> to vector<1x1x8xf32>
    %196 = vector.broadcast %195 : vector<1x1x8xf32> to vector<4x8x8xf32>
    %197 = arith.addf %194, %196 : vector<4x8x8xf32>
    %cst_72 = arith.constant dense<0xFF800000> : vector<4x8xf32>
    %198 = vector.multi_reduction <maximumf>, %197, %cst_72 [2] : vector<4x8x8xf32> to vector<4x8xf32>
    %199 = vector.shape_cast %198 : vector<4x8xf32> to vector<4x8x1xf32>
    %200 = vector.broadcast %199 : vector<4x8x1xf32> to vector<4x8x8xf32>
    %201 = arith.subf %197, %200 : vector<4x8x8xf32>
    %202 = math.exp %201 : vector<4x8x8xf32>
    %cst_73 = arith.constant dense<0.000000e+00> : vector<4x8xf32>
    %203 = vector.multi_reduction <add>, %202, %cst_73 [2] : vector<4x8x8xf32> to vector<4x8xf32>
    %204 = vector.shape_cast %203 : vector<4x8xf32> to vector<4x8x1xf32>
    %205 = tpu.reciprocal %204 {approx = true} : vector<4x8x1xf32> -> vector<4x8x1xf32>
    %206 = vector.broadcast %205 : vector<4x8x1xf32> to vector<4x8x8xf32>
    %207 = arith.mulf %202, %206 : vector<4x8x8xf32>
    "tpu.trace_start"() <{level = 10 : i32, message = "hqk,hkd->hqd"}> : () -> ()
    %cst_74 = arith.constant dense<0.000000e+00> : vector<4x8x8xf32>
    %208 = tpu.matmul %207, %193, %cst_74 {dimension_numbers = #tpu.dot_dimension_numbers<[2], [1], [1], [2], [0, 0, 0, 1, 1, 2], [0], [0]>} : vector<4x8x8xf32>, vector<4x8x8xf32>, vector<4x8x8xf32> -> vector<4x8x8xf32>
    "tpu.trace_stop"() : () -> ()
    "tpu.trace_start"() <{level = 10 : i32, message = "hqd,hdo->hqo"}> : () -> ()
    %cst_75 = arith.constant dense<0.000000e+00> : vector<4x8x32xf32>
    %209 = tpu.matmul %208, %157, %cst_75 {dimension_numbers = #tpu.dot_dimension_numbers<[2], [1], [1], [2], [0, 0, 0, 1, 1, 2], [0], [0]>} : vector<4x8x8xf32>, vector<4x8x32xf32>, vector<4x8x32xf32> -> vector<4x8x32xf32>
    "tpu.trace_stop"() : () -> ()
    %cst_76 = arith.constant dense<0.000000e+00> : vector<8x32xf32>
    %210 = vector.multi_reduction <add>, %209, %cst_76 [0] : vector<4x8x32xf32> to vector<8x32xf32>
    %211 = vector.broadcast %158 : vector<1x32xf32> to vector<8x32xf32>
    %212 = arith.addf %210, %211 : vector<8x32xf32>
    %213 = arith.addf %129, %212 : vector<8x32xf32>
    %c12 = arith.constant 12 : index
    %c0_77 = arith.constant 0 : index
    %214 = vector.load %arg10[%c12, %c0_77] : memref<45x128xf32, #tpu.memory_space<vmem>>, vector<1x32xf32>
    %c13 = arith.constant 13 : index
    %c0_78 = arith.constant 0 : index
    %215 = vector.load %arg10[%c13, %c0_78] : memref<45x128xf32, #tpu.memory_space<vmem>>, vector<1x32xf32>
    %cst_79 = arith.constant dense<0.000000e+00> : vector<8xf32>
    %216 = vector.multi_reduction <add>, %213, %cst_79 [1] : vector<8x32xf32> to vector<8xf32>
    %217 = vector.shape_cast %216 : vector<8xf32> to vector<8x1xf32>
    %cst_80 = arith.constant 3.200000e+01 : f32
    %218 = vector.broadcast %cst_80 : f32 to vector<8x1xf32>
    %219 = arith.divf %217, %218 : vector<8x1xf32>
    %220 = vector.broadcast %219 : vector<8x1xf32> to vector<8x32xf32>
    %221 = arith.subf %213, %220 : vector<8x32xf32>
    %222 = arith.mulf %221, %221 : vector<8x32xf32>
    %cst_81 = arith.constant dense<0.000000e+00> : vector<8xf32>
    %223 = vector.multi_reduction <add>, %222, %cst_81 [1] : vector<8x32xf32> to vector<8xf32>
    %224 = vector.shape_cast %223 : vector<8xf32> to vector<8x1xf32>
    %cst_82 = arith.constant 0.0322580636 : f32
    %225 = vector.broadcast %cst_82 : f32 to vector<8x1xf32>
    %226 = arith.mulf %224, %225 : vector<8x1xf32>
    %227 = math.sqrt %226 : vector<8x1xf32>
    %cst_83 = arith.constant 9.99999997E-7 : f32
    %228 = vector.broadcast %cst_83 : f32 to vector<8x1xf32>
    %229 = arith.addf %227, %228 : vector<8x1xf32>
    %230 = tpu.reciprocal %229 {approx = true} : vector<8x1xf32> -> vector<8x1xf32>
    %231 = vector.broadcast %230 : vector<8x1xf32> to vector<8x32xf32>
    %232 = arith.mulf %221, %231 : vector<8x32xf32>
    %233 = vector.broadcast %214 : vector<1x32xf32> to vector<8x32xf32>
    %234 = arith.mulf %233, %232 : vector<8x32xf32>
    %235 = vector.broadcast %215 : vector<1x32xf32> to vector<8x32xf32>
    %236 = arith.addf %234, %235 : vector<8x32xf32>
    %c1_84 = arith.constant 1 : index
    %c0_85 = arith.constant 0 : index
    %c0_86 = arith.constant 0 : index
    %237 = vector.load %arg7[%c1_84, %c0_85, %c0_86] : memref<4x32x64xf32, #tpu.memory_space<vmem>>, vector<1x32x64xf32>
    %238 = vector.shape_cast %237 : vector<1x32x64xf32> to vector<32x64xf32>
    %c14 = arith.constant 14 : index
    %c0_87 = arith.constant 0 : index
    %239 = vector.load %arg10[%c14, %c0_87] : memref<45x128xf32, #tpu.memory_space<vmem>>, vector<1x64xf32>
    %c1_88 = arith.constant 1 : index
    %c0_89 = arith.constant 0 : index
    %c0_90 = arith.constant 0 : index
    %240 = vector.load %arg8[%c1_88, %c0_89, %c0_90] : memref<4x64x32xf32, #tpu.memory_space<vmem>>, vector<1x64x32xf32>
    %241 = vector.shape_cast %240 : vector<1x64x32xf32> to vector<64x32xf32>
    %c15 = arith.constant 15 : index
    %c0_91 = arith.constant 0 : index
    %242 = vector.load %arg10[%c15, %c0_91] : memref<45x128xf32, #tpu.memory_space<vmem>>, vector<1x32xf32>
    %cst_92 = arith.constant dense<0.000000e+00> : vector<8x64xf32>
    %243 = tpu.matmul %236, %238, %cst_92 {dimension_numbers = #tpu.dot_dimension_numbers<[1], [0], [0], [1], [0, 0, 1, 1], [], []>} : vector<8x32xf32>, vector<32x64xf32>, vector<8x64xf32> -> vector<8x64xf32>
    %244 = vector.broadcast %239 : vector<1x64xf32> to vector<8x64xf32>
    %245 = arith.addf %243, %244 : vector<8x64xf32>
    %cst_93 = arith.constant 0.000000e+00 : f32
    %246 = vector.broadcast %cst_93 : f32 to vector<8x64xf32>
    %247 = arith.maximumf %245, %246 : vector<8x64xf32>
    %cst_94 = arith.constant dense<0.000000e+00> : vector<8x32xf32>
    %248 = tpu.matmul %247, %241, %cst_94 {dimension_numbers = #tpu.dot_dimension_numbers<[1], [0], [0], [1], [0, 0, 1, 1], [], []>} : vector<8x64xf32>, vector<64x32xf32>, vector<8x32xf32> -> vector<8x32xf32>
    %249 = vector.broadcast %242 : vector<1x32xf32> to vector<8x32xf32>
    %250 = arith.addf %248, %249 : vector<8x32xf32>
    %251 = arith.addf %213, %250 : vector<8x32xf32>
    %c40 = arith.constant 40 : index
    %c0_95 = arith.constant 0 : index
    %252 = vector.load %arg10[%c40, %c0_95] : memref<45x128xf32, #tpu.memory_space<vmem>>, vector<1x32xf32>
    %c41 = arith.constant 41 : index
    %c0_96 = arith.constant 0 : index
    %253 = vector.load %arg10[%c41, %c0_96] : memref<45x128xf32, #tpu.memory_space<vmem>>, vector<1x32xf32>
    %cst_97 = arith.constant dense<0.000000e+00> : vector<8xf32>
    %254 = vector.multi_reduction <add>, %251, %cst_97 [1] : vector<8x32xf32> to vector<8xf32>
    %255 = vector.shape_cast %254 : vector<8xf32> to vector<8x1xf32>
    %cst_98 = arith.constant 3.200000e+01 : f32
    %256 = vector.broadcast %cst_98 : f32 to vector<8x1xf32>
    %257 = arith.divf %255, %256 : vector<8x1xf32>
    %258 = vector.broadcast %257 : vector<8x1xf32> to vector<8x32xf32>
    %259 = arith.subf %251, %258 : vector<8x32xf32>
    %260 = arith.mulf %259, %259 : vector<8x32xf32>
    %cst_99 = arith.constant dense<0.000000e+00> : vector<8xf32>
    %261 = vector.multi_reduction <add>, %260, %cst_99 [1] : vector<8x32xf32> to vector<8xf32>
    %262 = vector.shape_cast %261 : vector<8xf32> to vector<8x1xf32>
    %cst_100 = arith.constant 0.0322580636 : f32
    %263 = vector.broadcast %cst_100 : f32 to vector<8x1xf32>
    %264 = arith.mulf %262, %263 : vector<8x1xf32>
    %265 = math.sqrt %264 : vector<8x1xf32>
    %cst_101 = arith.constant 9.99999997E-7 : f32
    %266 = vector.broadcast %cst_101 : f32 to vector<8x1xf32>
    %267 = arith.addf %265, %266 : vector<8x1xf32>
    %268 = tpu.reciprocal %267 {approx = true} : vector<8x1xf32> -> vector<8x1xf32>
    %269 = vector.broadcast %268 : vector<8x1xf32> to vector<8x32xf32>
    %270 = arith.mulf %259, %269 : vector<8x32xf32>
    %271 = vector.broadcast %252 : vector<1x32xf32> to vector<8x32xf32>
    %272 = arith.mulf %271, %270 : vector<8x32xf32>
    %273 = vector.broadcast %253 : vector<1x32xf32> to vector<8x32xf32>
    %274 = arith.addf %272, %273 : vector<8x32xf32>
    %c0_102 = arith.constant 0 : index
    %c0_103 = arith.constant 0 : index
    %c0_104 = arith.constant 0 : index
    %275 = vector.load %arg2[%c0_102, %c0_103, %c0_104] : memref<2x8x32xf32, #tpu.memory_space<vmem>>, vector<1x8x32xf32>
    %276 = vector.shape_cast %275 : vector<1x8x32xf32> to vector<8x32xf32>
    %c16 = arith.constant 16 : index
    %c0_105 = arith.constant 0 : index
    %277 = vector.load %arg10[%c16, %c0_105] : memref<45x128xf32, #tpu.memory_space<vmem>>, vector<1x32xf32>
    %c17 = arith.constant 17 : index
    %c0_106 = arith.constant 0 : index
    %278 = vector.load %arg10[%c17, %c0_106] : memref<45x128xf32, #tpu.memory_space<vmem>>, vector<1x32xf32>
    %cst_107 = arith.constant dense<0.000000e+00> : vector<8xf32>
    %279 = vector.multi_reduction <add>, %276, %cst_107 [1] : vector<8x32xf32> to vector<8xf32>
    %280 = vector.shape_cast %279 : vector<8xf32> to vector<8x1xf32>
    %cst_108 = arith.constant 3.200000e+01 : f32
    %281 = vector.broadcast %cst_108 : f32 to vector<8x1xf32>
    %282 = arith.divf %280, %281 : vector<8x1xf32>
    %283 = vector.broadcast %282 : vector<8x1xf32> to vector<8x32xf32>
    %284 = arith.subf %276, %283 : vector<8x32xf32>
    %285 = arith.mulf %284, %284 : vector<8x32xf32>
    %cst_109 = arith.constant dense<0.000000e+00> : vector<8xf32>
    %286 = vector.multi_reduction <add>, %285, %cst_109 [1] : vector<8x32xf32> to vector<8xf32>
    %287 = vector.shape_cast %286 : vector<8xf32> to vector<8x1xf32>
    %cst_110 = arith.constant 0.0322580636 : f32
    %288 = vector.broadcast %cst_110 : f32 to vector<8x1xf32>
    %289 = arith.mulf %287, %288 : vector<8x1xf32>
    %290 = math.sqrt %289 : vector<8x1xf32>
    %cst_111 = arith.constant 9.99999997E-7 : f32
    %291 = vector.broadcast %cst_111 : f32 to vector<8x1xf32>
    %292 = arith.addf %290, %291 : vector<8x1xf32>
    %293 = tpu.reciprocal %292 {approx = true} : vector<8x1xf32> -> vector<8x1xf32>
    %294 = vector.broadcast %293 : vector<8x1xf32> to vector<8x32xf32>
    %295 = arith.mulf %284, %294 : vector<8x32xf32>
    %296 = vector.broadcast %277 : vector<1x32xf32> to vector<8x32xf32>
    %297 = arith.mulf %296, %295 : vector<8x32xf32>
    %298 = vector.broadcast %278 : vector<1x32xf32> to vector<8x32xf32>
    %299 = arith.addf %297, %298 : vector<8x32xf32>
    %c2_112 = arith.constant 2 : index
    %c0_113 = arith.constant 0 : index
    %c0_114 = arith.constant 0 : index
    %300 = vector.load %arg5[%c2_112, %c0_113, %c0_114] : memref<6x32x96xf32, #tpu.memory_space<vmem>>, vector<1x32x96xf32>
    %301 = vector.shape_cast %300 : vector<1x32x96xf32> to vector<32x96xf32>
    %c18 = arith.constant 18 : index
    %c0_115 = arith.constant 0 : index
    %302 = vector.load %arg10[%c18, %c0_115] : memref<45x128xf32, #tpu.memory_space<vmem>>, vector<1x96xf32>
    %c2_116 = arith.constant 2 : index
    %c0_117 = arith.constant 0 : index
    %c0_118 = arith.constant 0 : index
    %c0_119 = arith.constant 0 : index
    %303 = vector.load %arg6[%c2_116, %c0_117, %c0_118, %c0_119] : memref<6x4x8x32xf32, #tpu.memory_space<vmem>>, vector<1x4x8x32xf32>
    %304 = vector.shape_cast %303 : vector<1x4x8x32xf32> to vector<4x8x32xf32>
    %c19 = arith.constant 19 : index
    %c0_120 = arith.constant 0 : index
    %305 = vector.load %arg10[%c19, %c0_120] : memref<45x128xf32, #tpu.memory_space<vmem>>, vector<1x32xf32>
    %cst_121 = arith.constant dense<0.000000e+00> : vector<8x96xf32>
    %306 = tpu.matmul %299, %301, %cst_121 {dimension_numbers = #tpu.dot_dimension_numbers<[1], [0], [0], [1], [0, 0, 1, 1], [], []>} : vector<8x32xf32>, vector<32x96xf32>, vector<8x96xf32> -> vector<8x96xf32>
    %307 = vector.broadcast %302 : vector<1x96xf32> to vector<8x96xf32>
    %308 = arith.addf %306, %307 : vector<8x96xf32>
    %309 = vector.extract_strided_slice %308 {offsets = [0, 0], sizes = [8, 32], strides = [1, 1]} : vector<8x96xf32> to vector<8x32xf32>
    %310 = vector.extract_strided_slice %308 {offsets = [0, 32], sizes = [8, 32], strides = [1, 1]} : vector<8x96xf32> to vector<8x32xf32>
    %311 = vector.extract_strided_slice %308 {offsets = [0, 64], sizes = [8, 32], strides = [1, 1]} : vector<8x96xf32> to vector<8x32xf32>
    %cst_122 = arith.constant 0.353553385 : f32
    %312 = vector.broadcast %cst_122 : f32 to vector<8x32xf32>
    %313 = arith.mulf %309, %312 : vector<8x32xf32>
    %314 = vector.extract_strided_slice %313 {offsets = [0, 0], sizes = [8, 8], strides = [1, 1]} : vector<8x32xf32> to vector<8x8xf32>
    %315 = vector.extract_strided_slice %313 {offsets = [0, 8], sizes = [8, 8], strides = [1, 1]} : vector<8x32xf32> to vector<8x8xf32>
    %316 = vector.extract_strided_slice %313 {offsets = [0, 16], sizes = [8, 8], strides = [1, 1]} : vector<8x32xf32> to vector<8x8xf32>
    %317 = vector.extract_strided_slice %313 {offsets = [0, 24], sizes = [8, 8], strides = [1, 1]} : vector<8x32xf32> to vector<8x8xf32>
    %318 = vector.shape_cast %314 : vector<8x8xf32> to vector<1x8x8xf32>
    %319 = vector.shape_cast %315 : vector<8x8xf32> to vector<1x8x8xf32>
    %320 = vector.shape_cast %316 : vector<8x8xf32> to vector<1x8x8xf32>
    %321 = vector.shape_cast %317 : vector<8x8xf32> to vector<1x8x8xf32>
    %322 = tpu.concatenate %318, %319, %320, %321 in 0 : vector<1x8x8xf32>, vector<1x8x8xf32>, vector<1x8x8xf32>, vector<1x8x8xf32> -> vector<4x8x8xf32>
    %323 = vector.extract_strided_slice %310 {offsets = [0, 0], sizes = [8, 8], strides = [1, 1]} : vector<8x32xf32> to vector<8x8xf32>
    %324 = vector.extract_strided_slice %310 {offsets = [0, 8], sizes = [8, 8], strides = [1, 1]} : vector<8x32xf32> to vector<8x8xf32>
    %325 = vector.extract_strided_slice %310 {offsets = [0, 16], sizes = [8, 8], strides = [1, 1]} : vector<8x32xf32> to vector<8x8xf32>
    %326 = vector.extract_strided_slice %310 {offsets = [0, 24], sizes = [8, 8], strides = [1, 1]} : vector<8x32xf32> to vector<8x8xf32>
    %327 = vector.shape_cast %323 : vector<8x8xf32> to vector<1x8x8xf32>
    %328 = vector.shape_cast %324 : vector<8x8xf32> to vector<1x8x8xf32>
    %329 = vector.shape_cast %325 : vector<8x8xf32> to vector<1x8x8xf32>
    %330 = vector.shape_cast %326 : vector<8x8xf32> to vector<1x8x8xf32>
    %331 = tpu.concatenate %327, %328, %329, %330 in 0 : vector<1x8x8xf32>, vector<1x8x8xf32>, vector<1x8x8xf32>, vector<1x8x8xf32> -> vector<4x8x8xf32>
    %332 = vector.extract_strided_slice %311 {offsets = [0, 0], sizes = [8, 8], strides = [1, 1]} : vector<8x32xf32> to vector<8x8xf32>
    %333 = vector.extract_strided_slice %311 {offsets = [0, 8], sizes = [8, 8], strides = [1, 1]} : vector<8x32xf32> to vector<8x8xf32>
    %334 = vector.extract_strided_slice %311 {offsets = [0, 16], sizes = [8, 8], strides = [1, 1]} : vector<8x32xf32> to vector<8x8xf32>
    %335 = vector.extract_strided_slice %311 {offsets = [0, 24], sizes = [8, 8], strides = [1, 1]} : vector<8x32xf32> to vector<8x8xf32>
    %336 = vector.shape_cast %332 : vector<8x8xf32> to vector<1x8x8xf32>
    %337 = vector.shape_cast %333 : vector<8x8xf32> to vector<1x8x8xf32>
    %338 = vector.shape_cast %334 : vector<8x8xf32> to vector<1x8x8xf32>
    %339 = vector.shape_cast %335 : vector<8x8xf32> to vector<1x8x8xf32>
    %340 = tpu.concatenate %336, %337, %338, %339 in 0 : vector<1x8x8xf32>, vector<1x8x8xf32>, vector<1x8x8xf32>, vector<1x8x8xf32> -> vector<4x8x8xf32>
    "tpu.trace_start"() <{level = 10 : i32, message = "hqd,hkd->hqk"}> : () -> ()
    %cst_123 = arith.constant dense<0.000000e+00> : vector<4x8x8xf32>
    %341 = tpu.matmul %322, %331, %cst_123 {dimension_numbers = #tpu.dot_dimension_numbers<[2], [2], [1], [1], [0, 0, 0, 1, 1, 1], [0], [0]>} : vector<4x8x8xf32>, vector<4x8x8xf32>, vector<4x8x8xf32> -> vector<4x8x8xf32>
    "tpu.trace_stop"() : () -> ()
    %342 = vector.shape_cast %5 : vector<8x8xf32> to vector<1x8x8xf32>
    %343 = vector.broadcast %342 : vector<1x8x8xf32> to vector<4x8x8xf32>
    %344 = arith.addf %341, %343 : vector<4x8x8xf32>
    %cst_124 = arith.constant dense<0xFF800000> : vector<4x8xf32>
    %345 = vector.multi_reduction <maximumf>, %344, %cst_124 [2] : vector<4x8x8xf32> to vector<4x8xf32>
    %346 = vector.shape_cast %345 : vector<4x8xf32> to vector<4x8x1xf32>
    %347 = vector.broadcast %346 : vector<4x8x1xf32> to vector<4x8x8xf32>
    %348 = arith.subf %344, %347 : vector<4x8x8xf32>
    %349 = math.exp %348 : vector<4x8x8xf32>
    %cst_125 = arith.constant dense<0.000000e+00> : vector<4x8xf32>
    %350 = vector.multi_reduction <add>, %349, %cst_125 [2] : vector<4x8x8xf32> to vector<4x8xf32>
    %351 = vector.shape_cast %350 : vector<4x8xf32> to vector<4x8x1xf32>
    %352 = tpu.reciprocal %351 {approx = true} : vector<4x8x1xf32> -> vector<4x8x1xf32>
    %353 = vector.broadcast %352 : vector<4x8x1xf32> to vector<4x8x8xf32>
    %354 = arith.mulf %349, %353 : vector<4x8x8xf32>
    "tpu.trace_start"() <{level = 10 : i32, message = "hqk,hkd->hqd"}> : () -> ()
    %cst_126 = arith.constant dense<0.000000e+00> : vector<4x8x8xf32>
    %355 = tpu.matmul %354, %340, %cst_126 {dimension_numbers = #tpu.dot_dimension_numbers<[2], [1], [1], [2], [0, 0, 0, 1, 1, 2], [0], [0]>} : vector<4x8x8xf32>, vector<4x8x8xf32>, vector<4x8x8xf32> -> vector<4x8x8xf32>
    "tpu.trace_stop"() : () -> ()
    "tpu.trace_start"() <{level = 10 : i32, message = "hqd,hdo->hqo"}> : () -> ()
    %cst_127 = arith.constant dense<0.000000e+00> : vector<4x8x32xf32>
    %356 = tpu.matmul %355, %304, %cst_127 {dimension_numbers = #tpu.dot_dimension_numbers<[2], [1], [1], [2], [0, 0, 0, 1, 1, 2], [0], [0]>} : vector<4x8x8xf32>, vector<4x8x32xf32>, vector<4x8x32xf32> -> vector<4x8x32xf32>
    "tpu.trace_stop"() : () -> ()
    %cst_128 = arith.constant dense<0.000000e+00> : vector<8x32xf32>
    %357 = vector.multi_reduction <add>, %356, %cst_128 [0] : vector<4x8x32xf32> to vector<8x32xf32>
    %358 = vector.broadcast %305 : vector<1x32xf32> to vector<8x32xf32>
    %359 = arith.addf %357, %358 : vector<8x32xf32>
    %360 = arith.addf %276, %359 : vector<8x32xf32>
    %c20 = arith.constant 20 : index
    %c0_129 = arith.constant 0 : index
    %361 = vector.load %arg10[%c20, %c0_129] : memref<45x128xf32, #tpu.memory_space<vmem>>, vector<1x32xf32>
    %c21 = arith.constant 21 : index
    %c0_130 = arith.constant 0 : index
    %362 = vector.load %arg10[%c21, %c0_130] : memref<45x128xf32, #tpu.memory_space<vmem>>, vector<1x32xf32>
    %cst_131 = arith.constant dense<0.000000e+00> : vector<8xf32>
    %363 = vector.multi_reduction <add>, %360, %cst_131 [1] : vector<8x32xf32> to vector<8xf32>
    %364 = vector.shape_cast %363 : vector<8xf32> to vector<8x1xf32>
    %cst_132 = arith.constant 3.200000e+01 : f32
    %365 = vector.broadcast %cst_132 : f32 to vector<8x1xf32>
    %366 = arith.divf %364, %365 : vector<8x1xf32>
    %367 = vector.broadcast %366 : vector<8x1xf32> to vector<8x32xf32>
    %368 = arith.subf %360, %367 : vector<8x32xf32>
    %369 = arith.mulf %368, %368 : vector<8x32xf32>
    %cst_133 = arith.constant dense<0.000000e+00> : vector<8xf32>
    %370 = vector.multi_reduction <add>, %369, %cst_133 [1] : vector<8x32xf32> to vector<8xf32>
    %371 = vector.shape_cast %370 : vector<8xf32> to vector<8x1xf32>
    %cst_134 = arith.constant 0.0322580636 : f32
    %372 = vector.broadcast %cst_134 : f32 to vector<8x1xf32>
    %373 = arith.mulf %371, %372 : vector<8x1xf32>
    %374 = math.sqrt %373 : vector<8x1xf32>
    %cst_135 = arith.constant 9.99999997E-7 : f32
    %375 = vector.broadcast %cst_135 : f32 to vector<8x1xf32>
    %376 = arith.addf %374, %375 : vector<8x1xf32>
    %377 = tpu.reciprocal %376 {approx = true} : vector<8x1xf32> -> vector<8x1xf32>
    %378 = vector.broadcast %377 : vector<8x1xf32> to vector<8x32xf32>
    %379 = arith.mulf %368, %378 : vector<8x32xf32>
    %380 = vector.broadcast %361 : vector<1x32xf32> to vector<8x32xf32>
    %381 = arith.mulf %380, %379 : vector<8x32xf32>
    %382 = vector.broadcast %362 : vector<1x32xf32> to vector<8x32xf32>
    %383 = arith.addf %381, %382 : vector<8x32xf32>
    %c4_136 = arith.constant 4 : index
    %c0_137 = arith.constant 0 : index
    %c0_138 = arith.constant 0 : index
    %384 = vector.load %arg5[%c4_136, %c0_137, %c0_138] : memref<6x32x96xf32, #tpu.memory_space<vmem>>, vector<1x32x96xf32>
    %385 = vector.shape_cast %384 : vector<1x32x96xf32> to vector<32x96xf32>
    %c22 = arith.constant 22 : index
    %c0_139 = arith.constant 0 : index
    %386 = vector.load %arg10[%c22, %c0_139] : memref<45x128xf32, #tpu.memory_space<vmem>>, vector<1x96xf32>
    %c4_140 = arith.constant 4 : index
    %c0_141 = arith.constant 0 : index
    %c0_142 = arith.constant 0 : index
    %c0_143 = arith.constant 0 : index
    %387 = vector.load %arg6[%c4_140, %c0_141, %c0_142, %c0_143] : memref<6x4x8x32xf32, #tpu.memory_space<vmem>>, vector<1x4x8x32xf32>
    %388 = vector.shape_cast %387 : vector<1x4x8x32xf32> to vector<4x8x32xf32>
    %c23 = arith.constant 23 : index
    %c0_144 = arith.constant 0 : index
    %389 = vector.load %arg10[%c23, %c0_144] : memref<45x128xf32, #tpu.memory_space<vmem>>, vector<1x32xf32>
    %390 = vector.extract_strided_slice %385 {offsets = [0, 0], sizes = [32, 32], strides = [1, 1]} : vector<32x96xf32> to vector<32x32xf32>
    %cst_145 = arith.constant dense<0.000000e+00> : vector<8x32xf32>
    %391 = tpu.matmul %383, %390, %cst_145 {dimension_numbers = #tpu.dot_dimension_numbers<[1], [0], [0], [1], [0, 0, 1, 1], [], []>} : vector<8x32xf32>, vector<32x32xf32>, vector<8x32xf32> -> vector<8x32xf32>
    %392 = vector.extract_strided_slice %386 {offsets = [0, 0], sizes = [1, 32], strides = [1, 1]} : vector<1x96xf32> to vector<1x32xf32>
    %393 = vector.broadcast %392 : vector<1x32xf32> to vector<8x32xf32>
    %394 = arith.addf %391, %393 : vector<8x32xf32>
    %395 = vector.extract_strided_slice %385 {offsets = [0, 32], sizes = [32, 64], strides = [1, 1]} : vector<32x96xf32> to vector<32x64xf32>
    %cst_146 = arith.constant dense<0.000000e+00> : vector<8x64xf32>
    %396 = tpu.matmul %274, %395, %cst_146 {dimension_numbers = #tpu.dot_dimension_numbers<[1], [0], [0], [1], [0, 0, 1, 1], [], []>} : vector<8x32xf32>, vector<32x64xf32>, vector<8x64xf32> -> vector<8x64xf32>
    %397 = vector.extract_strided_slice %386 {offsets = [0, 32], sizes = [1, 64], strides = [1, 1]} : vector<1x96xf32> to vector<1x64xf32>
    %398 = vector.broadcast %397 : vector<1x64xf32> to vector<8x64xf32>
    %399 = arith.addf %396, %398 : vector<8x64xf32>
    %400 = vector.extract_strided_slice %399 {offsets = [0, 0], sizes = [8, 32], strides = [1, 1]} : vector<8x64xf32> to vector<8x32xf32>
    %401 = vector.extract_strided_slice %399 {offsets = [0, 32], sizes = [8, 32], strides = [1, 1]} : vector<8x64xf32> to vector<8x32xf32>
    %cst_147 = arith.constant 0.353553385 : f32
    %402 = vector.broadcast %cst_147 : f32 to vector<8x32xf32>
    %403 = arith.mulf %394, %402 : vector<8x32xf32>
    %404 = vector.extract_strided_slice %403 {offsets = [0, 0], sizes = [8, 8], strides = [1, 1]} : vector<8x32xf32> to vector<8x8xf32>
    %405 = vector.extract_strided_slice %403 {offsets = [0, 8], sizes = [8, 8], strides = [1, 1]} : vector<8x32xf32> to vector<8x8xf32>
    %406 = vector.extract_strided_slice %403 {offsets = [0, 16], sizes = [8, 8], strides = [1, 1]} : vector<8x32xf32> to vector<8x8xf32>
    %407 = vector.extract_strided_slice %403 {offsets = [0, 24], sizes = [8, 8], strides = [1, 1]} : vector<8x32xf32> to vector<8x8xf32>
    %408 = vector.shape_cast %404 : vector<8x8xf32> to vector<1x8x8xf32>
    %409 = vector.shape_cast %405 : vector<8x8xf32> to vector<1x8x8xf32>
    %410 = vector.shape_cast %406 : vector<8x8xf32> to vector<1x8x8xf32>
    %411 = vector.shape_cast %407 : vector<8x8xf32> to vector<1x8x8xf32>
    %412 = tpu.concatenate %408, %409, %410, %411 in 0 : vector<1x8x8xf32>, vector<1x8x8xf32>, vector<1x8x8xf32>, vector<1x8x8xf32> -> vector<4x8x8xf32>
    %413 = vector.extract_strided_slice %400 {offsets = [0, 0], sizes = [8, 8], strides = [1, 1]} : vector<8x32xf32> to vector<8x8xf32>
    %414 = vector.extract_strided_slice %400 {offsets = [0, 8], sizes = [8, 8], strides = [1, 1]} : vector<8x32xf32> to vector<8x8xf32>
    %415 = vector.extract_strided_slice %400 {offsets = [0, 16], sizes = [8, 8], strides = [1, 1]} : vector<8x32xf32> to vector<8x8xf32>
    %416 = vector.extract_strided_slice %400 {offsets = [0, 24], sizes = [8, 8], strides = [1, 1]} : vector<8x32xf32> to vector<8x8xf32>
    %417 = vector.shape_cast %413 : vector<8x8xf32> to vector<1x8x8xf32>
    %418 = vector.shape_cast %414 : vector<8x8xf32> to vector<1x8x8xf32>
    %419 = vector.shape_cast %415 : vector<8x8xf32> to vector<1x8x8xf32>
    %420 = vector.shape_cast %416 : vector<8x8xf32> to vector<1x8x8xf32>
    %421 = tpu.concatenate %417, %418, %419, %420 in 0 : vector<1x8x8xf32>, vector<1x8x8xf32>, vector<1x8x8xf32>, vector<1x8x8xf32> -> vector<4x8x8xf32>
    %422 = vector.extract_strided_slice %401 {offsets = [0, 0], sizes = [8, 8], strides = [1, 1]} : vector<8x32xf32> to vector<8x8xf32>
    %423 = vector.extract_strided_slice %401 {offsets = [0, 8], sizes = [8, 8], strides = [1, 1]} : vector<8x32xf32> to vector<8x8xf32>
    %424 = vector.extract_strided_slice %401 {offsets = [0, 16], sizes = [8, 8], strides = [1, 1]} : vector<8x32xf32> to vector<8x8xf32>
    %425 = vector.extract_strided_slice %401 {offsets = [0, 24], sizes = [8, 8], strides = [1, 1]} : vector<8x32xf32> to vector<8x8xf32>
    %426 = vector.shape_cast %422 : vector<8x8xf32> to vector<1x8x8xf32>
    %427 = vector.shape_cast %423 : vector<8x8xf32> to vector<1x8x8xf32>
    %428 = vector.shape_cast %424 : vector<8x8xf32> to vector<1x8x8xf32>
    %429 = vector.shape_cast %425 : vector<8x8xf32> to vector<1x8x8xf32>
    %430 = tpu.concatenate %426, %427, %428, %429 in 0 : vector<1x8x8xf32>, vector<1x8x8xf32>, vector<1x8x8xf32>, vector<1x8x8xf32> -> vector<4x8x8xf32>
    "tpu.trace_start"() <{level = 10 : i32, message = "hqd,hkd->hqk"}> : () -> ()
    %cst_148 = arith.constant dense<0.000000e+00> : vector<4x8x8xf32>
    %431 = tpu.matmul %412, %421, %cst_148 {dimension_numbers = #tpu.dot_dimension_numbers<[2], [2], [1], [1], [0, 0, 0, 1, 1, 1], [0], [0]>} : vector<4x8x8xf32>, vector<4x8x8xf32>, vector<4x8x8xf32> -> vector<4x8x8xf32>
    "tpu.trace_stop"() : () -> ()
    %432 = vector.shape_cast %3 : vector<1x8xf32> to vector<1x1x8xf32>
    %433 = vector.broadcast %432 : vector<1x1x8xf32> to vector<4x8x8xf32>
    %434 = arith.addf %431, %433 : vector<4x8x8xf32>
    %cst_149 = arith.constant dense<0xFF800000> : vector<4x8xf32>
    %435 = vector.multi_reduction <maximumf>, %434, %cst_149 [2] : vector<4x8x8xf32> to vector<4x8xf32>
    %436 = vector.shape_cast %435 : vector<4x8xf32> to vector<4x8x1xf32>
    %437 = vector.broadcast %436 : vector<4x8x1xf32> to vector<4x8x8xf32>
    %438 = arith.subf %434, %437 : vector<4x8x8xf32>
    %439 = math.exp %438 : vector<4x8x8xf32>
    %cst_150 = arith.constant dense<0.000000e+00> : vector<4x8xf32>
    %440 = vector.multi_reduction <add>, %439, %cst_150 [2] : vector<4x8x8xf32> to vector<4x8xf32>
    %441 = vector.shape_cast %440 : vector<4x8xf32> to vector<4x8x1xf32>
    %442 = tpu.reciprocal %441 {approx = true} : vector<4x8x1xf32> -> vector<4x8x1xf32>
    %443 = vector.broadcast %442 : vector<4x8x1xf32> to vector<4x8x8xf32>
    %444 = arith.mulf %439, %443 : vector<4x8x8xf32>
    "tpu.trace_start"() <{level = 10 : i32, message = "hqk,hkd->hqd"}> : () -> ()
    %cst_151 = arith.constant dense<0.000000e+00> : vector<4x8x8xf32>
    %445 = tpu.matmul %444, %430, %cst_151 {dimension_numbers = #tpu.dot_dimension_numbers<[2], [1], [1], [2], [0, 0, 0, 1, 1, 2], [0], [0]>} : vector<4x8x8xf32>, vector<4x8x8xf32>, vector<4x8x8xf32> -> vector<4x8x8xf32>
    "tpu.trace_stop"() : () -> ()
    "tpu.trace_start"() <{level = 10 : i32, message = "hqd,hdo->hqo"}> : () -> ()
    %cst_152 = arith.constant dense<0.000000e+00> : vector<4x8x32xf32>
    %446 = tpu.matmul %445, %388, %cst_152 {dimension_numbers = #tpu.dot_dimension_numbers<[2], [1], [1], [2], [0, 0, 0, 1, 1, 2], [0], [0]>} : vector<4x8x8xf32>, vector<4x8x32xf32>, vector<4x8x32xf32> -> vector<4x8x32xf32>
    "tpu.trace_stop"() : () -> ()
    %cst_153 = arith.constant dense<0.000000e+00> : vector<8x32xf32>
    %447 = vector.multi_reduction <add>, %446, %cst_153 [0] : vector<4x8x32xf32> to vector<8x32xf32>
    %448 = vector.broadcast %389 : vector<1x32xf32> to vector<8x32xf32>
    %449 = arith.addf %447, %448 : vector<8x32xf32>
    %450 = arith.addf %360, %449 : vector<8x32xf32>
    %c24 = arith.constant 24 : index
    %c0_154 = arith.constant 0 : index
    %451 = vector.load %arg10[%c24, %c0_154] : memref<45x128xf32, #tpu.memory_space<vmem>>, vector<1x32xf32>
    %c25 = arith.constant 25 : index
    %c0_155 = arith.constant 0 : index
    %452 = vector.load %arg10[%c25, %c0_155] : memref<45x128xf32, #tpu.memory_space<vmem>>, vector<1x32xf32>
    %cst_156 = arith.constant dense<0.000000e+00> : vector<8xf32>
    %453 = vector.multi_reduction <add>, %450, %cst_156 [1] : vector<8x32xf32> to vector<8xf32>
    %454 = vector.shape_cast %453 : vector<8xf32> to vector<8x1xf32>
    %cst_157 = arith.constant 3.200000e+01 : f32
    %455 = vector.broadcast %cst_157 : f32 to vector<8x1xf32>
    %456 = arith.divf %454, %455 : vector<8x1xf32>
    %457 = vector.broadcast %456 : vector<8x1xf32> to vector<8x32xf32>
    %458 = arith.subf %450, %457 : vector<8x32xf32>
    %459 = arith.mulf %458, %458 : vector<8x32xf32>
    %cst_158 = arith.constant dense<0.000000e+00> : vector<8xf32>
    %460 = vector.multi_reduction <add>, %459, %cst_158 [1] : vector<8x32xf32> to vector<8xf32>
    %461 = vector.shape_cast %460 : vector<8xf32> to vector<8x1xf32>
    %cst_159 = arith.constant 0.0322580636 : f32
    %462 = vector.broadcast %cst_159 : f32 to vector<8x1xf32>
    %463 = arith.mulf %461, %462 : vector<8x1xf32>
    %464 = math.sqrt %463 : vector<8x1xf32>
    %cst_160 = arith.constant 9.99999997E-7 : f32
    %465 = vector.broadcast %cst_160 : f32 to vector<8x1xf32>
    %466 = arith.addf %464, %465 : vector<8x1xf32>
    %467 = tpu.reciprocal %466 {approx = true} : vector<8x1xf32> -> vector<8x1xf32>
    %468 = vector.broadcast %467 : vector<8x1xf32> to vector<8x32xf32>
    %469 = arith.mulf %458, %468 : vector<8x32xf32>
    %470 = vector.broadcast %451 : vector<1x32xf32> to vector<8x32xf32>
    %471 = arith.mulf %470, %469 : vector<8x32xf32>
    %472 = vector.broadcast %452 : vector<1x32xf32> to vector<8x32xf32>
    %473 = arith.addf %471, %472 : vector<8x32xf32>
    %c2_161 = arith.constant 2 : index
    %c0_162 = arith.constant 0 : index
    %c0_163 = arith.constant 0 : index
    %474 = vector.load %arg7[%c2_161, %c0_162, %c0_163] : memref<4x32x64xf32, #tpu.memory_space<vmem>>, vector<1x32x64xf32>
    %475 = vector.shape_cast %474 : vector<1x32x64xf32> to vector<32x64xf32>
    %c26 = arith.constant 26 : index
    %c0_164 = arith.constant 0 : index
    %476 = vector.load %arg10[%c26, %c0_164] : memref<45x128xf32, #tpu.memory_space<vmem>>, vector<1x64xf32>
    %c2_165 = arith.constant 2 : index
    %c0_166 = arith.constant 0 : index
    %c0_167 = arith.constant 0 : index
    %477 = vector.load %arg8[%c2_165, %c0_166, %c0_167] : memref<4x64x32xf32, #tpu.memory_space<vmem>>, vector<1x64x32xf32>
    %478 = vector.shape_cast %477 : vector<1x64x32xf32> to vector<64x32xf32>
    %c27 = arith.constant 27 : index
    %c0_168 = arith.constant 0 : index
    %479 = vector.load %arg10[%c27, %c0_168] : memref<45x128xf32, #tpu.memory_space<vmem>>, vector<1x32xf32>
    %cst_169 = arith.constant dense<0.000000e+00> : vector<8x64xf32>
    %480 = tpu.matmul %473, %475, %cst_169 {dimension_numbers = #tpu.dot_dimension_numbers<[1], [0], [0], [1], [0, 0, 1, 1], [], []>} : vector<8x32xf32>, vector<32x64xf32>, vector<8x64xf32> -> vector<8x64xf32>
    %481 = vector.broadcast %476 : vector<1x64xf32> to vector<8x64xf32>
    %482 = arith.addf %480, %481 : vector<8x64xf32>
    %cst_170 = arith.constant 0.000000e+00 : f32
    %483 = vector.broadcast %cst_170 : f32 to vector<8x64xf32>
    %484 = arith.maximumf %482, %483 : vector<8x64xf32>
    %cst_171 = arith.constant dense<0.000000e+00> : vector<8x32xf32>
    %485 = tpu.matmul %484, %478, %cst_171 {dimension_numbers = #tpu.dot_dimension_numbers<[1], [0], [0], [1], [0, 0, 1, 1], [], []>} : vector<8x64xf32>, vector<64x32xf32>, vector<8x32xf32> -> vector<8x32xf32>
    %486 = vector.broadcast %479 : vector<1x32xf32> to vector<8x32xf32>
    %487 = arith.addf %485, %486 : vector<8x32xf32>
    %488 = arith.addf %450, %487 : vector<8x32xf32>
    %c28 = arith.constant 28 : index
    %c0_172 = arith.constant 0 : index
    %489 = vector.load %arg10[%c28, %c0_172] : memref<45x128xf32, #tpu.memory_space<vmem>>, vector<1x32xf32>
    %c29 = arith.constant 29 : index
    %c0_173 = arith.constant 0 : index
    %490 = vector.load %arg10[%c29, %c0_173] : memref<45x128xf32, #tpu.memory_space<vmem>>, vector<1x32xf32>
    %cst_174 = arith.constant dense<0.000000e+00> : vector<8xf32>
    %491 = vector.multi_reduction <add>, %488, %cst_174 [1] : vector<8x32xf32> to vector<8xf32>
    %492 = vector.shape_cast %491 : vector<8xf32> to vector<8x1xf32>
    %cst_175 = arith.constant 3.200000e+01 : f32
    %493 = vector.broadcast %cst_175 : f32 to vector<8x1xf32>
    %494 = arith.divf %492, %493 : vector<8x1xf32>
    %495 = vector.broadcast %494 : vector<8x1xf32> to vector<8x32xf32>
    %496 = arith.subf %488, %495 : vector<8x32xf32>
    %497 = arith.mulf %496, %496 : vector<8x32xf32>
    %cst_176 = arith.constant dense<0.000000e+00> : vector<8xf32>
    %498 = vector.multi_reduction <add>, %497, %cst_176 [1] : vector<8x32xf32> to vector<8xf32>
    %499 = vector.shape_cast %498 : vector<8xf32> to vector<8x1xf32>
    %cst_177 = arith.constant 0.0322580636 : f32
    %500 = vector.broadcast %cst_177 : f32 to vector<8x1xf32>
    %501 = arith.mulf %499, %500 : vector<8x1xf32>
    %502 = math.sqrt %501 : vector<8x1xf32>
    %cst_178 = arith.constant 9.99999997E-7 : f32
    %503 = vector.broadcast %cst_178 : f32 to vector<8x1xf32>
    %504 = arith.addf %502, %503 : vector<8x1xf32>
    %505 = tpu.reciprocal %504 {approx = true} : vector<8x1xf32> -> vector<8x1xf32>
    %506 = vector.broadcast %505 : vector<8x1xf32> to vector<8x32xf32>
    %507 = arith.mulf %496, %506 : vector<8x32xf32>
    %508 = vector.broadcast %489 : vector<1x32xf32> to vector<8x32xf32>
    %509 = arith.mulf %508, %507 : vector<8x32xf32>
    %510 = vector.broadcast %490 : vector<1x32xf32> to vector<8x32xf32>
    %511 = arith.addf %509, %510 : vector<8x32xf32>
    %c3_179 = arith.constant 3 : index
    %c0_180 = arith.constant 0 : index
    %c0_181 = arith.constant 0 : index
    %512 = vector.load %arg5[%c3_179, %c0_180, %c0_181] : memref<6x32x96xf32, #tpu.memory_space<vmem>>, vector<1x32x96xf32>
    %513 = vector.shape_cast %512 : vector<1x32x96xf32> to vector<32x96xf32>
    %c30 = arith.constant 30 : index
    %c0_182 = arith.constant 0 : index
    %514 = vector.load %arg10[%c30, %c0_182] : memref<45x128xf32, #tpu.memory_space<vmem>>, vector<1x96xf32>
    %c3_183 = arith.constant 3 : index
    %c0_184 = arith.constant 0 : index
    %c0_185 = arith.constant 0 : index
    %c0_186 = arith.constant 0 : index
    %515 = vector.load %arg6[%c3_183, %c0_184, %c0_185, %c0_186] : memref<6x4x8x32xf32, #tpu.memory_space<vmem>>, vector<1x4x8x32xf32>
    %516 = vector.shape_cast %515 : vector<1x4x8x32xf32> to vector<4x8x32xf32>
    %c31 = arith.constant 31 : index
    %c0_187 = arith.constant 0 : index
    %517 = vector.load %arg10[%c31, %c0_187] : memref<45x128xf32, #tpu.memory_space<vmem>>, vector<1x32xf32>
    %cst_188 = arith.constant dense<0.000000e+00> : vector<8x96xf32>
    %518 = tpu.matmul %511, %513, %cst_188 {dimension_numbers = #tpu.dot_dimension_numbers<[1], [0], [0], [1], [0, 0, 1, 1], [], []>} : vector<8x32xf32>, vector<32x96xf32>, vector<8x96xf32> -> vector<8x96xf32>
    %519 = vector.broadcast %514 : vector<1x96xf32> to vector<8x96xf32>
    %520 = arith.addf %518, %519 : vector<8x96xf32>
    %521 = vector.extract_strided_slice %520 {offsets = [0, 0], sizes = [8, 32], strides = [1, 1]} : vector<8x96xf32> to vector<8x32xf32>
    %522 = vector.extract_strided_slice %520 {offsets = [0, 32], sizes = [8, 32], strides = [1, 1]} : vector<8x96xf32> to vector<8x32xf32>
    %523 = vector.extract_strided_slice %520 {offsets = [0, 64], sizes = [8, 32], strides = [1, 1]} : vector<8x96xf32> to vector<8x32xf32>
    %cst_189 = arith.constant 0.353553385 : f32
    %524 = vector.broadcast %cst_189 : f32 to vector<8x32xf32>
    %525 = arith.mulf %521, %524 : vector<8x32xf32>
    %526 = vector.extract_strided_slice %525 {offsets = [0, 0], sizes = [8, 8], strides = [1, 1]} : vector<8x32xf32> to vector<8x8xf32>
    %527 = vector.extract_strided_slice %525 {offsets = [0, 8], sizes = [8, 8], strides = [1, 1]} : vector<8x32xf32> to vector<8x8xf32>
    %528 = vector.extract_strided_slice %525 {offsets = [0, 16], sizes = [8, 8], strides = [1, 1]} : vector<8x32xf32> to vector<8x8xf32>
    %529 = vector.extract_strided_slice %525 {offsets = [0, 24], sizes = [8, 8], strides = [1, 1]} : vector<8x32xf32> to vector<8x8xf32>
    %530 = vector.shape_cast %526 : vector<8x8xf32> to vector<1x8x8xf32>
    %531 = vector.shape_cast %527 : vector<8x8xf32> to vector<1x8x8xf32>
    %532 = vector.shape_cast %528 : vector<8x8xf32> to vector<1x8x8xf32>
    %533 = vector.shape_cast %529 : vector<8x8xf32> to vector<1x8x8xf32>
    %534 = tpu.concatenate %530, %531, %532, %533 in 0 : vector<1x8x8xf32>, vector<1x8x8xf32>, vector<1x8x8xf32>, vector<1x8x8xf32> -> vector<4x8x8xf32>
    %535 = vector.extract_strided_slice %522 {offsets = [0, 0], sizes = [8, 8], strides = [1, 1]} : vector<8x32xf32> to vector<8x8xf32>
    %536 = vector.extract_strided_slice %522 {offsets = [0, 8], sizes = [8, 8], strides = [1, 1]} : vector<8x32xf32> to vector<8x8xf32>
    %537 = vector.extract_strided_slice %522 {offsets = [0, 16], sizes = [8, 8], strides = [1, 1]} : vector<8x32xf32> to vector<8x8xf32>
    %538 = vector.extract_strided_slice %522 {offsets = [0, 24], sizes = [8, 8], strides = [1, 1]} : vector<8x32xf32> to vector<8x8xf32>
    %539 = vector.shape_cast %535 : vector<8x8xf32> to vector<1x8x8xf32>
    %540 = vector.shape_cast %536 : vector<8x8xf32> to vector<1x8x8xf32>
    %541 = vector.shape_cast %537 : vector<8x8xf32> to vector<1x8x8xf32>
    %542 = vector.shape_cast %538 : vector<8x8xf32> to vector<1x8x8xf32>
    %543 = tpu.concatenate %539, %540, %541, %542 in 0 : vector<1x8x8xf32>, vector<1x8x8xf32>, vector<1x8x8xf32>, vector<1x8x8xf32> -> vector<4x8x8xf32>
    %544 = vector.extract_strided_slice %523 {offsets = [0, 0], sizes = [8, 8], strides = [1, 1]} : vector<8x32xf32> to vector<8x8xf32>
    %545 = vector.extract_strided_slice %523 {offsets = [0, 8], sizes = [8, 8], strides = [1, 1]} : vector<8x32xf32> to vector<8x8xf32>
    %546 = vector.extract_strided_slice %523 {offsets = [0, 16], sizes = [8, 8], strides = [1, 1]} : vector<8x32xf32> to vector<8x8xf32>
    %547 = vector.extract_strided_slice %523 {offsets = [0, 24], sizes = [8, 8], strides = [1, 1]} : vector<8x32xf32> to vector<8x8xf32>
    %548 = vector.shape_cast %544 : vector<8x8xf32> to vector<1x8x8xf32>
    %549 = vector.shape_cast %545 : vector<8x8xf32> to vector<1x8x8xf32>
    %550 = vector.shape_cast %546 : vector<8x8xf32> to vector<1x8x8xf32>
    %551 = vector.shape_cast %547 : vector<8x8xf32> to vector<1x8x8xf32>
    %552 = tpu.concatenate %548, %549, %550, %551 in 0 : vector<1x8x8xf32>, vector<1x8x8xf32>, vector<1x8x8xf32>, vector<1x8x8xf32> -> vector<4x8x8xf32>
    "tpu.trace_start"() <{level = 10 : i32, message = "hqd,hkd->hqk"}> : () -> ()
    %cst_190 = arith.constant dense<0.000000e+00> : vector<4x8x8xf32>
    %553 = tpu.matmul %534, %543, %cst_190 {dimension_numbers = #tpu.dot_dimension_numbers<[2], [2], [1], [1], [0, 0, 0, 1, 1, 1], [0], [0]>} : vector<4x8x8xf32>, vector<4x8x8xf32>, vector<4x8x8xf32> -> vector<4x8x8xf32>
    "tpu.trace_stop"() : () -> ()
    %554 = vector.shape_cast %5 : vector<8x8xf32> to vector<1x8x8xf32>
    %555 = vector.broadcast %554 : vector<1x8x8xf32> to vector<4x8x8xf32>
    %556 = arith.addf %553, %555 : vector<4x8x8xf32>
    %cst_191 = arith.constant dense<0xFF800000> : vector<4x8xf32>
    %557 = vector.multi_reduction <maximumf>, %556, %cst_191 [2] : vector<4x8x8xf32> to vector<4x8xf32>
    %558 = vector.shape_cast %557 : vector<4x8xf32> to vector<4x8x1xf32>
    %559 = vector.broadcast %558 : vector<4x8x1xf32> to vector<4x8x8xf32>
    %560 = arith.subf %556, %559 : vector<4x8x8xf32>
    %561 = math.exp %560 : vector<4x8x8xf32>
    %cst_192 = arith.constant dense<0.000000e+00> : vector<4x8xf32>
    %562 = vector.multi_reduction <add>, %561, %cst_192 [2] : vector<4x8x8xf32> to vector<4x8xf32>
    %563 = vector.shape_cast %562 : vector<4x8xf32> to vector<4x8x1xf32>
    %564 = tpu.reciprocal %563 {approx = true} : vector<4x8x1xf32> -> vector<4x8x1xf32>
    %565 = vector.broadcast %564 : vector<4x8x1xf32> to vector<4x8x8xf32>
    %566 = arith.mulf %561, %565 : vector<4x8x8xf32>
    "tpu.trace_start"() <{level = 10 : i32, message = "hqk,hkd->hqd"}> : () -> ()
    %cst_193 = arith.constant dense<0.000000e+00> : vector<4x8x8xf32>
    %567 = tpu.matmul %566, %552, %cst_193 {dimension_numbers = #tpu.dot_dimension_numbers<[2], [1], [1], [2], [0, 0, 0, 1, 1, 2], [0], [0]>} : vector<4x8x8xf32>, vector<4x8x8xf32>, vector<4x8x8xf32> -> vector<4x8x8xf32>
    "tpu.trace_stop"() : () -> ()
    "tpu.trace_start"() <{level = 10 : i32, message = "hqd,hdo->hqo"}> : () -> ()
    %cst_194 = arith.constant dense<0.000000e+00> : vector<4x8x32xf32>
    %568 = tpu.matmul %567, %516, %cst_194 {dimension_numbers = #tpu.dot_dimension_numbers<[2], [1], [1], [2], [0, 0, 0, 1, 1, 2], [0], [0]>} : vector<4x8x8xf32>, vector<4x8x32xf32>, vector<4x8x32xf32> -> vector<4x8x32xf32>
    "tpu.trace_stop"() : () -> ()
    %cst_195 = arith.constant dense<0.000000e+00> : vector<8x32xf32>
    %569 = vector.multi_reduction <add>, %568, %cst_195 [0] : vector<4x8x32xf32> to vector<8x32xf32>
    %570 = vector.broadcast %517 : vector<1x32xf32> to vector<8x32xf32>
    %571 = arith.addf %569, %570 : vector<8x32xf32>
    %572 = arith.addf %488, %571 : vector<8x32xf32>
    %c32 = arith.constant 32 : index
    %c0_196 = arith.constant 0 : index
    %573 = vector.load %arg10[%c32, %c0_196] : memref<45x128xf32, #tpu.memory_space<vmem>>, vector<1x32xf32>
    %c33 = arith.constant 33 : index
    %c0_197 = arith.constant 0 : index
    %574 = vector.load %arg10[%c33, %c0_197] : memref<45x128xf32, #tpu.memory_space<vmem>>, vector<1x32xf32>
    %cst_198 = arith.constant dense<0.000000e+00> : vector<8xf32>
    %575 = vector.multi_reduction <add>, %572, %cst_198 [1] : vector<8x32xf32> to vector<8xf32>
    %576 = vector.shape_cast %575 : vector<8xf32> to vector<8x1xf32>
    %cst_199 = arith.constant 3.200000e+01 : f32
    %577 = vector.broadcast %cst_199 : f32 to vector<8x1xf32>
    %578 = arith.divf %576, %577 : vector<8x1xf32>
    %579 = vector.broadcast %578 : vector<8x1xf32> to vector<8x32xf32>
    %580 = arith.subf %572, %579 : vector<8x32xf32>
    %581 = arith.mulf %580, %580 : vector<8x32xf32>
    %cst_200 = arith.constant dense<0.000000e+00> : vector<8xf32>
    %582 = vector.multi_reduction <add>, %581, %cst_200 [1] : vector<8x32xf32> to vector<8xf32>
    %583 = vector.shape_cast %582 : vector<8xf32> to vector<8x1xf32>
    %cst_201 = arith.constant 0.0322580636 : f32
    %584 = vector.broadcast %cst_201 : f32 to vector<8x1xf32>
    %585 = arith.mulf %583, %584 : vector<8x1xf32>
    %586 = math.sqrt %585 : vector<8x1xf32>
    %cst_202 = arith.constant 9.99999997E-7 : f32
    %587 = vector.broadcast %cst_202 : f32 to vector<8x1xf32>
    %588 = arith.addf %586, %587 : vector<8x1xf32>
    %589 = tpu.reciprocal %588 {approx = true} : vector<8x1xf32> -> vector<8x1xf32>
    %590 = vector.broadcast %589 : vector<8x1xf32> to vector<8x32xf32>
    %591 = arith.mulf %580, %590 : vector<8x32xf32>
    %592 = vector.broadcast %573 : vector<1x32xf32> to vector<8x32xf32>
    %593 = arith.mulf %592, %591 : vector<8x32xf32>
    %594 = vector.broadcast %574 : vector<1x32xf32> to vector<8x32xf32>
    %595 = arith.addf %593, %594 : vector<8x32xf32>
    %c5_203 = arith.constant 5 : index
    %c0_204 = arith.constant 0 : index
    %c0_205 = arith.constant 0 : index
    %596 = vector.load %arg5[%c5_203, %c0_204, %c0_205] : memref<6x32x96xf32, #tpu.memory_space<vmem>>, vector<1x32x96xf32>
    %597 = vector.shape_cast %596 : vector<1x32x96xf32> to vector<32x96xf32>
    %c34 = arith.constant 34 : index
    %c0_206 = arith.constant 0 : index
    %598 = vector.load %arg10[%c34, %c0_206] : memref<45x128xf32, #tpu.memory_space<vmem>>, vector<1x96xf32>
    %c5_207 = arith.constant 5 : index
    %c0_208 = arith.constant 0 : index
    %c0_209 = arith.constant 0 : index
    %c0_210 = arith.constant 0 : index
    %599 = vector.load %arg6[%c5_207, %c0_208, %c0_209, %c0_210] : memref<6x4x8x32xf32, #tpu.memory_space<vmem>>, vector<1x4x8x32xf32>
    %600 = vector.shape_cast %599 : vector<1x4x8x32xf32> to vector<4x8x32xf32>
    %c35 = arith.constant 35 : index
    %c0_211 = arith.constant 0 : index
    %601 = vector.load %arg10[%c35, %c0_211] : memref<45x128xf32, #tpu.memory_space<vmem>>, vector<1x32xf32>
    %602 = vector.extract_strided_slice %597 {offsets = [0, 0], sizes = [32, 32], strides = [1, 1]} : vector<32x96xf32> to vector<32x32xf32>
    %cst_212 = arith.constant dense<0.000000e+00> : vector<8x32xf32>
    %603 = tpu.matmul %595, %602, %cst_212 {dimension_numbers = #tpu.dot_dimension_numbers<[1], [0], [0], [1], [0, 0, 1, 1], [], []>} : vector<8x32xf32>, vector<32x32xf32>, vector<8x32xf32> -> vector<8x32xf32>
    %604 = vector.extract_strided_slice %598 {offsets = [0, 0], sizes = [1, 32], strides = [1, 1]} : vector<1x96xf32> to vector<1x32xf32>
    %605 = vector.broadcast %604 : vector<1x32xf32> to vector<8x32xf32>
    %606 = arith.addf %603, %605 : vector<8x32xf32>
    %607 = vector.extract_strided_slice %597 {offsets = [0, 32], sizes = [32, 64], strides = [1, 1]} : vector<32x96xf32> to vector<32x64xf32>
    %cst_213 = arith.constant dense<0.000000e+00> : vector<8x64xf32>
    %608 = tpu.matmul %274, %607, %cst_213 {dimension_numbers = #tpu.dot_dimension_numbers<[1], [0], [0], [1], [0, 0, 1, 1], [], []>} : vector<8x32xf32>, vector<32x64xf32>, vector<8x64xf32> -> vector<8x64xf32>
    %609 = vector.extract_strided_slice %598 {offsets = [0, 32], sizes = [1, 64], strides = [1, 1]} : vector<1x96xf32> to vector<1x64xf32>
    %610 = vector.broadcast %609 : vector<1x64xf32> to vector<8x64xf32>
    %611 = arith.addf %608, %610 : vector<8x64xf32>
    %612 = vector.extract_strided_slice %611 {offsets = [0, 0], sizes = [8, 32], strides = [1, 1]} : vector<8x64xf32> to vector<8x32xf32>
    %613 = vector.extract_strided_slice %611 {offsets = [0, 32], sizes = [8, 32], strides = [1, 1]} : vector<8x64xf32> to vector<8x32xf32>
    %cst_214 = arith.constant 0.353553385 : f32
    %614 = vector.broadcast %cst_214 : f32 to vector<8x32xf32>
    %615 = arith.mulf %606, %614 : vector<8x32xf32>
    %616 = vector.extract_strided_slice %615 {offsets = [0, 0], sizes = [8, 8], strides = [1, 1]} : vector<8x32xf32> to vector<8x8xf32>
    %617 = vector.extract_strided_slice %615 {offsets = [0, 8], sizes = [8, 8], strides = [1, 1]} : vector<8x32xf32> to vector<8x8xf32>
    %618 = vector.extract_strided_slice %615 {offsets = [0, 16], sizes = [8, 8], strides = [1, 1]} : vector<8x32xf32> to vector<8x8xf32>
    %619 = vector.extract_strided_slice %615 {offsets = [0, 24], sizes = [8, 8], strides = [1, 1]} : vector<8x32xf32> to vector<8x8xf32>
    %620 = vector.shape_cast %616 : vector<8x8xf32> to vector<1x8x8xf32>
    %621 = vector.shape_cast %617 : vector<8x8xf32> to vector<1x8x8xf32>
    %622 = vector.shape_cast %618 : vector<8x8xf32> to vector<1x8x8xf32>
    %623 = vector.shape_cast %619 : vector<8x8xf32> to vector<1x8x8xf32>
    %624 = tpu.concatenate %620, %621, %622, %623 in 0 : vector<1x8x8xf32>, vector<1x8x8xf32>, vector<1x8x8xf32>, vector<1x8x8xf32> -> vector<4x8x8xf32>
    %625 = vector.extract_strided_slice %612 {offsets = [0, 0], sizes = [8, 8], strides = [1, 1]} : vector<8x32xf32> to vector<8x8xf32>
    %626 = vector.extract_strided_slice %612 {offsets = [0, 8], sizes = [8, 8], strides = [1, 1]} : vector<8x32xf32> to vector<8x8xf32>
    %627 = vector.extract_strided_slice %612 {offsets = [0, 16], sizes = [8, 8], strides = [1, 1]} : vector<8x32xf32> to vector<8x8xf32>
    %628 = vector.extract_strided_slice %612 {offsets = [0, 24], sizes = [8, 8], strides = [1, 1]} : vector<8x32xf32> to vector<8x8xf32>
    %629 = vector.shape_cast %625 : vector<8x8xf32> to vector<1x8x8xf32>
    %630 = vector.shape_cast %626 : vector<8x8xf32> to vector<1x8x8xf32>
    %631 = vector.shape_cast %627 : vector<8x8xf32> to vector<1x8x8xf32>
    %632 = vector.shape_cast %628 : vector<8x8xf32> to vector<1x8x8xf32>
    %633 = tpu.concatenate %629, %630, %631, %632 in 0 : vector<1x8x8xf32>, vector<1x8x8xf32>, vector<1x8x8xf32>, vector<1x8x8xf32> -> vector<4x8x8xf32>
    %634 = vector.extract_strided_slice %613 {offsets = [0, 0], sizes = [8, 8], strides = [1, 1]} : vector<8x32xf32> to vector<8x8xf32>
    %635 = vector.extract_strided_slice %613 {offsets = [0, 8], sizes = [8, 8], strides = [1, 1]} : vector<8x32xf32> to vector<8x8xf32>
    %636 = vector.extract_strided_slice %613 {offsets = [0, 16], sizes = [8, 8], strides = [1, 1]} : vector<8x32xf32> to vector<8x8xf32>
    %637 = vector.extract_strided_slice %613 {offsets = [0, 24], sizes = [8, 8], strides = [1, 1]} : vector<8x32xf32> to vector<8x8xf32>
    %638 = vector.shape_cast %634 : vector<8x8xf32> to vector<1x8x8xf32>
    %639 = vector.shape_cast %635 : vector<8x8xf32> to vector<1x8x8xf32>
    %640 = vector.shape_cast %636 : vector<8x8xf32> to vector<1x8x8xf32>
    %641 = vector.shape_cast %637 : vector<8x8xf32> to vector<1x8x8xf32>
    %642 = tpu.concatenate %638, %639, %640, %641 in 0 : vector<1x8x8xf32>, vector<1x8x8xf32>, vector<1x8x8xf32>, vector<1x8x8xf32> -> vector<4x8x8xf32>
    "tpu.trace_start"() <{level = 10 : i32, message = "hqd,hkd->hqk"}> : () -> ()
    %cst_215 = arith.constant dense<0.000000e+00> : vector<4x8x8xf32>
    %643 = tpu.matmul %624, %633, %cst_215 {dimension_numbers = #tpu.dot_dimension_numbers<[2], [2], [1], [1], [0, 0, 0, 1, 1, 1], [0], [0]>} : vector<4x8x8xf32>, vector<4x8x8xf32>, vector<4x8x8xf32> -> vector<4x8x8xf32>
    "tpu.trace_stop"() : () -> ()
    %644 = vector.shape_cast %3 : vector<1x8xf32> to vector<1x1x8xf32>
    %645 = vector.broadcast %644 : vector<1x1x8xf32> to vector<4x8x8xf32>
    %646 = arith.addf %643, %645 : vector<4x8x8xf32>
    %cst_216 = arith.constant dense<0xFF800000> : vector<4x8xf32>
    %647 = vector.multi_reduction <maximumf>, %646, %cst_216 [2] : vector<4x8x8xf32> to vector<4x8xf32>
    %648 = vector.shape_cast %647 : vector<4x8xf32> to vector<4x8x1xf32>
    %649 = vector.broadcast %648 : vector<4x8x1xf32> to vector<4x8x8xf32>
    %650 = arith.subf %646, %649 : vector<4x8x8xf32>
    %651 = math.exp %650 : vector<4x8x8xf32>
    %cst_217 = arith.constant dense<0.000000e+00> : vector<4x8xf32>
    %652 = vector.multi_reduction <add>, %651, %cst_217 [2] : vector<4x8x8xf32> to vector<4x8xf32>
    %653 = vector.shape_cast %652 : vector<4x8xf32> to vector<4x8x1xf32>
    %654 = tpu.reciprocal %653 {approx = true} : vector<4x8x1xf32> -> vector<4x8x1xf32>
    %655 = vector.broadcast %654 : vector<4x8x1xf32> to vector<4x8x8xf32>
    %656 = arith.mulf %651, %655 : vector<4x8x8xf32>
    "tpu.trace_start"() <{level = 10 : i32, message = "hqk,hkd->hqd"}> : () -> ()
    %cst_218 = arith.constant dense<0.000000e+00> : vector<4x8x8xf32>
    %657 = tpu.matmul %656, %642, %cst_218 {dimension_numbers = #tpu.dot_dimension_numbers<[2], [1], [1], [2], [0, 0, 0, 1, 1, 2], [0], [0]>} : vector<4x8x8xf32>, vector<4x8x8xf32>, vector<4x8x8xf32> -> vector<4x8x8xf32>
    "tpu.trace_stop"() : () -> ()
    "tpu.trace_start"() <{level = 10 : i32, message = "hqd,hdo->hqo"}> : () -> ()
    %cst_219 = arith.constant dense<0.000000e+00> : vector<4x8x32xf32>
    %658 = tpu.matmul %657, %600, %cst_219 {dimension_numbers = #tpu.dot_dimension_numbers<[2], [1], [1], [2], [0, 0, 0, 1, 1, 2], [0], [0]>} : vector<4x8x8xf32>, vector<4x8x32xf32>, vector<4x8x32xf32> -> vector<4x8x32xf32>
    "tpu.trace_stop"() : () -> ()
    %cst_220 = arith.constant dense<0.000000e+00> : vector<8x32xf32>
    %659 = vector.multi_reduction <add>, %658, %cst_220 [0] : vector<4x8x32xf32> to vector<8x32xf32>
    %660 = vector.broadcast %601 : vector<1x32xf32> to vector<8x32xf32>
    %661 = arith.addf %659, %660 : vector<8x32xf32>
    %662 = arith.addf %572, %661 : vector<8x32xf32>
    %c36 = arith.constant 36 : index
    %c0_221 = arith.constant 0 : index
    %663 = vector.load %arg10[%c36, %c0_221] : memref<45x128xf32, #tpu.memory_space<vmem>>, vector<1x32xf32>
    %c37 = arith.constant 37 : index
    %c0_222 = arith.constant 0 : index
    %664 = vector.load %arg10[%c37, %c0_222] : memref<45x128xf32, #tpu.memory_space<vmem>>, vector<1x32xf32>
    %cst_223 = arith.constant dense<0.000000e+00> : vector<8xf32>
    %665 = vector.multi_reduction <add>, %662, %cst_223 [1] : vector<8x32xf32> to vector<8xf32>
    %666 = vector.shape_cast %665 : vector<8xf32> to vector<8x1xf32>
    %cst_224 = arith.constant 3.200000e+01 : f32
    %667 = vector.broadcast %cst_224 : f32 to vector<8x1xf32>
    %668 = arith.divf %666, %667 : vector<8x1xf32>
    %669 = vector.broadcast %668 : vector<8x1xf32> to vector<8x32xf32>
    %670 = arith.subf %662, %669 : vector<8x32xf32>
    %671 = arith.mulf %670, %670 : vector<8x32xf32>
    %cst_225 = arith.constant dense<0.000000e+00> : vector<8xf32>
    %672 = vector.multi_reduction <add>, %671, %cst_225 [1] : vector<8x32xf32> to vector<8xf32>
    %673 = vector.shape_cast %672 : vector<8xf32> to vector<8x1xf32>
    %cst_226 = arith.constant 0.0322580636 : f32
    %674 = vector.broadcast %cst_226 : f32 to vector<8x1xf32>
    %675 = arith.mulf %673, %674 : vector<8x1xf32>
    %676 = math.sqrt %675 : vector<8x1xf32>
    %cst_227 = arith.constant 9.99999997E-7 : f32
    %677 = vector.broadcast %cst_227 : f32 to vector<8x1xf32>
    %678 = arith.addf %676, %677 : vector<8x1xf32>
    %679 = tpu.reciprocal %678 {approx = true} : vector<8x1xf32> -> vector<8x1xf32>
    %680 = vector.broadcast %679 : vector<8x1xf32> to vector<8x32xf32>
    %681 = arith.mulf %670, %680 : vector<8x32xf32>
    %682 = vector.broadcast %663 : vector<1x32xf32> to vector<8x32xf32>
    %683 = arith.mulf %682, %681 : vector<8x32xf32>
    %684 = vector.broadcast %664 : vector<1x32xf32> to vector<8x32xf32>
    %685 = arith.addf %683, %684 : vector<8x32xf32>
    %c3_228 = arith.constant 3 : index
    %c0_229 = arith.constant 0 : index
    %c0_230 = arith.constant 0 : index
    %686 = vector.load %arg7[%c3_228, %c0_229, %c0_230] : memref<4x32x64xf32, #tpu.memory_space<vmem>>, vector<1x32x64xf32>
    %687 = vector.shape_cast %686 : vector<1x32x64xf32> to vector<32x64xf32>
    %c38 = arith.constant 38 : index
    %c0_231 = arith.constant 0 : index
    %688 = vector.load %arg10[%c38, %c0_231] : memref<45x128xf32, #tpu.memory_space<vmem>>, vector<1x64xf32>
    %c3_232 = arith.constant 3 : index
    %c0_233 = arith.constant 0 : index
    %c0_234 = arith.constant 0 : index
    %689 = vector.load %arg8[%c3_232, %c0_233, %c0_234] : memref<4x64x32xf32, #tpu.memory_space<vmem>>, vector<1x64x32xf32>
    %690 = vector.shape_cast %689 : vector<1x64x32xf32> to vector<64x32xf32>
    %c39 = arith.constant 39 : index
    %c0_235 = arith.constant 0 : index
    %691 = vector.load %arg10[%c39, %c0_235] : memref<45x128xf32, #tpu.memory_space<vmem>>, vector<1x32xf32>
    %cst_236 = arith.constant dense<0.000000e+00> : vector<8x64xf32>
    %692 = tpu.matmul %685, %687, %cst_236 {dimension_numbers = #tpu.dot_dimension_numbers<[1], [0], [0], [1], [0, 0, 1, 1], [], []>} : vector<8x32xf32>, vector<32x64xf32>, vector<8x64xf32> -> vector<8x64xf32>
    %693 = vector.broadcast %688 : vector<1x64xf32> to vector<8x64xf32>
    %694 = arith.addf %692, %693 : vector<8x64xf32>
    %cst_237 = arith.constant 0.000000e+00 : f32
    %695 = vector.broadcast %cst_237 : f32 to vector<8x64xf32>
    %696 = arith.maximumf %694, %695 : vector<8x64xf32>
    %cst_238 = arith.constant dense<0.000000e+00> : vector<8x32xf32>
    %697 = tpu.matmul %696, %690, %cst_238 {dimension_numbers = #tpu.dot_dimension_numbers<[1], [0], [0], [1], [0, 0, 1, 1], [], []>} : vector<8x64xf32>, vector<64x32xf32>, vector<8x32xf32> -> vector<8x32xf32>
    %698 = vector.broadcast %691 : vector<1x32xf32> to vector<8x32xf32>
    %699 = arith.addf %697, %698 : vector<8x32xf32>
    %700 = arith.addf %662, %699 : vector<8x32xf32>
    %c42 = arith.constant 42 : index
    %c0_239 = arith.constant 0 : index
    %701 = vector.load %arg10[%c42, %c0_239] : memref<45x128xf32, #tpu.memory_space<vmem>>, vector<1x32xf32>
    %c43 = arith.constant 43 : index
    %c0_240 = arith.constant 0 : index
    %702 = vector.load %arg10[%c43, %c0_240] : memref<45x128xf32, #tpu.memory_space<vmem>>, vector<1x32xf32>
    %cst_241 = arith.constant dense<0.000000e+00> : vector<8xf32>
    %703 = vector.multi_reduction <add>, %700, %cst_241 [1] : vector<8x32xf32> to vector<8xf32>
    %704 = vector.shape_cast %703 : vector<8xf32> to vector<8x1xf32>
    %cst_242 = arith.constant 3.200000e+01 : f32
    %705 = vector.broadcast %cst_242 : f32 to vector<8x1xf32>
    %706 = arith.divf %704, %705 : vector<8x1xf32>
    %707 = vector.broadcast %706 : vector<8x1xf32> to vector<8x32xf32>
    %708 = arith.subf %700, %707 : vector<8x32xf32>
    %709 = arith.mulf %708, %708 : vector<8x32xf32>
    %cst_243 = arith.constant dense<0.000000e+00> : vector<8xf32>
    %710 = vector.multi_reduction <add>, %709, %cst_243 [1] : vector<8x32xf32> to vector<8xf32>
    %711 = vector.shape_cast %710 : vector<8xf32> to vector<8x1xf32>
    %cst_244 = arith.constant 0.0322580636 : f32
    %712 = vector.broadcast %cst_244 : f32 to vector<8x1xf32>
    %713 = arith.mulf %711, %712 : vector<8x1xf32>
    %714 = math.sqrt %713 : vector<8x1xf32>
    %cst_245 = arith.constant 9.99999997E-7 : f32
    %715 = vector.broadcast %cst_245 : f32 to vector<8x1xf32>
    %716 = arith.addf %714, %715 : vector<8x1xf32>
    %717 = tpu.reciprocal %716 {approx = true} : vector<8x1xf32> -> vector<8x1xf32>
    %718 = vector.broadcast %717 : vector<8x1xf32> to vector<8x32xf32>
    %719 = arith.mulf %708, %718 : vector<8x32xf32>
    %720 = vector.broadcast %701 : vector<1x32xf32> to vector<8x32xf32>
    %721 = arith.mulf %720, %719 : vector<8x32xf32>
    %722 = vector.broadcast %702 : vector<1x32xf32> to vector<8x32xf32>
    %723 = arith.addf %721, %722 : vector<8x32xf32>
    %cst_246 = arith.constant dense<0.000000e+00> : vector<8x128xf32>
    %724 = tpu.matmul %723, %0, %cst_246 {dimension_numbers = #tpu.dot_dimension_numbers<[1], [0], [0], [1], [0, 0, 1, 1], [], []>} : vector<8x32xf32>, vector<32x128xf32>, vector<8x128xf32> -> vector<8x128xf32>
    %725 = vector.broadcast %1 : vector<1x128xf32> to vector<8x128xf32>
    %726 = arith.addf %724, %725 : vector<8x128xf32>
    %cst_247 = arith.constant dense<0xFF800000> : vector<8xf32>
    %727 = vector.multi_reduction <maximumf>, %726, %cst_247 [1] : vector<8x128xf32> to vector<8xf32>
    %728 = vector.shape_cast %727 : vector<8xf32> to vector<8x1xf32>
    %729 = vector.broadcast %728 : vector<8x1xf32> to vector<8x128xf32>
    %730 = arith.subf %726, %729 : vector<8x128xf32>
    %731 = math.exp %730 : vector<8x128xf32>
    %cst_248 = arith.constant dense<0.000000e+00> : vector<8xf32>
    %732 = vector.multi_reduction <add>, %731, %cst_248 [1] : vector<8x128xf32> to vector<8xf32>
    %733 = vector.shape_cast %732 : vector<8xf32> to vector<8x1xf32>
    %734 = math.log %733 : vector<8x1xf32>
    %735 = vector.broadcast %734 : vector<8x1xf32> to vector<8x128xf32>
    %736 = arith.subf %730, %735 : vector<8x128xf32>
    %c0_249 = arith.constant 0 : index
    %c0_250 = arith.constant 0 : index
    %c0_251 = arith.constant 0 : index
    %737 = vector.load %arg11[%c0_249, %c0_250, %c0_251] : memref<2x8x128xf32, #tpu.memory_space<vmem>>, vector<1x8x128xf32>
    %738 = vector.shape_cast %737 : vector<1x8x128xf32> to vector<8x128xf32>
    %739 = vector.shape_cast %736 : vector<8x128xf32> to vector<1x8x128xf32>
    tpu.vector_store %arg11[%c0_249, %c0_250, %c0_251], %739 {strides = array<i32>} : memref<2x8x128xf32, #tpu.memory_space<vmem>>, vector<1x8x128xf32>,
    %c1_252 = arith.constant 1 : index
    %c0_253 = arith.constant 0 : index
    %c0_254 = arith.constant 0 : index
    %740 = vector.load %arg3[%c1_252, %c0_253, %c0_254] : memref<2x1x8xf32, #tpu.memory_space<vmem>>, vector<1x1x8xf32>
    %741 = vector.shape_cast %740 : vector<1x1x8xf32> to vector<1x8xf32>
    %c1_255 = arith.constant 1 : index
    %c0_256 = arith.constant 0 : index
    %c0_257 = arith.constant 0 : index
    %742 = vector.load %arg4[%c1_255, %c0_256, %c0_257] : memref<2x8x8xf32, #tpu.memory_space<vmem>>, vector<1x8x8xf32>
    %743 = vector.shape_cast %742 : vector<1x8x8xf32> to vector<8x8xf32>
    %c1_258 = arith.constant 1 : index
    %c0_259 = arith.constant 0 : index
    %c0_260 = arith.constant 0 : index
    %744 = vector.load %arg1[%c1_258, %c0_259, %c0_260] : memref<2x8x32xf32, #tpu.memory_space<vmem>>, vector<1x8x32xf32>
    %745 = vector.shape_cast %744 : vector<1x8x32xf32> to vector<8x32xf32>
    %c0_261 = arith.constant 0 : index
    %c0_262 = arith.constant 0 : index
    %746 = vector.load %arg10[%c0_261, %c0_262] : memref<45x128xf32, #tpu.memory_space<vmem>>, vector<1x32xf32>
    %c1_263 = arith.constant 1 : index
    %c0_264 = arith.constant 0 : index
    %747 = vector.load %arg10[%c1_263, %c0_264] : memref<45x128xf32, #tpu.memory_space<vmem>>, vector<1x32xf32>
    %cst_265 = arith.constant dense<0.000000e+00> : vector<8xf32>
    %748 = vector.multi_reduction <add>, %745, %cst_265 [1] : vector<8x32xf32> to vector<8xf32>
    %749 = vector.shape_cast %748 : vector<8xf32> to vector<8x1xf32>
    %cst_266 = arith.constant 3.200000e+01 : f32
    %750 = vector.broadcast %cst_266 : f32 to vector<8x1xf32>
    %751 = arith.divf %749, %750 : vector<8x1xf32>
    %752 = vector.broadcast %751 : vector<8x1xf32> to vector<8x32xf32>
    %753 = arith.subf %745, %752 : vector<8x32xf32>
    %754 = arith.mulf %753, %753 : vector<8x32xf32>
    %cst_267 = arith.constant dense<0.000000e+00> : vector<8xf32>
    %755 = vector.multi_reduction <add>, %754, %cst_267 [1] : vector<8x32xf32> to vector<8xf32>
    %756 = vector.shape_cast %755 : vector<8xf32> to vector<8x1xf32>
    %cst_268 = arith.constant 0.0322580636 : f32
    %757 = vector.broadcast %cst_268 : f32 to vector<8x1xf32>
    %758 = arith.mulf %756, %757 : vector<8x1xf32>
    %759 = math.sqrt %758 : vector<8x1xf32>
    %cst_269 = arith.constant 9.99999997E-7 : f32
    %760 = vector.broadcast %cst_269 : f32 to vector<8x1xf32>
    %761 = arith.addf %759, %760 : vector<8x1xf32>
    %762 = tpu.reciprocal %761 {approx = true} : vector<8x1xf32> -> vector<8x1xf32>
    %763 = vector.broadcast %762 : vector<8x1xf32> to vector<8x32xf32>
    %764 = arith.mulf %753, %763 : vector<8x32xf32>
    %765 = vector.broadcast %746 : vector<1x32xf32> to vector<8x32xf32>
    %766 = arith.mulf %765, %764 : vector<8x32xf32>
    %767 = vector.broadcast %747 : vector<1x32xf32> to vector<8x32xf32>
    %768 = arith.addf %766, %767 : vector<8x32xf32>
    %c0_270 = arith.constant 0 : index
    %c0_271 = arith.constant 0 : index
    %c0_272 = arith.constant 0 : index
    %769 = vector.load %arg5[%c0_270, %c0_271, %c0_272] : memref<6x32x96xf32, #tpu.memory_space<vmem>>, vector<1x32x96xf32>
    %770 = vector.shape_cast %769 : vector<1x32x96xf32> to vector<32x96xf32>
    %c2_273 = arith.constant 2 : index
    %c0_274 = arith.constant 0 : index
    %771 = vector.load %arg10[%c2_273, %c0_274] : memref<45x128xf32, #tpu.memory_space<vmem>>, vector<1x96xf32>
    %c0_275 = arith.constant 0 : index
    %c0_276 = arith.constant 0 : index
    %c0_277 = arith.constant 0 : index
    %c0_278 = arith.constant 0 : index
    %772 = vector.load %arg6[%c0_275, %c0_276, %c0_277, %c0_278] : memref<6x4x8x32xf32, #tpu.memory_space<vmem>>, vector<1x4x8x32xf32>
    %773 = vector.shape_cast %772 : vector<1x4x8x32xf32> to vector<4x8x32xf32>
    %c3_279 = arith.constant 3 : index
    %c0_280 = arith.constant 0 : index
    %774 = vector.load %arg10[%c3_279, %c0_280] : memref<45x128xf32, #tpu.memory_space<vmem>>, vector<1x32xf32>
    %cst_281 = arith.constant dense<0.000000e+00> : vector<8x96xf32>
    %775 = tpu.matmul %768, %770, %cst_281 {dimension_numbers = #tpu.dot_dimension_numbers<[1], [0], [0], [1], [0, 0, 1, 1], [], []>} : vector<8x32xf32>, vector<32x96xf32>, vector<8x96xf32> -> vector<8x96xf32>
    %776 = vector.broadcast %771 : vector<1x96xf32> to vector<8x96xf32>
    %777 = arith.addf %775, %776 : vector<8x96xf32>
    %778 = vector.extract_strided_slice %777 {offsets = [0, 0], sizes = [8, 32], strides = [1, 1]} : vector<8x96xf32> to vector<8x32xf32>
    %779 = vector.extract_strided_slice %777 {offsets = [0, 32], sizes = [8, 32], strides = [1, 1]} : vector<8x96xf32> to vector<8x32xf32>
    %780 = vector.extract_strided_slice %777 {offsets = [0, 64], sizes = [8, 32], strides = [1, 1]} : vector<8x96xf32> to vector<8x32xf32>
    %cst_282 = arith.constant 0.353553385 : f32
    %781 = vector.broadcast %cst_282 : f32 to vector<8x32xf32>
    %782 = arith.mulf %778, %781 : vector<8x32xf32>
    %783 = vector.extract_strided_slice %782 {offsets = [0, 0], sizes = [8, 8], strides = [1, 1]} : vector<8x32xf32> to vector<8x8xf32>
    %784 = vector.extract_strided_slice %782 {offsets = [0, 8], sizes = [8, 8], strides = [1, 1]} : vector<8x32xf32> to vector<8x8xf32>
    %785 = vector.extract_strided_slice %782 {offsets = [0, 16], sizes = [8, 8], strides = [1, 1]} : vector<8x32xf32> to vector<8x8xf32>
    %786 = vector.extract_strided_slice %782 {offsets = [0, 24], sizes = [8, 8], strides = [1, 1]} : vector<8x32xf32> to vector<8x8xf32>
    %787 = vector.shape_cast %783 : vector<8x8xf32> to vector<1x8x8xf32>
    %788 = vector.shape_cast %784 : vector<8x8xf32> to vector<1x8x8xf32>
    %789 = vector.shape_cast %785 : vector<8x8xf32> to vector<1x8x8xf32>
    %790 = vector.shape_cast %786 : vector<8x8xf32> to vector<1x8x8xf32>
    %791 = tpu.concatenate %787, %788, %789, %790 in 0 : vector<1x8x8xf32>, vector<1x8x8xf32>, vector<1x8x8xf32>, vector<1x8x8xf32> -> vector<4x8x8xf32>
    %792 = vector.extract_strided_slice %779 {offsets = [0, 0], sizes = [8, 8], strides = [1, 1]} : vector<8x32xf32> to vector<8x8xf32>
    %793 = vector.extract_strided_slice %779 {offsets = [0, 8], sizes = [8, 8], strides = [1, 1]} : vector<8x32xf32> to vector<8x8xf32>
    %794 = vector.extract_strided_slice %779 {offsets = [0, 16], sizes = [8, 8], strides = [1, 1]} : vector<8x32xf32> to vector<8x8xf32>
    %795 = vector.extract_strided_slice %779 {offsets = [0, 24], sizes = [8, 8], strides = [1, 1]} : vector<8x32xf32> to vector<8x8xf32>
    %796 = vector.shape_cast %792 : vector<8x8xf32> to vector<1x8x8xf32>
    %797 = vector.shape_cast %793 : vector<8x8xf32> to vector<1x8x8xf32>
    %798 = vector.shape_cast %794 : vector<8x8xf32> to vector<1x8x8xf32>
    %799 = vector.shape_cast %795 : vector<8x8xf32> to vector<1x8x8xf32>
    %800 = tpu.concatenate %796, %797, %798, %799 in 0 : vector<1x8x8xf32>, vector<1x8x8xf32>, vector<1x8x8xf32>, vector<1x8x8xf32> -> vector<4x8x8xf32>
    %801 = vector.extract_strided_slice %780 {offsets = [0, 0], sizes = [8, 8], strides = [1, 1]} : vector<8x32xf32> to vector<8x8xf32>
    %802 = vector.extract_strided_slice %780 {offsets = [0, 8], sizes = [8, 8], strides = [1, 1]} : vector<8x32xf32> to vector<8x8xf32>
    %803 = vector.extract_strided_slice %780 {offsets = [0, 16], sizes = [8, 8], strides = [1, 1]} : vector<8x32xf32> to vector<8x8xf32>
    %804 = vector.extract_strided_slice %780 {offsets = [0, 24], sizes = [8, 8], strides = [1, 1]} : vector<8x32xf32> to vector<8x8xf32>
    %805 = vector.shape_cast %801 : vector<8x8xf32> to vector<1x8x8xf32>
    %806 = vector.shape_cast %802 : vector<8x8xf32> to vector<1x8x8xf32>
    %807 = vector.shape_cast %803 : vector<8x8xf32> to vector<1x8x8xf32>
    %808 = vector.shape_cast %804 : vector<8x8xf32> to vector<1x8x8xf32>
    %809 = tpu.concatenate %805, %806, %807, %808 in 0 : vector<1x8x8xf32>, vector<1x8x8xf32>, vector<1x8x8xf32>, vector<1x8x8xf32> -> vector<4x8x8xf32>
    "tpu.trace_start"() <{level = 10 : i32, message = "hqd,hkd->hqk"}> : () -> ()
    %cst_283 = arith.constant dense<0.000000e+00> : vector<4x8x8xf32>
    %810 = tpu.matmul %791, %800, %cst_283 {dimension_numbers = #tpu.dot_dimension_numbers<[2], [2], [1], [1], [0, 0, 0, 1, 1, 1], [0], [0]>} : vector<4x8x8xf32>, vector<4x8x8xf32>, vector<4x8x8xf32> -> vector<4x8x8xf32>
    "tpu.trace_stop"() : () -> ()
    %811 = vector.shape_cast %741 : vector<1x8xf32> to vector<1x1x8xf32>
    %812 = vector.broadcast %811 : vector<1x1x8xf32> to vector<4x8x8xf32>
    %813 = arith.addf %810, %812 : vector<4x8x8xf32>
    %cst_284 = arith.constant dense<0xFF800000> : vector<4x8xf32>
    %814 = vector.multi_reduction <maximumf>, %813, %cst_284 [2] : vector<4x8x8xf32> to vector<4x8xf32>
    %815 = vector.shape_cast %814 : vector<4x8xf32> to vector<4x8x1xf32>
    %816 = vector.broadcast %815 : vector<4x8x1xf32> to vector<4x8x8xf32>
    %817 = arith.subf %813, %816 : vector<4x8x8xf32>
    %818 = math.exp %817 : vector<4x8x8xf32>
    %cst_285 = arith.constant dense<0.000000e+00> : vector<4x8xf32>
    %819 = vector.multi_reduction <add>, %818, %cst_285 [2] : vector<4x8x8xf32> to vector<4x8xf32>
    %820 = vector.shape_cast %819 : vector<4x8xf32> to vector<4x8x1xf32>
    %821 = tpu.reciprocal %820 {approx = true} : vector<4x8x1xf32> -> vector<4x8x1xf32>
    %822 = vector.broadcast %821 : vector<4x8x1xf32> to vector<4x8x8xf32>
    %823 = arith.mulf %818, %822 : vector<4x8x8xf32>
    "tpu.trace_start"() <{level = 10 : i32, message = "hqk,hkd->hqd"}> : () -> ()
    %cst_286 = arith.constant dense<0.000000e+00> : vector<4x8x8xf32>
    %824 = tpu.matmul %823, %809, %cst_286 {dimension_numbers = #tpu.dot_dimension_numbers<[2], [1], [1], [2], [0, 0, 0, 1, 1, 2], [0], [0]>} : vector<4x8x8xf32>, vector<4x8x8xf32>, vector<4x8x8xf32> -> vector<4x8x8xf32>
    "tpu.trace_stop"() : () -> ()
    "tpu.trace_start"() <{level = 10 : i32, message = "hqd,hdo->hqo"}> : () -> ()
    %cst_287 = arith.constant dense<0.000000e+00> : vector<4x8x32xf32>
    %825 = tpu.matmul %824, %773, %cst_287 {dimension_numbers = #tpu.dot_dimension_numbers<[2], [1], [1], [2], [0, 0, 0, 1, 1, 2], [0], [0]>} : vector<4x8x8xf32>, vector<4x8x32xf32>, vector<4x8x32xf32> -> vector<4x8x32xf32>
    "tpu.trace_stop"() : () -> ()
    %cst_288 = arith.constant dense<0.000000e+00> : vector<8x32xf32>
    %826 = vector.multi_reduction <add>, %825, %cst_288 [0] : vector<4x8x32xf32> to vector<8x32xf32>
    %827 = vector.broadcast %774 : vector<1x32xf32> to vector<8x32xf32>
    %828 = arith.addf %826, %827 : vector<8x32xf32>
    %829 = arith.addf %745, %828 : vector<8x32xf32>
    %c4_289 = arith.constant 4 : index
    %c0_290 = arith.constant 0 : index
    %830 = vector.load %arg10[%c4_289, %c0_290] : memref<45x128xf32, #tpu.memory_space<vmem>>, vector<1x32xf32>
    %c5_291 = arith.constant 5 : index
    %c0_292 = arith.constant 0 : index
    %831 = vector.load %arg10[%c5_291, %c0_292] : memref<45x128xf32, #tpu.memory_space<vmem>>, vector<1x32xf32>
    %cst_293 = arith.constant dense<0.000000e+00> : vector<8xf32>
    %832 = vector.multi_reduction <add>, %829, %cst_293 [1] : vector<8x32xf32> to vector<8xf32>
    %833 = vector.shape_cast %832 : vector<8xf32> to vector<8x1xf32>
    %cst_294 = arith.constant 3.200000e+01 : f32
    %834 = vector.broadcast %cst_294 : f32 to vector<8x1xf32>
    %835 = arith.divf %833, %834 : vector<8x1xf32>
    %836 = vector.broadcast %835 : vector<8x1xf32> to vector<8x32xf32>
    %837 = arith.subf %829, %836 : vector<8x32xf32>
    %838 = arith.mulf %837, %837 : vector<8x32xf32>
    %cst_295 = arith.constant dense<0.000000e+00> : vector<8xf32>
    %839 = vector.multi_reduction <add>, %838, %cst_295 [1] : vector<8x32xf32> to vector<8xf32>
    %840 = vector.shape_cast %839 : vector<8xf32> to vector<8x1xf32>
    %cst_296 = arith.constant 0.0322580636 : f32
    %841 = vector.broadcast %cst_296 : f32 to vector<8x1xf32>
    %842 = arith.mulf %840, %841 : vector<8x1xf32>
    %843 = math.sqrt %842 : vector<8x1xf32>
    %cst_297 = arith.constant 9.99999997E-7 : f32
    %844 = vector.broadcast %cst_297 : f32 to vector<8x1xf32>
    %845 = arith.addf %843, %844 : vector<8x1xf32>
    %846 = tpu.reciprocal %845 {approx = true} : vector<8x1xf32> -> vector<8x1xf32>
    %847 = vector.broadcast %846 : vector<8x1xf32> to vector<8x32xf32>
    %848 = arith.mulf %837, %847 : vector<8x32xf32>
    %849 = vector.broadcast %830 : vector<1x32xf32> to vector<8x32xf32>
    %850 = arith.mulf %849, %848 : vector<8x32xf32>
    %851 = vector.broadcast %831 : vector<1x32xf32> to vector<8x32xf32>
    %852 = arith.addf %850, %851 : vector<8x32xf32>
    %c0_298 = arith.constant 0 : index
    %c0_299 = arith.constant 0 : index
    %c0_300 = arith.constant 0 : index
    %853 = vector.load %arg7[%c0_298, %c0_299, %c0_300] : memref<4x32x64xf32, #tpu.memory_space<vmem>>, vector<1x32x64xf32>
    %854 = vector.shape_cast %853 : vector<1x32x64xf32> to vector<32x64xf32>
    %c6_301 = arith.constant 6 : index
    %c0_302 = arith.constant 0 : index
    %855 = vector.load %arg10[%c6_301, %c0_302] : memref<45x128xf32, #tpu.memory_space<vmem>>, vector<1x64xf32>
    %c0_303 = arith.constant 0 : index
    %c0_304 = arith.constant 0 : index
    %c0_305 = arith.constant 0 : index
    %856 = vector.load %arg8[%c0_303, %c0_304, %c0_305] : memref<4x64x32xf32, #tpu.memory_space<vmem>>, vector<1x64x32xf32>
    %857 = vector.shape_cast %856 : vector<1x64x32xf32> to vector<64x32xf32>
    %c7_306 = arith.constant 7 : index
    %c0_307 = arith.constant 0 : index
    %858 = vector.load %arg10[%c7_306, %c0_307] : memref<45x128xf32, #tpu.memory_space<vmem>>, vector<1x32xf32>
    %cst_308 = arith.constant dense<0.000000e+00> : vector<8x64xf32>
    %859 = tpu.matmul %852, %854, %cst_308 {dimension_numbers = #tpu.dot_dimension_numbers<[1], [0], [0], [1], [0, 0, 1, 1], [], []>} : vector<8x32xf32>, vector<32x64xf32>, vector<8x64xf32> -> vector<8x64xf32>
    %860 = vector.broadcast %855 : vector<1x64xf32> to vector<8x64xf32>
    %861 = arith.addf %859, %860 : vector<8x64xf32>
    %cst_309 = arith.constant 0.000000e+00 : f32
    %862 = vector.broadcast %cst_309 : f32 to vector<8x64xf32>
    %863 = arith.maximumf %861, %862 : vector<8x64xf32>
    %cst_310 = arith.constant dense<0.000000e+00> : vector<8x32xf32>
    %864 = tpu.matmul %863, %857, %cst_310 {dimension_numbers = #tpu.dot_dimension_numbers<[1], [0], [0], [1], [0, 0, 1, 1], [], []>} : vector<8x64xf32>, vector<64x32xf32>, vector<8x32xf32> -> vector<8x32xf32>
    %865 = vector.broadcast %858 : vector<1x32xf32> to vector<8x32xf32>
    %866 = arith.addf %864, %865 : vector<8x32xf32>
    %867 = arith.addf %829, %866 : vector<8x32xf32>
    %c8_311 = arith.constant 8 : index
    %c0_312 = arith.constant 0 : index
    %868 = vector.load %arg10[%c8_311, %c0_312] : memref<45x128xf32, #tpu.memory_space<vmem>>, vector<1x32xf32>
    %c9_313 = arith.constant 9 : index
    %c0_314 = arith.constant 0 : index
    %869 = vector.load %arg10[%c9_313, %c0_314] : memref<45x128xf32, #tpu.memory_space<vmem>>, vector<1x32xf32>
    %cst_315 = arith.constant dense<0.000000e+00> : vector<8xf32>
    %870 = vector.multi_reduction <add>, %867, %cst_315 [1] : vector<8x32xf32> to vector<8xf32>
    %871 = vector.shape_cast %870 : vector<8xf32> to vector<8x1xf32>
    %cst_316 = arith.constant 3.200000e+01 : f32
    %872 = vector.broadcast %cst_316 : f32 to vector<8x1xf32>
    %873 = arith.divf %871, %872 : vector<8x1xf32>
    %874 = vector.broadcast %873 : vector<8x1xf32> to vector<8x32xf32>
    %875 = arith.subf %867, %874 : vector<8x32xf32>
    %876 = arith.mulf %875, %875 : vector<8x32xf32>
    %cst_317 = arith.constant dense<0.000000e+00> : vector<8xf32>
    %877 = vector.multi_reduction <add>, %876, %cst_317 [1] : vector<8x32xf32> to vector<8xf32>
    %878 = vector.shape_cast %877 : vector<8xf32> to vector<8x1xf32>
    %cst_318 = arith.constant 0.0322580636 : f32
    %879 = vector.broadcast %cst_318 : f32 to vector<8x1xf32>
    %880 = arith.mulf %878, %879 : vector<8x1xf32>
    %881 = math.sqrt %880 : vector<8x1xf32>
    %cst_319 = arith.constant 9.99999997E-7 : f32
    %882 = vector.broadcast %cst_319 : f32 to vector<8x1xf32>
    %883 = arith.addf %881, %882 : vector<8x1xf32>
    %884 = tpu.reciprocal %883 {approx = true} : vector<8x1xf32> -> vector<8x1xf32>
    %885 = vector.broadcast %884 : vector<8x1xf32> to vector<8x32xf32>
    %886 = arith.mulf %875, %885 : vector<8x32xf32>
    %887 = vector.broadcast %868 : vector<1x32xf32> to vector<8x32xf32>
    %888 = arith.mulf %887, %886 : vector<8x32xf32>
    %889 = vector.broadcast %869 : vector<1x32xf32> to vector<8x32xf32>
    %890 = arith.addf %888, %889 : vector<8x32xf32>
    %c1_320 = arith.constant 1 : index
    %c0_321 = arith.constant 0 : index
    %c0_322 = arith.constant 0 : index
    %891 = vector.load %arg5[%c1_320, %c0_321, %c0_322] : memref<6x32x96xf32, #tpu.memory_space<vmem>>, vector<1x32x96xf32>
    %892 = vector.shape_cast %891 : vector<1x32x96xf32> to vector<32x96xf32>
    %c10_323 = arith.constant 10 : index
    %c0_324 = arith.constant 0 : index
    %893 = vector.load %arg10[%c10_323, %c0_324] : memref<45x128xf32, #tpu.memory_space<vmem>>, vector<1x96xf32>
    %c1_325 = arith.constant 1 : index
    %c0_326 = arith.constant 0 : index
    %c0_327 = arith.constant 0 : index
    %c0_328 = arith.constant 0 : index
    %894 = vector.load %arg6[%c1_325, %c0_326, %c0_327, %c0_328] : memref<6x4x8x32xf32, #tpu.memory_space<vmem>>, vector<1x4x8x32xf32>
    %895 = vector.shape_cast %894 : vector<1x4x8x32xf32> to vector<4x8x32xf32>
    %c11_329 = arith.constant 11 : index
    %c0_330 = arith.constant 0 : index
    %896 = vector.load %arg10[%c11_329, %c0_330] : memref<45x128xf32, #tpu.memory_space<vmem>>, vector<1x32xf32>
    %cst_331 = arith.constant dense<0.000000e+00> : vector<8x96xf32>
    %897 = tpu.matmul %890, %892, %cst_331 {dimension_numbers = #tpu.dot_dimension_numbers<[1], [0], [0], [1], [0, 0, 1, 1], [], []>} : vector<8x32xf32>, vector<32x96xf32>, vector<8x96xf32> -> vector<8x96xf32>
    %898 = vector.broadcast %893 : vector<1x96xf32> to vector<8x96xf32>
    %899 = arith.addf %897, %898 : vector<8x96xf32>
    %900 = vector.extract_strided_slice %899 {offsets = [0, 0], sizes = [8, 32], strides = [1, 1]} : vector<8x96xf32> to vector<8x32xf32>
    %901 = vector.extract_strided_slice %899 {offsets = [0, 32], sizes = [8, 32], strides = [1, 1]} : vector<8x96xf32> to vector<8x32xf32>
    %902 = vector.extract_strided_slice %899 {offsets = [0, 64], sizes = [8, 32], strides = [1, 1]} : vector<8x96xf32> to vector<8x32xf32>
    %cst_332 = arith.constant 0.353553385 : f32
    %903 = vector.broadcast %cst_332 : f32 to vector<8x32xf32>
    %904 = arith.mulf %900, %903 : vector<8x32xf32>
    %905 = vector.extract_strided_slice %904 {offsets = [0, 0], sizes = [8, 8], strides = [1, 1]} : vector<8x32xf32> to vector<8x8xf32>
    %906 = vector.extract_strided_slice %904 {offsets = [0, 8], sizes = [8, 8], strides = [1, 1]} : vector<8x32xf32> to vector<8x8xf32>
    %907 = vector.extract_strided_slice %904 {offsets = [0, 16], sizes = [8, 8], strides = [1, 1]} : vector<8x32xf32> to vector<8x8xf32>
    %908 = vector.extract_strided_slice %904 {offsets = [0, 24], sizes = [8, 8], strides = [1, 1]} : vector<8x32xf32> to vector<8x8xf32>
    %909 = vector.shape_cast %905 : vector<8x8xf32> to vector<1x8x8xf32>
    %910 = vector.shape_cast %906 : vector<8x8xf32> to vector<1x8x8xf32>
    %911 = vector.shape_cast %907 : vector<8x8xf32> to vector<1x8x8xf32>
    %912 = vector.shape_cast %908 : vector<8x8xf32> to vector<1x8x8xf32>
    %913 = tpu.concatenate %909, %910, %911, %912 in 0 : vector<1x8x8xf32>, vector<1x8x8xf32>, vector<1x8x8xf32>, vector<1x8x8xf32> -> vector<4x8x8xf32>
    %914 = vector.extract_strided_slice %901 {offsets = [0, 0], sizes = [8, 8], strides = [1, 1]} : vector<8x32xf32> to vector<8x8xf32>
    %915 = vector.extract_strided_slice %901 {offsets = [0, 8], sizes = [8, 8], strides = [1, 1]} : vector<8x32xf32> to vector<8x8xf32>
    %916 = vector.extract_strided_slice %901 {offsets = [0, 16], sizes = [8, 8], strides = [1, 1]} : vector<8x32xf32> to vector<8x8xf32>
    %917 = vector.extract_strided_slice %901 {offsets = [0, 24], sizes = [8, 8], strides = [1, 1]} : vector<8x32xf32> to vector<8x8xf32>
    %918 = vector.shape_cast %914 : vector<8x8xf32> to vector<1x8x8xf32>
    %919 = vector.shape_cast %915 : vector<8x8xf32> to vector<1x8x8xf32>
    %920 = vector.shape_cast %916 : vector<8x8xf32> to vector<1x8x8xf32>
    %921 = vector.shape_cast %917 : vector<8x8xf32> to vector<1x8x8xf32>
    %922 = tpu.concatenate %918, %919, %920, %921 in 0 : vector<1x8x8xf32>, vector<1x8x8xf32>, vector<1x8x8xf32>, vector<1x8x8xf32> -> vector<4x8x8xf32>
    %923 = vector.extract_strided_slice %902 {offsets = [0, 0], sizes = [8, 8], strides = [1, 1]} : vector<8x32xf32> to vector<8x8xf32>
    %924 = vector.extract_strided_slice %902 {offsets = [0, 8], sizes = [8, 8], strides = [1, 1]} : vector<8x32xf32> to vector<8x8xf32>
    %925 = vector.extract_strided_slice %902 {offsets = [0, 16], sizes = [8, 8], strides = [1, 1]} : vector<8x32xf32> to vector<8x8xf32>
    %926 = vector.extract_strided_slice %902 {offsets = [0, 24], sizes = [8, 8], strides = [1, 1]} : vector<8x32xf32> to vector<8x8xf32>
    %927 = vector.shape_cast %923 : vector<8x8xf32> to vector<1x8x8xf32>
    %928 = vector.shape_cast %924 : vector<8x8xf32> to vector<1x8x8xf32>
    %929 = vector.shape_cast %925 : vector<8x8xf32> to vector<1x8x8xf32>
    %930 = vector.shape_cast %926 : vector<8x8xf32> to vector<1x8x8xf32>
    %931 = tpu.concatenate %927, %928, %929, %930 in 0 : vector<1x8x8xf32>, vector<1x8x8xf32>, vector<1x8x8xf32>, vector<1x8x8xf32> -> vector<4x8x8xf32>
    "tpu.trace_start"() <{level = 10 : i32, message = "hqd,hkd->hqk"}> : () -> ()
    %cst_333 = arith.constant dense<0.000000e+00> : vector<4x8x8xf32>
    %932 = tpu.matmul %913, %922, %cst_333 {dimension_numbers = #tpu.dot_dimension_numbers<[2], [2], [1], [1], [0, 0, 0, 1, 1, 1], [0], [0]>} : vector<4x8x8xf32>, vector<4x8x8xf32>, vector<4x8x8xf32> -> vector<4x8x8xf32>
    "tpu.trace_stop"() : () -> ()
    %933 = vector.shape_cast %741 : vector<1x8xf32> to vector<1x1x8xf32>
    %934 = vector.broadcast %933 : vector<1x1x8xf32> to vector<4x8x8xf32>
    %935 = arith.addf %932, %934 : vector<4x8x8xf32>
    %cst_334 = arith.constant dense<0xFF800000> : vector<4x8xf32>
    %936 = vector.multi_reduction <maximumf>, %935, %cst_334 [2] : vector<4x8x8xf32> to vector<4x8xf32>
    %937 = vector.shape_cast %936 : vector<4x8xf32> to vector<4x8x1xf32>
    %938 = vector.broadcast %937 : vector<4x8x1xf32> to vector<4x8x8xf32>
    %939 = arith.subf %935, %938 : vector<4x8x8xf32>
    %940 = math.exp %939 : vector<4x8x8xf32>
    %cst_335 = arith.constant dense<0.000000e+00> : vector<4x8xf32>
    %941 = vector.multi_reduction <add>, %940, %cst_335 [2] : vector<4x8x8xf32> to vector<4x8xf32>
    %942 = vector.shape_cast %941 : vector<4x8xf32> to vector<4x8x1xf32>
    %943 = tpu.reciprocal %942 {approx = true} : vector<4x8x1xf32> -> vector<4x8x1xf32>
    %944 = vector.broadcast %943 : vector<4x8x1xf32> to vector<4x8x8xf32>
    %945 = arith.mulf %940, %944 : vector<4x8x8xf32>
    "tpu.trace_start"() <{level = 10 : i32, message = "hqk,hkd->hqd"}> : () -> ()
    %cst_336 = arith.constant dense<0.000000e+00> : vector<4x8x8xf32>
    %946 = tpu.matmul %945, %931, %cst_336 {dimension_numbers = #tpu.dot_dimension_numbers<[2], [1], [1], [2], [0, 0, 0, 1, 1, 2], [0], [0]>} : vector<4x8x8xf32>, vector<4x8x8xf32>, vector<4x8x8xf32> -> vector<4x8x8xf32>
    "tpu.trace_stop"() : () -> ()
    "tpu.trace_start"() <{level = 10 : i32, message = "hqd,hdo->hqo"}> : () -> ()
    %cst_337 = arith.constant dense<0.000000e+00> : vector<4x8x32xf32>
    %947 = tpu.matmul %946, %895, %cst_337 {dimension_numbers = #tpu.dot_dimension_numbers<[2], [1], [1], [2], [0, 0, 0, 1, 1, 2], [0], [0]>} : vector<4x8x8xf32>, vector<4x8x32xf32>, vector<4x8x32xf32> -> vector<4x8x32xf32>
    "tpu.trace_stop"() : () -> ()
    %cst_338 = arith.constant dense<0.000000e+00> : vector<8x32xf32>
    %948 = vector.multi_reduction <add>, %947, %cst_338 [0] : vector<4x8x32xf32> to vector<8x32xf32>
    %949 = vector.broadcast %896 : vector<1x32xf32> to vector<8x32xf32>
    %950 = arith.addf %948, %949 : vector<8x32xf32>
    %951 = arith.addf %867, %950 : vector<8x32xf32>
    %c12_339 = arith.constant 12 : index
    %c0_340 = arith.constant 0 : index
    %952 = vector.load %arg10[%c12_339, %c0_340] : memref<45x128xf32, #tpu.memory_space<vmem>>, vector<1x32xf32>
    %c13_341 = arith.constant 13 : index
    %c0_342 = arith.constant 0 : index
    %953 = vector.load %arg10[%c13_341, %c0_342] : memref<45x128xf32, #tpu.memory_space<vmem>>, vector<1x32xf32>
    %cst_343 = arith.constant dense<0.000000e+00> : vector<8xf32>
    %954 = vector.multi_reduction <add>, %951, %cst_343 [1] : vector<8x32xf32> to vector<8xf32>
    %955 = vector.shape_cast %954 : vector<8xf32> to vector<8x1xf32>
    %cst_344 = arith.constant 3.200000e+01 : f32
    %956 = vector.broadcast %cst_344 : f32 to vector<8x1xf32>
    %957 = arith.divf %955, %956 : vector<8x1xf32>
    %958 = vector.broadcast %957 : vector<8x1xf32> to vector<8x32xf32>
    %959 = arith.subf %951, %958 : vector<8x32xf32>
    %960 = arith.mulf %959, %959 : vector<8x32xf32>
    %cst_345 = arith.constant dense<0.000000e+00> : vector<8xf32>
    %961 = vector.multi_reduction <add>, %960, %cst_345 [1] : vector<8x32xf32> to vector<8xf32>
    %962 = vector.shape_cast %961 : vector<8xf32> to vector<8x1xf32>
    %cst_346 = arith.constant 0.0322580636 : f32
    %963 = vector.broadcast %cst_346 : f32 to vector<8x1xf32>
    %964 = arith.mulf %962, %963 : vector<8x1xf32>
    %965 = math.sqrt %964 : vector<8x1xf32>
    %cst_347 = arith.constant 9.99999997E-7 : f32
    %966 = vector.broadcast %cst_347 : f32 to vector<8x1xf32>
    %967 = arith.addf %965, %966 : vector<8x1xf32>
    %968 = tpu.reciprocal %967 {approx = true} : vector<8x1xf32> -> vector<8x1xf32>
    %969 = vector.broadcast %968 : vector<8x1xf32> to vector<8x32xf32>
    %970 = arith.mulf %959, %969 : vector<8x32xf32>
    %971 = vector.broadcast %952 : vector<1x32xf32> to vector<8x32xf32>
    %972 = arith.mulf %971, %970 : vector<8x32xf32>
    %973 = vector.broadcast %953 : vector<1x32xf32> to vector<8x32xf32>
    %974 = arith.addf %972, %973 : vector<8x32xf32>
    %c1_348 = arith.constant 1 : index
    %c0_349 = arith.constant 0 : index
    %c0_350 = arith.constant 0 : index
    %975 = vector.load %arg7[%c1_348, %c0_349, %c0_350] : memref<4x32x64xf32, #tpu.memory_space<vmem>>, vector<1x32x64xf32>
    %976 = vector.shape_cast %975 : vector<1x32x64xf32> to vector<32x64xf32>
    %c14_351 = arith.constant 14 : index
    %c0_352 = arith.constant 0 : index
    %977 = vector.load %arg10[%c14_351, %c0_352] : memref<45x128xf32, #tpu.memory_space<vmem>>, vector<1x64xf32>
    %c1_353 = arith.constant 1 : index
    %c0_354 = arith.constant 0 : index
    %c0_355 = arith.constant 0 : index
    %978 = vector.load %arg8[%c1_353, %c0_354, %c0_355] : memref<4x64x32xf32, #tpu.memory_space<vmem>>, vector<1x64x32xf32>
    %979 = vector.shape_cast %978 : vector<1x64x32xf32> to vector<64x32xf32>
    %c15_356 = arith.constant 15 : index
    %c0_357 = arith.constant 0 : index
    %980 = vector.load %arg10[%c15_356, %c0_357] : memref<45x128xf32, #tpu.memory_space<vmem>>, vector<1x32xf32>
    %cst_358 = arith.constant dense<0.000000e+00> : vector<8x64xf32>
    %981 = tpu.matmul %974, %976, %cst_358 {dimension_numbers = #tpu.dot_dimension_numbers<[1], [0], [0], [1], [0, 0, 1, 1], [], []>} : vector<8x32xf32>, vector<32x64xf32>, vector<8x64xf32> -> vector<8x64xf32>
    %982 = vector.broadcast %977 : vector<1x64xf32> to vector<8x64xf32>
    %983 = arith.addf %981, %982 : vector<8x64xf32>
    %cst_359 = arith.constant 0.000000e+00 : f32
    %984 = vector.broadcast %cst_359 : f32 to vector<8x64xf32>
    %985 = arith.maximumf %983, %984 : vector<8x64xf32>
    %cst_360 = arith.constant dense<0.000000e+00> : vector<8x32xf32>
    %986 = tpu.matmul %985, %979, %cst_360 {dimension_numbers = #tpu.dot_dimension_numbers<[1], [0], [0], [1], [0, 0, 1, 1], [], []>} : vector<8x64xf32>, vector<64x32xf32>, vector<8x32xf32> -> vector<8x32xf32>
    %987 = vector.broadcast %980 : vector<1x32xf32> to vector<8x32xf32>
    %988 = arith.addf %986, %987 : vector<8x32xf32>
    %989 = arith.addf %951, %988 : vector<8x32xf32>
    %c40_361 = arith.constant 40 : index
    %c0_362 = arith.constant 0 : index
    %990 = vector.load %arg10[%c40_361, %c0_362] : memref<45x128xf32, #tpu.memory_space<vmem>>, vector<1x32xf32>
    %c41_363 = arith.constant 41 : index
    %c0_364 = arith.constant 0 : index
    %991 = vector.load %arg10[%c41_363, %c0_364] : memref<45x128xf32, #tpu.memory_space<vmem>>, vector<1x32xf32>
    %cst_365 = arith.constant dense<0.000000e+00> : vector<8xf32>
    %992 = vector.multi_reduction <add>, %989, %cst_365 [1] : vector<8x32xf32> to vector<8xf32>
    %993 = vector.shape_cast %992 : vector<8xf32> to vector<8x1xf32>
    %cst_366 = arith.constant 3.200000e+01 : f32
    %994 = vector.broadcast %cst_366 : f32 to vector<8x1xf32>
    %995 = arith.divf %993, %994 : vector<8x1xf32>
    %996 = vector.broadcast %995 : vector<8x1xf32> to vector<8x32xf32>
    %997 = arith.subf %989, %996 : vector<8x32xf32>
    %998 = arith.mulf %997, %997 : vector<8x32xf32>
    %cst_367 = arith.constant dense<0.000000e+00> : vector<8xf32>
    %999 = vector.multi_reduction <add>, %998, %cst_367 [1] : vector<8x32xf32> to vector<8xf32>
    %1000 = vector.shape_cast %999 : vector<8xf32> to vector<8x1xf32>
    %cst_368 = arith.constant 0.0322580636 : f32
    %1001 = vector.broadcast %cst_368 : f32 to vector<8x1xf32>
    %1002 = arith.mulf %1000, %1001 : vector<8x1xf32>
    %1003 = math.sqrt %1002 : vector<8x1xf32>
    %cst_369 = arith.constant 9.99999997E-7 : f32
    %1004 = vector.broadcast %cst_369 : f32 to vector<8x1xf32>
    %1005 = arith.addf %1003, %1004 : vector<8x1xf32>
    %1006 = tpu.reciprocal %1005 {approx = true} : vector<8x1xf32> -> vector<8x1xf32>
    %1007 = vector.broadcast %1006 : vector<8x1xf32> to vector<8x32xf32>
    %1008 = arith.mulf %997, %1007 : vector<8x32xf32>
    %1009 = vector.broadcast %990 : vector<1x32xf32> to vector<8x32xf32>
    %1010 = arith.mulf %1009, %1008 : vector<8x32xf32>
    %1011 = vector.broadcast %991 : vector<1x32xf32> to vector<8x32xf32>
    %1012 = arith.addf %1010, %1011 : vector<8x32xf32>
    %c1_370 = arith.constant 1 : index
    %c0_371 = arith.constant 0 : index
    %c0_372 = arith.constant 0 : index
    %1013 = vector.load %arg2[%c1_370, %c0_371, %c0_372] : memref<2x8x32xf32, #tpu.memory_space<vmem>>, vector<1x8x32xf32>
    %1014 = vector.shape_cast %1013 : vector<1x8x32xf32> to vector<8x32xf32>
    %c16_373 = arith.constant 16 : index
    %c0_374 = arith.constant 0 : index
    %1015 = vector.load %arg10[%c16_373, %c0_374] : memref<45x128xf32, #tpu.memory_space<vmem>>, vector<1x32xf32>
    %c17_375 = arith.constant 17 : index
    %c0_376 = arith.constant 0 : index
    %1016 = vector.load %arg10[%c17_375, %c0_376] : memref<45x128xf32, #tpu.memory_space<vmem>>, vector<1x32xf32>
    %cst_377 = arith.constant dense<0.000000e+00> : vector<8xf32>
    %1017 = vector.multi_reduction <add>, %1014, %cst_377 [1] : vector<8x32xf32> to vector<8xf32>
    %1018 = vector.shape_cast %1017 : vector<8xf32> to vector<8x1xf32>
    %cst_378 = arith.constant 3.200000e+01 : f32
    %1019 = vector.broadcast %cst_378 : f32 to vector<8x1xf32>
    %1020 = arith.divf %1018, %1019 : vector<8x1xf32>
    %1021 = vector.broadcast %1020 : vector<8x1xf32> to vector<8x32xf32>
    %1022 = arith.subf %1014, %1021 : vector<8x32xf32>
    %1023 = arith.mulf %1022, %1022 : vector<8x32xf32>
    %cst_379 = arith.constant dense<0.000000e+00> : vector<8xf32>
    %1024 = vector.multi_reduction <add>, %1023, %cst_379 [1] : vector<8x32xf32> to vector<8xf32>
    %1025 = vector.shape_cast %1024 : vector<8xf32> to vector<8x1xf32>
    %cst_380 = arith.constant 0.0322580636 : f32
    %1026 = vector.broadcast %cst_380 : f32 to vector<8x1xf32>
    %1027 = arith.mulf %1025, %1026 : vector<8x1xf32>
    %1028 = math.sqrt %1027 : vector<8x1xf32>
    %cst_381 = arith.constant 9.99999997E-7 : f32
    %1029 = vector.broadcast %cst_381 : f32 to vector<8x1xf32>
    %1030 = arith.addf %1028, %1029 : vector<8x1xf32>
    %1031 = tpu.reciprocal %1030 {approx = true} : vector<8x1xf32> -> vector<8x1xf32>
    %1032 = vector.broadcast %1031 : vector<8x1xf32> to vector<8x32xf32>
    %1033 = arith.mulf %1022, %1032 : vector<8x32xf32>
    %1034 = vector.broadcast %1015 : vector<1x32xf32> to vector<8x32xf32>
    %1035 = arith.mulf %1034, %1033 : vector<8x32xf32>
    %1036 = vector.broadcast %1016 : vector<1x32xf32> to vector<8x32xf32>
    %1037 = arith.addf %1035, %1036 : vector<8x32xf32>
    %c2_382 = arith.constant 2 : index
    %c0_383 = arith.constant 0 : index
    %c0_384 = arith.constant 0 : index
    %1038 = vector.load %arg5[%c2_382, %c0_383, %c0_384] : memref<6x32x96xf32, #tpu.memory_space<vmem>>, vector<1x32x96xf32>
    %1039 = vector.shape_cast %1038 : vector<1x32x96xf32> to vector<32x96xf32>
    %c18_385 = arith.constant 18 : index
    %c0_386 = arith.constant 0 : index
    %1040 = vector.load %arg10[%c18_385, %c0_386] : memref<45x128xf32, #tpu.memory_space<vmem>>, vector<1x96xf32>
    %c2_387 = arith.constant 2 : index
    %c0_388 = arith.constant 0 : index
    %c0_389 = arith.constant 0 : index
    %c0_390 = arith.constant 0 : index
    %1041 = vector.load %arg6[%c2_387, %c0_388, %c0_389, %c0_390] : memref<6x4x8x32xf32, #tpu.memory_space<vmem>>, vector<1x4x8x32xf32>
    %1042 = vector.shape_cast %1041 : vector<1x4x8x32xf32> to vector<4x8x32xf32>
    %c19_391 = arith.constant 19 : index
    %c0_392 = arith.constant 0 : index
    %1043 = vector.load %arg10[%c19_391, %c0_392] : memref<45x128xf32, #tpu.memory_space<vmem>>, vector<1x32xf32>
    %cst_393 = arith.constant dense<0.000000e+00> : vector<8x96xf32>
    %1044 = tpu.matmul %1037, %1039, %cst_393 {dimension_numbers = #tpu.dot_dimension_numbers<[1], [0], [0], [1], [0, 0, 1, 1], [], []>} : vector<8x32xf32>, vector<32x96xf32>, vector<8x96xf32> -> vector<8x96xf32>
    %1045 = vector.broadcast %1040 : vector<1x96xf32> to vector<8x96xf32>
    %1046 = arith.addf %1044, %1045 : vector<8x96xf32>
    %1047 = vector.extract_strided_slice %1046 {offsets = [0, 0], sizes = [8, 32], strides = [1, 1]} : vector<8x96xf32> to vector<8x32xf32>
    %1048 = vector.extract_strided_slice %1046 {offsets = [0, 32], sizes = [8, 32], strides = [1, 1]} : vector<8x96xf32> to vector<8x32xf32>
    %1049 = vector.extract_strided_slice %1046 {offsets = [0, 64], sizes = [8, 32], strides = [1, 1]} : vector<8x96xf32> to vector<8x32xf32>
    %cst_394 = arith.constant 0.353553385 : f32
    %1050 = vector.broadcast %cst_394 : f32 to vector<8x32xf32>
    %1051 = arith.mulf %1047, %1050 : vector<8x32xf32>
    %1052 = vector.extract_strided_slice %1051 {offsets = [0, 0], sizes = [8, 8], strides = [1, 1]} : vector<8x32xf32> to vector<8x8xf32>
    %1053 = vector.extract_strided_slice %1051 {offsets = [0, 8], sizes = [8, 8], strides = [1, 1]} : vector<8x32xf32> to vector<8x8xf32>
    %1054 = vector.extract_strided_slice %1051 {offsets = [0, 16], sizes = [8, 8], strides = [1, 1]} : vector<8x32xf32> to vector<8x8xf32>
    %1055 = vector.extract_strided_slice %1051 {offsets = [0, 24], sizes = [8, 8], strides = [1, 1]} : vector<8x32xf32> to vector<8x8xf32>
    %1056 = vector.shape_cast %1052 : vector<8x8xf32> to vector<1x8x8xf32>
    %1057 = vector.shape_cast %1053 : vector<8x8xf32> to vector<1x8x8xf32>
    %1058 = vector.shape_cast %1054 : vector<8x8xf32> to vector<1x8x8xf32>
    %1059 = vector.shape_cast %1055 : vector<8x8xf32> to vector<1x8x8xf32>
    %1060 = tpu.concatenate %1056, %1057, %1058, %1059 in 0 : vector<1x8x8xf32>, vector<1x8x8xf32>, vector<1x8x8xf32>, vector<1x8x8xf32> -> vector<4x8x8xf32>
    %1061 = vector.extract_strided_slice %1048 {offsets = [0, 0], sizes = [8, 8], strides = [1, 1]} : vector<8x32xf32> to vector<8x8xf32>
    %1062 = vector.extract_strided_slice %1048 {offsets = [0, 8], sizes = [8, 8], strides = [1, 1]} : vector<8x32xf32> to vector<8x8xf32>
    %1063 = vector.extract_strided_slice %1048 {offsets = [0, 16], sizes = [8, 8], strides = [1, 1]} : vector<8x32xf32> to vector<8x8xf32>
    %1064 = vector.extract_strided_slice %1048 {offsets = [0, 24], sizes = [8, 8], strides = [1, 1]} : vector<8x32xf32> to vector<8x8xf32>
    %1065 = vector.shape_cast %1061 : vector<8x8xf32> to vector<1x8x8xf32>
    %1066 = vector.shape_cast %1062 : vector<8x8xf32> to vector<1x8x8xf32>
    %1067 = vector.shape_cast %1063 : vector<8x8xf32> to vector<1x8x8xf32>
    %1068 = vector.shape_cast %1064 : vector<8x8xf32> to vector<1x8x8xf32>
    %1069 = tpu.concatenate %1065, %1066, %1067, %1068 in 0 : vector<1x8x8xf32>, vector<1x8x8xf32>, vector<1x8x8xf32>, vector<1x8x8xf32> -> vector<4x8x8xf32>
    %1070 = vector.extract_strided_slice %1049 {offsets = [0, 0], sizes = [8, 8], strides = [1, 1]} : vector<8x32xf32> to vector<8x8xf32>
    %1071 = vector.extract_strided_slice %1049 {offsets = [0, 8], sizes = [8, 8], strides = [1, 1]} : vector<8x32xf32> to vector<8x8xf32>
    %1072 = vector.extract_strided_slice %1049 {offsets = [0, 16], sizes = [8, 8], strides = [1, 1]} : vector<8x32xf32> to vector<8x8xf32>
    %1073 = vector.extract_strided_slice %1049 {offsets = [0, 24], sizes = [8, 8], strides = [1, 1]} : vector<8x32xf32> to vector<8x8xf32>
    %1074 = vector.shape_cast %1070 : vector<8x8xf32> to vector<1x8x8xf32>
    %1075 = vector.shape_cast %1071 : vector<8x8xf32> to vector<1x8x8xf32>
    %1076 = vector.shape_cast %1072 : vector<8x8xf32> to vector<1x8x8xf32>
    %1077 = vector.shape_cast %1073 : vector<8x8xf32> to vector<1x8x8xf32>
    %1078 = tpu.concatenate %1074, %1075, %1076, %1077 in 0 : vector<1x8x8xf32>, vector<1x8x8xf32>, vector<1x8x8xf32>, vector<1x8x8xf32> -> vector<4x8x8xf32>
    "tpu.trace_start"() <{level = 10 : i32, message = "hqd,hkd->hqk"}> : () -> ()
    %cst_395 = arith.constant dense<0.000000e+00> : vector<4x8x8xf32>
    %1079 = tpu.matmul %1060, %1069, %cst_395 {dimension_numbers = #tpu.dot_dimension_numbers<[2], [2], [1], [1], [0, 0, 0, 1, 1, 1], [0], [0]>} : vector<4x8x8xf32>, vector<4x8x8xf32>, vector<4x8x8xf32> -> vector<4x8x8xf32>
    "tpu.trace_stop"() : () -> ()
    %1080 = vector.shape_cast %743 : vector<8x8xf32> to vector<1x8x8xf32>
    %1081 = vector.broadcast %1080 : vector<1x8x8xf32> to vector<4x8x8xf32>
    %1082 = arith.addf %1079, %1081 : vector<4x8x8xf32>
    %cst_396 = arith.constant dense<0xFF800000> : vector<4x8xf32>
    %1083 = vector.multi_reduction <maximumf>, %1082, %cst_396 [2] : vector<4x8x8xf32> to vector<4x8xf32>
    %1084 = vector.shape_cast %1083 : vector<4x8xf32> to vector<4x8x1xf32>
    %1085 = vector.broadcast %1084 : vector<4x8x1xf32> to vector<4x8x8xf32>
    %1086 = arith.subf %1082, %1085 : vector<4x8x8xf32>
    %1087 = math.exp %1086 : vector<4x8x8xf32>
    %cst_397 = arith.constant dense<0.000000e+00> : vector<4x8xf32>
    %1088 = vector.multi_reduction <add>, %1087, %cst_397 [2] : vector<4x8x8xf32> to vector<4x8xf32>
    %1089 = vector.shape_cast %1088 : vector<4x8xf32> to vector<4x8x1xf32>
    %1090 = tpu.reciprocal %1089 {approx = true} : vector<4x8x1xf32> -> vector<4x8x1xf32>
    %1091 = vector.broadcast %1090 : vector<4x8x1xf32> to vector<4x8x8xf32>
    %1092 = arith.mulf %1087, %1091 : vector<4x8x8xf32>
    "tpu.trace_start"() <{level = 10 : i32, message = "hqk,hkd->hqd"}> : () -> ()
    %cst_398 = arith.constant dense<0.000000e+00> : vector<4x8x8xf32>
    %1093 = tpu.matmul %1092, %1078, %cst_398 {dimension_numbers = #tpu.dot_dimension_numbers<[2], [1], [1], [2], [0, 0, 0, 1, 1, 2], [0], [0]>} : vector<4x8x8xf32>, vector<4x8x8xf32>, vector<4x8x8xf32> -> vector<4x8x8xf32>
    "tpu.trace_stop"() : () -> ()
    "tpu.trace_start"() <{level = 10 : i32, message = "hqd,hdo->hqo"}> : () -> ()
    %cst_399 = arith.constant dense<0.000000e+00> : vector<4x8x32xf32>
    %1094 = tpu.matmul %1093, %1042, %cst_399 {dimension_numbers = #tpu.dot_dimension_numbers<[2], [1], [1], [2], [0, 0, 0, 1, 1, 2], [0], [0]>} : vector<4x8x8xf32>, vector<4x8x32xf32>, vector<4x8x32xf32> -> vector<4x8x32xf32>
    "tpu.trace_stop"() : () -> ()
    %cst_400 = arith.constant dense<0.000000e+00> : vector<8x32xf32>
    %1095 = vector.multi_reduction <add>, %1094, %cst_400 [0] : vector<4x8x32xf32> to vector<8x32xf32>
    %1096 = vector.broadcast %1043 : vector<1x32xf32> to vector<8x32xf32>
    %1097 = arith.addf %1095, %1096 : vector<8x32xf32>
    %1098 = arith.addf %1014, %1097 : vector<8x32xf32>
    %c20_401 = arith.constant 20 : index
    %c0_402 = arith.constant 0 : index
    %1099 = vector.load %arg10[%c20_401, %c0_402] : memref<45x128xf32, #tpu.memory_space<vmem>>, vector<1x32xf32>
    %c21_403 = arith.constant 21 : index
    %c0_404 = arith.constant 0 : index
    %1100 = vector.load %arg10[%c21_403, %c0_404] : memref<45x128xf32, #tpu.memory_space<vmem>>, vector<1x32xf32>
    %cst_405 = arith.constant dense<0.000000e+00> : vector<8xf32>
    %1101 = vector.multi_reduction <add>, %1098, %cst_405 [1] : vector<8x32xf32> to vector<8xf32>
    %1102 = vector.shape_cast %1101 : vector<8xf32> to vector<8x1xf32>
    %cst_406 = arith.constant 3.200000e+01 : f32
    %1103 = vector.broadcast %cst_406 : f32 to vector<8x1xf32>
    %1104 = arith.divf %1102, %1103 : vector<8x1xf32>
    %1105 = vector.broadcast %1104 : vector<8x1xf32> to vector<8x32xf32>
    %1106 = arith.subf %1098, %1105 : vector<8x32xf32>
    %1107 = arith.mulf %1106, %1106 : vector<8x32xf32>
    %cst_407 = arith.constant dense<0.000000e+00> : vector<8xf32>
    %1108 = vector.multi_reduction <add>, %1107, %cst_407 [1] : vector<8x32xf32> to vector<8xf32>
    %1109 = vector.shape_cast %1108 : vector<8xf32> to vector<8x1xf32>
    %cst_408 = arith.constant 0.0322580636 : f32
    %1110 = vector.broadcast %cst_408 : f32 to vector<8x1xf32>
    %1111 = arith.mulf %1109, %1110 : vector<8x1xf32>
    %1112 = math.sqrt %1111 : vector<8x1xf32>
    %cst_409 = arith.constant 9.99999997E-7 : f32
    %1113 = vector.broadcast %cst_409 : f32 to vector<8x1xf32>
    %1114 = arith.addf %1112, %1113 : vector<8x1xf32>
    %1115 = tpu.reciprocal %1114 {approx = true} : vector<8x1xf32> -> vector<8x1xf32>
    %1116 = vector.broadcast %1115 : vector<8x1xf32> to vector<8x32xf32>
    %1117 = arith.mulf %1106, %1116 : vector<8x32xf32>
    %1118 = vector.broadcast %1099 : vector<1x32xf32> to vector<8x32xf32>
    %1119 = arith.mulf %1118, %1117 : vector<8x32xf32>
    %1120 = vector.broadcast %1100 : vector<1x32xf32> to vector<8x32xf32>
    %1121 = arith.addf %1119, %1120 : vector<8x32xf32>
    %c4_410 = arith.constant 4 : index
    %c0_411 = arith.constant 0 : index
    %c0_412 = arith.constant 0 : index
    %1122 = vector.load %arg5[%c4_410, %c0_411, %c0_412] : memref<6x32x96xf32, #tpu.memory_space<vmem>>, vector<1x32x96xf32>
    %1123 = vector.shape_cast %1122 : vector<1x32x96xf32> to vector<32x96xf32>
    %c22_413 = arith.constant 22 : index
    %c0_414 = arith.constant 0 : index
    %1124 = vector.load %arg10[%c22_413, %c0_414] : memref<45x128xf32, #tpu.memory_space<vmem>>, vector<1x96xf32>
    %c4_415 = arith.constant 4 : index
    %c0_416 = arith.constant 0 : index
    %c0_417 = arith.constant 0 : index
    %c0_418 = arith.constant 0 : index
    %1125 = vector.load %arg6[%c4_415, %c0_416, %c0_417, %c0_418] : memref<6x4x8x32xf32, #tpu.memory_space<vmem>>, vector<1x4x8x32xf32>
    %1126 = vector.shape_cast %1125 : vector<1x4x8x32xf32> to vector<4x8x32xf32>
    %c23_419 = arith.constant 23 : index
    %c0_420 = arith.constant 0 : index
    %1127 = vector.load %arg10[%c23_419, %c0_420] : memref<45x128xf32, #tpu.memory_space<vmem>>, vector<1x32xf32>
    %1128 = vector.extract_strided_slice %1123 {offsets = [0, 0], sizes = [32, 32], strides = [1, 1]} : vector<32x96xf32> to vector<32x32xf32>
    %cst_421 = arith.constant dense<0.000000e+00> : vector<8x32xf32>
    %1129 = tpu.matmul %1121, %1128, %cst_421 {dimension_numbers = #tpu.dot_dimension_numbers<[1], [0], [0], [1], [0, 0, 1, 1], [], []>} : vector<8x32xf32>, vector<32x32xf32>, vector<8x32xf32> -> vector<8x32xf32>
    %1130 = vector.extract_strided_slice %1124 {offsets = [0, 0], sizes = [1, 32], strides = [1, 1]} : vector<1x96xf32> to vector<1x32xf32>
    %1131 = vector.broadcast %1130 : vector<1x32xf32> to vector<8x32xf32>
    %1132 = arith.addf %1129, %1131 : vector<8x32xf32>
    %1133 = vector.extract_strided_slice %1123 {offsets = [0, 32], sizes = [32, 64], strides = [1, 1]} : vector<32x96xf32> to vector<32x64xf32>
    %cst_422 = arith.constant dense<0.000000e+00> : vector<8x64xf32>
    %1134 = tpu.matmul %1012, %1133, %cst_422 {dimension_numbers = #tpu.dot_dimension_numbers<[1], [0], [0], [1], [0, 0, 1, 1], [], []>} : vector<8x32xf32>, vector<32x64xf32>, vector<8x64xf32> -> vector<8x64xf32>
    %1135 = vector.extract_strided_slice %1124 {offsets = [0, 32], sizes = [1, 64], strides = [1, 1]} : vector<1x96xf32> to vector<1x64xf32>
    %1136 = vector.broadcast %1135 : vector<1x64xf32> to vector<8x64xf32>
    %1137 = arith.addf %1134, %1136 : vector<8x64xf32>
    %1138 = vector.extract_strided_slice %1137 {offsets = [0, 0], sizes = [8, 32], strides = [1, 1]} : vector<8x64xf32> to vector<8x32xf32>
    %1139 = vector.extract_strided_slice %1137 {offsets = [0, 32], sizes = [8, 32], strides = [1, 1]} : vector<8x64xf32> to vector<8x32xf32>
    %cst_423 = arith.constant 0.353553385 : f32
    %1140 = vector.broadcast %cst_423 : f32 to vector<8x32xf32>
    %1141 = arith.mulf %1132, %1140 : vector<8x32xf32>
    %1142 = vector.extract_strided_slice %1141 {offsets = [0, 0], sizes = [8, 8], strides = [1, 1]} : vector<8x32xf32> to vector<8x8xf32>
    %1143 = vector.extract_strided_slice %1141 {offsets = [0, 8], sizes = [8, 8], strides = [1, 1]} : vector<8x32xf32> to vector<8x8xf32>
    %1144 = vector.extract_strided_slice %1141 {offsets = [0, 16], sizes = [8, 8], strides = [1, 1]} : vector<8x32xf32> to vector<8x8xf32>
    %1145 = vector.extract_strided_slice %1141 {offsets = [0, 24], sizes = [8, 8], strides = [1, 1]} : vector<8x32xf32> to vector<8x8xf32>
    %1146 = vector.shape_cast %1142 : vector<8x8xf32> to vector<1x8x8xf32>
    %1147 = vector.shape_cast %1143 : vector<8x8xf32> to vector<1x8x8xf32>
    %1148 = vector.shape_cast %1144 : vector<8x8xf32> to vector<1x8x8xf32>
    %1149 = vector.shape_cast %1145 : vector<8x8xf32> to vector<1x8x8xf32>
    %1150 = tpu.concatenate %1146, %1147, %1148, %1149 in 0 : vector<1x8x8xf32>, vector<1x8x8xf32>, vector<1x8x8xf32>, vector<1x8x8xf32> -> vector<4x8x8xf32>
    %1151 = vector.extract_strided_slice %1138 {offsets = [0, 0], sizes = [8, 8], strides = [1, 1]} : vector<8x32xf32> to vector<8x8xf32>
    %1152 = vector.extract_strided_slice %1138 {offsets = [0, 8], sizes = [8, 8], strides = [1, 1]} : vector<8x32xf32> to vector<8x8xf32>
    %1153 = vector.extract_strided_slice %1138 {offsets = [0, 16], sizes = [8, 8], strides = [1, 1]} : vector<8x32xf32> to vector<8x8xf32>
    %1154 = vector.extract_strided_slice %1138 {offsets = [0, 24], sizes = [8, 8], strides = [1, 1]} : vector<8x32xf32> to vector<8x8xf32>
    %1155 = vector.shape_cast %1151 : vector<8x8xf32> to vector<1x8x8xf32>
    %1156 = vector.shape_cast %1152 : vector<8x8xf32> to vector<1x8x8xf32>
    %1157 = vector.shape_cast %1153 : vector<8x8xf32> to vector<1x8x8xf32>
    %1158 = vector.shape_cast %1154 : vector<8x8xf32> to vector<1x8x8xf32>
    %1159 = tpu.concatenate %1155, %1156, %1157, %1158 in 0 : vector<1x8x8xf32>, vector<1x8x8xf32>, vector<1x8x8xf32>, vector<1x8x8xf32> -> vector<4x8x8xf32>
    %1160 = vector.extract_strided_slice %1139 {offsets = [0, 0], sizes = [8, 8], strides = [1, 1]} : vector<8x32xf32> to vector<8x8xf32>
    %1161 = vector.extract_strided_slice %1139 {offsets = [0, 8], sizes = [8, 8], strides = [1, 1]} : vector<8x32xf32> to vector<8x8xf32>
    %1162 = vector.extract_strided_slice %1139 {offsets = [0, 16], sizes = [8, 8], strides = [1, 1]} : vector<8x32xf32> to vector<8x8xf32>
    %1163 = vector.extract_strided_slice %1139 {offsets = [0, 24], sizes = [8, 8], strides = [1, 1]} : vector<8x32xf32> to vector<8x8xf32>
    %1164 = vector.shape_cast %1160 : vector<8x8xf32> to vector<1x8x8xf32>
    %1165 = vector.shape_cast %1161 : vector<8x8xf32> to vector<1x8x8xf32>
    %1166 = vector.shape_cast %1162 : vector<8x8xf32> to vector<1x8x8xf32>
    %1167 = vector.shape_cast %1163 : vector<8x8xf32> to vector<1x8x8xf32>
    %1168 = tpu.concatenate %1164, %1165, %1166, %1167 in 0 : vector<1x8x8xf32>, vector<1x8x8xf32>, vector<1x8x8xf32>, vector<1x8x8xf32> -> vector<4x8x8xf32>
    "tpu.trace_start"() <{level = 10 : i32, message = "hqd,hkd->hqk"}> : () -> ()
    %cst_424 = arith.constant dense<0.000000e+00> : vector<4x8x8xf32>
    %1169 = tpu.matmul %1150, %1159, %cst_424 {dimension_numbers = #tpu.dot_dimension_numbers<[2], [2], [1], [1], [0, 0, 0, 1, 1, 1], [0], [0]>} : vector<4x8x8xf32>, vector<4x8x8xf32>, vector<4x8x8xf32> -> vector<4x8x8xf32>
    "tpu.trace_stop"() : () -> ()
    %1170 = vector.shape_cast %741 : vector<1x8xf32> to vector<1x1x8xf32>
    %1171 = vector.broadcast %1170 : vector<1x1x8xf32> to vector<4x8x8xf32>
    %1172 = arith.addf %1169, %1171 : vector<4x8x8xf32>
    %cst_425 = arith.constant dense<0xFF800000> : vector<4x8xf32>
    %1173 = vector.multi_reduction <maximumf>, %1172, %cst_425 [2] : vector<4x8x8xf32> to vector<4x8xf32>
    %1174 = vector.shape_cast %1173 : vector<4x8xf32> to vector<4x8x1xf32>
    %1175 = vector.broadcast %1174 : vector<4x8x1xf32> to vector<4x8x8xf32>
    %1176 = arith.subf %1172, %1175 : vector<4x8x8xf32>
    %1177 = math.exp %1176 : vector<4x8x8xf32>
    %cst_426 = arith.constant dense<0.000000e+00> : vector<4x8xf32>
    %1178 = vector.multi_reduction <add>, %1177, %cst_426 [2] : vector<4x8x8xf32> to vector<4x8xf32>
    %1179 = vector.shape_cast %1178 : vector<4x8xf32> to vector<4x8x1xf32>
    %1180 = tpu.reciprocal %1179 {approx = true} : vector<4x8x1xf32> -> vector<4x8x1xf32>
    %1181 = vector.broadcast %1180 : vector<4x8x1xf32> to vector<4x8x8xf32>
    %1182 = arith.mulf %1177, %1181 : vector<4x8x8xf32>
    "tpu.trace_start"() <{level = 10 : i32, message = "hqk,hkd->hqd"}> : () -> ()
    %cst_427 = arith.constant dense<0.000000e+00> : vector<4x8x8xf32>
    %1183 = tpu.matmul %1182, %1168, %cst_427 {dimension_numbers = #tpu.dot_dimension_numbers<[2], [1], [1], [2], [0, 0, 0, 1, 1, 2], [0], [0]>} : vector<4x8x8xf32>, vector<4x8x8xf32>, vector<4x8x8xf32> -> vector<4x8x8xf32>
    "tpu.trace_stop"() : () -> ()
    "tpu.trace_start"() <{level = 10 : i32, message = "hqd,hdo->hqo"}> : () -> ()
    %cst_428 = arith.constant dense<0.000000e+00> : vector<4x8x32xf32>
    %1184 = tpu.matmul %1183, %1126, %cst_428 {dimension_numbers = #tpu.dot_dimension_numbers<[2], [1], [1], [2], [0, 0, 0, 1, 1, 2], [0], [0]>} : vector<4x8x8xf32>, vector<4x8x32xf32>, vector<4x8x32xf32> -> vector<4x8x32xf32>
    "tpu.trace_stop"() : () -> ()
    %cst_429 = arith.constant dense<0.000000e+00> : vector<8x32xf32>
    %1185 = vector.multi_reduction <add>, %1184, %cst_429 [0] : vector<4x8x32xf32> to vector<8x32xf32>
    %1186 = vector.broadcast %1127 : vector<1x32xf32> to vector<8x32xf32>
    %1187 = arith.addf %1185, %1186 : vector<8x32xf32>
    %1188 = arith.addf %1098, %1187 : vector<8x32xf32>
    %c24_430 = arith.constant 24 : index
    %c0_431 = arith.constant 0 : index
    %1189 = vector.load %arg10[%c24_430, %c0_431] : memref<45x128xf32, #tpu.memory_space<vmem>>, vector<1x32xf32>
    %c25_432 = arith.constant 25 : index
    %c0_433 = arith.constant 0 : index
    %1190 = vector.load %arg10[%c25_432, %c0_433] : memref<45x128xf32, #tpu.memory_space<vmem>>, vector<1x32xf32>
    %cst_434 = arith.constant dense<0.000000e+00> : vector<8xf32>
    %1191 = vector.multi_reduction <add>, %1188, %cst_434 [1] : vector<8x32xf32> to vector<8xf32>
    %1192 = vector.shape_cast %1191 : vector<8xf32> to vector<8x1xf32>
    %cst_435 = arith.constant 3.200000e+01 : f32
    %1193 = vector.broadcast %cst_435 : f32 to vector<8x1xf32>
    %1194 = arith.divf %1192, %1193 : vector<8x1xf32>
    %1195 = vector.broadcast %1194 : vector<8x1xf32> to vector<8x32xf32>
    %1196 = arith.subf %1188, %1195 : vector<8x32xf32>
    %1197 = arith.mulf %1196, %1196 : vector<8x32xf32>
    %cst_436 = arith.constant dense<0.000000e+00> : vector<8xf32>
    %1198 = vector.multi_reduction <add>, %1197, %cst_436 [1] : vector<8x32xf32> to vector<8xf32>
    %1199 = vector.shape_cast %1198 : vector<8xf32> to vector<8x1xf32>
    %cst_437 = arith.constant 0.0322580636 : f32
    %1200 = vector.broadcast %cst_437 : f32 to vector<8x1xf32>
    %1201 = arith.mulf %1199, %1200 : vector<8x1xf32>
    %1202 = math.sqrt %1201 : vector<8x1xf32>
    %cst_438 = arith.constant 9.99999997E-7 : f32
    %1203 = vector.broadcast %cst_438 : f32 to vector<8x1xf32>
    %1204 = arith.addf %1202, %1203 : vector<8x1xf32>
    %1205 = tpu.reciprocal %1204 {approx = true} : vector<8x1xf32> -> vector<8x1xf32>
    %1206 = vector.broadcast %1205 : vector<8x1xf32> to vector<8x32xf32>
    %1207 = arith.mulf %1196, %1206 : vector<8x32xf32>
    %1208 = vector.broadcast %1189 : vector<1x32xf32> to vector<8x32xf32>
    %1209 = arith.mulf %1208, %1207 : vector<8x32xf32>
    %1210 = vector.broadcast %1190 : vector<1x32xf32> to vector<8x32xf32>
    %1211 = arith.addf %1209, %1210 : vector<8x32xf32>
    %c2_439 = arith.constant 2 : index
    %c0_440 = arith.constant 0 : index
    %c0_441 = arith.constant 0 : index
    %1212 = vector.load %arg7[%c2_439, %c0_440, %c0_441] : memref<4x32x64xf32, #tpu.memory_space<vmem>>, vector<1x32x64xf32>
    %1213 = vector.shape_cast %1212 : vector<1x32x64xf32> to vector<32x64xf32>
    %c26_442 = arith.constant 26 : index
    %c0_443 = arith.constant 0 : index
    %1214 = vector.load %arg10[%c26_442, %c0_443] : memref<45x128xf32, #tpu.memory_space<vmem>>, vector<1x64xf32>
    %c2_444 = arith.constant 2 : index
    %c0_445 = arith.constant 0 : index
    %c0_446 = arith.constant 0 : index
    %1215 = vector.load %arg8[%c2_444, %c0_445, %c0_446] : memref<4x64x32xf32, #tpu.memory_space<vmem>>, vector<1x64x32xf32>
    %1216 = vector.shape_cast %1215 : vector<1x64x32xf32> to vector<64x32xf32>
    %c27_447 = arith.constant 27 : index
    %c0_448 = arith.constant 0 : index
    %1217 = vector.load %arg10[%c27_447, %c0_448] : memref<45x128xf32, #tpu.memory_space<vmem>>, vector<1x32xf32>
    %cst_449 = arith.constant dense<0.000000e+00> : vector<8x64xf32>
    %1218 = tpu.matmul %1211, %1213, %cst_449 {dimension_numbers = #tpu.dot_dimension_numbers<[1], [0], [0], [1], [0, 0, 1, 1], [], []>} : vector<8x32xf32>, vector<32x64xf32>, vector<8x64xf32> -> vector<8x64xf32>
    %1219 = vector.broadcast %1214 : vector<1x64xf32> to vector<8x64xf32>
    %1220 = arith.addf %1218, %1219 : vector<8x64xf32>
    %cst_450 = arith.constant 0.000000e+00 : f32
    %1221 = vector.broadcast %cst_450 : f32 to vector<8x64xf32>
    %1222 = arith.maximumf %1220, %1221 : vector<8x64xf32>
    %cst_451 = arith.constant dense<0.000000e+00> : vector<8x32xf32>
    %1223 = tpu.matmul %1222, %1216, %cst_451 {dimension_numbers = #tpu.dot_dimension_numbers<[1], [0], [0], [1], [0, 0, 1, 1], [], []>} : vector<8x64xf32>, vector<64x32xf32>, vector<8x32xf32> -> vector<8x32xf32>
    %1224 = vector.broadcast %1217 : vector<1x32xf32> to vector<8x32xf32>
    %1225 = arith.addf %1223, %1224 : vector<8x32xf32>
    %1226 = arith.addf %1188, %1225 : vector<8x32xf32>
    %c28_452 = arith.constant 28 : index
    %c0_453 = arith.constant 0 : index
    %1227 = vector.load %arg10[%c28_452, %c0_453] : memref<45x128xf32, #tpu.memory_space<vmem>>, vector<1x32xf32>
    %c29_454 = arith.constant 29 : index
    %c0_455 = arith.constant 0 : index
    %1228 = vector.load %arg10[%c29_454, %c0_455] : memref<45x128xf32, #tpu.memory_space<vmem>>, vector<1x32xf32>
    %cst_456 = arith.constant dense<0.000000e+00> : vector<8xf32>
    %1229 = vector.multi_reduction <add>, %1226, %cst_456 [1] : vector<8x32xf32> to vector<8xf32>
    %1230 = vector.shape_cast %1229 : vector<8xf32> to vector<8x1xf32>
    %cst_457 = arith.constant 3.200000e+01 : f32
    %1231 = vector.broadcast %cst_457 : f32 to vector<8x1xf32>
    %1232 = arith.divf %1230, %1231 : vector<8x1xf32>
    %1233 = vector.broadcast %1232 : vector<8x1xf32> to vector<8x32xf32>
    %1234 = arith.subf %1226, %1233 : vector<8x32xf32>
    %1235 = arith.mulf %1234, %1234 : vector<8x32xf32>
    %cst_458 = arith.constant dense<0.000000e+00> : vector<8xf32>
    %1236 = vector.multi_reduction <add>, %1235, %cst_458 [1] : vector<8x32xf32> to vector<8xf32>
    %1237 = vector.shape_cast %1236 : vector<8xf32> to vector<8x1xf32>
    %cst_459 = arith.constant 0.0322580636 : f32
    %1238 = vector.broadcast %cst_459 : f32 to vector<8x1xf32>
    %1239 = arith.mulf %1237, %1238 : vector<8x1xf32>
    %1240 = math.sqrt %1239 : vector<8x1xf32>
    %cst_460 = arith.constant 9.99999997E-7 : f32
    %1241 = vector.broadcast %cst_460 : f32 to vector<8x1xf32>
    %1242 = arith.addf %1240, %1241 : vector<8x1xf32>
    %1243 = tpu.reciprocal %1242 {approx = true} : vector<8x1xf32> -> vector<8x1xf32>
    %1244 = vector.broadcast %1243 : vector<8x1xf32> to vector<8x32xf32>
    %1245 = arith.mulf %1234, %1244 : vector<8x32xf32>
    %1246 = vector.broadcast %1227 : vector<1x32xf32> to vector<8x32xf32>
    %1247 = arith.mulf %1246, %1245 : vector<8x32xf32>
    %1248 = vector.broadcast %1228 : vector<1x32xf32> to vector<8x32xf32>
    %1249 = arith.addf %1247, %1248 : vector<8x32xf32>
    %c3_461 = arith.constant 3 : index
    %c0_462 = arith.constant 0 : index
    %c0_463 = arith.constant 0 : index
    %1250 = vector.load %arg5[%c3_461, %c0_462, %c0_463] : memref<6x32x96xf32, #tpu.memory_space<vmem>>, vector<1x32x96xf32>
    %1251 = vector.shape_cast %1250 : vector<1x32x96xf32> to vector<32x96xf32>
    %c30_464 = arith.constant 30 : index
    %c0_465 = arith.constant 0 : index
    %1252 = vector.load %arg10[%c30_464, %c0_465] : memref<45x128xf32, #tpu.memory_space<vmem>>, vector<1x96xf32>
    %c3_466 = arith.constant 3 : index
    %c0_467 = arith.constant 0 : index
    %c0_468 = arith.constant 0 : index
    %c0_469 = arith.constant 0 : index
    %1253 = vector.load %arg6[%c3_466, %c0_467, %c0_468, %c0_469] : memref<6x4x8x32xf32, #tpu.memory_space<vmem>>, vector<1x4x8x32xf32>
    %1254 = vector.shape_cast %1253 : vector<1x4x8x32xf32> to vector<4x8x32xf32>
    %c31_470 = arith.constant 31 : index
    %c0_471 = arith.constant 0 : index
    %1255 = vector.load %arg10[%c31_470, %c0_471] : memref<45x128xf32, #tpu.memory_space<vmem>>, vector<1x32xf32>
    %cst_472 = arith.constant dense<0.000000e+00> : vector<8x96xf32>
    %1256 = tpu.matmul %1249, %1251, %cst_472 {dimension_numbers = #tpu.dot_dimension_numbers<[1], [0], [0], [1], [0, 0, 1, 1], [], []>} : vector<8x32xf32>, vector<32x96xf32>, vector<8x96xf32> -> vector<8x96xf32>
    %1257 = vector.broadcast %1252 : vector<1x96xf32> to vector<8x96xf32>
    %1258 = arith.addf %1256, %1257 : vector<8x96xf32>
    %1259 = vector.extract_strided_slice %1258 {offsets = [0, 0], sizes = [8, 32], strides = [1, 1]} : vector<8x96xf32> to vector<8x32xf32>
    %1260 = vector.extract_strided_slice %1258 {offsets = [0, 32], sizes = [8, 32], strides = [1, 1]} : vector<8x96xf32> to vector<8x32xf32>
    %1261 = vector.extract_strided_slice %1258 {offsets = [0, 64], sizes = [8, 32], strides = [1, 1]} : vector<8x96xf32> to vector<8x32xf32>
    %cst_473 = arith.constant 0.353553385 : f32
    %1262 = vector.broadcast %cst_473 : f32 to vector<8x32xf32>
    %1263 = arith.mulf %1259, %1262 : vector<8x32xf32>
    %1264 = vector.extract_strided_slice %1263 {offsets = [0, 0], sizes = [8, 8], strides = [1, 1]} : vector<8x32xf32> to vector<8x8xf32>
    %1265 = vector.extract_strided_slice %1263 {offsets = [0, 8], sizes = [8, 8], strides = [1, 1]} : vector<8x32xf32> to vector<8x8xf32>
    %1266 = vector.extract_strided_slice %1263 {offsets = [0, 16], sizes = [8, 8], strides = [1, 1]} : vector<8x32xf32> to vector<8x8xf32>
    %1267 = vector.extract_strided_slice %1263 {offsets = [0, 24], sizes = [8, 8], strides = [1, 1]} : vector<8x32xf32> to vector<8x8xf32>
    %1268 = vector.shape_cast %1264 : vector<8x8xf32> to vector<1x8x8xf32>
    %1269 = vector.shape_cast %1265 : vector<8x8xf32> to vector<1x8x8xf32>
    %1270 = vector.shape_cast %1266 : vector<8x8xf32> to vector<1x8x8xf32>
    %1271 = vector.shape_cast %1267 : vector<8x8xf32> to vector<1x8x8xf32>
    %1272 = tpu.concatenate %1268, %1269, %1270, %1271 in 0 : vector<1x8x8xf32>, vector<1x8x8xf32>, vector<1x8x8xf32>, vector<1x8x8xf32> -> vector<4x8x8xf32>
    %1273 = vector.extract_strided_slice %1260 {offsets = [0, 0], sizes = [8, 8], strides = [1, 1]} : vector<8x32xf32> to vector<8x8xf32>
    %1274 = vector.extract_strided_slice %1260 {offsets = [0, 8], sizes = [8, 8], strides = [1, 1]} : vector<8x32xf32> to vector<8x8xf32>
    %1275 = vector.extract_strided_slice %1260 {offsets = [0, 16], sizes = [8, 8], strides = [1, 1]} : vector<8x32xf32> to vector<8x8xf32>
    %1276 = vector.extract_strided_slice %1260 {offsets = [0, 24], sizes = [8, 8], strides = [1, 1]} : vector<8x32xf32> to vector<8x8xf32>
    %1277 = vector.shape_cast %1273 : vector<8x8xf32> to vector<1x8x8xf32>
    %1278 = vector.shape_cast %1274 : vector<8x8xf32> to vector<1x8x8xf32>
    %1279 = vector.shape_cast %1275 : vector<8x8xf32> to vector<1x8x8xf32>
    %1280 = vector.shape_cast %1276 : vector<8x8xf32> to vector<1x8x8xf32>
    %1281 = tpu.concatenate %1277, %1278, %1279, %1280 in 0 : vector<1x8x8xf32>, vector<1x8x8xf32>, vector<1x8x8xf32>, vector<1x8x8xf32> -> vector<4x8x8xf32>
    %1282 = vector.extract_strided_slice %1261 {offsets = [0, 0], sizes = [8, 8], strides = [1, 1]} : vector<8x32xf32> to vector<8x8xf32>
    %1283 = vector.extract_strided_slice %1261 {offsets = [0, 8], sizes = [8, 8], strides = [1, 1]} : vector<8x32xf32> to vector<8x8xf32>
    %1284 = vector.extract_strided_slice %1261 {offsets = [0, 16], sizes = [8, 8], strides = [1, 1]} : vector<8x32xf32> to vector<8x8xf32>
    %1285 = vector.extract_strided_slice %1261 {offsets = [0, 24], sizes = [8, 8], strides = [1, 1]} : vector<8x32xf32> to vector<8x8xf32>
    %1286 = vector.shape_cast %1282 : vector<8x8xf32> to vector<1x8x8xf32>
    %1287 = vector.shape_cast %1283 : vector<8x8xf32> to vector<1x8x8xf32>
    %1288 = vector.shape_cast %1284 : vector<8x8xf32> to vector<1x8x8xf32>
    %1289 = vector.shape_cast %1285 : vector<8x8xf32> to vector<1x8x8xf32>
    %1290 = tpu.concatenate %1286, %1287, %1288, %1289 in 0 : vector<1x8x8xf32>, vector<1x8x8xf32>, vector<1x8x8xf32>, vector<1x8x8xf32> -> vector<4x8x8xf32>
    "tpu.trace_start"() <{level = 10 : i32, message = "hqd,hkd->hqk"}> : () -> ()
    %cst_474 = arith.constant dense<0.000000e+00> : vector<4x8x8xf32>
    %1291 = tpu.matmul %1272, %1281, %cst_474 {dimension_numbers = #tpu.dot_dimension_numbers<[2], [2], [1], [1], [0, 0, 0, 1, 1, 1], [0], [0]>} : vector<4x8x8xf32>, vector<4x8x8xf32>, vector<4x8x8xf32> -> vector<4x8x8xf32>
    "tpu.trace_stop"() : () -> ()
    %1292 = vector.shape_cast %743 : vector<8x8xf32> to vector<1x8x8xf32>
    %1293 = vector.broadcast %1292 : vector<1x8x8xf32> to vector<4x8x8xf32>
    %1294 = arith.addf %1291, %1293 : vector<4x8x8xf32>
    %cst_475 = arith.constant dense<0xFF800000> : vector<4x8xf32>
    %1295 = vector.multi_reduction <maximumf>, %1294, %cst_475 [2] : vector<4x8x8xf32> to vector<4x8xf32>
    %1296 = vector.shape_cast %1295 : vector<4x8xf32> to vector<4x8x1xf32>
    %1297 = vector.broadcast %1296 : vector<4x8x1xf32> to vector<4x8x8xf32>
    %1298 = arith.subf %1294, %1297 : vector<4x8x8xf32>
    %1299 = math.exp %1298 : vector<4x8x8xf32>
    %cst_476 = arith.constant dense<0.000000e+00> : vector<4x8xf32>
    %1300 = vector.multi_reduction <add>, %1299, %cst_476 [2] : vector<4x8x8xf32> to vector<4x8xf32>
    %1301 = vector.shape_cast %1300 : vector<4x8xf32> to vector<4x8x1xf32>
    %1302 = tpu.reciprocal %1301 {approx = true} : vector<4x8x1xf32> -> vector<4x8x1xf32>
    %1303 = vector.broadcast %1302 : vector<4x8x1xf32> to vector<4x8x8xf32>
    %1304 = arith.mulf %1299, %1303 : vector<4x8x8xf32>
    "tpu.trace_start"() <{level = 10 : i32, message = "hqk,hkd->hqd"}> : () -> ()
    %cst_477 = arith.constant dense<0.000000e+00> : vector<4x8x8xf32>
    %1305 = tpu.matmul %1304, %1290, %cst_477 {dimension_numbers = #tpu.dot_dimension_numbers<[2], [1], [1], [2], [0, 0, 0, 1, 1, 2], [0], [0]>} : vector<4x8x8xf32>, vector<4x8x8xf32>, vector<4x8x8xf32> -> vector<4x8x8xf32>
    "tpu.trace_stop"() : () -> ()
    "tpu.trace_start"() <{level = 10 : i32, message = "hqd,hdo->hqo"}> : () -> ()
    %cst_478 = arith.constant dense<0.000000e+00> : vector<4x8x32xf32>
    %1306 = tpu.matmul %1305, %1254, %cst_478 {dimension_numbers = #tpu.dot_dimension_numbers<[2], [1], [1], [2], [0, 0, 0, 1, 1, 2], [0], [0]>} : vector<4x8x8xf32>, vector<4x8x32xf32>, vector<4x8x32xf32> -> vector<4x8x32xf32>
    "tpu.trace_stop"() : () -> ()
    %cst_479 = arith.constant dense<0.000000e+00> : vector<8x32xf32>
    %1307 = vector.multi_reduction <add>, %1306, %cst_479 [0] : vector<4x8x32xf32> to vector<8x32xf32>
    %1308 = vector.broadcast %1255 : vector<1x32xf32> to vector<8x32xf32>
    %1309 = arith.addf %1307, %1308 : vector<8x32xf32>
    %1310 = arith.addf %1226, %1309 : vector<8x32xf32>
    %c32_480 = arith.constant 32 : index
    %c0_481 = arith.constant 0 : index
    %1311 = vector.load %arg10[%c32_480, %c0_481] : memref<45x128xf32, #tpu.memory_space<vmem>>, vector<1x32xf32>
    %c33_482 = arith.constant 33 : index
    %c0_483 = arith.constant 0 : index
    %1312 = vector.load %arg10[%c33_482, %c0_483] : memref<45x128xf32, #tpu.memory_space<vmem>>, vector<1x32xf32>
    %cst_484 = arith.constant dense<0.000000e+00> : vector<8xf32>
    %1313 = vector.multi_reduction <add>, %1310, %cst_484 [1] : vector<8x32xf32> to vector<8xf32>
    %1314 = vector.shape_cast %1313 : vector<8xf32> to vector<8x1xf32>
    %cst_485 = arith.constant 3.200000e+01 : f32
    %1315 = vector.broadcast %cst_485 : f32 to vector<8x1xf32>
    %1316 = arith.divf %1314, %1315 : vector<8x1xf32>
    %1317 = vector.broadcast %1316 : vector<8x1xf32> to vector<8x32xf32>
    %1318 = arith.subf %1310, %1317 : vector<8x32xf32>
    %1319 = arith.mulf %1318, %1318 : vector<8x32xf32>
    %cst_486 = arith.constant dense<0.000000e+00> : vector<8xf32>
    %1320 = vector.multi_reduction <add>, %1319, %cst_486 [1] : vector<8x32xf32> to vector<8xf32>
    %1321 = vector.shape_cast %1320 : vector<8xf32> to vector<8x1xf32>
    %cst_487 = arith.constant 0.0322580636 : f32
    %1322 = vector.broadcast %cst_487 : f32 to vector<8x1xf32>
    %1323 = arith.mulf %1321, %1322 : vector<8x1xf32>
    %1324 = math.sqrt %1323 : vector<8x1xf32>
    %cst_488 = arith.constant 9.99999997E-7 : f32
    %1325 = vector.broadcast %cst_488 : f32 to vector<8x1xf32>
    %1326 = arith.addf %1324, %1325 : vector<8x1xf32>
    %1327 = tpu.reciprocal %1326 {approx = true} : vector<8x1xf32> -> vector<8x1xf32>
    %1328 = vector.broadcast %1327 : vector<8x1xf32> to vector<8x32xf32>
    %1329 = arith.mulf %1318, %1328 : vector<8x32xf32>
    %1330 = vector.broadcast %1311 : vector<1x32xf32> to vector<8x32xf32>
    %1331 = arith.mulf %1330, %1329 : vector<8x32xf32>
    %1332 = vector.broadcast %1312 : vector<1x32xf32> to vector<8x32xf32>
    %1333 = arith.addf %1331, %1332 : vector<8x32xf32>
    %c5_489 = arith.constant 5 : index
    %c0_490 = arith.constant 0 : index
    %c0_491 = arith.constant 0 : index
    %1334 = vector.load %arg5[%c5_489, %c0_490, %c0_491] : memref<6x32x96xf32, #tpu.memory_space<vmem>>, vector<1x32x96xf32>
    %1335 = vector.shape_cast %1334 : vector<1x32x96xf32> to vector<32x96xf32>
    %c34_492 = arith.constant 34 : index
    %c0_493 = arith.constant 0 : index
    %1336 = vector.load %arg10[%c34_492, %c0_493] : memref<45x128xf32, #tpu.memory_space<vmem>>, vector<1x96xf32>
    %c5_494 = arith.constant 5 : index
    %c0_495 = arith.constant 0 : index
    %c0_496 = arith.constant 0 : index
    %c0_497 = arith.constant 0 : index
    %1337 = vector.load %arg6[%c5_494, %c0_495, %c0_496, %c0_497] : memref<6x4x8x32xf32, #tpu.memory_space<vmem>>, vector<1x4x8x32xf32>
    %1338 = vector.shape_cast %1337 : vector<1x4x8x32xf32> to vector<4x8x32xf32>
    %c35_498 = arith.constant 35 : index
    %c0_499 = arith.constant 0 : index
    %1339 = vector.load %arg10[%c35_498, %c0_499] : memref<45x128xf32, #tpu.memory_space<vmem>>, vector<1x32xf32>
    %1340 = vector.extract_strided_slice %1335 {offsets = [0, 0], sizes = [32, 32], strides = [1, 1]} : vector<32x96xf32> to vector<32x32xf32>
    %cst_500 = arith.constant dense<0.000000e+00> : vector<8x32xf32>
    %1341 = tpu.matmul %1333, %1340, %cst_500 {dimension_numbers = #tpu.dot_dimension_numbers<[1], [0], [0], [1], [0, 0, 1, 1], [], []>} : vector<8x32xf32>, vector<32x32xf32>, vector<8x32xf32> -> vector<8x32xf32>
    %1342 = vector.extract_strided_slice %1336 {offsets = [0, 0], sizes = [1, 32], strides = [1, 1]} : vector<1x96xf32> to vector<1x32xf32>
    %1343 = vector.broadcast %1342 : vector<1x32xf32> to vector<8x32xf32>
    %1344 = arith.addf %1341, %1343 : vector<8x32xf32>
    %1345 = vector.extract_strided_slice %1335 {offsets = [0, 32], sizes = [32, 64], strides = [1, 1]} : vector<32x96xf32> to vector<32x64xf32>
    %cst_501 = arith.constant dense<0.000000e+00> : vector<8x64xf32>
    %1346 = tpu.matmul %1012, %1345, %cst_501 {dimension_numbers = #tpu.dot_dimension_numbers<[1], [0], [0], [1], [0, 0, 1, 1], [], []>} : vector<8x32xf32>, vector<32x64xf32>, vector<8x64xf32> -> vector<8x64xf32>
    %1347 = vector.extract_strided_slice %1336 {offsets = [0, 32], sizes = [1, 64], strides = [1, 1]} : vector<1x96xf32> to vector<1x64xf32>
    %1348 = vector.broadcast %1347 : vector<1x64xf32> to vector<8x64xf32>
    %1349 = arith.addf %1346, %1348 : vector<8x64xf32>
    %1350 = vector.extract_strided_slice %1349 {offsets = [0, 0], sizes = [8, 32], strides = [1, 1]} : vector<8x64xf32> to vector<8x32xf32>
    %1351 = vector.extract_strided_slice %1349 {offsets = [0, 32], sizes = [8, 32], strides = [1, 1]} : vector<8x64xf32> to vector<8x32xf32>
    %cst_502 = arith.constant 0.353553385 : f32
    %1352 = vector.broadcast %cst_502 : f32 to vector<8x32xf32>
    %1353 = arith.mulf %1344, %1352 : vector<8x32xf32>
    %1354 = vector.extract_strided_slice %1353 {offsets = [0, 0], sizes = [8, 8], strides = [1, 1]} : vector<8x32xf32> to vector<8x8xf32>
    %1355 = vector.extract_strided_slice %1353 {offsets = [0, 8], sizes = [8, 8], strides = [1, 1]} : vector<8x32xf32> to vector<8x8xf32>
    %1356 = vector.extract_strided_slice %1353 {offsets = [0, 16], sizes = [8, 8], strides = [1, 1]} : vector<8x32xf32> to vector<8x8xf32>
    %1357 = vector.extract_strided_slice %1353 {offsets = [0, 24], sizes = [8, 8], strides = [1, 1]} : vector<8x32xf32> to vector<8x8xf32>
    %1358 = vector.shape_cast %1354 : vector<8x8xf32> to vector<1x8x8xf32>
    %1359 = vector.shape_cast %1355 : vector<8x8xf32> to vector<1x8x8xf32>
    %1360 = vector.shape_cast %1356 : vector<8x8xf32> to vector<1x8x8xf32>
    %1361 = vector.shape_cast %1357 : vector<8x8xf32> to vector<1x8x8xf32>
    %1362 = tpu.concatenate %1358, %1359, %1360, %1361 in 0 : vector<1x8x8xf32>, vector<1x8x8xf32>, vector<1x8x8xf32>, vector<1x8x8xf32> -> vector<4x8x8xf32>
    %1363 = vector.extract_strided_slice %1350 {offsets = [0, 0], sizes = [8, 8], strides = [1, 1]} : vector<8x32xf32> to vector<8x8xf32>
    %1364 = vector.extract_strided_slice %1350 {offsets = [0, 8], sizes = [8, 8], strides = [1, 1]} : vector<8x32xf32> to vector<8x8xf32>
    %1365 = vector.extract_strided_slice %1350 {offsets = [0, 16], sizes = [8, 8], strides = [1, 1]} : vector<8x32xf32> to vector<8x8xf32>
    %1366 = vector.extract_strided_slice %1350 {offsets = [0, 24], sizes = [8, 8], strides = [1, 1]} : vector<8x32xf32> to vector<8x8xf32>
    %1367 = vector.shape_cast %1363 : vector<8x8xf32> to vector<1x8x8xf32>
    %1368 = vector.shape_cast %1364 : vector<8x8xf32> to vector<1x8x8xf32>
    %1369 = vector.shape_cast %1365 : vector<8x8xf32> to vector<1x8x8xf32>
    %1370 = vector.shape_cast %1366 : vector<8x8xf32> to vector<1x8x8xf32>
    %1371 = tpu.concatenate %1367, %1368, %1369, %1370 in 0 : vector<1x8x8xf32>, vector<1x8x8xf32>, vector<1x8x8xf32>, vector<1x8x8xf32> -> vector<4x8x8xf32>
    %1372 = vector.extract_strided_slice %1351 {offsets = [0, 0], sizes = [8, 8], strides = [1, 1]} : vector<8x32xf32> to vector<8x8xf32>
    %1373 = vector.extract_strided_slice %1351 {offsets = [0, 8], sizes = [8, 8], strides = [1, 1]} : vector<8x32xf32> to vector<8x8xf32>
    %1374 = vector.extract_strided_slice %1351 {offsets = [0, 16], sizes = [8, 8], strides = [1, 1]} : vector<8x32xf32> to vector<8x8xf32>
    %1375 = vector.extract_strided_slice %1351 {offsets = [0, 24], sizes = [8, 8], strides = [1, 1]} : vector<8x32xf32> to vector<8x8xf32>
    %1376 = vector.shape_cast %1372 : vector<8x8xf32> to vector<1x8x8xf32>
    %1377 = vector.shape_cast %1373 : vector<8x8xf32> to vector<1x8x8xf32>
    %1378 = vector.shape_cast %1374 : vector<8x8xf32> to vector<1x8x8xf32>
    %1379 = vector.shape_cast %1375 : vector<8x8xf32> to vector<1x8x8xf32>
    %1380 = tpu.concatenate %1376, %1377, %1378, %1379 in 0 : vector<1x8x8xf32>, vector<1x8x8xf32>, vector<1x8x8xf32>, vector<1x8x8xf32> -> vector<4x8x8xf32>
    "tpu.trace_start"() <{level = 10 : i32, message = "hqd,hkd->hqk"}> : () -> ()
    %cst_503 = arith.constant dense<0.000000e+00> : vector<4x8x8xf32>
    %1381 = tpu.matmul %1362, %1371, %cst_503 {dimension_numbers = #tpu.dot_dimension_numbers<[2], [2], [1], [1], [0, 0, 0, 1, 1, 1], [0], [0]>} : vector<4x8x8xf32>, vector<4x8x8xf32>, vector<4x8x8xf32> -> vector<4x8x8xf32>
    "tpu.trace_stop"() : () -> ()
    %1382 = vector.shape_cast %741 : vector<1x8xf32> to vector<1x1x8xf32>
    %1383 = vector.broadcast %1382 : vector<1x1x8xf32> to vector<4x8x8xf32>
    %1384 = arith.addf %1381, %1383 : vector<4x8x8xf32>
    %cst_504 = arith.constant dense<0xFF800000> : vector<4x8xf32>
    %1385 = vector.multi_reduction <maximumf>, %1384, %cst_504 [2] : vector<4x8x8xf32> to vector<4x8xf32>
    %1386 = vector.shape_cast %1385 : vector<4x8xf32> to vector<4x8x1xf32>
    %1387 = vector.broadcast %1386 : vector<4x8x1xf32> to vector<4x8x8xf32>
    %1388 = arith.subf %1384, %1387 : vector<4x8x8xf32>
    %1389 = math.exp %1388 : vector<4x8x8xf32>
    %cst_505 = arith.constant dense<0.000000e+00> : vector<4x8xf32>
    %1390 = vector.multi_reduction <add>, %1389, %cst_505 [2] : vector<4x8x8xf32> to vector<4x8xf32>
    %1391 = vector.shape_cast %1390 : vector<4x8xf32> to vector<4x8x1xf32>
    %1392 = tpu.reciprocal %1391 {approx = true} : vector<4x8x1xf32> -> vector<4x8x1xf32>
    %1393 = vector.broadcast %1392 : vector<4x8x1xf32> to vector<4x8x8xf32>
    %1394 = arith.mulf %1389, %1393 : vector<4x8x8xf32>
    "tpu.trace_start"() <{level = 10 : i32, message = "hqk,hkd->hqd"}> : () -> ()
    %cst_506 = arith.constant dense<0.000000e+00> : vector<4x8x8xf32>
    %1395 = tpu.matmul %1394, %1380, %cst_506 {dimension_numbers = #tpu.dot_dimension_numbers<[2], [1], [1], [2], [0, 0, 0, 1, 1, 2], [0], [0]>} : vector<4x8x8xf32>, vector<4x8x8xf32>, vector<4x8x8xf32> -> vector<4x8x8xf32>
    "tpu.trace_stop"() : () -> ()
    "tpu.trace_start"() <{level = 10 : i32, message = "hqd,hdo->hqo"}> : () -> ()
    %cst_507 = arith.constant dense<0.000000e+00> : vector<4x8x32xf32>
    %1396 = tpu.matmul %1395, %1338, %cst_507 {dimension_numbers = #tpu.dot_dimension_numbers<[2], [1], [1], [2], [0, 0, 0, 1, 1, 2], [0], [0]>} : vector<4x8x8xf32>, vector<4x8x32xf32>, vector<4x8x32xf32> -> vector<4x8x32xf32>
    "tpu.trace_stop"() : () -> ()
    %cst_508 = arith.constant dense<0.000000e+00> : vector<8x32xf32>
    %1397 = vector.multi_reduction <add>, %1396, %cst_508 [0] : vector<4x8x32xf32> to vector<8x32xf32>
    %1398 = vector.broadcast %1339 : vector<1x32xf32> to vector<8x32xf32>
    %1399 = arith.addf %1397, %1398 : vector<8x32xf32>
    %1400 = arith.addf %1310, %1399 : vector<8x32xf32>
    %c36_509 = arith.constant 36 : index
    %c0_510 = arith.constant 0 : index
    %1401 = vector.load %arg10[%c36_509, %c0_510] : memref<45x128xf32, #tpu.memory_space<vmem>>, vector<1x32xf32>
    %c37_511 = arith.constant 37 : index
    %c0_512 = arith.constant 0 : index
    %1402 = vector.load %arg10[%c37_511, %c0_512] : memref<45x128xf32, #tpu.memory_space<vmem>>, vector<1x32xf32>
    %cst_513 = arith.constant dense<0.000000e+00> : vector<8xf32>
    %1403 = vector.multi_reduction <add>, %1400, %cst_513 [1] : vector<8x32xf32> to vector<8xf32>
    %1404 = vector.shape_cast %1403 : vector<8xf32> to vector<8x1xf32>
    %cst_514 = arith.constant 3.200000e+01 : f32
    %1405 = vector.broadcast %cst_514 : f32 to vector<8x1xf32>
    %1406 = arith.divf %1404, %1405 : vector<8x1xf32>
    %1407 = vector.broadcast %1406 : vector<8x1xf32> to vector<8x32xf32>
    %1408 = arith.subf %1400, %1407 : vector<8x32xf32>
    %1409 = arith.mulf %1408, %1408 : vector<8x32xf32>
    %cst_515 = arith.constant dense<0.000000e+00> : vector<8xf32>
    %1410 = vector.multi_reduction <add>, %1409, %cst_515 [1] : vector<8x32xf32> to vector<8xf32>
    %1411 = vector.shape_cast %1410 : vector<8xf32> to vector<8x1xf32>
    %cst_516 = arith.constant 0.0322580636 : f32
    %1412 = vector.broadcast %cst_516 : f32 to vector<8x1xf32>
    %1413 = arith.mulf %1411, %1412 : vector<8x1xf32>
    %1414 = math.sqrt %1413 : vector<8x1xf32>
    %cst_517 = arith.constant 9.99999997E-7 : f32
    %1415 = vector.broadcast %cst_517 : f32 to vector<8x1xf32>
    %1416 = arith.addf %1414, %1415 : vector<8x1xf32>
    %1417 = tpu.reciprocal %1416 {approx = true} : vector<8x1xf32> -> vector<8x1xf32>
    %1418 = vector.broadcast %1417 : vector<8x1xf32> to vector<8x32xf32>
    %1419 = arith.mulf %1408, %1418 : vector<8x32xf32>
    %1420 = vector.broadcast %1401 : vector<1x32xf32> to vector<8x32xf32>
    %1421 = arith.mulf %1420, %1419 : vector<8x32xf32>
    %1422 = vector.broadcast %1402 : vector<1x32xf32> to vector<8x32xf32>
    %1423 = arith.addf %1421, %1422 : vector<8x32xf32>
    %c3_518 = arith.constant 3 : index
    %c0_519 = arith.constant 0 : index
    %c0_520 = arith.constant 0 : index
    %1424 = vector.load %arg7[%c3_518, %c0_519, %c0_520] : memref<4x32x64xf32, #tpu.memory_space<vmem>>, vector<1x32x64xf32>
    %1425 = vector.shape_cast %1424 : vector<1x32x64xf32> to vector<32x64xf32>
    %c38_521 = arith.constant 38 : index
    %c0_522 = arith.constant 0 : index
    %1426 = vector.load %arg10[%c38_521, %c0_522] : memref<45x128xf32, #tpu.memory_space<vmem>>, vector<1x64xf32>
    %c3_523 = arith.constant 3 : index
    %c0_524 = arith.constant 0 : index
    %c0_525 = arith.constant 0 : index
    %1427 = vector.load %arg8[%c3_523, %c0_524, %c0_525] : memref<4x64x32xf32, #tpu.memory_space<vmem>>, vector<1x64x32xf32>
    %1428 = vector.shape_cast %1427 : vector<1x64x32xf32> to vector<64x32xf32>
    %c39_526 = arith.constant 39 : index
    %c0_527 = arith.constant 0 : index
    %1429 = vector.load %arg10[%c39_526, %c0_527] : memref<45x128xf32, #tpu.memory_space<vmem>>, vector<1x32xf32>
    %cst_528 = arith.constant dense<0.000000e+00> : vector<8x64xf32>
    %1430 = tpu.matmul %1423, %1425, %cst_528 {dimension_numbers = #tpu.dot_dimension_numbers<[1], [0], [0], [1], [0, 0, 1, 1], [], []>} : vector<8x32xf32>, vector<32x64xf32>, vector<8x64xf32> -> vector<8x64xf32>
    %1431 = vector.broadcast %1426 : vector<1x64xf32> to vector<8x64xf32>
    %1432 = arith.addf %1430, %1431 : vector<8x64xf32>
    %cst_529 = arith.constant 0.000000e+00 : f32
    %1433 = vector.broadcast %cst_529 : f32 to vector<8x64xf32>
    %1434 = arith.maximumf %1432, %1433 : vector<8x64xf32>
    %cst_530 = arith.constant dense<0.000000e+00> : vector<8x32xf32>
    %1435 = tpu.matmul %1434, %1428, %cst_530 {dimension_numbers = #tpu.dot_dimension_numbers<[1], [0], [0], [1], [0, 0, 1, 1], [], []>} : vector<8x64xf32>, vector<64x32xf32>, vector<8x32xf32> -> vector<8x32xf32>
    %1436 = vector.broadcast %1429 : vector<1x32xf32> to vector<8x32xf32>
    %1437 = arith.addf %1435, %1436 : vector<8x32xf32>
    %1438 = arith.addf %1400, %1437 : vector<8x32xf32>
    %c42_531 = arith.constant 42 : index
    %c0_532 = arith.constant 0 : index
    %1439 = vector.load %arg10[%c42_531, %c0_532] : memref<45x128xf32, #tpu.memory_space<vmem>>, vector<1x32xf32>
    %c43_533 = arith.constant 43 : index
    %c0_534 = arith.constant 0 : index
    %1440 = vector.load %arg10[%c43_533, %c0_534] : memref<45x128xf32, #tpu.memory_space<vmem>>, vector<1x32xf32>
    %cst_535 = arith.constant dense<0.000000e+00> : vector<8xf32>
    %1441 = vector.multi_reduction <add>, %1438, %cst_535 [1] : vector<8x32xf32> to vector<8xf32>
    %1442 = vector.shape_cast %1441 : vector<8xf32> to vector<8x1xf32>
    %cst_536 = arith.constant 3.200000e+01 : f32
    %1443 = vector.broadcast %cst_536 : f32 to vector<8x1xf32>
    %1444 = arith.divf %1442, %1443 : vector<8x1xf32>
    %1445 = vector.broadcast %1444 : vector<8x1xf32> to vector<8x32xf32>
    %1446 = arith.subf %1438, %1445 : vector<8x32xf32>
    %1447 = arith.mulf %1446, %1446 : vector<8x32xf32>
    %cst_537 = arith.constant dense<0.000000e+00> : vector<8xf32>
    %1448 = vector.multi_reduction <add>, %1447, %cst_537 [1] : vector<8x32xf32> to vector<8xf32>
    %1449 = vector.shape_cast %1448 : vector<8xf32> to vector<8x1xf32>
    %cst_538 = arith.constant 0.0322580636 : f32
    %1450 = vector.broadcast %cst_538 : f32 to vector<8x1xf32>
    %1451 = arith.mulf %1449, %1450 : vector<8x1xf32>
    %1452 = math.sqrt %1451 : vector<8x1xf32>
    %cst_539 = arith.constant 9.99999997E-7 : f32
    %1453 = vector.broadcast %cst_539 : f32 to vector<8x1xf32>
    %1454 = arith.addf %1452, %1453 : vector<8x1xf32>
    %1455 = tpu.reciprocal %1454 {approx = true} : vector<8x1xf32> -> vector<8x1xf32>
    %1456 = vector.broadcast %1455 : vector<8x1xf32> to vector<8x32xf32>
    %1457 = arith.mulf %1446, %1456 : vector<8x32xf32>
    %1458 = vector.broadcast %1439 : vector<1x32xf32> to vector<8x32xf32>
    %1459 = arith.mulf %1458, %1457 : vector<8x32xf32>
    %1460 = vector.broadcast %1440 : vector<1x32xf32> to vector<8x32xf32>
    %1461 = arith.addf %1459, %1460 : vector<8x32xf32>
    %cst_540 = arith.constant dense<0.000000e+00> : vector<8x128xf32>
    %1462 = tpu.matmul %1461, %0, %cst_540 {dimension_numbers = #tpu.dot_dimension_numbers<[1], [0], [0], [1], [0, 0, 1, 1], [], []>} : vector<8x32xf32>, vector<32x128xf32>, vector<8x128xf32> -> vector<8x128xf32>
    %1463 = vector.broadcast %1 : vector<1x128xf32> to vector<8x128xf32>
    %1464 = arith.addf %1462, %1463 : vector<8x128xf32>
    %cst_541 = arith.constant dense<0xFF800000> : vector<8xf32>
    %1465 = vector.multi_reduction <maximumf>, %1464, %cst_541 [1] : vector<8x128xf32> to vector<8xf32>
    %1466 = vector.shape_cast %1465 : vector<8xf32> to vector<8x1xf32>
    %1467 = vector.broadcast %1466 : vector<8x1xf32> to vector<8x128xf32>
    %1468 = arith.subf %1464, %1467 : vector<8x128xf32>
    %1469 = math.exp %1468 : vector<8x128xf32>
    %cst_542 = arith.constant dense<0.000000e+00> : vector<8xf32>
    %1470 = vector.multi_reduction <add>, %1469, %cst_542 [1] : vector<8x128xf32> to vector<8xf32>
    %1471 = vector.shape_cast %1470 : vector<8xf32> to vector<8x1xf32>
    %1472 = math.log %1471 : vector<8x1xf32>
    %1473 = vector.broadcast %1472 : vector<8x1xf32> to vector<8x128xf32>
    %1474 = arith.subf %1468, %1473 : vector<8x128xf32>
    %c1_543 = arith.constant 1 : index
    %c0_544 = arith.constant 0 : index
    %c0_545 = arith.constant 0 : index
    %1475 = vector.load %arg11[%c1_543, %c0_544, %c0_545] : memref<2x8x128xf32, #tpu.memory_space<vmem>>, vector<1x8x128xf32>
    %1476 = vector.shape_cast %1475 : vector<1x8x128xf32> to vector<8x128xf32>
    %1477 = vector.shape_cast %1474 : vector<8x128xf32> to vector<1x8x128xf32>
    tpu.vector_store %arg11[%c1_543, %c0_544, %c0_545], %1477 {strides = array<i32>} : memref<2x8x128xf32, #tpu.memory_space<vmem>>, vector<1x8x128xf32>,
    return
  }
  func.func @transform_0(%arg0: i32) -> (i32, i32, i32) {
    %c0_i32 = arith.constant 0 : i32
    %c0_i32_0 = arith.constant 0 : i32
    %c0_i32_1 = arith.constant 0 : i32
    return %arg0, %c0_i32, %c0_i32_0 : i32, i32, i32
  }
  func.func @transform_1(%arg0: i32) -> (i32, i32, i32) {
    %c0_i32 = arith.constant 0 : i32
    %c0_i32_0 = arith.constant 0 : i32
    %c0_i32_1 = arith.constant 0 : i32
    return %arg0, %c0_i32, %c0_i32_0 : i32, i32, i32
  }
  func.func @transform_2(%arg0: i32) -> (i32, i32, i32) {
    %c0_i32 = arith.constant 0 : i32
    %c0_i32_0 = arith.constant 0 : i32
    %c0_i32_1 = arith.constant 0 : i32
    return %arg0, %c0_i32, %c0_i32_0 : i32, i32, i32
  }
  func.func @transform_3(%arg0: i32) -> (i32, i32, i32) {
    %c0_i32 = arith.constant 0 : i32
    %c0_i32_0 = arith.constant 0 : i32
    %c0_i32_1 = arith.constant 0 : i32
    return %arg0, %c0_i32, %c0_i32_0 : i32, i32, i32
  }
  func.func @transform_4(%arg0: i32) -> (i32, i32, i32) {
    %c0_i32 = arith.constant 0 : i32
    %c0_i32_0 = arith.constant 0 : i32
    %c0_i32_1 = arith.constant 0 : i32
    %c0_i32_2 = arith.constant 0 : i32
    return %c0_i32, %c0_i32_0, %c0_i32_1 : i32, i32, i32
  }
  func.func @transform_5(%arg0: i32) -> (i32, i32, i32, i32) {
    %c0_i32 = arith.constant 0 : i32
    %c0_i32_0 = arith.constant 0 : i32
    %c0_i32_1 = arith.constant 0 : i32
    %c0_i32_2 = arith.constant 0 : i32
    %c0_i32_3 = arith.constant 0 : i32
    return %c0_i32, %c0_i32_0, %c0_i32_1, %c0_i32_2 : i32, i32, i32, i32
  }
  func.func @transform_6(%arg0: i32) -> (i32, i32, i32) {
    %c0_i32 = arith.constant 0 : i32
    %c0_i32_0 = arith.constant 0 : i32
    %c0_i32_1 = arith.constant 0 : i32
    %c0_i32_2 = arith.constant 0 : i32
    return %c0_i32, %c0_i32_0, %c0_i32_1 : i32, i32, i32
  }
  func.func @transform_7(%arg0: i32) -> (i32, i32, i32) {
    %c0_i32 = arith.constant 0 : i32
    %c0_i32_0 = arith.constant 0 : i32
    %c0_i32_1 = arith.constant 0 : i32
    %c0_i32_2 = arith.constant 0 : i32
    return %c0_i32, %c0_i32_0, %c0_i32_1 : i32, i32, i32
  }
  func.func @transform_8(%arg0: i32) -> (i32, i32) {
    %c0_i32 = arith.constant 0 : i32
    %c0_i32_0 = arith.constant 0 : i32
    %c0_i32_1 = arith.constant 0 : i32
    return %c0_i32, %c0_i32_0 : i32, i32
  }
  func.func @transform_9(%arg0: i32) -> (i32, i32) {
    %c0_i32 = arith.constant 0 : i32
    %c0_i32_0 = arith.constant 0 : i32
    %c0_i32_1 = arith.constant 0 : i32
    return %c0_i32, %c0_i32_0 : i32, i32
  }
  func.func @transform_10(%arg0: i32) -> (i32, i32, i32) {
    %c0_i32 = arith.constant 0 : i32
    %c0_i32_0 = arith.constant 0 : i32
    %c0_i32_1 = arith.constant 0 : i32
    return %arg0, %c0_i32, %c0_i32_0 : i32, i32, i32
  }
}

</mosaic_0001>

<llo_original>
// kernel: encoder_decoder_forward.1
$region0: #{encoder_decoder_forward.1}
  #allocation0 [shape = 'u32[]', space=smem, size = 0x4, offset = 0x4, fixed_abs, tag = 'smem constant byte address 0x4 - core index']
  #allocation1 [shape = 'u32[72,128]{1,0:T(1,128)}', space=vmem, size = 0x9000, scoped, tag = 'internal scratch']
  %s0 = inlined_call_operand.vmem [shape: f32[2,8,32], index: 0, kind: input, shape index: {}]
  %s1 = inlined_call_operand.vmem [shape: f32[2,8,32], index: 1, kind: input, shape index: {}]
  %s2 = inlined_call_operand.vmem [shape: f32[2,1,8], index: 2, kind: input, shape index: {}]
  %s3 = inlined_call_operand.vmem [shape: f32[2,8,8], index: 3, kind: input, shape index: {}]
  %s4 = inlined_call_operand.vmem [shape: f32[6,32,96], index: 4, kind: input, shape index: {}]
  %s5 = inlined_call_operand.vmem [shape: f32[6,4,8,32], index: 5, kind: input, shape index: {}]
  %s6 = inlined_call_operand.vmem [shape: f32[4,32,64], index: 6, kind: input, shape index: {}]
  %s7 = inlined_call_operand.vmem [shape: f32[4,64,32], index: 7, kind: input, shape index: {}]
  %s8 = inlined_call_operand.vmem [shape: f32[32,128], index: 8, kind: input, shape index: {}]
  %s9 = inlined_call_operand.vmem [shape: f32[45,128], index: 9, kind: input, shape index: {}]
  %s10 = inlined_call_operand.hbm [shape: f32[2,8,128], index: 10, kind: output, shape index: {}]
  %s11 = sld [smem:[#allocation0]]
  $region50: #{encoder_decoder_forward.1} parent=0
    _
  %s13 = ssub.s32 1, %s11
  %s14 = scalar_select 0, %s13, %s11
  $region1: #{encoder_decoder_forward.1} parent=0
    #allocation2 [shape = 'u8[8192]{0}', space=vmem, size = 0x2000, scoped, tag = 'output window, operand 0, single buffered']
    #allocation3 [shape = 's32[1]{0}', space=sflag, size = 0x4, scoped, tag = 'scoped memory for encoder_decoder_forward.1']
    %15 = vsyncpa [#allocation3], 0
    // Predicated region
    $region2: #{encoder_decoder_forward.1} parent=1 // pred_check
      _
    $region3: #{encoder_decoder_forward.1} parent=1 // pred_check_branch
      %17 = sbr.rel (0) target = $region5
    $region4: #{encoder_decoder_forward.1} parent=1 // pred_region
      _
    $region5: #{encoder_decoder_forward.1} parent=1 // pred_fallthru
      _
    // Predicated region
    $region6: #{encoder_decoder_forward.1} parent=1 // pred_check
      _
    $region7: #{encoder_decoder_forward.1} parent=1 // pred_check_branch
      %19 = sbr.rel (0) target = $region9
    $region8: #{encoder_decoder_forward.1} parent=1 // pred_region
      _
    $region9: #{encoder_decoder_forward.1} parent=1 // pred_fallthru
      _
    // Predicated region
    $region10: #{encoder_decoder_forward.1} parent=1 // pred_check
      _
    $region11: #{encoder_decoder_forward.1} parent=1 // pred_check_branch
      %21 = sbr.rel (0) target = $region13
    $region12: #{encoder_decoder_forward.1} parent=1 // pred_region
      _
    $region13: #{encoder_decoder_forward.1} parent=1 // pred_fallthru
      _
    // Predicated region
    $region14: #{encoder_decoder_forward.1} parent=1 // pred_check
      _
    $region15: #{encoder_decoder_forward.1} parent=1 // pred_check_branch
      %23 = sbr.rel (0) target = $region17
    $region16: #{encoder_decoder_forward.1} parent=1 // pred_region
      _
    $region17: #{encoder_decoder_forward.1} parent=1 // pred_fallthru
      _
    // Predicated region
    $region18: #{encoder_decoder_forward.1} parent=1 // pred_check
      _
    $region19: #{encoder_decoder_forward.1} parent=1 // pred_check_branch
      %25 = sbr.rel (0) target = $region21
    $region20: #{encoder_decoder_forward.1} parent=1 // pred_region
      _
    $region21: #{encoder_decoder_forward.1} parent=1 // pred_fallthru
      _
    // Predicated region
    $region22: #{encoder_decoder_forward.1} parent=1 // pred_check
      _
    $region23: #{encoder_decoder_forward.1} parent=1 // pred_check_branch
      %27 = sbr.rel (0) target = $region25
    $region24: #{encoder_decoder_forward.1} parent=1 // pred_region
      _
    $region25: #{encoder_decoder_forward.1} parent=1 // pred_fallthru
      _
    // Predicated region
    $region26: #{encoder_decoder_forward.1} parent=1 // pred_check
      _
    $region27: #{encoder_decoder_forward.1} parent=1 // pred_check_branch
      %29 = sbr.rel (0) target = $region29
    $region28: #{encoder_decoder_forward.1} parent=1 // pred_region
      _
    $region29: #{encoder_decoder_forward.1} parent=1 // pred_fallthru
      _
    // Predicated region
    $region30: #{encoder_decoder_forward.1} parent=1 // pred_check
      _
    $region31: #{encoder_decoder_forward.1} parent=1 // pred_check_branch
      %31 = sbr.rel (0) target = $region33
    $region32: #{encoder_decoder_forward.1} parent=1 // pred_region
      _
    $region33: #{encoder_decoder_forward.1} parent=1 // pred_fallthru
      _
    // Predicated region
    $region34: #{encoder_decoder_forward.1} parent=1 // pred_check
      _
    $region35: #{encoder_decoder_forward.1} parent=1 // pred_check_branch
      %33 = sbr.rel (0) target = $region37
    $region36: #{encoder_decoder_forward.1} parent=1 // pred_region
      _
    $region37: #{encoder_decoder_forward.1} parent=1 // pred_fallthru
      _
    // Predicated region
    $region38: #{encoder_decoder_forward.1} parent=1 // pred_check
      _
    $region39: #{encoder_decoder_forward.1} parent=1 // pred_check_branch
      %35 = sbr.rel (0) target = $region41
    $region40: #{encoder_decoder_forward.1} parent=1 // pred_region
      _
    $region41: #{encoder_decoder_forward.1} parent=1 // pred_fallthru
      _
    %v36 = vld [vmem:[%s8] sm:$0xff]
    %v37 = vld [vmem:[%s8 + $0x8] sm:$0xff]
    %v38 = vld [vmem:[%s8 + $0x10] sm:$0xff]
    %v39 = vld [vmem:[%s8 + $0x18] sm:$0xff]
    %v40 = vld [vmem:[%s9 + $0x2c] sm:$0x1]
    %v41 = vld [vmem:[%s2] sm:$0x1]
    %v42 = vld [vmem:[%s3] sm:$0xff]
    %v43 = vld [vmem:[%s0] sm:$0xff]
    %v44 = vld [vmem:[%s9] sm:$0x1]
    %v45 = vld [vmem:[%s9 + $0x1] sm:$0x1]
    %vm46 = vcmask 261120
    %v47 = vsel %vm46, %v43, 0.0
    %48 = vadd.xlane.f32.xlu0 %v47
    %v49 = vpop.xlane.xlu0 %48
    %v50 = vrcp.pop 32.0
    %v51 = vmul.f32 32.0, %v50
    %v52 = vsub.f32 1.0, %v51
    %v53 = vmul.f32 %v50, %v52
    %v54 = vadd.f32 %v50, %v53
    %vm55 = vweird.f32 %v50
    %v56 = vsel %vm55, %v50, %v54
    %v57 = vmul.f32 %v49, %v56
    %v58 = vsub.f32 %v43, %v57
    %v59 = vmul.f32 %v58, %v58
    %v60 = vsel %vm46, %v59, 0.0
    %61 = vadd.xlane.f32.xlu0 %v60
    %v62 = vpop.xlane.xlu0 %61
    %v63 = vmul.f32 %v62, 0.032258064
    %v64 = vrsqrt.pop %v63
    %v65 = vmul.f32 %v64, %v63
    %v66 = vmul.f32 %v65, %v64
    %v67 = vmul.f32 0.5, %v66
    %v68 = vsub.f32 1.5, %v67
    %v69 = vmul.f32 %v64, %v68
    %v70 = vmul.f32 %v63, %v69
    %vm71 = vcmp.eq.f32.partialorder %v63, inf
    %v72 = vsel %vm71, %v63, %v70
    %vm73 = vcmp.eq.f32.partialorder %v63, 0.0
    %v74 = vand.u32 %v63, 2147483648
    %v75 = vsel %vm73, %v74, %v72
    %v76 = vadd.f32 %v75, 1e-06
    %v77 = vrcp.pop %v76
    %v78 = vmul.f32 %v58, %v77
    %v79 = vperm.slane %v44, 0
    %v80 = vmul.f32 %v79, %v78
    %v81 = vperm.slane %v45, 0
    %v82 = vadd.f32 %v80, %v81
    %v83 = vld [vmem:[%s4] sm:$0xff]
    %v84 = vld [vmem:[%s4 + $0x8] sm:$0xff]
    %v85 = vld [vmem:[%s4 + $0x10] sm:$0xff]
    %v86 = vld [vmem:[%s4 + $0x18] sm:$0xff]
    %v87 = vld [vmem:[%s9 + $0x2] sm:$0x1]
    %v88 = vld [vmem:[%s5] sm:$0xff]
    %v89 = vld [vmem:[%s5 + $0x8] sm:$0xff]
    %v90 = vld [vmem:[%s5 + $0x10] sm:$0xff]
    %v91 = vld [vmem:[%s5 + $0x18] sm:$0xff]
    %v92 = vld [vmem:[%s9 + $0x3] sm:$0x1]
    %v93 = vperm.slane %v87, 0
    %v95 = vsel %vm46, %v82, 0
    %97 = vmatpush.msra.mxu0 0.0
    %98 = vmatpush.msra.mxu0 0.0
    %99 = vmatpush.msra.mxu0 0.0
    %100 = vmatpush.msra.mxu0 0.0
    %101 = vmatpush.msra.mxu0 0.0
    %102 = vmatpush.msra.mxu0 0.0
    %103 = vmatpush.msra.mxu0 0.0
    %104 = vmatpush.msra.mxu0 0.0
    %105 = vmatpush.msra.mxu0 0.0
    %106 = vmatpush.msra.mxu0 0.0
    %107 = vmatpush.msra.mxu0 0.0
    %108 = vmatpush.msra.mxu0 0.0
    %109 = vmatpush.msra.mxu0 %v86
    %110 = vmatpush.msra.mxu0 %v85
    %111 = vmatpush.msra.mxu0 %v84
    %112 = vmatpush.msra.mxu0 %v83
    %113 = vmatmul.f32.gmra.mxu0 %v95
    %v114 = vpop.f32.mrf.mxu0
    %v115 = vadd.f32 %v93, %v114
    %116 = vdwg.mxu0
    %v117 = vmul.f32 %v115, 0.35355338
    %119 = vrot.lane.b32.xlu0 %v117, 120
    %v120 = vpop.permute.xlu0 %119
    %121 = vrot.lane.b32.xlu0 %v117, 112
    %v122 = vpop.permute.xlu0 %121
    %123 = vrot.lane.b32.xlu0 %v117, 104
    %v124 = vpop.permute.xlu0 %123
    %126 = vrot.lane.b32.xlu0 %v115, 120
    %v127 = vpop.permute.xlu0 %126
    %128 = vrot.lane.b32.xlu0 %v115, 112
    %v129 = vpop.permute.xlu0 %128
    %130 = vrot.lane.b32.xlu0 %v115, 104
    %v131 = vpop.permute.xlu0 %130
    %v133 = vperm.slane %v41, 0
    %135 = vrot.lane.b32.xlu0 %v115, 96
    %v136 = vpop.permute.xlu0 %135
    %vm137 = vcmask 64512
    %v138 = vsel %vm137, %v117, 0
    %v140 = vsel %vm137, %v136, 0
    %142 = vmatpush.xpose.msra.mxu0 0.0
    %143 = vmatpush.xpose.msra.mxu0 0.0
    %144 = vmatpush.xpose.msra.mxu0 0.0
    %145 = vmatpush.xpose.msra.mxu0 0.0
    %146 = vmatpush.xpose.msra.mxu0 0.0
    %147 = vmatpush.xpose.msra.mxu0 0.0
    %148 = vmatpush.xpose.msra.mxu0 0.0
    %149 = vmatpush.xpose.msra.mxu0 0.0
    %150 = vmatpush.xpose.msra.mxu0 0.0
    %151 = vmatpush.xpose.msra.mxu0 0.0
    %152 = vmatpush.xpose.msra.mxu0 0.0
    %153 = vmatpush.xpose.msra.mxu0 0.0
    %154 = vmatpush.xpose.msra.mxu0 0.0
    %155 = vmatpush.xpose.msra.mxu0 0.0
    %156 = vmatpush.xpose.msra.mxu0 0.0
    %157 = vmatpush.xpose.msra.mxu0 %v140
    %158 = vmatmul.f32.gmra.mxu0 %v138
    %v159 = vpop.f32.mrf.mxu0
    %v160 = vadd.f32 %v133, %v159
    %161 = vdwg.mxu0
    %162 = vrot.lane.b32.xlu0 %v127, 96
    %v163 = vpop.permute.xlu0 %162
    %v164 = vsel %vm137, %v120, 0
    %v166 = vsel %vm137, %v163, 0
    %168 = vmatpush.xpose.msra.mxu0 0.0
    %169 = vmatpush.xpose.msra.mxu0 0.0
    %170 = vmatpush.xpose.msra.mxu0 0.0
    %171 = vmatpush.xpose.msra.mxu0 0.0
    %172 = vmatpush.xpose.msra.mxu0 0.0
    %173 = vmatpush.xpose.msra.mxu0 0.0
    %174 = vmatpush.xpose.msra.mxu0 0.0
    %175 = vmatpush.xpose.msra.mxu0 0.0
    %176 = vmatpush.xpose.msra.mxu0 0.0
    %177 = vmatpush.xpose.msra.mxu0 0.0
    %178 = vmatpush.xpose.msra.mxu0 0.0
    %179 = vmatpush.xpose.msra.mxu0 0.0
    %180 = vmatpush.xpose.msra.mxu0 0.0
    %181 = vmatpush.xpose.msra.mxu0 0.0
    %182 = vmatpush.xpose.msra.mxu0 0.0
    %183 = vmatpush.xpose.msra.mxu0 %v166
    %184 = vmatmul.f32.gmra.mxu0 %v164
    %v185 = vpop.f32.mrf.mxu0
    %v186 = vadd.f32 %v133, %v185
    %187 = vdwg.mxu0
    %188 = vrot.lane.b32.xlu0 %v129, 96
    %v189 = vpop.permute.xlu0 %188
    %v190 = vsel %vm137, %v122, 0
    %v192 = vsel %vm137, %v189, 0
    %194 = vmatpush.xpose.msra.mxu0 0.0
    %195 = vmatpush.xpose.msra.mxu0 0.0
    %196 = vmatpush.xpose.msra.mxu0 0.0
    %197 = vmatpush.xpose.msra.mxu0 0.0
    %198 = vmatpush.xpose.msra.mxu0 0.0
    %199 = vmatpush.xpose.msra.mxu0 0.0
    %200 = vmatpush.xpose.msra.mxu0 0.0
    %201 = vmatpush.xpose.msra.mxu0 0.0
    %202 = vmatpush.xpose.msra.mxu0 0.0
    %203 = vmatpush.xpose.msra.mxu0 0.0
    %204 = vmatpush.xpose.msra.mxu0 0.0
    %205 = vmatpush.xpose.msra.mxu0 0.0
    %206 = vmatpush.xpose.msra.mxu0 0.0
    %207 = vmatpush.xpose.msra.mxu0 0.0
    %208 = vmatpush.xpose.msra.mxu0 0.0
    %209 = vmatpush.xpose.msra.mxu0 %v192
    %210 = vmatmul.f32.gmra.mxu0 %v190
    %v211 = vpop.f32.mrf.mxu0
    %v212 = vadd.f32 %v133, %v211
    %213 = vdwg.mxu0
    %214 = vrot.lane.b32.xlu0 %v131, 96
    %v215 = vpop.permute.xlu0 %214
    %v216 = vsel %vm137, %v124, 0
    %v218 = vsel %vm137, %v215, 0
    %220 = vmatpush.xpose.msra.mxu0 0.0
    %221 = vmatpush.xpose.msra.mxu0 0.0
    %222 = vmatpush.xpose.msra.mxu0 0.0
    %223 = vmatpush.xpose.msra.mxu0 0.0
    %224 = vmatpush.xpose.msra.mxu0 0.0
    %225 = vmatpush.xpose.msra.mxu0 0.0
    %226 = vmatpush.xpose.msra.mxu0 0.0
    %227 = vmatpush.xpose.msra.mxu0 0.0
    %228 = vmatpush.xpose.msra.mxu0 0.0
    %229 = vmatpush.xpose.msra.mxu0 0.0
    %230 = vmatpush.xpose.msra.mxu0 0.0
    %231 = vmatpush.xpose.msra.mxu0 0.0
    %232 = vmatpush.xpose.msra.mxu0 0.0
    %233 = vmatpush.xpose.msra.mxu0 0.0
    %234 = vmatpush.xpose.msra.mxu0 0.0
    %235 = vmatpush.xpose.msra.mxu0 %v218
    %236 = vmatmul.f32.gmra.mxu0 %v216
    %v237 = vpop.f32.mrf.mxu0
    %v238 = vadd.f32 %v133, %v237
    %239 = vdwg.mxu0
    %v240 = vsel %vm137, %v160, -inf
    %241 = vmax.xlane.f32.xlu0 %v240
    %v242 = vpop.xlane.xlu0 %241
    %v243 = vsel %vm137, %v186, -inf
    %244 = vmax.xlane.f32.xlu0 %v243
    %v245 = vpop.xlane.xlu0 %244
    %v246 = vsel %vm137, %v212, -inf
    %247 = vmax.xlane.f32.xlu0 %v246
    %v248 = vpop.xlane.xlu0 %247
    %v249 = vsel %vm137, %v238, -inf
    %250 = vmax.xlane.f32.xlu0 %v249
    %v251 = vpop.xlane.xlu0 %250
    %v252 = vsub.f32 %v160, %v242
    %v253 = vsub.f32 %v186, %v245
    %v254 = vsub.f32 %v212, %v248
    %v255 = vsub.f32 %v238, %v251
    %v256 = vmul.f32 %v252, 1.442695
    %v257 = vpow.pop %v256
    %v258 = vmul.f32 %v253, 1.442695
    %v259 = vpow.pop %v258
    %v260 = vmul.f32 %v254, 1.442695
    %v261 = vpow.pop %v260
    %v262 = vmul.f32 %v255, 1.442695
    %v263 = vpow.pop %v262
    %v264 = vsel %vm137, %v257, 0.0
    %265 = vadd.xlane.f32.xlu0 %v264
    %v266 = vpop.xlane.xlu0 %265
    %v267 = vsel %vm137, %v259, 0.0
    %268 = vadd.xlane.f32.xlu0 %v267
    %v269 = vpop.xlane.xlu0 %268
    %v270 = vsel %vm137, %v261, 0.0
    %271 = vadd.xlane.f32.xlu0 %v270
    %v272 = vpop.xlane.xlu0 %271
    %v273 = vsel %vm137, %v263, 0.0
    %274 = vadd.xlane.f32.xlu0 %v273
    %v275 = vpop.xlane.xlu0 %274
    %v276 = vrcp.pop %v266
    %v277 = vrcp.pop %v269
    %v278 = vrcp.pop %v272
    %v279 = vrcp.pop %v275
    %v280 = vmul.f32 %v257, %v276
    %v281 = vmul.f32 %v259, %v277
    %v282 = vmul.f32 %v261, %v278
    %v283 = vmul.f32 %v263, %v279
    %284 = vrot.lane.b32.xlu0 %v115, 64
    %v285 = vpop.permute.xlu0 %284
    %v288 = vsel %vm137, %v280, 0
    %290 = vmatpush.msra.mxu0 0.0
    %291 = vmatpush.msra.mxu0 0.0
    %292 = vmatpush.msra.mxu0 0.0
    %293 = vmatpush.msra.mxu0 0.0
    %294 = vmatpush.msra.mxu0 0.0
    %295 = vmatpush.msra.mxu0 0.0
    %296 = vmatpush.msra.mxu0 0.0
    %297 = vmatpush.msra.mxu0 0.0
    %298 = vmatpush.msra.mxu0 0.0
    %299 = vmatpush.msra.mxu0 0.0
    %300 = vmatpush.msra.mxu0 0.0
    %301 = vmatpush.msra.mxu0 0.0
    %302 = vmatpush.msra.mxu0 0.0
    %303 = vmatpush.msra.mxu0 0.0
    %304 = vmatpush.msra.mxu0 0.0
    %305 = vmatpush.msra.mxu0 %v285
    %306 = vmatmul.f32.gmra.mxu0 %v288
    %v307 = vpop.f32.mrf.mxu0
    %v308 = vadd.f32 0.0, %v307
    %309 = vdwg.mxu0
    %310 = vrot.lane.b32.xlu0 %v127, 64
    %v311 = vpop.permute.xlu0 %310
    %v314 = vsel %vm137, %v281, 0
    %316 = vmatpush.msra.mxu0 0.0
    %317 = vmatpush.msra.mxu0 0.0
    %318 = vmatpush.msra.mxu0 0.0
    %319 = vmatpush.msra.mxu0 0.0
    %320 = vmatpush.msra.mxu0 0.0
    %321 = vmatpush.msra.mxu0 0.0
    %322 = vmatpush.msra.mxu0 0.0
    %323 = vmatpush.msra.mxu0 0.0
    %324 = vmatpush.msra.mxu0 0.0
    %325 = vmatpush.msra.mxu0 0.0
    %326 = vmatpush.msra.mxu0 0.0
    %327 = vmatpush.msra.mxu0 0.0
    %328 = vmatpush.msra.mxu0 0.0
    %329 = vmatpush.msra.mxu0 0.0
    %330 = vmatpush.msra.mxu0 0.0
    %331 = vmatpush.msra.mxu0 %v311
    %332 = vmatmul.f32.gmra.mxu0 %v314
    %v333 = vpop.f32.mrf.mxu0
    %v334 = vadd.f32 0.0, %v333
    %335 = vdwg.mxu0
    %336 = vrot.lane.b32.xlu0 %v129, 64
    %v337 = vpop.permute.xlu0 %336
    %v340 = vsel %vm137, %v282, 0
    %342 = vmatpush.msra.mxu0 0.0
    %343 = vmatpush.msra.mxu0 0.0
    %344 = vmatpush.msra.mxu0 0.0
    %345 = vmatpush.msra.mxu0 0.0
    %346 = vmatpush.msra.mxu0 0.0
    %347 = vmatpush.msra.mxu0 0.0
    %348 = vmatpush.msra.mxu0 0.0
    %349 = vmatpush.msra.mxu0 0.0
    %350 = vmatpush.msra.mxu0 0.0
    %351 = vmatpush.msra.mxu0 0.0
    %352 = vmatpush.msra.mxu0 0.0
    %353 = vmatpush.msra.mxu0 0.0
    %354 = vmatpush.msra.mxu0 0.0
    %355 = vmatpush.msra.mxu0 0.0
    %356 = vmatpush.msra.mxu0 0.0
    %357 = vmatpush.msra.mxu0 %v337
    %358 = vmatmul.f32.gmra.mxu0 %v340
    %v359 = vpop.f32.mrf.mxu0
    %v360 = vadd.f32 0.0, %v359
    %361 = vdwg.mxu0
    %362 = vrot.lane.b32.xlu0 %v131, 64
    %v363 = vpop.permute.xlu0 %362
    %v366 = vsel %vm137, %v283, 0
    %368 = vmatpush.msra.mxu0 0.0
    %369 = vmatpush.msra.mxu0 0.0
    %370 = vmatpush.msra.mxu0 0.0
    %371 = vmatpush.msra.mxu0 0.0
    %372 = vmatpush.msra.mxu0 0.0
    %373 = vmatpush.msra.mxu0 0.0
    %374 = vmatpush.msra.mxu0 0.0
    %375 = vmatpush.msra.mxu0 0.0
    %376 = vmatpush.msra.mxu0 0.0
    %377 = vmatpush.msra.mxu0 0.0
    %378 = vmatpush.msra.mxu0 0.0
    %379 = vmatpush.msra.mxu0 0.0
    %380 = vmatpush.msra.mxu0 0.0
    %381 = vmatpush.msra.mxu0 0.0
    %382 = vmatpush.msra.mxu0 0.0
    %383 = vmatpush.msra.mxu0 %v363
    %384 = vmatmul.f32.gmra.mxu0 %v366
    %v385 = vpop.f32.mrf.mxu0
    %v386 = vadd.f32 0.0, %v385
    %387 = vdwg.mxu0
    %v389 = vsel %vm137, %v308, 0
    %391 = vmatpush.msra.mxu0 0.0
    %392 = vmatpush.msra.mxu0 0.0
    %393 = vmatpush.msra.mxu0 0.0
    %394 = vmatpush.msra.mxu0 0.0
    %395 = vmatpush.msra.mxu0 0.0
    %396 = vmatpush.msra.mxu0 0.0
    %397 = vmatpush.msra.mxu0 0.0
    %398 = vmatpush.msra.mxu0 0.0
    %399 = vmatpush.msra.mxu0 0.0
    %400 = vmatpush.msra.mxu0 0.0
    %401 = vmatpush.msra.mxu0 0.0
    %402 = vmatpush.msra.mxu0 0.0
    %403 = vmatpush.msra.mxu0 0.0
    %404 = vmatpush.msra.mxu0 0.0
    %405 = vmatpush.msra.mxu0 0.0
    %406 = vmatpush.msra.mxu0 %v88
    %407 = vmatmul.f32.gmra.mxu0 %v389
    %v408 = vpop.f32.mrf.mxu0
    %v409 = vadd.f32 0.0, %v408
    %410 = vdwg.mxu0
    %v412 = vsel %vm137, %v334, 0
    %414 = vmatpush.msra.mxu0 0.0
    %415 = vmatpush.msra.mxu0 0.0
    %416 = vmatpush.msra.mxu0 0.0
    %417 = vmatpush.msra.mxu0 0.0
    %418 = vmatpush.msra.mxu0 0.0
    %419 = vmatpush.msra.mxu0 0.0
    %420 = vmatpush.msra.mxu0 0.0
    %421 = vmatpush.msra.mxu0 0.0
    %422 = vmatpush.msra.mxu0 0.0
    %423 = vmatpush.msra.mxu0 0.0
    %424 = vmatpush.msra.mxu0 0.0
    %425 = vmatpush.msra.mxu0 0.0
    %426 = vmatpush.msra.mxu0 0.0
    %427 = vmatpush.msra.mxu0 0.0
    %428 = vmatpush.msra.mxu0 0.0
    %429 = vmatpush.msra.mxu0 %v89
    %430 = vmatmul.f32.gmra.mxu0 %v412
    %v431 = vpop.f32.mrf.mxu0
    %v432 = vadd.f32 0.0, %v431
    %433 = vdwg.mxu0
    %v435 = vsel %vm137, %v360, 0
    %437 = vmatpush.msra.mxu0 0.0
    %438 = vmatpush.msra.mxu0 0.0
    %439 = vmatpush.msra.mxu0 0.0
    %440 = vmatpush.msra.mxu0 0.0
    %441 = vmatpush.msra.mxu0 0.0
    %442 = vmatpush.msra.mxu0 0.0
    %443 = vmatpush.msra.mxu0 0.0
    %444 = vmatpush.msra.mxu0 0.0
    %445 = vmatpush.msra.mxu0 0.0
    %446 = vmatpush.msra.mxu0 0.0
    %447 = vmatpush.msra.mxu0 0.0
    %448 = vmatpush.msra.mxu0 0.0
    %449 = vmatpush.msra.mxu0 0.0
    %450 = vmatpush.msra.mxu0 0.0
    %451 = vmatpush.msra.mxu0 0.0
    %452 = vmatpush.msra.mxu0 %v90
    %453 = vmatmul.f32.gmra.mxu0 %v435
    %v454 = vpop.f32.mrf.mxu0
    %v455 = vadd.f32 0.0, %v454
    %456 = vdwg.mxu0
    %v458 = vsel %vm137, %v386, 0
    %460 = vmatpush.msra.mxu0 0.0
    %461 = vmatpush.msra.mxu0 0.0
    %462 = vmatpush.msra.mxu0 0.0
    %463 = vmatpush.msra.mxu0 0.0
    %464 = vmatpush.msra.mxu0 0.0
    %465 = vmatpush.msra.mxu0 0.0
    %466 = vmatpush.msra.mxu0 0.0
    %467 = vmatpush.msra.mxu0 0.0
    %468 = vmatpush.msra.mxu0 0.0
    %469 = vmatpush.msra.mxu0 0.0
    %470 = vmatpush.msra.mxu0 0.0
    %471 = vmatpush.msra.mxu0 0.0
    %472 = vmatpush.msra.mxu0 0.0
    %473 = vmatpush.msra.mxu0 0.0
    %474 = vmatpush.msra.mxu0 0.0
    %475 = vmatpush.msra.mxu0 %v91
    %476 = vmatmul.f32.gmra.mxu0 %v458
    %v477 = vpop.f32.mrf.mxu0
    %v478 = vadd.f32 0.0, %v477
    %479 = vdwg.mxu0
    %v480 = vsel %vm46, %v409, 0.0
    %v481 = vsel %vm46, %v432, 0.0
    %v482 = vadd.f32 %v480, %v481
    %v483 = vsel %vm46, %v455, 0.0
    %v484 = vadd.f32 %v482, %v483
    %v485 = vsel %vm46, %v478, 0.0
    %v486 = vadd.f32 %v484, %v485
    %v487 = vperm.slane %v92, 0
    %v488 = vadd.f32 %v486, %v487
    %v489 = vadd.f32 %v43, %v488
    %v490 = vld [vmem:[%s9 + $0x4] sm:$0x1]
    %v491 = vld [vmem:[%s9 + $0x5] sm:$0x1]
    %v492 = vsel %vm46, %v489, 0.0
    %493 = vadd.xlane.f32.xlu0 %v492
    %v494 = vpop.xlane.xlu0 %493
    %v495 = vmul.f32 %v494, %v56
    %v496 = vsub.f32 %v489, %v495
    %v497 = vmul.f32 %v496, %v496
    %v498 = vsel %vm46, %v497, 0.0
    %499 = vadd.xlane.f32.xlu0 %v498
    %v500 = vpop.xlane.xlu0 %499
    %v501 = vmul.f32 %v500, 0.032258064
    %v502 = vrsqrt.pop %v501
    %v503 = vmul.f32 %v502, %v501
    %v504 = vmul.f32 %v503, %v502
    %v505 = vmul.f32 0.5, %v504
    %v506 = vsub.f32 1.5, %v505
    %v507 = vmul.f32 %v502, %v506
    %v508 = vmul.f32 %v501, %v507
    %vm509 = vcmp.eq.f32.partialorder %v501, inf
    %v510 = vsel %vm509, %v501, %v508
    %vm511 = vcmp.eq.f32.partialorder %v501, 0.0
    %v512 = vand.u32 %v501, 2147483648
    %v513 = vsel %vm511, %v512, %v510
    %v514 = vadd.f32 %v513, 1e-06
    %v515 = vrcp.pop %v514
    %v516 = vmul.f32 %v496, %v515
    %v517 = vperm.slane %v490, 0
    %v518 = vmul.f32 %v517, %v516
    %v519 = vperm.slane %v491, 0
    %v520 = vadd.f32 %v518, %v519
    %v521 = vld [vmem:[%s6] sm:$0xff]
    %v522 = vld [vmem:[%s6 + $0x8] sm:$0xff]
    %v523 = vld [vmem:[%s6 + $0x10] sm:$0xff]
    %v524 = vld [vmem:[%s6 + $0x18] sm:$0xff]
    %v525 = vld [vmem:[%s9 + $0x6] sm:$0x1]
    %v526 = vld [vmem:[%s7] sm:$0xff]
    %v527 = vld [vmem:[%s7 + $0x8] sm:$0xff]
    %v528 = vld [vmem:[%s7 + $0x10] sm:$0xff]
    %v529 = vld [vmem:[%s7 + $0x18] sm:$0xff]
    %v530 = vld [vmem:[%s7 + $0x20] sm:$0xff]
    %v531 = vld [vmem:[%s7 + $0x28] sm:$0xff]
    %v532 = vld [vmem:[%s7 + $0x30] sm:$0xff]
    %v533 = vld [vmem:[%s7 + $0x38] sm:$0xff]
    %v534 = vld [vmem:[%s9 + $0x7] sm:$0x1]
    %v535 = vperm.slane %v525, 0
    %v537 = vsel %vm46, %v520, 0
    %539 = vmatpush.msra.mxu0 0.0
    %540 = vmatpush.msra.mxu0 0.0
    %541 = vmatpush.msra.mxu0 0.0
    %542 = vmatpush.msra.mxu0 0.0
    %543 = vmatpush.msra.mxu0 0.0
    %544 = vmatpush.msra.mxu0 0.0
    %545 = vmatpush.msra.mxu0 0.0
    %546 = vmatpush.msra.mxu0 0.0
    %547 = vmatpush.msra.mxu0 0.0
    %548 = vmatpush.msra.mxu0 0.0
    %549 = vmatpush.msra.mxu0 0.0
    %550 = vmatpush.msra.mxu0 0.0
    %551 = vmatpush.msra.mxu0 %v524
    %552 = vmatpush.msra.mxu0 %v523
    %553 = vmatpush.msra.mxu0 %v522
    %554 = vmatpush.msra.mxu0 %v521
    %555 = vmatmul.f32.gmra.mxu0 %v537
    %v556 = vpop.f32.mrf.mxu0
    %v557 = vadd.f32 %v535, %v556
    %558 = vdwg.mxu0
    %v559 = vmax.f32 %v557, 0.0
    %v560 = vperm.slane %v534, 0
    %vm561 = vcmask 523264
    %v563 = vsel %vm561, %v559, 0
    %565 = vmatpush.msra.mxu0 0.0
    %566 = vmatpush.msra.mxu0 0.0
    %567 = vmatpush.msra.mxu0 0.0
    %568 = vmatpush.msra.mxu0 0.0
    %569 = vmatpush.msra.mxu0 0.0
    %570 = vmatpush.msra.mxu0 0.0
    %571 = vmatpush.msra.mxu0 0.0
    %572 = vmatpush.msra.mxu0 0.0
    %573 = vmatpush.msra.mxu0 %v533
    %574 = vmatpush.msra.mxu0 %v532
    %575 = vmatpush.msra.mxu0 %v531
    %576 = vmatpush.msra.mxu0 %v530
    %577 = vmatpush.msra.mxu0 %v529
    %578 = vmatpush.msra.mxu0 %v528
    %579 = vmatpush.msra.mxu0 %v527
    %580 = vmatpush.msra.mxu0 %v526
    %581 = vmatmul.f32.gmra.mxu0 %v563
    %v582 = vpop.f32.mrf.mxu0
    %v583 = vadd.f32 %v560, %v582
    %584 = vdwg.mxu0
    %v585 = vadd.f32 %v489, %v583
    %v586 = vld [vmem:[%s9 + $0x8] sm:$0x1]
    %v587 = vld [vmem:[%s9 + $0x9] sm:$0x1]
    %v588 = vsel %vm46, %v585, 0.0
    %589 = vadd.xlane.f32.xlu0 %v588
    %v590 = vpop.xlane.xlu0 %589
    %v591 = vmul.f32 %v590, %v56
    %v592 = vsub.f32 %v585, %v591
    %v593 = vmul.f32 %v592, %v592
    %v594 = vsel %vm46, %v593, 0.0
    %595 = vadd.xlane.f32.xlu0 %v594
    %v596 = vpop.xlane.xlu0 %595
    %v597 = vmul.f32 %v596, 0.032258064
    %v598 = vrsqrt.pop %v597
    %v599 = vmul.f32 %v598, %v597
    %v600 = vmul.f32 %v599, %v598
    %v601 = vmul.f32 0.5, %v600
    %v602 = vsub.f32 1.5, %v601
    %v603 = vmul.f32 %v598, %v602
    %v604 = vmul.f32 %v597, %v603
    %vm605 = vcmp.eq.f32.partialorder %v597, inf
    %v606 = vsel %vm605, %v597, %v604
    %vm607 = vcmp.eq.f32.partialorder %v597, 0.0
    %v608 = vand.u32 %v597, 2147483648
    %v609 = vsel %vm607, %v608, %v606
    %v610 = vadd.f32 %v609, 1e-06
    %v611 = vrcp.pop %v610
    %v612 = vmul.f32 %v592, %v611
    %v613 = vperm.slane %v586, 0
    %v614 = vmul.f32 %v613, %v612
    %v615 = vperm.slane %v587, 0
    %v616 = vadd.f32 %v614, %v615
    %s617 = scalar_lea.vmem %s4, 32
    %v618 = vld [vmem:[%s617] sm:$0xff]
    %v619 = vld [vmem:[%s617 + $0x8] sm:$0xff]
    %v620 = vld [vmem:[%s617 + $0x10] sm:$0xff]
    %v621 = vld [vmem:[%s617 + $0x18] sm:$0xff]
    %v622 = vld [vmem:[%s9 + $0xa] sm:$0x1]
    %s623 = scalar_lea.vmem %s5, 32
    %v624 = vld [vmem:[%s623] sm:$0xff]
    %v625 = vld [vmem:[%s623 + $0x8] sm:$0xff]
    %v626 = vld [vmem:[%s623 + $0x10] sm:$0xff]
    %v627 = vld [vmem:[%s623 + $0x18] sm:$0xff]
    %v628 = vld [vmem:[%s9 + $0xb] sm:$0x1]
    %v629 = vperm.slane %v622, 0
    %v631 = vsel %vm46, %v616, 0
    %633 = vmatpush.msra.mxu0 0.0
    %634 = vmatpush.msra.mxu0 0.0
    %635 = vmatpush.msra.mxu0 0.0
    %636 = vmatpush.msra.mxu0 0.0
    %637 = vmatpush.msra.mxu0 0.0
    %638 = vmatpush.msra.mxu0 0.0
    %639 = vmatpush.msra.mxu0 0.0
    %640 = vmatpush.msra.mxu0 0.0
    %641 = vmatpush.msra.mxu0 0.0
    %642 = vmatpush.msra.mxu0 0.0
    %643 = vmatpush.msra.mxu0 0.0
    %644 = vmatpush.msra.mxu0 0.0
    %645 = vmatpush.msra.mxu0 %v621
    %646 = vmatpush.msra.mxu0 %v620
    %647 = vmatpush.msra.mxu0 %v619
    %648 = vmatpush.msra.mxu0 %v618
    %649 = vmatmul.f32.gmra.mxu0 %v631
    %v650 = vpop.f32.mrf.mxu0
    %v651 = vadd.f32 %v629, %v650
    %652 = vdwg.mxu0
    %v653 = vmul.f32 %v651, 0.35355338
    %655 = vrot.lane.b32.xlu0 %v653, 120
    %v656 = vpop.permute.xlu0 %655
    %657 = vrot.lane.b32.xlu0 %v653, 112
    %v658 = vpop.permute.xlu0 %657
    %659 = vrot.lane.b32.xlu0 %v653, 104
    %v660 = vpop.permute.xlu0 %659
    %662 = vrot.lane.b32.xlu0 %v651, 120
    %v663 = vpop.permute.xlu0 %662
    %664 = vrot.lane.b32.xlu0 %v651, 112
    %v665 = vpop.permute.xlu0 %664
    %666 = vrot.lane.b32.xlu0 %v651, 104
    %v667 = vpop.permute.xlu0 %666
    %668 = vrot.lane.b32.xlu0 %v651, 96
    %v669 = vpop.permute.xlu0 %668
    %v670 = vsel %vm137, %v653, 0
    %v672 = vsel %vm137, %v669, 0
    %674 = vmatpush.xpose.msra.mxu0 0.0
    %675 = vmatpush.xpose.msra.mxu0 0.0
    %676 = vmatpush.xpose.msra.mxu0 0.0
    %677 = vmatpush.xpose.msra.mxu0 0.0
    %678 = vmatpush.xpose.msra.mxu0 0.0
    %679 = vmatpush.xpose.msra.mxu0 0.0
    %680 = vmatpush.xpose.msra.mxu0 0.0
    %681 = vmatpush.xpose.msra.mxu0 0.0
    %682 = vmatpush.xpose.msra.mxu0 0.0
    %683 = vmatpush.xpose.msra.mxu0 0.0
    %684 = vmatpush.xpose.msra.mxu0 0.0
    %685 = vmatpush.xpose.msra.mxu0 0.0
    %686 = vmatpush.xpose.msra.mxu0 0.0
    %687 = vmatpush.xpose.msra.mxu0 0.0
    %688 = vmatpush.xpose.msra.mxu0 0.0
    %689 = vmatpush.xpose.msra.mxu0 %v672
    %690 = vmatmul.f32.gmra.mxu0 %v670
    %v691 = vpop.f32.mrf.mxu0
    %v692 = vadd.f32 %v133, %v691
    %693 = vdwg.mxu0
    %694 = vrot.lane.b32.xlu0 %v663, 96
    %v695 = vpop.permute.xlu0 %694
    %v696 = vsel %vm137, %v656, 0
    %v698 = vsel %vm137, %v695, 0
    %700 = vmatpush.xpose.msra.mxu0 0.0
    %701 = vmatpush.xpose.msra.mxu0 0.0
    %702 = vmatpush.xpose.msra.mxu0 0.0
    %703 = vmatpush.xpose.msra.mxu0 0.0
    %704 = vmatpush.xpose.msra.mxu0 0.0
    %705 = vmatpush.xpose.msra.mxu0 0.0
    %706 = vmatpush.xpose.msra.mxu0 0.0
    %707 = vmatpush.xpose.msra.mxu0 0.0
    %708 = vmatpush.xpose.msra.mxu0 0.0
    %709 = vmatpush.xpose.msra.mxu0 0.0
    %710 = vmatpush.xpose.msra.mxu0 0.0
    %711 = vmatpush.xpose.msra.mxu0 0.0
    %712 = vmatpush.xpose.msra.mxu0 0.0
    %713 = vmatpush.xpose.msra.mxu0 0.0
    %714 = vmatpush.xpose.msra.mxu0 0.0
    %715 = vmatpush.xpose.msra.mxu0 %v698
    %716 = vmatmul.f32.gmra.mxu0 %v696
    %v717 = vpop.f32.mrf.mxu0
    %v718 = vadd.f32 %v133, %v717
    %719 = vdwg.mxu0
    %720 = vrot.lane.b32.xlu0 %v665, 96
    %v721 = vpop.permute.xlu0 %720
    %v722 = vsel %vm137, %v658, 0
    %v724 = vsel %vm137, %v721, 0
    %726 = vmatpush.xpose.msra.mxu0 0.0
    %727 = vmatpush.xpose.msra.mxu0 0.0
    %728 = vmatpush.xpose.msra.mxu0 0.0
    %729 = vmatpush.xpose.msra.mxu0 0.0
    %730 = vmatpush.xpose.msra.mxu0 0.0
    %731 = vmatpush.xpose.msra.mxu0 0.0
    %732 = vmatpush.xpose.msra.mxu0 0.0
    %733 = vmatpush.xpose.msra.mxu0 0.0
    %734 = vmatpush.xpose.msra.mxu0 0.0
    %735 = vmatpush.xpose.msra.mxu0 0.0
    %736 = vmatpush.xpose.msra.mxu0 0.0
    %737 = vmatpush.xpose.msra.mxu0 0.0
    %738 = vmatpush.xpose.msra.mxu0 0.0
    %739 = vmatpush.xpose.msra.mxu0 0.0
    %740 = vmatpush.xpose.msra.mxu0 0.0
    %741 = vmatpush.xpose.msra.mxu0 %v724
    %742 = vmatmul.f32.gmra.mxu0 %v722
    %v743 = vpop.f32.mrf.mxu0
    %v744 = vadd.f32 %v133, %v743
    %745 = vdwg.mxu0
    %746 = vrot.lane.b32.xlu0 %v667, 96
    %v747 = vpop.permute.xlu0 %746
    %v748 = vsel %vm137, %v660, 0
    %v750 = vsel %vm137, %v747, 0
    %752 = vmatpush.xpose.msra.mxu0 0.0
    %753 = vmatpush.xpose.msra.mxu0 0.0
    %754 = vmatpush.xpose.msra.mxu0 0.0
    %755 = vmatpush.xpose.msra.mxu0 0.0
    %756 = vmatpush.xpose.msra.mxu0 0.0
    %757 = vmatpush.xpose.msra.mxu0 0.0
    %758 = vmatpush.xpose.msra.mxu0 0.0
    %759 = vmatpush.xpose.msra.mxu0 0.0
    %760 = vmatpush.xpose.msra.mxu0 0.0
    %761 = vmatpush.xpose.msra.mxu0 0.0
    %762 = vmatpush.xpose.msra.mxu0 0.0
    %763 = vmatpush.xpose.msra.mxu0 0.0
    %764 = vmatpush.xpose.msra.mxu0 0.0
    %765 = vmatpush.xpose.msra.mxu0 0.0
    %766 = vmatpush.xpose.msra.mxu0 0.0
    %767 = vmatpush.xpose.msra.mxu0 %v750
    %768 = vmatmul.f32.gmra.mxu0 %v748
    %v769 = vpop.f32.mrf.mxu0
    %v770 = vadd.f32 %v133, %v769
    %771 = vdwg.mxu0
    %v772 = vsel %vm137, %v692, -inf
    %773 = vmax.xlane.f32.xlu0 %v772
    %v774 = vpop.xlane.xlu0 %773
    %v775 = vsel %vm137, %v718, -inf
    %776 = vmax.xlane.f32.xlu0 %v775
    %v777 = vpop.xlane.xlu0 %776
    %v778 = vsel %vm137, %v744, -inf
    %779 = vmax.xlane.f32.xlu0 %v778
    %v780 = vpop.xlane.xlu0 %779
    %v781 = vsel %vm137, %v770, -inf
    %782 = vmax.xlane.f32.xlu0 %v781
    %v783 = vpop.xlane.xlu0 %782
    %v784 = vsub.f32 %v692, %v774
    %v785 = vsub.f32 %v718, %v777
    %v786 = vsub.f32 %v744, %v780
    %v787 = vsub.f32 %v770, %v783
    %v788 = vmul.f32 %v784, 1.442695
    %v789 = vpow.pop %v788
    %v790 = vmul.f32 %v785, 1.442695
    %v791 = vpow.pop %v790
    %v792 = vmul.f32 %v786, 1.442695
    %v793 = vpow.pop %v792
    %v794 = vmul.f32 %v787, 1.442695
    %v795 = vpow.pop %v794
    %v796 = vsel %vm137, %v789, 0.0
    %797 = vadd.xlane.f32.xlu0 %v796
    %v798 = vpop.xlane.xlu0 %797
    %v799 = vsel %vm137, %v791, 0.0
    %800 = vadd.xlane.f32.xlu0 %v799
    %v801 = vpop.xlane.xlu0 %800
    %v802 = vsel %vm137, %v793, 0.0
    %803 = vadd.xlane.f32.xlu0 %v802
    %v804 = vpop.xlane.xlu0 %803
    %v805 = vsel %vm137, %v795, 0.0
    %806 = vadd.xlane.f32.xlu0 %v805
    %v807 = vpop.xlane.xlu0 %806
    %v808 = vrcp.pop %v798
    %v809 = vrcp.pop %v801
    %v810 = vrcp.pop %v804
    %v811 = vrcp.pop %v807
    %v812 = vmul.f32 %v789, %v808
    %v813 = vmul.f32 %v791, %v809
    %v814 = vmul.f32 %v793, %v810
    %v815 = vmul.f32 %v795, %v811
    %816 = vrot.lane.b32.xlu0 %v651, 64
    %v817 = vpop.permute.xlu0 %816
    %v820 = vsel %vm137, %v812, 0
    %822 = vmatpush.msra.mxu0 0.0
    %823 = vmatpush.msra.mxu0 0.0
    %824 = vmatpush.msra.mxu0 0.0
    %825 = vmatpush.msra.mxu0 0.0
    %826 = vmatpush.msra.mxu0 0.0
    %827 = vmatpush.msra.mxu0 0.0
    %828 = vmatpush.msra.mxu0 0.0
    %829 = vmatpush.msra.mxu0 0.0
    %830 = vmatpush.msra.mxu0 0.0
    %831 = vmatpush.msra.mxu0 0.0
    %832 = vmatpush.msra.mxu0 0.0
    %833 = vmatpush.msra.mxu0 0.0
    %834 = vmatpush.msra.mxu0 0.0
    %835 = vmatpush.msra.mxu0 0.0
    %836 = vmatpush.msra.mxu0 0.0
    %837 = vmatpush.msra.mxu0 %v817
    %838 = vmatmul.f32.gmra.mxu0 %v820
    %v839 = vpop.f32.mrf.mxu0
    %v840 = vadd.f32 0.0, %v839
    %841 = vdwg.mxu0
    %842 = vrot.lane.b32.xlu0 %v663, 64
    %v843 = vpop.permute.xlu0 %842
    %v846 = vsel %vm137, %v813, 0
    %848 = vmatpush.msra.mxu0 0.0
    %849 = vmatpush.msra.mxu0 0.0
    %850 = vmatpush.msra.mxu0 0.0
    %851 = vmatpush.msra.mxu0 0.0
    %852 = vmatpush.msra.mxu0 0.0
    %853 = vmatpush.msra.mxu0 0.0
    %854 = vmatpush.msra.mxu0 0.0
    %855 = vmatpush.msra.mxu0 0.0
    %856 = vmatpush.msra.mxu0 0.0
    %857 = vmatpush.msra.mxu0 0.0
    %858 = vmatpush.msra.mxu0 0.0
    %859 = vmatpush.msra.mxu0 0.0
    %860 = vmatpush.msra.mxu0 0.0
    %861 = vmatpush.msra.mxu0 0.0
    %862 = vmatpush.msra.mxu0 0.0
    %863 = vmatpush.msra.mxu0 %v843
    %864 = vmatmul.f32.gmra.mxu0 %v846
    %v865 = vpop.f32.mrf.mxu0
    %v866 = vadd.f32 0.0, %v865
    %867 = vdwg.mxu0
    %868 = vrot.lane.b32.xlu0 %v665, 64
    %v869 = vpop.permute.xlu0 %868
    %v872 = vsel %vm137, %v814, 0
    %874 = vmatpush.msra.mxu0 0.0
    %875 = vmatpush.msra.mxu0 0.0
    %876 = vmatpush.msra.mxu0 0.0
    %877 = vmatpush.msra.mxu0 0.0
    %878 = vmatpush.msra.mxu0 0.0
    %879 = vmatpush.msra.mxu0 0.0
    %880 = vmatpush.msra.mxu0 0.0
    %881 = vmatpush.msra.mxu0 0.0
    %882 = vmatpush.msra.mxu0 0.0
    %883 = vmatpush.msra.mxu0 0.0
    %884 = vmatpush.msra.mxu0 0.0
    %885 = vmatpush.msra.mxu0 0.0
    %886 = vmatpush.msra.mxu0 0.0
    %887 = vmatpush.msra.mxu0 0.0
    %888 = vmatpush.msra.mxu0 0.0
    %889 = vmatpush.msra.mxu0 %v869
    %890 = vmatmul.f32.gmra.mxu0 %v872
    %v891 = vpop.f32.mrf.mxu0
    %v892 = vadd.f32 0.0, %v891
    %893 = vdwg.mxu0
    %894 = vrot.lane.b32.xlu0 %v667, 64
    %v895 = vpop.permute.xlu0 %894
    %v898 = vsel %vm137, %v815, 0
    %900 = vmatpush.msra.mxu0 0.0
    %901 = vmatpush.msra.mxu0 0.0
    %902 = vmatpush.msra.mxu0 0.0
    %903 = vmatpush.msra.mxu0 0.0
    %904 = vmatpush.msra.mxu0 0.0
    %905 = vmatpush.msra.mxu0 0.0
    %906 = vmatpush.msra.mxu0 0.0
    %907 = vmatpush.msra.mxu0 0.0
    %908 = vmatpush.msra.mxu0 0.0
    %909 = vmatpush.msra.mxu0 0.0
    %910 = vmatpush.msra.mxu0 0.0
    %911 = vmatpush.msra.mxu0 0.0
    %912 = vmatpush.msra.mxu0 0.0
    %913 = vmatpush.msra.mxu0 0.0
    %914 = vmatpush.msra.mxu0 0.0
    %915 = vmatpush.msra.mxu0 %v895
    %916 = vmatmul.f32.gmra.mxu0 %v898
    %v917 = vpop.f32.mrf.mxu0
    %v918 = vadd.f32 0.0, %v917
    %919 = vdwg.mxu0
    %v921 = vsel %vm137, %v840, 0
    %923 = vmatpush.msra.mxu0 0.0
    %924 = vmatpush.msra.mxu0 0.0
    %925 = vmatpush.msra.mxu0 0.0
    %926 = vmatpush.msra.mxu0 0.0
    %927 = vmatpush.msra.mxu0 0.0
    %928 = vmatpush.msra.mxu0 0.0
    %929 = vmatpush.msra.mxu0 0.0
    %930 = vmatpush.msra.mxu0 0.0
    %931 = vmatpush.msra.mxu0 0.0
    %932 = vmatpush.msra.mxu0 0.0
    %933 = vmatpush.msra.mxu0 0.0
    %934 = vmatpush.msra.mxu0 0.0
    %935 = vmatpush.msra.mxu0 0.0
    %936 = vmatpush.msra.mxu0 0.0
    %937 = vmatpush.msra.mxu0 0.0
    %938 = vmatpush.msra.mxu0 %v624
    %939 = vmatmul.f32.gmra.mxu0 %v921
    %v940 = vpop.f32.mrf.mxu0
    %v941 = vadd.f32 0.0, %v940
    %942 = vdwg.mxu0
    %v944 = vsel %vm137, %v866, 0
    %946 = vmatpush.msra.mxu0 0.0
    %947 = vmatpush.msra.mxu0 0.0
    %948 = vmatpush.msra.mxu0 0.0
    %949 = vmatpush.msra.mxu0 0.0
    %950 = vmatpush.msra.mxu0 0.0
    %951 = vmatpush.msra.mxu0 0.0
    %952 = vmatpush.msra.mxu0 0.0
    %953 = vmatpush.msra.mxu0 0.0
    %954 = vmatpush.msra.mxu0 0.0
    %955 = vmatpush.msra.mxu0 0.0
    %956 = vmatpush.msra.mxu0 0.0
    %957 = vmatpush.msra.mxu0 0.0
    %958 = vmatpush.msra.mxu0 0.0
    %959 = vmatpush.msra.mxu0 0.0
    %960 = vmatpush.msra.mxu0 0.0
    %961 = vmatpush.msra.mxu0 %v625
    %962 = vmatmul.f32.gmra.mxu0 %v944
    %v963 = vpop.f32.mrf.mxu0
    %v964 = vadd.f32 0.0, %v963
    %965 = vdwg.mxu0
    %v967 = vsel %vm137, %v892, 0
    %969 = vmatpush.msra.mxu0 0.0
    %970 = vmatpush.msra.mxu0 0.0
    %971 = vmatpush.msra.mxu0 0.0
    %972 = vmatpush.msra.mxu0 0.0
    %973 = vmatpush.msra.mxu0 0.0
    %974 = vmatpush.msra.mxu0 0.0
    %975 = vmatpush.msra.mxu0 0.0
    %976 = vmatpush.msra.mxu0 0.0
    %977 = vmatpush.msra.mxu0 0.0
    %978 = vmatpush.msra.mxu0 0.0
    %979 = vmatpush.msra.mxu0 0.0
    %980 = vmatpush.msra.mxu0 0.0
    %981 = vmatpush.msra.mxu0 0.0
    %982 = vmatpush.msra.mxu0 0.0
    %983 = vmatpush.msra.mxu0 0.0
    %984 = vmatpush.msra.mxu0 %v626
    %985 = vmatmul.f32.gmra.mxu0 %v967
    %v986 = vpop.f32.mrf.mxu0
    %v987 = vadd.f32 0.0, %v986
    %988 = vdwg.mxu0
    %v990 = vsel %vm137, %v918, 0
    %992 = vmatpush.msra.mxu0 0.0
    %993 = vmatpush.msra.mxu0 0.0
    %994 = vmatpush.msra.mxu0 0.0
    %995 = vmatpush.msra.mxu0 0.0
    %996 = vmatpush.msra.mxu0 0.0
    %997 = vmatpush.msra.mxu0 0.0
    %998 = vmatpush.msra.mxu0 0.0
    %999 = vmatpush.msra.mxu0 0.0
    %1000 = vmatpush.msra.mxu0 0.0
    %1001 = vmatpush.msra.mxu0 0.0
    %1002 = vmatpush.msra.mxu0 0.0
    %1003 = vmatpush.msra.mxu0 0.0
    %1004 = vmatpush.msra.mxu0 0.0
    %1005 = vmatpush.msra.mxu0 0.0
    %1006 = vmatpush.msra.mxu0 0.0
    %1007 = vmatpush.msra.mxu0 %v627
    %1008 = vmatmul.f32.gmra.mxu0 %v990
    %v1009 = vpop.f32.mrf.mxu0
    %v1010 = vadd.f32 0.0, %v1009
    %1011 = vdwg.mxu0
    %v1012 = vsel %vm46, %v941, 0.0
    %v1013 = vsel %vm46, %v964, 0.0
    %v1014 = vadd.f32 %v1012, %v1013
    %v1015 = vsel %vm46, %v987, 0.0
    %v1016 = vadd.f32 %v1014, %v1015
    %v1017 = vsel %vm46, %v1010, 0.0
    %v1018 = vadd.f32 %v1016, %v1017
    %v1019 = vperm.slane %v628, 0
    %v1020 = vadd.f32 %v1018, %v1019
    %v1021 = vadd.f32 %v585, %v1020
    %v1022 = vld [vmem:[%s9 + $0xc] sm:$0x1]
    %v1023 = vld [vmem:[%s9 + $0xd] sm:$0x1]
    %v1024 = vsel %vm46, %v1021, 0.0
    %1025 = vadd.xlane.f32.xlu0 %v1024
    %v1026 = vpop.xlane.xlu0 %1025
    %v1027 = vmul.f32 %v1026, %v56
    %v1028 = vsub.f32 %v1021, %v1027
    %v1029 = vmul.f32 %v1028, %v1028
    %v1030 = vsel %vm46, %v1029, 0.0
    %1031 = vadd.xlane.f32.xlu0 %v1030
    %v1032 = vpop.xlane.xlu0 %1031
    %v1033 = vmul.f32 %v1032, 0.032258064
    %v1034 = vrsqrt.pop %v1033
    %v1035 = vmul.f32 %v1034, %v1033
    %v1036 = vmul.f32 %v1035, %v1034
    %v1037 = vmul.f32 0.5, %v1036
    %v1038 = vsub.f32 1.5, %v1037
    %v1039 = vmul.f32 %v1034, %v1038
    %v1040 = vmul.f32 %v1033, %v1039
    %vm1041 = vcmp.eq.f32.partialorder %v1033, inf
    %v1042 = vsel %vm1041, %v1033, %v1040
    %vm1043 = vcmp.eq.f32.partialorder %v1033, 0.0
    %v1044 = vand.u32 %v1033, 2147483648
    %v1045 = vsel %vm1043, %v1044, %v1042
    %v1046 = vadd.f32 %v1045, 1e-06
    %v1047 = vrcp.pop %v1046
    %v1048 = vmul.f32 %v1028, %v1047
    %v1049 = vperm.slane %v1022, 0
    %v1050 = vmul.f32 %v1049, %v1048
    %v1051 = vperm.slane %v1023, 0
    %v1052 = vadd.f32 %v1050, %v1051
    %s1053 = scalar_lea.vmem %s6, 32
    %v1054 = vld [vmem:[%s1053] sm:$0xff]
    %v1055 = vld [vmem:[%s1053 + $0x8] sm:$0xff]
    %v1056 = vld [vmem:[%s1053 + $0x10] sm:$0xff]
    %v1057 = vld [vmem:[%s1053 + $0x18] sm:$0xff]
    %v1058 = vld [vmem:[%s9 + $0xe] sm:$0x1]
    %s1059 = scalar_lea.vmem %s7, 64
    %v1060 = vld [vmem:[%s1059] sm:$0xff]
    %v1061 = vld [vmem:[%s1059 + $0x8] sm:$0xff]
    %v1062 = vld [vmem:[%s1059 + $0x10] sm:$0xff]
    %v1063 = vld [vmem:[%s1059 + $0x18] sm:$0xff]
    %v1064 = vld [vmem:[%s1059 + $0x20] sm:$0xff]
    %v1065 = vld [vmem:[%s1059 + $0x28] sm:$0xff]
    %v1066 = vld [vmem:[%s1059 + $0x30] sm:$0xff]
    %v1067 = vld [vmem:[%s1059 + $0x38] sm:$0xff]
    %v1068 = vld [vmem:[%s9 + $0xf] sm:$0x1]
    %v1069 = vperm.slane %v1058, 0
    %v1071 = vsel %vm46, %v1052, 0
    %1073 = vmatpush.msra.mxu0 0.0
    %1074 = vmatpush.msra.mxu0 0.0
    %1075 = vmatpush.msra.mxu0 0.0
    %1076 = vmatpush.msra.mxu0 0.0
    %1077 = vmatpush.msra.mxu0 0.0
    %1078 = vmatpush.msra.mxu0 0.0
    %1079 = vmatpush.msra.mxu0 0.0
    %1080 = vmatpush.msra.mxu0 0.0
    %1081 = vmatpush.msra.mxu0 0.0
    %1082 = vmatpush.msra.mxu0 0.0
    %1083 = vmatpush.msra.mxu0 0.0
    %1084 = vmatpush.msra.mxu0 0.0
    %1085 = vmatpush.msra.mxu0 %v1057
    %1086 = vmatpush.msra.mxu0 %v1056
    %1087 = vmatpush.msra.mxu0 %v1055
    %1088 = vmatpush.msra.mxu0 %v1054
    %1089 = vmatmul.f32.gmra.mxu0 %v1071
    %v1090 = vpop.f32.mrf.mxu0
    %v1091 = vadd.f32 %v1069, %v1090
    %1092 = vdwg.mxu0
    %v1093 = vmax.f32 %v1091, 0.0
    %v1094 = vperm.slane %v1068, 0
    %v1096 = vsel %vm561, %v1093, 0
    %1098 = vmatpush.msra.mxu0 0.0
    %1099 = vmatpush.msra.mxu0 0.0
    %1100 = vmatpush.msra.mxu0 0.0
    %1101 = vmatpush.msra.mxu0 0.0
    %1102 = vmatpush.msra.mxu0 0.0
    %1103 = vmatpush.msra.mxu0 0.0
    %1104 = vmatpush.msra.mxu0 0.0
    %1105 = vmatpush.msra.mxu0 0.0
    %1106 = vmatpush.msra.mxu0 %v1067
    %1107 = vmatpush.msra.mxu0 %v1066
    %1108 = vmatpush.msra.mxu0 %v1065
    %1109 = vmatpush.msra.mxu0 %v1064
    %1110 = vmatpush.msra.mxu0 %v1063
    %1111 = vmatpush.msra.mxu0 %v1062
    %1112 = vmatpush.msra.mxu0 %v1061
    %1113 = vmatpush.msra.mxu0 %v1060
    %1114 = vmatmul.f32.gmra.mxu0 %v1096
    %v1115 = vpop.f32.mrf.mxu0
    %v1116 = vadd.f32 %v1094, %v1115
    %1117 = vdwg.mxu0
    %v1118 = vadd.f32 %v1021, %v1116
    %v1119 = vld [vmem:[%s9 + $0x28] sm:$0x1]
    %v1120 = vld [vmem:[%s9 + $0x29] sm:$0x1]
    %v1121 = vsel %vm46, %v1118, 0.0
    %1122 = vadd.xlane.f32.xlu0 %v1121
    %v1123 = vpop.xlane.xlu0 %1122
    %v1124 = vmul.f32 %v1123, %v56
    %v1125 = vsub.f32 %v1118, %v1124
    %v1126 = vmul.f32 %v1125, %v1125
    %v1127 = vsel %vm46, %v1126, 0.0
    %1128 = vadd.xlane.f32.xlu0 %v1127
    %v1129 = vpop.xlane.xlu0 %1128
    %v1130 = vmul.f32 %v1129, 0.032258064
    %v1131 = vrsqrt.pop %v1130
    %v1132 = vmul.f32 %v1131, %v1130
    %v1133 = vmul.f32 %v1132, %v1131
    %v1134 = vmul.f32 0.5, %v1133
    %v1135 = vsub.f32 1.5, %v1134
    %v1136 = vmul.f32 %v1131, %v1135
    %v1137 = vmul.f32 %v1130, %v1136
    %vm1138 = vcmp.eq.f32.partialorder %v1130, inf
    %v1139 = vsel %vm1138, %v1130, %v1137
    %vm1140 = vcmp.eq.f32.partialorder %v1130, 0.0
    %v1141 = vand.u32 %v1130, 2147483648
    %v1142 = vsel %vm1140, %v1141, %v1139
    %v1143 = vadd.f32 %v1142, 1e-06
    %v1144 = vrcp.pop %v1143
    %v1145 = vmul.f32 %v1125, %v1144
    %v1146 = vperm.slane %v1119, 0
    %v1147 = vmul.f32 %v1146, %v1145
    %v1148 = vperm.slane %v1120, 0
    %v1149 = vadd.f32 %v1147, %v1148
    %v1150 = vld [vmem:[%s1] sm:$0xff]
    %v1151 = vld [vmem:[%s9 + $0x10] sm:$0x1]
    %v1152 = vld [vmem:[%s9 + $0x11] sm:$0x1]
    %v1153 = vsel %vm46, %v1150, 0.0
    %1154 = vadd.xlane.f32.xlu0 %v1153
    %v1155 = vpop.xlane.xlu0 %1154
    %v1156 = vmul.f32 %v1155, %v56
    %v1157 = vsub.f32 %v1150, %v1156
    %v1158 = vmul.f32 %v1157, %v1157
    %v1159 = vsel %vm46, %v1158, 0.0
    %1160 = vadd.xlane.f32.xlu0 %v1159
    %v1161 = vpop.xlane.xlu0 %1160
    %v1162 = vmul.f32 %v1161, 0.032258064
    %v1163 = vrsqrt.pop %v1162
    %v1164 = vmul.f32 %v1163, %v1162
    %v1165 = vmul.f32 %v1164, %v1163
    %v1166 = vmul.f32 0.5, %v1165
    %v1167 = vsub.f32 1.5, %v1166
    %v1168 = vmul.f32 %v1163, %v1167
    %v1169 = vmul.f32 %v1162, %v1168
    %vm1170 = vcmp.eq.f32.partialorder %v1162, inf
    %v1171 = vsel %vm1170, %v1162, %v1169
    %vm1172 = vcmp.eq.f32.partialorder %v1162, 0.0
    %v1173 = vand.u32 %v1162, 2147483648
    %v1174 = vsel %vm1172, %v1173, %v1171
    %v1175 = vadd.f32 %v1174, 1e-06
    %v1176 = vrcp.pop %v1175
    %v1177 = vmul.f32 %v1157, %v1176
    %v1178 = vperm.slane %v1151, 0
    %v1179 = vmul.f32 %v1178, %v1177
    %v1180 = vperm.slane %v1152, 0
    %v1181 = vadd.f32 %v1179, %v1180
    %s1182 = scalar_lea.vmem %s4, 64
    %v1183 = vld [vmem:[%s1182] sm:$0xff]
    %v1184 = vld [vmem:[%s1182 + $0x8] sm:$0xff]
    %v1185 = vld [vmem:[%s1182 + $0x10] sm:$0xff]
    %v1186 = vld [vmem:[%s1182 + $0x18] sm:$0xff]
    %v1187 = vld [vmem:[%s9 + $0x12] sm:$0x1]
    %s1188 = scalar_lea.vmem %s5, 64
    %v1189 = vld [vmem:[%s1188] sm:$0xff]
    %v1190 = vld [vmem:[%s1188 + $0x8] sm:$0xff]
    %v1191 = vld [vmem:[%s1188 + $0x10] sm:$0xff]
    %v1192 = vld [vmem:[%s1188 + $0x18] sm:$0xff]
    %v1193 = vld [vmem:[%s9 + $0x13] sm:$0x1]
    %v1194 = vperm.slane %v1187, 0
    %v1196 = vsel %vm46, %v1181, 0
    %1198 = vmatpush.msra.mxu0 0.0
    %1199 = vmatpush.msra.mxu0 0.0
    %1200 = vmatpush.msra.mxu0 0.0
    %1201 = vmatpush.msra.mxu0 0.0
    %1202 = vmatpush.msra.mxu0 0.0
    %1203 = vmatpush.msra.mxu0 0.0
    %1204 = vmatpush.msra.mxu0 0.0
    %1205 = vmatpush.msra.mxu0 0.0
    %1206 = vmatpush.msra.mxu0 0.0
    %1207 = vmatpush.msra.mxu0 0.0
    %1208 = vmatpush.msra.mxu0 0.0
    %1209 = vmatpush.msra.mxu0 0.0
    %1210 = vmatpush.msra.mxu0 %v1186
    %1211 = vmatpush.msra.mxu0 %v1185
    %1212 = vmatpush.msra.mxu0 %v1184
    %1213 = vmatpush.msra.mxu0 %v1183
    %1214 = vmatmul.f32.gmra.mxu0 %v1196
    %v1215 = vpop.f32.mrf.mxu0
    %v1216 = vadd.f32 %v1194, %v1215
    %1217 = vdwg.mxu0
    %v1218 = vmul.f32 %v1216, 0.35355338
    %1220 = vrot.lane.b32.xlu0 %v1218, 120
    %v1221 = vpop.permute.xlu0 %1220
    %1222 = vrot.lane.b32.xlu0 %v1218, 112
    %v1223 = vpop.permute.xlu0 %1222
    %1224 = vrot.lane.b32.xlu0 %v1218, 104
    %v1225 = vpop.permute.xlu0 %1224
    %1227 = vrot.lane.b32.xlu0 %v1216, 120
    %v1228 = vpop.permute.xlu0 %1227
    %1229 = vrot.lane.b32.xlu0 %v1216, 112
    %v1230 = vpop.permute.xlu0 %1229
    %1231 = vrot.lane.b32.xlu0 %v1216, 104
    %v1232 = vpop.permute.xlu0 %1231
    %1233 = vrot.lane.b32.xlu0 %v1216, 96
    %v1234 = vpop.permute.xlu0 %1233
    %v1235 = vsel %vm137, %v1218, 0
    %v1237 = vsel %vm137, %v1234, 0
    %1239 = vmatpush.xpose.msra.mxu0 0.0
    %1240 = vmatpush.xpose.msra.mxu0 0.0
    %1241 = vmatpush.xpose.msra.mxu0 0.0
    %1242 = vmatpush.xpose.msra.mxu0 0.0
    %1243 = vmatpush.xpose.msra.mxu0 0.0
    %1244 = vmatpush.xpose.msra.mxu0 0.0
    %1245 = vmatpush.xpose.msra.mxu0 0.0
    %1246 = vmatpush.xpose.msra.mxu0 0.0
    %1247 = vmatpush.xpose.msra.mxu0 0.0
    %1248 = vmatpush.xpose.msra.mxu0 0.0
    %1249 = vmatpush.xpose.msra.mxu0 0.0
    %1250 = vmatpush.xpose.msra.mxu0 0.0
    %1251 = vmatpush.xpose.msra.mxu0 0.0
    %1252 = vmatpush.xpose.msra.mxu0 0.0
    %1253 = vmatpush.xpose.msra.mxu0 0.0
    %1254 = vmatpush.xpose.msra.mxu0 %v1237
    %1255 = vmatmul.f32.gmra.mxu0 %v1235
    %v1256 = vpop.f32.mrf.mxu0
    %v1257 = vadd.f32 %v42, %v1256
    %1258 = vdwg.mxu0
    %1259 = vrot.lane.b32.xlu0 %v1228, 96
    %v1260 = vpop.permute.xlu0 %1259
    %v1261 = vsel %vm137, %v1221, 0
    %v1263 = vsel %vm137, %v1260, 0
    %1265 = vmatpush.xpose.msra.mxu0 0.0
    %1266 = vmatpush.xpose.msra.mxu0 0.0
    %1267 = vmatpush.xpose.msra.mxu0 0.0
    %1268 = vmatpush.xpose.msra.mxu0 0.0
    %1269 = vmatpush.xpose.msra.mxu0 0.0
    %1270 = vmatpush.xpose.msra.mxu0 0.0
    %1271 = vmatpush.xpose.msra.mxu0 0.0
    %1272 = vmatpush.xpose.msra.mxu0 0.0
    %1273 = vmatpush.xpose.msra.mxu0 0.0
    %1274 = vmatpush.xpose.msra.mxu0 0.0
    %1275 = vmatpush.xpose.msra.mxu0 0.0
    %1276 = vmatpush.xpose.msra.mxu0 0.0
    %1277 = vmatpush.xpose.msra.mxu0 0.0
    %1278 = vmatpush.xpose.msra.mxu0 0.0
    %1279 = vmatpush.xpose.msra.mxu0 0.0
    %1280 = vmatpush.xpose.msra.mxu0 %v1263
    %1281 = vmatmul.f32.gmra.mxu0 %v1261
    %v1282 = vpop.f32.mrf.mxu0
    %v1283 = vadd.f32 %v42, %v1282
    %1284 = vdwg.mxu0
    %1285 = vrot.lane.b32.xlu0 %v1230, 96
    %v1286 = vpop.permute.xlu0 %1285
    %v1287 = vsel %vm137, %v1223, 0
    %v1289 = vsel %vm137, %v1286, 0
    %1291 = vmatpush.xpose.msra.mxu0 0.0
    %1292 = vmatpush.xpose.msra.mxu0 0.0
    %1293 = vmatpush.xpose.msra.mxu0 0.0
    %1294 = vmatpush.xpose.msra.mxu0 0.0
    %1295 = vmatpush.xpose.msra.mxu0 0.0
    %1296 = vmatpush.xpose.msra.mxu0 0.0
    %1297 = vmatpush.xpose.msra.mxu0 0.0
    %1298 = vmatpush.xpose.msra.mxu0 0.0
    %1299 = vmatpush.xpose.msra.mxu0 0.0
    %1300 = vmatpush.xpose.msra.mxu0 0.0
    %1301 = vmatpush.xpose.msra.mxu0 0.0
    %1302 = vmatpush.xpose.msra.mxu0 0.0
    %1303 = vmatpush.xpose.msra.mxu0 0.0
    %1304 = vmatpush.xpose.msra.mxu0 0.0
    %1305 = vmatpush.xpose.msra.mxu0 0.0
    %1306 = vmatpush.xpose.msra.mxu0 %v1289
    %1307 = vmatmul.f32.gmra.mxu0 %v1287
    %v1308 = vpop.f32.mrf.mxu0
    %v1309 = vadd.f32 %v42, %v1308
    %1310 = vdwg.mxu0
    %1311 = vrot.lane.b32.xlu0 %v1232, 96
    %v1312 = vpop.permute.xlu0 %1311
    %v1313 = vsel %vm137, %v1225, 0
    %v1315 = vsel %vm137, %v1312, 0
    %1317 = vmatpush.xpose.msra.mxu0 0.0
    %1318 = vmatpush.xpose.msra.mxu0 0.0
    %1319 = vmatpush.xpose.msra.mxu0 0.0
    %1320 = vmatpush.xpose.msra.mxu0 0.0
    %1321 = vmatpush.xpose.msra.mxu0 0.0
    %1322 = vmatpush.xpose.msra.mxu0 0.0
    %1323 = vmatpush.xpose.msra.mxu0 0.0
    %1324 = vmatpush.xpose.msra.mxu0 0.0
    %1325 = vmatpush.xpose.msra.mxu0 0.0
    %1326 = vmatpush.xpose.msra.mxu0 0.0
    %1327 = vmatpush.xpose.msra.mxu0 0.0
    %1328 = vmatpush.xpose.msra.mxu0 0.0
    %1329 = vmatpush.xpose.msra.mxu0 0.0
    %1330 = vmatpush.xpose.msra.mxu0 0.0
    %1331 = vmatpush.xpose.msra.mxu0 0.0
    %1332 = vmatpush.xpose.msra.mxu0 %v1315
    %1333 = vmatmul.f32.gmra.mxu0 %v1313
    %v1334 = vpop.f32.mrf.mxu0
    %v1335 = vadd.f32 %v42, %v1334
    %1336 = vdwg.mxu0
    %v1337 = vsel %vm137, %v1257, -inf
    %1338 = vmax.xlane.f32.xlu0 %v1337
    %v1339 = vpop.xlane.xlu0 %1338
    %v1340 = vsel %vm137, %v1283, -inf
    %1341 = vmax.xlane.f32.xlu0 %v1340
    %v1342 = vpop.xlane.xlu0 %1341
    %v1343 = vsel %vm137, %v1309, -inf
    %1344 = vmax.xlane.f32.xlu0 %v1343
    %v1345 = vpop.xlane.xlu0 %1344
    %v1346 = vsel %vm137, %v1335, -inf
    %1347 = vmax.xlane.f32.xlu0 %v1346
    %v1348 = vpop.xlane.xlu0 %1347
    %v1349 = vsub.f32 %v1257, %v1339
    %v1350 = vsub.f32 %v1283, %v1342
    %v1351 = vsub.f32 %v1309, %v1345
    %v1352 = vsub.f32 %v1335, %v1348
    %v1353 = vmul.f32 %v1349, 1.442695
    %v1354 = vpow.pop %v1353
    %v1355 = vmul.f32 %v1350, 1.442695
    %v1356 = vpow.pop %v1355
    %v1357 = vmul.f32 %v1351, 1.442695
    %v1358 = vpow.pop %v1357
    %v1359 = vmul.f32 %v1352, 1.442695
    %v1360 = vpow.pop %v1359
    %v1361 = vsel %vm137, %v1354, 0.0
    %1362 = vadd.xlane.f32.xlu0 %v1361
    %v1363 = vpop.xlane.xlu0 %1362
    %v1364 = vsel %vm137, %v1356, 0.0
    %1365 = vadd.xlane.f32.xlu0 %v1364
    %v1366 = vpop.xlane.xlu0 %1365
    %v1367 = vsel %vm137, %v1358, 0.0
    %1368 = vadd.xlane.f32.xlu0 %v1367
    %v1369 = vpop.xlane.xlu0 %1368
    %v1370 = vsel %vm137, %v1360, 0.0
    %1371 = vadd.xlane.f32.xlu0 %v1370
    %v1372 = vpop.xlane.xlu0 %1371
    %v1373 = vrcp.pop %v1363
    %v1374 = vrcp.pop %v1366
    %v1375 = vrcp.pop %v1369
    %v1376 = vrcp.pop %v1372
    %v1377 = vmul.f32 %v1354, %v1373
    %v1378 = vmul.f32 %v1356, %v1374
    %v1379 = vmul.f32 %v1358, %v1375
    %v1380 = vmul.f32 %v1360, %v1376
    %1381 = vrot.lane.b32.xlu0 %v1216, 64
    %v1382 = vpop.permute.xlu0 %1381
    %v1385 = vsel %vm137, %v1377, 0
    %1387 = vmatpush.msra.mxu0 0.0
    %1388 = vmatpush.msra.mxu0 0.0
    %1389 = vmatpush.msra.mxu0 0.0
    %1390 = vmatpush.msra.mxu0 0.0
    %1391 = vmatpush.msra.mxu0 0.0
    %1392 = vmatpush.msra.mxu0 0.0
    %1393 = vmatpush.msra.mxu0 0.0
    %1394 = vmatpush.msra.mxu0 0.0
    %1395 = vmatpush.msra.mxu0 0.0
    %1396 = vmatpush.msra.mxu0 0.0
    %1397 = vmatpush.msra.mxu0 0.0
    %1398 = vmatpush.msra.mxu0 0.0
    %1399 = vmatpush.msra.mxu0 0.0
    %1400 = vmatpush.msra.mxu0 0.0
    %1401 = vmatpush.msra.mxu0 0.0
    %1402 = vmatpush.msra.mxu0 %v1382
    %1403 = vmatmul.f32.gmra.mxu0 %v1385
    %v1404 = vpop.f32.mrf.mxu0
    %v1405 = vadd.f32 0.0, %v1404
    %1406 = vdwg.mxu0
    %1407 = vrot.lane.b32.xlu0 %v1228, 64
    %v1408 = vpop.permute.xlu0 %1407
    %v1411 = vsel %vm137, %v1378, 0
    %1413 = vmatpush.msra.mxu0 0.0
    %1414 = vmatpush.msra.mxu0 0.0
    %1415 = vmatpush.msra.mxu0 0.0
    %1416 = vmatpush.msra.mxu0 0.0
    %1417 = vmatpush.msra.mxu0 0.0
    %1418 = vmatpush.msra.mxu0 0.0
    %1419 = vmatpush.msra.mxu0 0.0
    %1420 = vmatpush.msra.mxu0 0.0
    %1421 = vmatpush.msra.mxu0 0.0
    %1422 = vmatpush.msra.mxu0 0.0
    %1423 = vmatpush.msra.mxu0 0.0
    %1424 = vmatpush.msra.mxu0 0.0
    %1425 = vmatpush.msra.mxu0 0.0
    %1426 = vmatpush.msra.mxu0 0.0
    %1427 = vmatpush.msra.mxu0 0.0
    %1428 = vmatpush.msra.mxu0 %v1408
    %1429 = vmatmul.f32.gmra.mxu0 %v1411
    %v1430 = vpop.f32.mrf.mxu0
    %v1431 = vadd.f32 0.0, %v1430
    %1432 = vdwg.mxu0
    %1433 = vrot.lane.b32.xlu0 %v1230, 64
    %v1434 = vpop.permute.xlu0 %1433
    %v1437 = vsel %vm137, %v1379, 0
    %1439 = vmatpush.msra.mxu0 0.0
    %1440 = vmatpush.msra.mxu0 0.0
    %1441 = vmatpush.msra.mxu0 0.0
    %1442 = vmatpush.msra.mxu0 0.0
    %1443 = vmatpush.msra.mxu0 0.0
    %1444 = vmatpush.msra.mxu0 0.0
    %1445 = vmatpush.msra.mxu0 0.0
    %1446 = vmatpush.msra.mxu0 0.0
    %1447 = vmatpush.msra.mxu0 0.0
    %1448 = vmatpush.msra.mxu0 0.0
    %1449 = vmatpush.msra.mxu0 0.0
    %1450 = vmatpush.msra.mxu0 0.0
    %1451 = vmatpush.msra.mxu0 0.0
    %1452 = vmatpush.msra.mxu0 0.0
    %1453 = vmatpush.msra.mxu0 0.0
    %1454 = vmatpush.msra.mxu0 %v1434
    %1455 = vmatmul.f32.gmra.mxu0 %v1437
    %v1456 = vpop.f32.mrf.mxu0
    %v1457 = vadd.f32 0.0, %v1456
    %1458 = vdwg.mxu0
    %1459 = vrot.lane.b32.xlu0 %v1232, 64
    %v1460 = vpop.permute.xlu0 %1459
    %v1463 = vsel %vm137, %v1380, 0
    %1465 = vmatpush.msra.mxu0 0.0
    %1466 = vmatpush.msra.mxu0 0.0
    %1467 = vmatpush.msra.mxu0 0.0
    %1468 = vmatpush.msra.mxu0 0.0
    %1469 = vmatpush.msra.mxu0 0.0
    %1470 = vmatpush.msra.mxu0 0.0
    %1471 = vmatpush.msra.mxu0 0.0
    %1472 = vmatpush.msra.mxu0 0.0
    %1473 = vmatpush.msra.mxu0 0.0
    %1474 = vmatpush.msra.mxu0 0.0
    %1475 = vmatpush.msra.mxu0 0.0
    %1476 = vmatpush.msra.mxu0 0.0
    %1477 = vmatpush.msra.mxu0 0.0
    %1478 = vmatpush.msra.mxu0 0.0
    %1479 = vmatpush.msra.mxu0 0.0
    %1480 = vmatpush.msra.mxu0 %v1460
    %1481 = vmatmul.f32.gmra.mxu0 %v1463
    %v1482 = vpop.f32.mrf.mxu0
    %v1483 = vadd.f32 0.0, %v1482
    %1484 = vdwg.mxu0
    %v1486 = vsel %vm137, %v1405, 0
    %1488 = vmatpush.msra.mxu0 0.0
    %1489 = vmatpush.msra.mxu0 0.0
    %1490 = vmatpush.msra.mxu0 0.0
    %1491 = vmatpush.msra.mxu0 0.0
    %1492 = vmatpush.msra.mxu0 0.0
    %1493 = vmatpush.msra.mxu0 0.0
    %1494 = vmatpush.msra.mxu0 0.0
    %1495 = vmatpush.msra.mxu0 0.0
    %1496 = vmatpush.msra.mxu0 0.0
    %1497 = vmatpush.msra.mxu0 0.0
    %1498 = vmatpush.msra.mxu0 0.0
    %1499 = vmatpush.msra.mxu0 0.0
    %1500 = vmatpush.msra.mxu0 0.0
    %1501 = vmatpush.msra.mxu0 0.0
    %1502 = vmatpush.msra.mxu0 0.0
    %1503 = vmatpush.msra.mxu0 %v1189
    %1504 = vmatmul.f32.gmra.mxu0 %v1486
    %v1505 = vpop.f32.mrf.mxu0
    %v1506 = vadd.f32 0.0, %v1505
    %1507 = vdwg.mxu0
    %v1509 = vsel %vm137, %v1431, 0
    %1511 = vmatpush.msra.mxu0 0.0
    %1512 = vmatpush.msra.mxu0 0.0
    %1513 = vmatpush.msra.mxu0 0.0
    %1514 = vmatpush.msra.mxu0 0.0
    %1515 = vmatpush.msra.mxu0 0.0
    %1516 = vmatpush.msra.mxu0 0.0
    %1517 = vmatpush.msra.mxu0 0.0
    %1518 = vmatpush.msra.mxu0 0.0
    %1519 = vmatpush.msra.mxu0 0.0
    %1520 = vmatpush.msra.mxu0 0.0
    %1521 = vmatpush.msra.mxu0 0.0
    %1522 = vmatpush.msra.mxu0 0.0
    %1523 = vmatpush.msra.mxu0 0.0
    %1524 = vmatpush.msra.mxu0 0.0
    %1525 = vmatpush.msra.mxu0 0.0
    %1526 = vmatpush.msra.mxu0 %v1190
    %1527 = vmatmul.f32.gmra.mxu0 %v1509
    %v1528 = vpop.f32.mrf.mxu0
    %v1529 = vadd.f32 0.0, %v1528
    %1530 = vdwg.mxu0
    %v1532 = vsel %vm137, %v1457, 0
    %1534 = vmatpush.msra.mxu0 0.0
    %1535 = vmatpush.msra.mxu0 0.0
    %1536 = vmatpush.msra.mxu0 0.0
    %1537 = vmatpush.msra.mxu0 0.0
    %1538 = vmatpush.msra.mxu0 0.0
    %1539 = vmatpush.msra.mxu0 0.0
    %1540 = vmatpush.msra.mxu0 0.0
    %1541 = vmatpush.msra.mxu0 0.0
    %1542 = vmatpush.msra.mxu0 0.0
    %1543 = vmatpush.msra.mxu0 0.0
    %1544 = vmatpush.msra.mxu0 0.0
    %1545 = vmatpush.msra.mxu0 0.0
    %1546 = vmatpush.msra.mxu0 0.0
    %1547 = vmatpush.msra.mxu0 0.0
    %1548 = vmatpush.msra.mxu0 0.0
    %1549 = vmatpush.msra.mxu0 %v1191
    %1550 = vmatmul.f32.gmra.mxu0 %v1532
    %v1551 = vpop.f32.mrf.mxu0
    %v1552 = vadd.f32 0.0, %v1551
    %1553 = vdwg.mxu0
    %v1555 = vsel %vm137, %v1483, 0
    %1557 = vmatpush.msra.mxu0 0.0
    %1558 = vmatpush.msra.mxu0 0.0
    %1559 = vmatpush.msra.mxu0 0.0
    %1560 = vmatpush.msra.mxu0 0.0
    %1561 = vmatpush.msra.mxu0 0.0
    %1562 = vmatpush.msra.mxu0 0.0
    %1563 = vmatpush.msra.mxu0 0.0
    %1564 = vmatpush.msra.mxu0 0.0
    %1565 = vmatpush.msra.mxu0 0.0
    %1566 = vmatpush.msra.mxu0 0.0
    %1567 = vmatpush.msra.mxu0 0.0
    %1568 = vmatpush.msra.mxu0 0.0
    %1569 = vmatpush.msra.mxu0 0.0
    %1570 = vmatpush.msra.mxu0 0.0
    %1571 = vmatpush.msra.mxu0 0.0
    %1572 = vmatpush.msra.mxu0 %v1192
    %1573 = vmatmul.f32.gmra.mxu0 %v1555
    %v1574 = vpop.f32.mrf.mxu0
    %v1575 = vadd.f32 0.0, %v1574
    %1576 = vdwg.mxu0
    %v1577 = vsel %vm46, %v1506, 0.0
    %v1578 = vsel %vm46, %v1529, 0.0
    %v1579 = vadd.f32 %v1577, %v1578
    %v1580 = vsel %vm46, %v1552, 0.0
    %v1581 = vadd.f32 %v1579, %v1580
    %v1582 = vsel %vm46, %v1575, 0.0
    %v1583 = vadd.f32 %v1581, %v1582
    %v1584 = vperm.slane %v1193, 0
    %v1585 = vadd.f32 %v1583, %v1584
    %v1586 = vadd.f32 %v1150, %v1585
    %v1587 = vld [vmem:[%s9 + $0x14] sm:$0x1]
    %v1588 = vld [vmem:[%s9 + $0x15] sm:$0x1]
    %v1589 = vsel %vm46, %v1586, 0.0
    %1590 = vadd.xlane.f32.xlu0 %v1589
    %v1591 = vpop.xlane.xlu0 %1590
    %v1592 = vmul.f32 %v1591, %v56
    %v1593 = vsub.f32 %v1586, %v1592
    %v1594 = vmul.f32 %v1593, %v1593
    %v1595 = vsel %vm46, %v1594, 0.0
    %1596 = vadd.xlane.f32.xlu0 %v1595
    %v1597 = vpop.xlane.xlu0 %1596
    %v1598 = vmul.f32 %v1597, 0.032258064
    %v1599 = vrsqrt.pop %v1598
    %v1600 = vmul.f32 %v1599, %v1598
    %v1601 = vmul.f32 %v1600, %v1599
    %v1602 = vmul.f32 0.5, %v1601
    %v1603 = vsub.f32 1.5, %v1602
    %v1604 = vmul.f32 %v1599, %v1603
    %v1605 = vmul.f32 %v1598, %v1604
    %vm1606 = vcmp.eq.f32.partialorder %v1598, inf
    %v1607 = vsel %vm1606, %v1598, %v1605
    %vm1608 = vcmp.eq.f32.partialorder %v1598, 0.0
    %v1609 = vand.u32 %v1598, 2147483648
    %v1610 = vsel %vm1608, %v1609, %v1607
    %v1611 = vadd.f32 %v1610, 1e-06
    %v1612 = vrcp.pop %v1611
    %v1613 = vmul.f32 %v1593, %v1612
    %v1614 = vperm.slane %v1587, 0
    %v1615 = vmul.f32 %v1614, %v1613
    %v1616 = vperm.slane %v1588, 0
    %v1617 = vadd.f32 %v1615, %v1616
    %s1618 = scalar_lea.vmem %s4, 128
    %v1619 = vld [vmem:[%s1618] sm:$0xff]
    %v1620 = vld [vmem:[%s1618 + $0x8] sm:$0xff]
    %v1621 = vld [vmem:[%s1618 + $0x10] sm:$0xff]
    %v1622 = vld [vmem:[%s1618 + $0x18] sm:$0xff]
    %v1623 = vld [vmem:[%s9 + $0x16] sm:$0x1]
    %s1624 = scalar_lea.vmem %s5, 128
    %v1625 = vld [vmem:[%s1624] sm:$0xff]
    %v1626 = vld [vmem:[%s1624 + $0x8] sm:$0xff]
    %v1627 = vld [vmem:[%s1624 + $0x10] sm:$0xff]
    %v1628 = vld [vmem:[%s1624 + $0x18] sm:$0xff]
    %v1629 = vld [vmem:[%s9 + $0x17] sm:$0x1]
    %v1630 = vperm.slane %v1623, 0
    %v1632 = vsel %vm46, %v1617, 0
    %1634 = vmatpush.msra.mxu0 0.0
    %1635 = vmatpush.msra.mxu0 0.0
    %1636 = vmatpush.msra.mxu0 0.0
    %1637 = vmatpush.msra.mxu0 0.0
    %1638 = vmatpush.msra.mxu0 0.0
    %1639 = vmatpush.msra.mxu0 0.0
    %1640 = vmatpush.msra.mxu0 0.0
    %1641 = vmatpush.msra.mxu0 0.0
    %1642 = vmatpush.msra.mxu0 0.0
    %1643 = vmatpush.msra.mxu0 0.0
    %1644 = vmatpush.msra.mxu0 0.0
    %1645 = vmatpush.msra.mxu0 0.0
    %1646 = vmatpush.msra.mxu0 %v1622
    %1647 = vmatpush.msra.mxu0 %v1621
    %1648 = vmatpush.msra.mxu0 %v1620
    %1649 = vmatpush.msra.mxu0 %v1619
    %1650 = vmatmul.f32.gmra.mxu0 %v1632
    %v1651 = vpop.f32.mrf.mxu0
    %v1652 = vadd.f32 %v1630, %v1651
    %1653 = vdwg.mxu0
    %1658 = vrot.lane.b32.xlu0 %v1619, 96
    %v1659 = vpop.permute.xlu0 %1658
    %1660 = vrot.lane.b32.xlu0 %v1620, 96
    %v1661 = vpop.permute.xlu0 %1660
    %1662 = vrot.lane.b32.xlu0 %v1621, 96
    %v1663 = vpop.permute.xlu0 %1662
    %1664 = vrot.lane.b32.xlu0 %v1622, 96
    %v1665 = vpop.permute.xlu0 %1664
    %1671 = vrot.lane.b32.xlu0 %v1630, 96
    %v1672 = vpop.permute.xlu0 %1671
    %v1675 = vsel %vm46, %v1149, 0
    %1677 = vmatpush.msra.mxu0 0.0
    %1678 = vmatpush.msra.mxu0 0.0
    %1679 = vmatpush.msra.mxu0 0.0
    %1680 = vmatpush.msra.mxu0 0.0
    %1681 = vmatpush.msra.mxu0 0.0
    %1682 = vmatpush.msra.mxu0 0.0
    %1683 = vmatpush.msra.mxu0 0.0
    %1684 = vmatpush.msra.mxu0 0.0
    %1685 = vmatpush.msra.mxu0 0.0
    %1686 = vmatpush.msra.mxu0 0.0
    %1687 = vmatpush.msra.mxu0 0.0
    %1688 = vmatpush.msra.mxu0 0.0
    %1689 = vmatpush.msra.mxu0 %v1665
    %1690 = vmatpush.msra.mxu0 %v1663
    %1691 = vmatpush.msra.mxu0 %v1661
    %1692 = vmatpush.msra.mxu0 %v1659
    %1693 = vmatmul.f32.gmra.mxu0 %v1675
    %v1694 = vpop.f32.mrf.mxu0
    %v1695 = vadd.f32 %v1672, %v1694
    %1696 = vdwg.mxu0
    %v1697 = vmul.f32 %v1652, 0.35355338
    %1699 = vrot.lane.b32.xlu0 %v1697, 120
    %v1700 = vpop.permute.xlu0 %1699
    %1701 = vrot.lane.b32.xlu0 %v1697, 112
    %v1702 = vpop.permute.xlu0 %1701
    %1703 = vrot.lane.b32.xlu0 %v1697, 104
    %v1704 = vpop.permute.xlu0 %1703
    %1706 = vrot.lane.b32.xlu0 %v1695, 120
    %v1707 = vpop.permute.xlu0 %1706
    %1708 = vrot.lane.b32.xlu0 %v1695, 112
    %v1709 = vpop.permute.xlu0 %1708
    %1710 = vrot.lane.b32.xlu0 %v1695, 104
    %v1711 = vpop.permute.xlu0 %1710
    %v1712 = vsel %vm137, %v1697, 0
    %v1714 = vsel %vm137, %v1695, 0
    %1716 = vmatpush.xpose.msra.mxu0 0.0
    %1717 = vmatpush.xpose.msra.mxu0 0.0
    %1718 = vmatpush.xpose.msra.mxu0 0.0
    %1719 = vmatpush.xpose.msra.mxu0 0.0
    %1720 = vmatpush.xpose.msra.mxu0 0.0
    %1721 = vmatpush.xpose.msra.mxu0 0.0
    %1722 = vmatpush.xpose.msra.mxu0 0.0
    %1723 = vmatpush.xpose.msra.mxu0 0.0
    %1724 = vmatpush.xpose.msra.mxu0 0.0
    %1725 = vmatpush.xpose.msra.mxu0 0.0
    %1726 = vmatpush.xpose.msra.mxu0 0.0
    %1727 = vmatpush.xpose.msra.mxu0 0.0
    %1728 = vmatpush.xpose.msra.mxu0 0.0
    %1729 = vmatpush.xpose.msra.mxu0 0.0
    %1730 = vmatpush.xpose.msra.mxu0 0.0
    %1731 = vmatpush.xpose.msra.mxu0 %v1714
    %1732 = vmatmul.f32.gmra.mxu0 %v1712
    %v1733 = vpop.f32.mrf.mxu0
    %v1734 = vadd.f32 %v133, %v1733
    %1735 = vdwg.mxu0
    %v1736 = vsel %vm137, %v1700, 0
    %v1738 = vsel %vm137, %v1707, 0
    %1740 = vmatpush.xpose.msra.mxu0 0.0
    %1741 = vmatpush.xpose.msra.mxu0 0.0
    %1742 = vmatpush.xpose.msra.mxu0 0.0
    %1743 = vmatpush.xpose.msra.mxu0 0.0
    %1744 = vmatpush.xpose.msra.mxu0 0.0
    %1745 = vmatpush.xpose.msra.mxu0 0.0
    %1746 = vmatpush.xpose.msra.mxu0 0.0
    %1747 = vmatpush.xpose.msra.mxu0 0.0
    %1748 = vmatpush.xpose.msra.mxu0 0.0
    %1749 = vmatpush.xpose.msra.mxu0 0.0
    %1750 = vmatpush.xpose.msra.mxu0 0.0
    %1751 = vmatpush.xpose.msra.mxu0 0.0
    %1752 = vmatpush.xpose.msra.mxu0 0.0
    %1753 = vmatpush.xpose.msra.mxu0 0.0
    %1754 = vmatpush.xpose.msra.mxu0 0.0
    %1755 = vmatpush.xpose.msra.mxu0 %v1738
    %1756 = vmatmul.f32.gmra.mxu0 %v1736
    %v1757 = vpop.f32.mrf.mxu0
    %v1758 = vadd.f32 %v133, %v1757
    %1759 = vdwg.mxu0
    %v1760 = vsel %vm137, %v1702, 0
    %v1762 = vsel %vm137, %v1709, 0
    %1764 = vmatpush.xpose.msra.mxu0 0.0
    %1765 = vmatpush.xpose.msra.mxu0 0.0
    %1766 = vmatpush.xpose.msra.mxu0 0.0
    %1767 = vmatpush.xpose.msra.mxu0 0.0
    %1768 = vmatpush.xpose.msra.mxu0 0.0
    %1769 = vmatpush.xpose.msra.mxu0 0.0
    %1770 = vmatpush.xpose.msra.mxu0 0.0
    %1771 = vmatpush.xpose.msra.mxu0 0.0
    %1772 = vmatpush.xpose.msra.mxu0 0.0
    %1773 = vmatpush.xpose.msra.mxu0 0.0
    %1774 = vmatpush.xpose.msra.mxu0 0.0
    %1775 = vmatpush.xpose.msra.mxu0 0.0
    %1776 = vmatpush.xpose.msra.mxu0 0.0
    %1777 = vmatpush.xpose.msra.mxu0 0.0
    %1778 = vmatpush.xpose.msra.mxu0 0.0
    %1779 = vmatpush.xpose.msra.mxu0 %v1762
    %1780 = vmatmul.f32.gmra.mxu0 %v1760
    %v1781 = vpop.f32.mrf.mxu0
    %v1782 = vadd.f32 %v133, %v1781
    %1783 = vdwg.mxu0
    %v1784 = vsel %vm137, %v1704, 0
    %v1786 = vsel %vm137, %v1711, 0
    %1788 = vmatpush.xpose.msra.mxu0 0.0
    %1789 = vmatpush.xpose.msra.mxu0 0.0
    %1790 = vmatpush.xpose.msra.mxu0 0.0
    %1791 = vmatpush.xpose.msra.mxu0 0.0
    %1792 = vmatpush.xpose.msra.mxu0 0.0
    %1793 = vmatpush.xpose.msra.mxu0 0.0
    %1794 = vmatpush.xpose.msra.mxu0 0.0
    %1795 = vmatpush.xpose.msra.mxu0 0.0
    %1796 = vmatpush.xpose.msra.mxu0 0.0
    %1797 = vmatpush.xpose.msra.mxu0 0.0
    %1798 = vmatpush.xpose.msra.mxu0 0.0
    %1799 = vmatpush.xpose.msra.mxu0 0.0
    %1800 = vmatpush.xpose.msra.mxu0 0.0
    %1801 = vmatpush.xpose.msra.mxu0 0.0
    %1802 = vmatpush.xpose.msra.mxu0 0.0
    %1803 = vmatpush.xpose.msra.mxu0 %v1786
    %1804 = vmatmul.f32.gmra.mxu0 %v1784
    %v1805 = vpop.f32.mrf.mxu0
    %v1806 = vadd.f32 %v133, %v1805
    %1807 = vdwg.mxu0
    %v1808 = vsel %vm137, %v1734, -inf
    %1809 = vmax.xlane.f32.xlu0 %v1808
    %v1810 = vpop.xlane.xlu0 %1809
    %v1811 = vsel %vm137, %v1758, -inf
    %1812 = vmax.xlane.f32.xlu0 %v1811
    %v1813 = vpop.xlane.xlu0 %1812
    %v1814 = vsel %vm137, %v1782, -inf
    %1815 = vmax.xlane.f32.xlu0 %v1814
    %v1816 = vpop.xlane.xlu0 %1815
    %v1817 = vsel %vm137, %v1806, -inf
    %1818 = vmax.xlane.f32.xlu0 %v1817
    %v1819 = vpop.xlane.xlu0 %1818
    %v1820 = vsub.f32 %v1734, %v1810
    %v1821 = vsub.f32 %v1758, %v1813
    %v1822 = vsub.f32 %v1782, %v1816
    %v1823 = vsub.f32 %v1806, %v1819
    %v1824 = vmul.f32 %v1820, 1.442695
    %v1825 = vpow.pop %v1824
    %v1826 = vmul.f32 %v1821, 1.442695
    %v1827 = vpow.pop %v1826
    %v1828 = vmul.f32 %v1822, 1.442695
    %v1829 = vpow.pop %v1828
    %v1830 = vmul.f32 %v1823, 1.442695
    %v1831 = vpow.pop %v1830
    %v1832 = vsel %vm137, %v1825, 0.0
    %1833 = vadd.xlane.f32.xlu0 %v1832
    %v1834 = vpop.xlane.xlu0 %1833
    %v1835 = vsel %vm137, %v1827, 0.0
    %1836 = vadd.xlane.f32.xlu0 %v1835
    %v1837 = vpop.xlane.xlu0 %1836
    %v1838 = vsel %vm137, %v1829, 0.0
    %1839 = vadd.xlane.f32.xlu0 %v1838
    %v1840 = vpop.xlane.xlu0 %1839
    %v1841 = vsel %vm137, %v1831, 0.0
    %1842 = vadd.xlane.f32.xlu0 %v1841
    %v1843 = vpop.xlane.xlu0 %1842
    %v1844 = vrcp.pop %v1834
    %v1845 = vrcp.pop %v1837
    %v1846 = vrcp.pop %v1840
    %v1847 = vrcp.pop %v1843
    %v1848 = vmul.f32 %v1825, %v1844
    %v1849 = vmul.f32 %v1827, %v1845
    %v1850 = vmul.f32 %v1829, %v1846
    %v1851 = vmul.f32 %v1831, %v1847
    %1852 = vrot.lane.b32.xlu0 %v1695, 96
    %v1853 = vpop.permute.xlu0 %1852
    %v1856 = vsel %vm137, %v1848, 0
    %1858 = vmatpush.msra.mxu0 0.0
    %1859 = vmatpush.msra.mxu0 0.0
    %1860 = vmatpush.msra.mxu0 0.0
    %1861 = vmatpush.msra.mxu0 0.0
    %1862 = vmatpush.msra.mxu0 0.0
    %1863 = vmatpush.msra.mxu0 0.0
    %1864 = vmatpush.msra.mxu0 0.0
    %1865 = vmatpush.msra.mxu0 0.0
    %1866 = vmatpush.msra.mxu0 0.0
    %1867 = vmatpush.msra.mxu0 0.0
    %1868 = vmatpush.msra.mxu0 0.0
    %1869 = vmatpush.msra.mxu0 0.0
    %1870 = vmatpush.msra.mxu0 0.0
    %1871 = vmatpush.msra.mxu0 0.0
    %1872 = vmatpush.msra.mxu0 0.0
    %1873 = vmatpush.msra.mxu0 %v1853
    %1874 = vmatmul.f32.gmra.mxu0 %v1856
    %v1875 = vpop.f32.mrf.mxu0
    %v1876 = vadd.f32 0.0, %v1875
    %1877 = vdwg.mxu0
    %1878 = vrot.lane.b32.xlu0 %v1707, 96
    %v1879 = vpop.permute.xlu0 %1878
    %v1882 = vsel %vm137, %v1849, 0
    %1884 = vmatpush.msra.mxu0 0.0
    %1885 = vmatpush.msra.mxu0 0.0
    %1886 = vmatpush.msra.mxu0 0.0
    %1887 = vmatpush.msra.mxu0 0.0
    %1888 = vmatpush.msra.mxu0 0.0
    %1889 = vmatpush.msra.mxu0 0.0
    %1890 = vmatpush.msra.mxu0 0.0
    %1891 = vmatpush.msra.mxu0 0.0
    %1892 = vmatpush.msra.mxu0 0.0
    %1893 = vmatpush.msra.mxu0 0.0
    %1894 = vmatpush.msra.mxu0 0.0
    %1895 = vmatpush.msra.mxu0 0.0
    %1896 = vmatpush.msra.mxu0 0.0
    %1897 = vmatpush.msra.mxu0 0.0
    %1898 = vmatpush.msra.mxu0 0.0
    %1899 = vmatpush.msra.mxu0 %v1879
    %1900 = vmatmul.f32.gmra.mxu0 %v1882
    %v1901 = vpop.f32.mrf.mxu0
    %v1902 = vadd.f32 0.0, %v1901
    %1903 = vdwg.mxu0
    %1904 = vrot.lane.b32.xlu0 %v1709, 96
    %v1905 = vpop.permute.xlu0 %1904
    %v1908 = vsel %vm137, %v1850, 0
    %1910 = vmatpush.msra.mxu0 0.0
    %1911 = vmatpush.msra.mxu0 0.0
    %1912 = vmatpush.msra.mxu0 0.0
    %1913 = vmatpush.msra.mxu0 0.0
    %1914 = vmatpush.msra.mxu0 0.0
    %1915 = vmatpush.msra.mxu0 0.0
    %1916 = vmatpush.msra.mxu0 0.0
    %1917 = vmatpush.msra.mxu0 0.0
    %1918 = vmatpush.msra.mxu0 0.0
    %1919 = vmatpush.msra.mxu0 0.0
    %1920 = vmatpush.msra.mxu0 0.0
    %1921 = vmatpush.msra.mxu0 0.0
    %1922 = vmatpush.msra.mxu0 0.0
    %1923 = vmatpush.msra.mxu0 0.0
    %1924 = vmatpush.msra.mxu0 0.0
    %1925 = vmatpush.msra.mxu0 %v1905
    %1926 = vmatmul.f32.gmra.mxu0 %v1908
    %v1927 = vpop.f32.mrf.mxu0
    %v1928 = vadd.f32 0.0, %v1927
    %1929 = vdwg.mxu0
    %1930 = vrot.lane.b32.xlu0 %v1711, 96
    %v1931 = vpop.permute.xlu0 %1930
    %v1934 = vsel %vm137, %v1851, 0
    %1936 = vmatpush.msra.mxu0 0.0
    %1937 = vmatpush.msra.mxu0 0.0
    %1938 = vmatpush.msra.mxu0 0.0
    %1939 = vmatpush.msra.mxu0 0.0
    %1940 = vmatpush.msra.mxu0 0.0
    %1941 = vmatpush.msra.mxu0 0.0
    %1942 = vmatpush.msra.mxu0 0.0
    %1943 = vmatpush.msra.mxu0 0.0
    %1944 = vmatpush.msra.mxu0 0.0
    %1945 = vmatpush.msra.mxu0 0.0
    %1946 = vmatpush.msra.mxu0 0.0
    %1947 = vmatpush.msra.mxu0 0.0
    %1948 = vmatpush.msra.mxu0 0.0
    %1949 = vmatpush.msra.mxu0 0.0
    %1950 = vmatpush.msra.mxu0 0.0
    %1951 = vmatpush.msra.mxu0 %v1931
    %1952 = vmatmul.f32.gmra.mxu0 %v1934
    %v1953 = vpop.f32.mrf.mxu0
    %v1954 = vadd.f32 0.0, %v1953
    %1955 = vdwg.mxu0
    %v1957 = vsel %vm137, %v1876, 0
    %1959 = vmatpush.msra.mxu0 0.0
    %1960 = vmatpush.msra.mxu0 0.0
    %1961 = vmatpush.msra.mxu0 0.0
    %1962 = vmatpush.msra.mxu0 0.0
    %1963 = vmatpush.msra.mxu0 0.0
    %1964 = vmatpush.msra.mxu0 0.0
    %1965 = vmatpush.msra.mxu0 0.0
    %1966 = vmatpush.msra.mxu0 0.0
    %1967 = vmatpush.msra.mxu0 0.0
    %1968 = vmatpush.msra.mxu0 0.0
    %1969 = vmatpush.msra.mxu0 0.0
    %1970 = vmatpush.msra.mxu0 0.0
    %1971 = vmatpush.msra.mxu0 0.0
    %1972 = vmatpush.msra.mxu0 0.0
    %1973 = vmatpush.msra.mxu0 0.0
    %1974 = vmatpush.msra.mxu0 %v1625
    %1975 = vmatmul.f32.gmra.mxu0 %v1957
    %v1976 = vpop.f32.mrf.mxu0
    %v1977 = vadd.f32 0.0, %v1976
    %1978 = vdwg.mxu0
    %v1980 = vsel %vm137, %v1902, 0
    %1982 = vmatpush.msra.mxu0 0.0
    %1983 = vmatpush.msra.mxu0 0.0
    %1984 = vmatpush.msra.mxu0 0.0
    %1985 = vmatpush.msra.mxu0 0.0
    %1986 = vmatpush.msra.mxu0 0.0
    %1987 = vmatpush.msra.mxu0 0.0
    %1988 = vmatpush.msra.mxu0 0.0
    %1989 = vmatpush.msra.mxu0 0.0
    %1990 = vmatpush.msra.mxu0 0.0
    %1991 = vmatpush.msra.mxu0 0.0
    %1992 = vmatpush.msra.mxu0 0.0
    %1993 = vmatpush.msra.mxu0 0.0
    %1994 = vmatpush.msra.mxu0 0.0
    %1995 = vmatpush.msra.mxu0 0.0
    %1996 = vmatpush.msra.mxu0 0.0
    %1997 = vmatpush.msra.mxu0 %v1626
    %1998 = vmatmul.f32.gmra.mxu0 %v1980
    %v1999 = vpop.f32.mrf.mxu0
    %v2000 = vadd.f32 0.0, %v1999
    %2001 = vdwg.mxu0
    %v2003 = vsel %vm137, %v1928, 0
    %2005 = vmatpush.msra.mxu0 0.0
    %2006 = vmatpush.msra.mxu0 0.0
    %2007 = vmatpush.msra.mxu0 0.0
    %2008 = vmatpush.msra.mxu0 0.0
    %2009 = vmatpush.msra.mxu0 0.0
    %2010 = vmatpush.msra.mxu0 0.0
    %2011 = vmatpush.msra.mxu0 0.0
    %2012 = vmatpush.msra.mxu0 0.0
    %2013 = vmatpush.msra.mxu0 0.0
    %2014 = vmatpush.msra.mxu0 0.0
    %2015 = vmatpush.msra.mxu0 0.0
    %2016 = vmatpush.msra.mxu0 0.0
    %2017 = vmatpush.msra.mxu0 0.0
    %2018 = vmatpush.msra.mxu0 0.0
    %2019 = vmatpush.msra.mxu0 0.0
    %2020 = vmatpush.msra.mxu0 %v1627
    %2021 = vmatmul.f32.gmra.mxu0 %v2003
    %v2022 = vpop.f32.mrf.mxu0
    %v2023 = vadd.f32 0.0, %v2022
    %2024 = vdwg.mxu0
    %v2026 = vsel %vm137, %v1954, 0
    %2028 = vmatpush.msra.mxu0 0.0
    %2029 = vmatpush.msra.mxu0 0.0
    %2030 = vmatpush.msra.mxu0 0.0
    %2031 = vmatpush.msra.mxu0 0.0
    %2032 = vmatpush.msra.mxu0 0.0
    %2033 = vmatpush.msra.mxu0 0.0
    %2034 = vmatpush.msra.mxu0 0.0
    %2035 = vmatpush.msra.mxu0 0.0
    %2036 = vmatpush.msra.mxu0 0.0
    %2037 = vmatpush.msra.mxu0 0.0
    %2038 = vmatpush.msra.mxu0 0.0
    %2039 = vmatpush.msra.mxu0 0.0
    %2040 = vmatpush.msra.mxu0 0.0
    %2041 = vmatpush.msra.mxu0 0.0
    %2042 = vmatpush.msra.mxu0 0.0
    %2043 = vmatpush.msra.mxu0 %v1628
    %2044 = vmatmul.f32.gmra.mxu0 %v2026
    %v2045 = vpop.f32.mrf.mxu0
    %v2046 = vadd.f32 0.0, %v2045
    %2047 = vdwg.mxu0
    %v2048 = vsel %vm46, %v1977, 0.0
    %v2049 = vsel %vm46, %v2000, 0.0
    %v2050 = vadd.f32 %v2048, %v2049
    %v2051 = vsel %vm46, %v2023, 0.0
    %v2052 = vadd.f32 %v2050, %v2051
    %v2053 = vsel %vm46, %v2046, 0.0
    %v2054 = vadd.f32 %v2052, %v2053
    %v2055 = vperm.slane %v1629, 0
    %v2056 = vadd.f32 %v2054, %v2055
    %v2057 = vadd.f32 %v1586, %v2056
    %v2058 = vld [vmem:[%s9 + $0x18] sm:$0x1]
    %v2059 = vld [vmem:[%s9 + $0x19] sm:$0x1]
    %v2060 = vsel %vm46, %v2057, 0.0
    %2061 = vadd.xlane.f32.xlu0 %v2060
    %v2062 = vpop.xlane.xlu0 %2061
    %v2063 = vmul.f32 %v2062, %v56
    %v2064 = vsub.f32 %v2057, %v2063
    %v2065 = vmul.f32 %v2064, %v2064
    %v2066 = vsel %vm46, %v2065, 0.0
    %2067 = vadd.xlane.f32.xlu0 %v2066
    %v2068 = vpop.xlane.xlu0 %2067
    %v2069 = vmul.f32 %v2068, 0.032258064
    %v2070 = vrsqrt.pop %v2069
    %v2071 = vmul.f32 %v2070, %v2069
    %v2072 = vmul.f32 %v2071, %v2070
    %v2073 = vmul.f32 0.5, %v2072
    %v2074 = vsub.f32 1.5, %v2073
    %v2075 = vmul.f32 %v2070, %v2074
    %v2076 = vmul.f32 %v2069, %v2075
    %vm2077 = vcmp.eq.f32.partialorder %v2069, inf
    %v2078 = vsel %vm2077, %v2069, %v2076
    %vm2079 = vcmp.eq.f32.partialorder %v2069, 0.0
    %v2080 = vand.u32 %v2069, 2147483648
    %v2081 = vsel %vm2079, %v2080, %v2078
    %v2082 = vadd.f32 %v2081, 1e-06
    %v2083 = vrcp.pop %v2082
    %v2084 = vmul.f32 %v2064, %v2083
    %v2085 = vperm.slane %v2058, 0
    %v2086 = vmul.f32 %v2085, %v2084
    %v2087 = vperm.slane %v2059, 0
    %v2088 = vadd.f32 %v2086, %v2087
    %s2089 = scalar_lea.vmem %s6, 64
    %v2090 = vld [vmem:[%s2089] sm:$0xff]
    %v2091 = vld [vmem:[%s2089 + $0x8] sm:$0xff]
    %v2092 = vld [vmem:[%s2089 + $0x10] sm:$0xff]
    %v2093 = vld [vmem:[%s2089 + $0x18] sm:$0xff]
    %v2094 = vld [vmem:[%s9 + $0x1a] sm:$0x1]
    %s2095 = scalar_lea.vmem %s7, 128
    %v2096 = vld [vmem:[%s2095] sm:$0xff]
    %v2097 = vld [vmem:[%s2095 + $0x8] sm:$0xff]
    %v2098 = vld [vmem:[%s2095 + $0x10] sm:$0xff]
    %v2099 = vld [vmem:[%s2095 + $0x18] sm:$0xff]
    %v2100 = vld [vmem:[%s2095 + $0x20] sm:$0xff]
    %v2101 = vld [vmem:[%s2095 + $0x28] sm:$0xff]
    %v2102 = vld [vmem:[%s2095 + $0x30] sm:$0xff]
    %v2103 = vld [vmem:[%s2095 + $0x38] sm:$0xff]
    %v2104 = vld [vmem:[%s9 + $0x1b] sm:$0x1]
    %v2105 = vperm.slane %v2094, 0
    %v2107 = vsel %vm46, %v2088, 0
    %2109 = vmatpush.msra.mxu0 0.0
    %2110 = vmatpush.msra.mxu0 0.0
    %2111 = vmatpush.msra.mxu0 0.0
    %2112 = vmatpush.msra.mxu0 0.0
    %2113 = vmatpush.msra.mxu0 0.0
    %2114 = vmatpush.msra.mxu0 0.0
    %2115 = vmatpush.msra.mxu0 0.0
    %2116 = vmatpush.msra.mxu0 0.0
    %2117 = vmatpush.msra.mxu0 0.0
    %2118 = vmatpush.msra.mxu0 0.0
    %2119 = vmatpush.msra.mxu0 0.0
    %2120 = vmatpush.msra.mxu0 0.0
    %2121 = vmatpush.msra.mxu0 %v2093
    %2122 = vmatpush.msra.mxu0 %v2092
    %2123 = vmatpush.msra.mxu0 %v2091
    %2124 = vmatpush.msra.mxu0 %v2090
    %2125 = vmatmul.f32.gmra.mxu0 %v2107
    %v2126 = vpop.f32.mrf.mxu0
    %v2127 = vadd.f32 %v2105, %v2126
    %2128 = vdwg.mxu0
    %v2129 = vmax.f32 %v2127, 0.0
    %v2130 = vperm.slane %v2104, 0
    %v2132 = vsel %vm561, %v2129, 0
    %2134 = vmatpush.msra.mxu0 0.0
    %2135 = vmatpush.msra.mxu0 0.0
    %2136 = vmatpush.msra.mxu0 0.0
    %2137 = vmatpush.msra.mxu0 0.0
    %2138 = vmatpush.msra.mxu0 0.0
    %2139 = vmatpush.msra.mxu0 0.0
    %2140 = vmatpush.msra.mxu0 0.0
    %2141 = vmatpush.msra.mxu0 0.0
    %2142 = vmatpush.msra.mxu0 %v2103
    %2143 = vmatpush.msra.mxu0 %v2102
    %2144 = vmatpush.msra.mxu0 %v2101
    %2145 = vmatpush.msra.mxu0 %v2100
    %2146 = vmatpush.msra.mxu0 %v2099
    %2147 = vmatpush.msra.mxu0 %v2098
    %2148 = vmatpush.msra.mxu0 %v2097
    %2149 = vmatpush.msra.mxu0 %v2096
    %2150 = vmatmul.f32.gmra.mxu0 %v2132
    %v2151 = vpop.f32.mrf.mxu0
    %v2152 = vadd.f32 %v2130, %v2151
    %2153 = vdwg.mxu0
    %v2154 = vadd.f32 %v2057, %v2152
    %v2155 = vld [vmem:[%s9 + $0x1c] sm:$0x1]
    %v2156 = vld [vmem:[%s9 + $0x1d] sm:$0x1]
    %v2157 = vsel %vm46, %v2154, 0.0
    %2158 = vadd.xlane.f32.xlu0 %v2157
    %v2159 = vpop.xlane.xlu0 %2158
    %v2160 = vmul.f32 %v2159, %v56
    %v2161 = vsub.f32 %v2154, %v2160
    %v2162 = vmul.f32 %v2161, %v2161
    %v2163 = vsel %vm46, %v2162, 0.0
    %2164 = vadd.xlane.f32.xlu0 %v2163
    %v2165 = vpop.xlane.xlu0 %2164
    %v2166 = vmul.f32 %v2165, 0.032258064
    %v2167 = vrsqrt.pop %v2166
    %v2168 = vmul.f32 %v2167, %v2166
    %v2169 = vmul.f32 %v2168, %v2167
    %v2170 = vmul.f32 0.5, %v2169
    %v2171 = vsub.f32 1.5, %v2170
    %v2172 = vmul.f32 %v2167, %v2171
    %v2173 = vmul.f32 %v2166, %v2172
    %vm2174 = vcmp.eq.f32.partialorder %v2166, inf
    %v2175 = vsel %vm2174, %v2166, %v2173
    %vm2176 = vcmp.eq.f32.partialorder %v2166, 0.0
    %v2177 = vand.u32 %v2166, 2147483648
    %v2178 = vsel %vm2176, %v2177, %v2175
    %v2179 = vadd.f32 %v2178, 1e-06
    %v2180 = vrcp.pop %v2179
    %v2181 = vmul.f32 %v2161, %v2180
    %v2182 = vperm.slane %v2155, 0
    %v2183 = vmul.f32 %v2182, %v2181
    %v2184 = vperm.slane %v2156, 0
    %v2185 = vadd.f32 %v2183, %v2184
    %s2186 = scalar_lea.vmem %s4, 96
    %v2187 = vld [vmem:[%s2186] sm:$0xff]
    %v2188 = vld [vmem:[%s2186 + $0x8] sm:$0xff]
    %v2189 = vld [vmem:[%s2186 + $0x10] sm:$0xff]
    %v2190 = vld [vmem:[%s2186 + $0x18] sm:$0xff]
    %v2191 = vld [vmem:[%s9 + $0x1e] sm:$0x1]
    %s2192 = scalar_lea.vmem %s5, 96
    %v2193 = vld [vmem:[%s2192] sm:$0xff]
    %v2194 = vld [vmem:[%s2192 + $0x8] sm:$0xff]
    %v2195 = vld [vmem:[%s2192 + $0x10] sm:$0xff]
    %v2196 = vld [vmem:[%s2192 + $0x18] sm:$0xff]
    %v2197 = vld [vmem:[%s9 + $0x1f] sm:$0x1]
    %v2198 = vperm.slane %v2191, 0
    %v2200 = vsel %vm46, %v2185, 0
    %2202 = vmatpush.msra.mxu0 0.0
    %2203 = vmatpush.msra.mxu0 0.0
    %2204 = vmatpush.msra.mxu0 0.0
    %2205 = vmatpush.msra.mxu0 0.0
    %2206 = vmatpush.msra.mxu0 0.0
    %2207 = vmatpush.msra.mxu0 0.0
    %2208 = vmatpush.msra.mxu0 0.0
    %2209 = vmatpush.msra.mxu0 0.0
    %2210 = vmatpush.msra.mxu0 0.0
    %2211 = vmatpush.msra.mxu0 0.0
    %2212 = vmatpush.msra.mxu0 0.0
    %2213 = vmatpush.msra.mxu0 0.0
    %2214 = vmatpush.msra.mxu0 %v2190
    %2215 = vmatpush.msra.mxu0 %v2189
    %2216 = vmatpush.msra.mxu0 %v2188
    %2217 = vmatpush.msra.mxu0 %v2187
    %2218 = vmatmul.f32.gmra.mxu0 %v2200
    %v2219 = vpop.f32.mrf.mxu0
    %v2220 = vadd.f32 %v2198, %v2219
    %2221 = vdwg.mxu0
    %v2222 = vmul.f32 %v2220, 0.35355338
    %2224 = vrot.lane.b32.xlu0 %v2222, 120
    %v2225 = vpop.permute.xlu0 %2224
    %2226 = vrot.lane.b32.xlu0 %v2222, 112
    %v2227 = vpop.permute.xlu0 %2226
    %2228 = vrot.lane.b32.xlu0 %v2222, 104
    %v2229 = vpop.permute.xlu0 %2228
    %2231 = vrot.lane.b32.xlu0 %v2220, 120
    %v2232 = vpop.permute.xlu0 %2231
    %2233 = vrot.lane.b32.xlu0 %v2220, 112
    %v2234 = vpop.permute.xlu0 %2233
    %2235 = vrot.lane.b32.xlu0 %v2220, 104
    %v2236 = vpop.permute.xlu0 %2235
    %2237 = vrot.lane.b32.xlu0 %v2220, 96
    %v2238 = vpop.permute.xlu0 %2237
    %v2239 = vsel %vm137, %v2222, 0
    %v2241 = vsel %vm137, %v2238, 0
    %2243 = vmatpush.xpose.msra.mxu0 0.0
    %2244 = vmatpush.xpose.msra.mxu0 0.0
    %2245 = vmatpush.xpose.msra.mxu0 0.0
    %2246 = vmatpush.xpose.msra.mxu0 0.0
    %2247 = vmatpush.xpose.msra.mxu0 0.0
    %2248 = vmatpush.xpose.msra.mxu0 0.0
    %2249 = vmatpush.xpose.msra.mxu0 0.0
    %2250 = vmatpush.xpose.msra.mxu0 0.0
    %2251 = vmatpush.xpose.msra.mxu0 0.0
    %2252 = vmatpush.xpose.msra.mxu0 0.0
    %2253 = vmatpush.xpose.msra.mxu0 0.0
    %2254 = vmatpush.xpose.msra.mxu0 0.0
    %2255 = vmatpush.xpose.msra.mxu0 0.0
    %2256 = vmatpush.xpose.msra.mxu0 0.0
    %2257 = vmatpush.xpose.msra.mxu0 0.0
    %2258 = vmatpush.xpose.msra.mxu0 %v2241
    %2259 = vmatmul.f32.gmra.mxu0 %v2239
    %v2260 = vpop.f32.mrf.mxu0
    %v2261 = vadd.f32 %v42, %v2260
    %2262 = vdwg.mxu0
    %2263 = vrot.lane.b32.xlu0 %v2232, 96
    %v2264 = vpop.permute.xlu0 %2263
    %v2265 = vsel %vm137, %v2225, 0
    %v2267 = vsel %vm137, %v2264, 0
    %2269 = vmatpush.xpose.msra.mxu0 0.0
    %2270 = vmatpush.xpose.msra.mxu0 0.0
    %2271 = vmatpush.xpose.msra.mxu0 0.0
    %2272 = vmatpush.xpose.msra.mxu0 0.0
    %2273 = vmatpush.xpose.msra.mxu0 0.0
    %2274 = vmatpush.xpose.msra.mxu0 0.0
    %2275 = vmatpush.xpose.msra.mxu0 0.0
    %2276 = vmatpush.xpose.msra.mxu0 0.0
    %2277 = vmatpush.xpose.msra.mxu0 0.0
    %2278 = vmatpush.xpose.msra.mxu0 0.0
    %2279 = vmatpush.xpose.msra.mxu0 0.0
    %2280 = vmatpush.xpose.msra.mxu0 0.0
    %2281 = vmatpush.xpose.msra.mxu0 0.0
    %2282 = vmatpush.xpose.msra.mxu0 0.0
    %2283 = vmatpush.xpose.msra.mxu0 0.0
    %2284 = vmatpush.xpose.msra.mxu0 %v2267
    %2285 = vmatmul.f32.gmra.mxu0 %v2265
    %v2286 = vpop.f32.mrf.mxu0
    %v2287 = vadd.f32 %v42, %v2286
    %2288 = vdwg.mxu0
    %2289 = vrot.lane.b32.xlu0 %v2234, 96
    %v2290 = vpop.permute.xlu0 %2289
    %v2291 = vsel %vm137, %v2227, 0
    %v2293 = vsel %vm137, %v2290, 0
    %2295 = vmatpush.xpose.msra.mxu0 0.0
    %2296 = vmatpush.xpose.msra.mxu0 0.0
    %2297 = vmatpush.xpose.msra.mxu0 0.0
    %2298 = vmatpush.xpose.msra.mxu0 0.0
    %2299 = vmatpush.xpose.msra.mxu0 0.0
    %2300 = vmatpush.xpose.msra.mxu0 0.0
    %2301 = vmatpush.xpose.msra.mxu0 0.0
    %2302 = vmatpush.xpose.msra.mxu0 0.0
    %2303 = vmatpush.xpose.msra.mxu0 0.0
    %2304 = vmatpush.xpose.msra.mxu0 0.0
    %2305 = vmatpush.xpose.msra.mxu0 0.0
    %2306 = vmatpush.xpose.msra.mxu0 0.0
    %2307 = vmatpush.xpose.msra.mxu0 0.0
    %2308 = vmatpush.xpose.msra.mxu0 0.0
    %2309 = vmatpush.xpose.msra.mxu0 0.0
    %2310 = vmatpush.xpose.msra.mxu0 %v2293
    %2311 = vmatmul.f32.gmra.mxu0 %v2291
    %v2312 = vpop.f32.mrf.mxu0
    %v2313 = vadd.f32 %v42, %v2312
    %2314 = vdwg.mxu0
    %2315 = vrot.lane.b32.xlu0 %v2236, 96
    %v2316 = vpop.permute.xlu0 %2315
    %v2317 = vsel %vm137, %v2229, 0
    %v2319 = vsel %vm137, %v2316, 0
    %2321 = vmatpush.xpose.msra.mxu0 0.0
    %2322 = vmatpush.xpose.msra.mxu0 0.0
    %2323 = vmatpush.xpose.msra.mxu0 0.0
    %2324 = vmatpush.xpose.msra.mxu0 0.0
    %2325 = vmatpush.xpose.msra.mxu0 0.0
    %2326 = vmatpush.xpose.msra.mxu0 0.0
    %2327 = vmatpush.xpose.msra.mxu0 0.0
    %2328 = vmatpush.xpose.msra.mxu0 0.0
    %2329 = vmatpush.xpose.msra.mxu0 0.0
    %2330 = vmatpush.xpose.msra.mxu0 0.0
    %2331 = vmatpush.xpose.msra.mxu0 0.0
    %2332 = vmatpush.xpose.msra.mxu0 0.0
    %2333 = vmatpush.xpose.msra.mxu0 0.0
    %2334 = vmatpush.xpose.msra.mxu0 0.0
    %2335 = vmatpush.xpose.msra.mxu0 0.0
    %2336 = vmatpush.xpose.msra.mxu0 %v2319
    %2337 = vmatmul.f32.gmra.mxu0 %v2317
    %v2338 = vpop.f32.mrf.mxu0
    %v2339 = vadd.f32 %v42, %v2338
    %2340 = vdwg.mxu0
    %v2341 = vsel %vm137, %v2261, -inf
    %2342 = vmax.xlane.f32.xlu0 %v2341
    %v2343 = vpop.xlane.xlu0 %2342
    %v2344 = vsel %vm137, %v2287, -inf
    %2345 = vmax.xlane.f32.xlu0 %v2344
    %v2346 = vpop.xlane.xlu0 %2345
    %v2347 = vsel %vm137, %v2313, -inf
    %2348 = vmax.xlane.f32.xlu0 %v2347
    %v2349 = vpop.xlane.xlu0 %2348
    %v2350 = vsel %vm137, %v2339, -inf
    %2351 = vmax.xlane.f32.xlu0 %v2350
    %v2352 = vpop.xlane.xlu0 %2351
    %v2353 = vsub.f32 %v2261, %v2343
    %v2354 = vsub.f32 %v2287, %v2346
    %v2355 = vsub.f32 %v2313, %v2349
    %v2356 = vsub.f32 %v2339, %v2352
    %v2357 = vmul.f32 %v2353, 1.442695
    %v2358 = vpow.pop %v2357
    %v2359 = vmul.f32 %v2354, 1.442695
    %v2360 = vpow.pop %v2359
    %v2361 = vmul.f32 %v2355, 1.442695
    %v2362 = vpow.pop %v2361
    %v2363 = vmul.f32 %v2356, 1.442695
    %v2364 = vpow.pop %v2363
    %v2365 = vsel %vm137, %v2358, 0.0
    %2366 = vadd.xlane.f32.xlu0 %v2365
    %v2367 = vpop.xlane.xlu0 %2366
    %v2368 = vsel %vm137, %v2360, 0.0
    %2369 = vadd.xlane.f32.xlu0 %v2368
    %v2370 = vpop.xlane.xlu0 %2369
    %v2371 = vsel %vm137, %v2362, 0.0
    %2372 = vadd.xlane.f32.xlu0 %v2371
    %v2373 = vpop.xlane.xlu0 %2372
    %v2374 = vsel %vm137, %v2364, 0.0
    %2375 = vadd.xlane.f32.xlu0 %v2374
    %v2376 = vpop.xlane.xlu0 %2375
    %v2377 = vrcp.pop %v2367
    %v2378 = vrcp.pop %v2370
    %v2379 = vrcp.pop %v2373
    %v2380 = vrcp.pop %v2376
    %v2381 = vmul.f32 %v2358, %v2377
    %v2382 = vmul.f32 %v2360, %v2378
    %v2383 = vmul.f32 %v2362, %v2379
    %v2384 = vmul.f32 %v2364, %v2380
    %2385 = vrot.lane.b32.xlu0 %v2220, 64
    %v2386 = vpop.permute.xlu0 %2385
    %v2389 = vsel %vm137, %v2381, 0
    %2391 = vmatpush.msra.mxu0 0.0
    %2392 = vmatpush.msra.mxu0 0.0
    %2393 = vmatpush.msra.mxu0 0.0
    %2394 = vmatpush.msra.mxu0 0.0
    %2395 = vmatpush.msra.mxu0 0.0
    %2396 = vmatpush.msra.mxu0 0.0
    %2397 = vmatpush.msra.mxu0 0.0
    %2398 = vmatpush.msra.mxu0 0.0
    %2399 = vmatpush.msra.mxu0 0.0
    %2400 = vmatpush.msra.mxu0 0.0
    %2401 = vmatpush.msra.mxu0 0.0
    %2402 = vmatpush.msra.mxu0 0.0
    %2403 = vmatpush.msra.mxu0 0.0
    %2404 = vmatpush.msra.mxu0 0.0
    %2405 = vmatpush.msra.mxu0 0.0
    %2406 = vmatpush.msra.mxu0 %v2386
    %2407 = vmatmul.f32.gmra.mxu0 %v2389
    %v2408 = vpop.f32.mrf.mxu0
    %v2409 = vadd.f32 0.0, %v2408
    %2410 = vdwg.mxu0
    %2411 = vrot.lane.b32.xlu0 %v2232, 64
    %v2412 = vpop.permute.xlu0 %2411
    %v2415 = vsel %vm137, %v2382, 0
    %2417 = vmatpush.msra.mxu0 0.0
    %2418 = vmatpush.msra.mxu0 0.0
    %2419 = vmatpush.msra.mxu0 0.0
    %2420 = vmatpush.msra.mxu0 0.0
    %2421 = vmatpush.msra.mxu0 0.0
    %2422 = vmatpush.msra.mxu0 0.0
    %2423 = vmatpush.msra.mxu0 0.0
    %2424 = vmatpush.msra.mxu0 0.0
    %2425 = vmatpush.msra.mxu0 0.0
    %2426 = vmatpush.msra.mxu0 0.0
    %2427 = vmatpush.msra.mxu0 0.0
    %2428 = vmatpush.msra.mxu0 0.0
    %2429 = vmatpush.msra.mxu0 0.0
    %2430 = vmatpush.msra.mxu0 0.0
    %2431 = vmatpush.msra.mxu0 0.0
    %2432 = vmatpush.msra.mxu0 %v2412
    %2433 = vmatmul.f32.gmra.mxu0 %v2415
    %v2434 = vpop.f32.mrf.mxu0
    %v2435 = vadd.f32 0.0, %v2434
    %2436 = vdwg.mxu0
    %2437 = vrot.lane.b32.xlu0 %v2234, 64
    %v2438 = vpop.permute.xlu0 %2437
    %v2441 = vsel %vm137, %v2383, 0
    %2443 = vmatpush.msra.mxu0 0.0
    %2444 = vmatpush.msra.mxu0 0.0
    %2445 = vmatpush.msra.mxu0 0.0
    %2446 = vmatpush.msra.mxu0 0.0
    %2447 = vmatpush.msra.mxu0 0.0
    %2448 = vmatpush.msra.mxu0 0.0
    %2449 = vmatpush.msra.mxu0 0.0
    %2450 = vmatpush.msra.mxu0 0.0
    %2451 = vmatpush.msra.mxu0 0.0
    %2452 = vmatpush.msra.mxu0 0.0
    %2453 = vmatpush.msra.mxu0 0.0
    %2454 = vmatpush.msra.mxu0 0.0
    %2455 = vmatpush.msra.mxu0 0.0
    %2456 = vmatpush.msra.mxu0 0.0
    %2457 = vmatpush.msra.mxu0 0.0
    %2458 = vmatpush.msra.mxu0 %v2438
    %2459 = vmatmul.f32.gmra.mxu0 %v2441
    %v2460 = vpop.f32.mrf.mxu0
    %v2461 = vadd.f32 0.0, %v2460
    %2462 = vdwg.mxu0
    %2463 = vrot.lane.b32.xlu0 %v2236, 64
    %v2464 = vpop.permute.xlu0 %2463
    %v2467 = vsel %vm137, %v2384, 0
    %2469 = vmatpush.msra.mxu0 0.0
    %2470 = vmatpush.msra.mxu0 0.0
    %2471 = vmatpush.msra.mxu0 0.0
    %2472 = vmatpush.msra.mxu0 0.0
    %2473 = vmatpush.msra.mxu0 0.0
    %2474 = vmatpush.msra.mxu0 0.0
    %2475 = vmatpush.msra.mxu0 0.0
    %2476 = vmatpush.msra.mxu0 0.0
    %2477 = vmatpush.msra.mxu0 0.0
    %2478 = vmatpush.msra.mxu0 0.0
    %2479 = vmatpush.msra.mxu0 0.0
    %2480 = vmatpush.msra.mxu0 0.0
    %2481 = vmatpush.msra.mxu0 0.0
    %2482 = vmatpush.msra.mxu0 0.0
    %2483 = vmatpush.msra.mxu0 0.0
    %2484 = vmatpush.msra.mxu0 %v2464
    %2485 = vmatmul.f32.gmra.mxu0 %v2467
    %v2486 = vpop.f32.mrf.mxu0
    %v2487 = vadd.f32 0.0, %v2486
    %2488 = vdwg.mxu0
    %v2490 = vsel %vm137, %v2409, 0
    %2492 = vmatpush.msra.mxu0 0.0
    %2493 = vmatpush.msra.mxu0 0.0
    %2494 = vmatpush.msra.mxu0 0.0
    %2495 = vmatpush.msra.mxu0 0.0
    %2496 = vmatpush.msra.mxu0 0.0
    %2497 = vmatpush.msra.mxu0 0.0
    %2498 = vmatpush.msra.mxu0 0.0
    %2499 = vmatpush.msra.mxu0 0.0
    %2500 = vmatpush.msra.mxu0 0.0
    %2501 = vmatpush.msra.mxu0 0.0
    %2502 = vmatpush.msra.mxu0 0.0
    %2503 = vmatpush.msra.mxu0 0.0
    %2504 = vmatpush.msra.mxu0 0.0
    %2505 = vmatpush.msra.mxu0 0.0
    %2506 = vmatpush.msra.mxu0 0.0
    %2507 = vmatpush.msra.mxu0 %v2193
    %2508 = vmatmul.f32.gmra.mxu0 %v2490
    %v2509 = vpop.f32.mrf.mxu0
    %v2510 = vadd.f32 0.0, %v2509
    %2511 = vdwg.mxu0
    %v2513 = vsel %vm137, %v2435, 0
    %2515 = vmatpush.msra.mxu0 0.0
    %2516 = vmatpush.msra.mxu0 0.0
    %2517 = vmatpush.msra.mxu0 0.0
    %2518 = vmatpush.msra.mxu0 0.0
    %2519 = vmatpush.msra.mxu0 0.0
    %2520 = vmatpush.msra.mxu0 0.0
    %2521 = vmatpush.msra.mxu0 0.0
    %2522 = vmatpush.msra.mxu0 0.0
    %2523 = vmatpush.msra.mxu0 0.0
    %2524 = vmatpush.msra.mxu0 0.0
    %2525 = vmatpush.msra.mxu0 0.0
    %2526 = vmatpush.msra.mxu0 0.0
    %2527 = vmatpush.msra.mxu0 0.0
    %2528 = vmatpush.msra.mxu0 0.0
    %2529 = vmatpush.msra.mxu0 0.0
    %2530 = vmatpush.msra.mxu0 %v2194
    %2531 = vmatmul.f32.gmra.mxu0 %v2513
    %v2532 = vpop.f32.mrf.mxu0
    %v2533 = vadd.f32 0.0, %v2532
    %2534 = vdwg.mxu0
    %v2536 = vsel %vm137, %v2461, 0
    %2538 = vmatpush.msra.mxu0 0.0
    %2539 = vmatpush.msra.mxu0 0.0
    %2540 = vmatpush.msra.mxu0 0.0
    %2541 = vmatpush.msra.mxu0 0.0
    %2542 = vmatpush.msra.mxu0 0.0
    %2543 = vmatpush.msra.mxu0 0.0
    %2544 = vmatpush.msra.mxu0 0.0
    %2545 = vmatpush.msra.mxu0 0.0
    %2546 = vmatpush.msra.mxu0 0.0
    %2547 = vmatpush.msra.mxu0 0.0
    %2548 = vmatpush.msra.mxu0 0.0
    %2549 = vmatpush.msra.mxu0 0.0
    %2550 = vmatpush.msra.mxu0 0.0
    %2551 = vmatpush.msra.mxu0 0.0
    %2552 = vmatpush.msra.mxu0 0.0
    %2553 = vmatpush.msra.mxu0 %v2195
    %2554 = vmatmul.f32.gmra.mxu0 %v2536
    %v2555 = vpop.f32.mrf.mxu0
    %v2556 = vadd.f32 0.0, %v2555
    %2557 = vdwg.mxu0
    %v2559 = vsel %vm137, %v2487, 0
    %2561 = vmatpush.msra.mxu0 0.0
    %2562 = vmatpush.msra.mxu0 0.0
    %2563 = vmatpush.msra.mxu0 0.0
    %2564 = vmatpush.msra.mxu0 0.0
    %2565 = vmatpush.msra.mxu0 0.0
    %2566 = vmatpush.msra.mxu0 0.0
    %2567 = vmatpush.msra.mxu0 0.0
    %2568 = vmatpush.msra.mxu0 0.0
    %2569 = vmatpush.msra.mxu0 0.0
    %2570 = vmatpush.msra.mxu0 0.0
    %2571 = vmatpush.msra.mxu0 0.0
    %2572 = vmatpush.msra.mxu0 0.0
    %2573 = vmatpush.msra.mxu0 0.0
    %2574 = vmatpush.msra.mxu0 0.0
    %2575 = vmatpush.msra.mxu0 0.0
    %2576 = vmatpush.msra.mxu0 %v2196
    %2577 = vmatmul.f32.gmra.mxu0 %v2559
    %v2578 = vpop.f32.mrf.mxu0
    %v2579 = vadd.f32 0.0, %v2578
    %2580 = vdwg.mxu0
    %v2581 = vsel %vm46, %v2510, 0.0
    %v2582 = vsel %vm46, %v2533, 0.0
    %v2583 = vadd.f32 %v2581, %v2582
    %v2584 = vsel %vm46, %v2556, 0.0
    %v2585 = vadd.f32 %v2583, %v2584
    %v2586 = vsel %vm46, %v2579, 0.0
    %v2587 = vadd.f32 %v2585, %v2586
    %v2588 = vperm.slane %v2197, 0
    %v2589 = vadd.f32 %v2587, %v2588
    %v2590 = vadd.f32 %v2154, %v2589
    %v2591 = vld [vmem:[%s9 + $0x20] sm:$0x1]
    %v2592 = vld [vmem:[%s9 + $0x21] sm:$0x1]
    %v2593 = vsel %vm46, %v2590, 0.0
    %2594 = vadd.xlane.f32.xlu0 %v2593
    %v2595 = vpop.xlane.xlu0 %2594
    %v2596 = vmul.f32 %v2595, %v56
    %v2597 = vsub.f32 %v2590, %v2596
    %v2598 = vmul.f32 %v2597, %v2597
    %v2599 = vsel %vm46, %v2598, 0.0
    %2600 = vadd.xlane.f32.xlu0 %v2599
    %v2601 = vpop.xlane.xlu0 %2600
    %v2602 = vmul.f32 %v2601, 0.032258064
    %v2603 = vrsqrt.pop %v2602
    %v2604 = vmul.f32 %v2603, %v2602
    %v2605 = vmul.f32 %v2604, %v2603
    %v2606 = vmul.f32 0.5, %v2605
    %v2607 = vsub.f32 1.5, %v2606
    %v2608 = vmul.f32 %v2603, %v2607
    %v2609 = vmul.f32 %v2602, %v2608
    %vm2610 = vcmp.eq.f32.partialorder %v2602, inf
    %v2611 = vsel %vm2610, %v2602, %v2609
    %vm2612 = vcmp.eq.f32.partialorder %v2602, 0.0
    %v2613 = vand.u32 %v2602, 2147483648
    %v2614 = vsel %vm2612, %v2613, %v2611
    %v2615 = vadd.f32 %v2614, 1e-06
    %v2616 = vrcp.pop %v2615
    %v2617 = vmul.f32 %v2597, %v2616
    %v2618 = vperm.slane %v2591, 0
    %v2619 = vmul.f32 %v2618, %v2617
    %v2620 = vperm.slane %v2592, 0
    %v2621 = vadd.f32 %v2619, %v2620
    %s2622 = scalar_lea.vmem %s4, 160
    %v2623 = vld [vmem:[%s2622] sm:$0xff]
    %v2624 = vld [vmem:[%s2622 + $0x8] sm:$0xff]
    %v2625 = vld [vmem:[%s2622 + $0x10] sm:$0xff]
    %v2626 = vld [vmem:[%s2622 + $0x18] sm:$0xff]
    %v2627 = vld [vmem:[%s9 + $0x22] sm:$0x1]
    %s2628 = scalar_lea.vmem %s5, 160
    %v2629 = vld [vmem:[%s2628] sm:$0xff]
    %v2630 = vld [vmem:[%s2628 + $0x8] sm:$0xff]
    %v2631 = vld [vmem:[%s2628 + $0x10] sm:$0xff]
    %v2632 = vld [vmem:[%s2628 + $0x18] sm:$0xff]
    %v2633 = vld [vmem:[%s9 + $0x23] sm:$0x1]
    %v2634 = vperm.slane %v2627, 0
    %v2636 = vsel %vm46, %v2621, 0
    %2638 = vmatpush.msra.mxu0 0.0
    %2639 = vmatpush.msra.mxu0 0.0
    %2640 = vmatpush.msra.mxu0 0.0
    %2641 = vmatpush.msra.mxu0 0.0
    %2642 = vmatpush.msra.mxu0 0.0
    %2643 = vmatpush.msra.mxu0 0.0
    %2644 = vmatpush.msra.mxu0 0.0
    %2645 = vmatpush.msra.mxu0 0.0
    %2646 = vmatpush.msra.mxu0 0.0
    %2647 = vmatpush.msra.mxu0 0.0
    %2648 = vmatpush.msra.mxu0 0.0
    %2649 = vmatpush.msra.mxu0 0.0
    %2650 = vmatpush.msra.mxu0 %v2626
    %2651 = vmatpush.msra.mxu0 %v2625
    %2652 = vmatpush.msra.mxu0 %v2624
    %2653 = vmatpush.msra.mxu0 %v2623
    %2654 = vmatmul.f32.gmra.mxu0 %v2636
    %v2655 = vpop.f32.mrf.mxu0
    %v2656 = vadd.f32 %v2634, %v2655
    %2657 = vdwg.mxu0
    %2662 = vrot.lane.b32.xlu0 %v2623, 96
    %v2663 = vpop.permute.xlu0 %2662
    %2664 = vrot.lane.b32.xlu0 %v2624, 96
    %v2665 = vpop.permute.xlu0 %2664
    %2666 = vrot.lane.b32.xlu0 %v2625, 96
    %v2667 = vpop.permute.xlu0 %2666
    %2668 = vrot.lane.b32.xlu0 %v2626, 96
    %v2669 = vpop.permute.xlu0 %2668
    %2675 = vrot.lane.b32.xlu0 %v2634, 96
    %v2676 = vpop.permute.xlu0 %2675
    %2678 = vmatpush.msra.mxu0 0.0
    %2679 = vmatpush.msra.mxu0 0.0
    %2680 = vmatpush.msra.mxu0 0.0
    %2681 = vmatpush.msra.mxu0 0.0
    %2682 = vmatpush.msra.mxu0 0.0
    %2683 = vmatpush.msra.mxu0 0.0
    %2684 = vmatpush.msra.mxu0 0.0
    %2685 = vmatpush.msra.mxu0 0.0
    %2686 = vmatpush.msra.mxu0 0.0
    %2687 = vmatpush.msra.mxu0 0.0
    %2688 = vmatpush.msra.mxu0 0.0
    %2689 = vmatpush.msra.mxu0 0.0
    %2690 = vmatpush.msra.mxu0 %v2669
    %2691 = vmatpush.msra.mxu0 %v2667
    %2692 = vmatpush.msra.mxu0 %v2665
    %2693 = vmatpush.msra.mxu0 %v2663
    %2694 = vmatmul.f32.gmra.mxu0 %v1675
    %v2695 = vpop.f32.mrf.mxu0
    %v2696 = vadd.f32 %v2676, %v2695
    %2697 = vdwg.mxu0
    %v2698 = vmul.f32 %v2656, 0.35355338
    %2700 = vrot.lane.b32.xlu0 %v2698, 120
    %v2701 = vpop.permute.xlu0 %2700
    %2702 = vrot.lane.b32.xlu0 %v2698, 112
    %v2703 = vpop.permute.xlu0 %2702
    %2704 = vrot.lane.b32.xlu0 %v2698, 104
    %v2705 = vpop.permute.xlu0 %2704
    %2707 = vrot.lane.b32.xlu0 %v2696, 120
    %v2708 = vpop.permute.xlu0 %2707
    %2709 = vrot.lane.b32.xlu0 %v2696, 112
    %v2710 = vpop.permute.xlu0 %2709
    %2711 = vrot.lane.b32.xlu0 %v2696, 104
    %v2712 = vpop.permute.xlu0 %2711
    %v2713 = vsel %vm137, %v2698, 0
    %v2715 = vsel %vm137, %v2696, 0
    %2717 = vmatpush.xpose.msra.mxu0 0.0
    %2718 = vmatpush.xpose.msra.mxu0 0.0
    %2719 = vmatpush.xpose.msra.mxu0 0.0
    %2720 = vmatpush.xpose.msra.mxu0 0.0
    %2721 = vmatpush.xpose.msra.mxu0 0.0
    %2722 = vmatpush.xpose.msra.mxu0 0.0
    %2723 = vmatpush.xpose.msra.mxu0 0.0
    %2724 = vmatpush.xpose.msra.mxu0 0.0
    %2725 = vmatpush.xpose.msra.mxu0 0.0
    %2726 = vmatpush.xpose.msra.mxu0 0.0
    %2727 = vmatpush.xpose.msra.mxu0 0.0
    %2728 = vmatpush.xpose.msra.mxu0 0.0
    %2729 = vmatpush.xpose.msra.mxu0 0.0
    %2730 = vmatpush.xpose.msra.mxu0 0.0
    %2731 = vmatpush.xpose.msra.mxu0 0.0
    %2732 = vmatpush.xpose.msra.mxu0 %v2715
    %2733 = vmatmul.f32.gmra.mxu0 %v2713
    %v2734 = vpop.f32.mrf.mxu0
    %v2735 = vadd.f32 %v133, %v2734
    %2736 = vdwg.mxu0
    %v2737 = vsel %vm137, %v2701, 0
    %v2739 = vsel %vm137, %v2708, 0
    %2741 = vmatpush.xpose.msra.mxu0 0.0
    %2742 = vmatpush.xpose.msra.mxu0 0.0
    %2743 = vmatpush.xpose.msra.mxu0 0.0
    %2744 = vmatpush.xpose.msra.mxu0 0.0
    %2745 = vmatpush.xpose.msra.mxu0 0.0
    %2746 = vmatpush.xpose.msra.mxu0 0.0
    %2747 = vmatpush.xpose.msra.mxu0 0.0
    %2748 = vmatpush.xpose.msra.mxu0 0.0
    %2749 = vmatpush.xpose.msra.mxu0 0.0
    %2750 = vmatpush.xpose.msra.mxu0 0.0
    %2751 = vmatpush.xpose.msra.mxu0 0.0
    %2752 = vmatpush.xpose.msra.mxu0 0.0
    %2753 = vmatpush.xpose.msra.mxu0 0.0
    %2754 = vmatpush.xpose.msra.mxu0 0.0
    %2755 = vmatpush.xpose.msra.mxu0 0.0
    %2756 = vmatpush.xpose.msra.mxu0 %v2739
    %2757 = vmatmul.f32.gmra.mxu0 %v2737
    %v2758 = vpop.f32.mrf.mxu0
    %v2759 = vadd.f32 %v133, %v2758
    %2760 = vdwg.mxu0
    %v2761 = vsel %vm137, %v2703, 0
    %v2763 = vsel %vm137, %v2710, 0
    %2765 = vmatpush.xpose.msra.mxu0 0.0
    %2766 = vmatpush.xpose.msra.mxu0 0.0
    %2767 = vmatpush.xpose.msra.mxu0 0.0
    %2768 = vmatpush.xpose.msra.mxu0 0.0
    %2769 = vmatpush.xpose.msra.mxu0 0.0
    %2770 = vmatpush.xpose.msra.mxu0 0.0
    %2771 = vmatpush.xpose.msra.mxu0 0.0
    %2772 = vmatpush.xpose.msra.mxu0 0.0
    %2773 = vmatpush.xpose.msra.mxu0 0.0
    %2774 = vmatpush.xpose.msra.mxu0 0.0
    %2775 = vmatpush.xpose.msra.mxu0 0.0
    %2776 = vmatpush.xpose.msra.mxu0 0.0
    %2777 = vmatpush.xpose.msra.mxu0 0.0
    %2778 = vmatpush.xpose.msra.mxu0 0.0
    %2779 = vmatpush.xpose.msra.mxu0 0.0
    %2780 = vmatpush.xpose.msra.mxu0 %v2763
    %2781 = vmatmul.f32.gmra.mxu0 %v2761
    %v2782 = vpop.f32.mrf.mxu0
    %v2783 = vadd.f32 %v133, %v2782
    %2784 = vdwg.mxu0
    %v2785 = vsel %vm137, %v2705, 0
    %v2787 = vsel %vm137, %v2712, 0
    %2789 = vmatpush.xpose.msra.mxu0 0.0
    %2790 = vmatpush.xpose.msra.mxu0 0.0
    %2791 = vmatpush.xpose.msra.mxu0 0.0
    %2792 = vmatpush.xpose.msra.mxu0 0.0
    %2793 = vmatpush.xpose.msra.mxu0 0.0
    %2794 = vmatpush.xpose.msra.mxu0 0.0
    %2795 = vmatpush.xpose.msra.mxu0 0.0
    %2796 = vmatpush.xpose.msra.mxu0 0.0
    %2797 = vmatpush.xpose.msra.mxu0 0.0
    %2798 = vmatpush.xpose.msra.mxu0 0.0
    %2799 = vmatpush.xpose.msra.mxu0 0.0
    %2800 = vmatpush.xpose.msra.mxu0 0.0
    %2801 = vmatpush.xpose.msra.mxu0 0.0
    %2802 = vmatpush.xpose.msra.mxu0 0.0
    %2803 = vmatpush.xpose.msra.mxu0 0.0
    %2804 = vmatpush.xpose.msra.mxu0 %v2787
    %2805 = vmatmul.f32.gmra.mxu0 %v2785
    %v2806 = vpop.f32.mrf.mxu0
    %v2807 = vadd.f32 %v133, %v2806
    %2808 = vdwg.mxu0
    %v2809 = vsel %vm137, %v2735, -inf
    %2810 = vmax.xlane.f32.xlu0 %v2809
    %v2811 = vpop.xlane.xlu0 %2810
    %v2812 = vsel %vm137, %v2759, -inf
    %2813 = vmax.xlane.f32.xlu0 %v2812
    %v2814 = vpop.xlane.xlu0 %2813
    %v2815 = vsel %vm137, %v2783, -inf
    %2816 = vmax.xlane.f32.xlu0 %v2815
    %v2817 = vpop.xlane.xlu0 %2816
    %v2818 = vsel %vm137, %v2807, -inf
    %2819 = vmax.xlane.f32.xlu0 %v2818
    %v2820 = vpop.xlane.xlu0 %2819
    %v2821 = vsub.f32 %v2735, %v2811
    %v2822 = vsub.f32 %v2759, %v2814
    %v2823 = vsub.f32 %v2783, %v2817
    %v2824 = vsub.f32 %v2807, %v2820
    %v2825 = vmul.f32 %v2821, 1.442695
    %v2826 = vpow.pop %v2825
    %v2827 = vmul.f32 %v2822, 1.442695
    %v2828 = vpow.pop %v2827
    %v2829 = vmul.f32 %v2823, 1.442695
    %v2830 = vpow.pop %v2829
    %v2831 = vmul.f32 %v2824, 1.442695
    %v2832 = vpow.pop %v2831
    %v2833 = vsel %vm137, %v2826, 0.0
    %2834 = vadd.xlane.f32.xlu0 %v2833
    %v2835 = vpop.xlane.xlu0 %2834
    %v2836 = vsel %vm137, %v2828, 0.0
    %2837 = vadd.xlane.f32.xlu0 %v2836
    %v2838 = vpop.xlane.xlu0 %2837
    %v2839 = vsel %vm137, %v2830, 0.0
    %2840 = vadd.xlane.f32.xlu0 %v2839
    %v2841 = vpop.xlane.xlu0 %2840
    %v2842 = vsel %vm137, %v2832, 0.0
    %2843 = vadd.xlane.f32.xlu0 %v2842
    %v2844 = vpop.xlane.xlu0 %2843
    %v2845 = vrcp.pop %v2835
    %v2846 = vrcp.pop %v2838
    %v2847 = vrcp.pop %v2841
    %v2848 = vrcp.pop %v2844
    %v2849 = vmul.f32 %v2826, %v2845
    %v2850 = vmul.f32 %v2828, %v2846
    %v2851 = vmul.f32 %v2830, %v2847
    %v2852 = vmul.f32 %v2832, %v2848
    %2853 = vrot.lane.b32.xlu0 %v2696, 96
    %v2854 = vpop.permute.xlu0 %2853
    %v2857 = vsel %vm137, %v2849, 0
    %2859 = vmatpush.msra.mxu0 0.0
    %2860 = vmatpush.msra.mxu0 0.0
    %2861 = vmatpush.msra.mxu0 0.0
    %2862 = vmatpush.msra.mxu0 0.0
    %2863 = vmatpush.msra.mxu0 0.0
    %2864 = vmatpush.msra.mxu0 0.0
    %2865 = vmatpush.msra.mxu0 0.0
    %2866 = vmatpush.msra.mxu0 0.0
    %2867 = vmatpush.msra.mxu0 0.0
    %2868 = vmatpush.msra.mxu0 0.0
    %2869 = vmatpush.msra.mxu0 0.0
    %2870 = vmatpush.msra.mxu0 0.0
    %2871 = vmatpush.msra.mxu0 0.0
    %2872 = vmatpush.msra.mxu0 0.0
    %2873 = vmatpush.msra.mxu0 0.0
    %2874 = vmatpush.msra.mxu0 %v2854
    %2875 = vmatmul.f32.gmra.mxu0 %v2857
    %v2876 = vpop.f32.mrf.mxu0
    %v2877 = vadd.f32 0.0, %v2876
    %2878 = vdwg.mxu0
    %2879 = vrot.lane.b32.xlu0 %v2708, 96
    %v2880 = vpop.permute.xlu0 %2879
    %v2883 = vsel %vm137, %v2850, 0
    %2885 = vmatpush.msra.mxu0 0.0
    %2886 = vmatpush.msra.mxu0 0.0
    %2887 = vmatpush.msra.mxu0 0.0
    %2888 = vmatpush.msra.mxu0 0.0
    %2889 = vmatpush.msra.mxu0 0.0
    %2890 = vmatpush.msra.mxu0 0.0
    %2891 = vmatpush.msra.mxu0 0.0
    %2892 = vmatpush.msra.mxu0 0.0
    %2893 = vmatpush.msra.mxu0 0.0
    %2894 = vmatpush.msra.mxu0 0.0
    %2895 = vmatpush.msra.mxu0 0.0
    %2896 = vmatpush.msra.mxu0 0.0
    %2897 = vmatpush.msra.mxu0 0.0
    %2898 = vmatpush.msra.mxu0 0.0
    %2899 = vmatpush.msra.mxu0 0.0
    %2900 = vmatpush.msra.mxu0 %v2880
    %2901 = vmatmul.f32.gmra.mxu0 %v2883
    %v2902 = vpop.f32.mrf.mxu0
    %v2903 = vadd.f32 0.0, %v2902
    %2904 = vdwg.mxu0
    %2905 = vrot.lane.b32.xlu0 %v2710, 96
    %v2906 = vpop.permute.xlu0 %2905
    %v2909 = vsel %vm137, %v2851, 0
    %2911 = vmatpush.msra.mxu0 0.0
    %2912 = vmatpush.msra.mxu0 0.0
    %2913 = vmatpush.msra.mxu0 0.0
    %2914 = vmatpush.msra.mxu0 0.0
    %2915 = vmatpush.msra.mxu0 0.0
    %2916 = vmatpush.msra.mxu0 0.0
    %2917 = vmatpush.msra.mxu0 0.0
    %2918 = vmatpush.msra.mxu0 0.0
    %2919 = vmatpush.msra.mxu0 0.0
    %2920 = vmatpush.msra.mxu0 0.0
    %2921 = vmatpush.msra.mxu0 0.0
    %2922 = vmatpush.msra.mxu0 0.0
    %2923 = vmatpush.msra.mxu0 0.0
    %2924 = vmatpush.msra.mxu0 0.0
    %2925 = vmatpush.msra.mxu0 0.0
    %2926 = vmatpush.msra.mxu0 %v2906
    %2927 = vmatmul.f32.gmra.mxu0 %v2909
    %v2928 = vpop.f32.mrf.mxu0
    %v2929 = vadd.f32 0.0, %v2928
    %2930 = vdwg.mxu0
    %2931 = vrot.lane.b32.xlu0 %v2712, 96
    %v2932 = vpop.permute.xlu0 %2931
    %v2935 = vsel %vm137, %v2852, 0
    %2937 = vmatpush.msra.mxu0 0.0
    %2938 = vmatpush.msra.mxu0 0.0
    %2939 = vmatpush.msra.mxu0 0.0
    %2940 = vmatpush.msra.mxu0 0.0
    %2941 = vmatpush.msra.mxu0 0.0
    %2942 = vmatpush.msra.mxu0 0.0
    %2943 = vmatpush.msra.mxu0 0.0
    %2944 = vmatpush.msra.mxu0 0.0
    %2945 = vmatpush.msra.mxu0 0.0
    %2946 = vmatpush.msra.mxu0 0.0
    %2947 = vmatpush.msra.mxu0 0.0
    %2948 = vmatpush.msra.mxu0 0.0
    %2949 = vmatpush.msra.mxu0 0.0
    %2950 = vmatpush.msra.mxu0 0.0
    %2951 = vmatpush.msra.mxu0 0.0
    %2952 = vmatpush.msra.mxu0 %v2932
    %2953 = vmatmul.f32.gmra.mxu0 %v2935
    %v2954 = vpop.f32.mrf.mxu0
    %v2955 = vadd.f32 0.0, %v2954
    %2956 = vdwg.mxu0
    %v2958 = vsel %vm137, %v2877, 0
    %2960 = vmatpush.msra.mxu0 0.0
    %2961 = vmatpush.msra.mxu0 0.0
    %2962 = vmatpush.msra.mxu0 0.0
    %2963 = vmatpush.msra.mxu0 0.0
    %2964 = vmatpush.msra.mxu0 0.0
    %2965 = vmatpush.msra.mxu0 0.0
    %2966 = vmatpush.msra.mxu0 0.0
    %2967 = vmatpush.msra.mxu0 0.0
    %2968 = vmatpush.msra.mxu0 0.0
    %2969 = vmatpush.msra.mxu0 0.0
    %2970 = vmatpush.msra.mxu0 0.0
    %2971 = vmatpush.msra.mxu0 0.0
    %2972 = vmatpush.msra.mxu0 0.0
    %2973 = vmatpush.msra.mxu0 0.0
    %2974 = vmatpush.msra.mxu0 0.0
    %2975 = vmatpush.msra.mxu0 %v2629
    %2976 = vmatmul.f32.gmra.mxu0 %v2958
    %v2977 = vpop.f32.mrf.mxu0
    %v2978 = vadd.f32 0.0, %v2977
    %2979 = vdwg.mxu0
    %v2981 = vsel %vm137, %v2903, 0
    %2983 = vmatpush.msra.mxu0 0.0
    %2984 = vmatpush.msra.mxu0 0.0
    %2985 = vmatpush.msra.mxu0 0.0
    %2986 = vmatpush.msra.mxu0 0.0
    %2987 = vmatpush.msra.mxu0 0.0
    %2988 = vmatpush.msra.mxu0 0.0
    %2989 = vmatpush.msra.mxu0 0.0
    %2990 = vmatpush.msra.mxu0 0.0
    %2991 = vmatpush.msra.mxu0 0.0
    %2992 = vmatpush.msra.mxu0 0.0
    %2993 = vmatpush.msra.mxu0 0.0
    %2994 = vmatpush.msra.mxu0 0.0
    %2995 = vmatpush.msra.mxu0 0.0
    %2996 = vmatpush.msra.mxu0 0.0
    %2997 = vmatpush.msra.mxu0 0.0
    %2998 = vmatpush.msra.mxu0 %v2630
    %2999 = vmatmul.f32.gmra.mxu0 %v2981
    %v3000 = vpop.f32.mrf.mxu0
    %v3001 = vadd.f32 0.0, %v3000
    %3002 = vdwg.mxu0
    %v3004 = vsel %vm137, %v2929, 0
    %3006 = vmatpush.msra.mxu0 0.0
    %3007 = vmatpush.msra.mxu0 0.0
    %3008 = vmatpush.msra.mxu0 0.0
    %3009 = vmatpush.msra.mxu0 0.0
    %3010 = vmatpush.msra.mxu0 0.0
    %3011 = vmatpush.msra.mxu0 0.0
    %3012 = vmatpush.msra.mxu0 0.0
    %3013 = vmatpush.msra.mxu0 0.0
    %3014 = vmatpush.msra.mxu0 0.0
    %3015 = vmatpush.msra.mxu0 0.0
    %3016 = vmatpush.msra.mxu0 0.0
    %3017 = vmatpush.msra.mxu0 0.0
    %3018 = vmatpush.msra.mxu0 0.0
    %3019 = vmatpush.msra.mxu0 0.0
    %3020 = vmatpush.msra.mxu0 0.0
    %3021 = vmatpush.msra.mxu0 %v2631
    %3022 = vmatmul.f32.gmra.mxu0 %v3004
    %v3023 = vpop.f32.mrf.mxu0
    %v3024 = vadd.f32 0.0, %v3023
    %3025 = vdwg.mxu0
    %v3027 = vsel %vm137, %v2955, 0
    %3029 = vmatpush.msra.mxu0 0.0
    %3030 = vmatpush.msra.mxu0 0.0
    %3031 = vmatpush.msra.mxu0 0.0
    %3032 = vmatpush.msra.mxu0 0.0
    %3033 = vmatpush.msra.mxu0 0.0
    %3034 = vmatpush.msra.mxu0 0.0
    %3035 = vmatpush.msra.mxu0 0.0
    %3036 = vmatpush.msra.mxu0 0.0
    %3037 = vmatpush.msra.mxu0 0.0
    %3038 = vmatpush.msra.mxu0 0.0
    %3039 = vmatpush.msra.mxu0 0.0
    %3040 = vmatpush.msra.mxu0 0.0
    %3041 = vmatpush.msra.mxu0 0.0
    %3042 = vmatpush.msra.mxu0 0.0
    %3043 = vmatpush.msra.mxu0 0.0
    %3044 = vmatpush.msra.mxu0 %v2632
    %3045 = vmatmul.f32.gmra.mxu0 %v3027
    %v3046 = vpop.f32.mrf.mxu0
    %v3047 = vadd.f32 0.0, %v3046
    %3048 = vdwg.mxu0
    %v3049 = vsel %vm46, %v2978, 0.0
    %v3050 = vsel %vm46, %v3001, 0.0
    %v3051 = vadd.f32 %v3049, %v3050
    %v3052 = vsel %vm46, %v3024, 0.0
    %v3053 = vadd.f32 %v3051, %v3052
    %v3054 = vsel %vm46, %v3047, 0.0
    %v3055 = vadd.f32 %v3053, %v3054
    %v3056 = vperm.slane %v2633, 0
    %v3057 = vadd.f32 %v3055, %v3056
    %v3058 = vadd.f32 %v2590, %v3057
    %v3059 = vld [vmem:[%s9 + $0x24] sm:$0x1]
    %v3060 = vld [vmem:[%s9 + $0x25] sm:$0x1]
    %v3061 = vsel %vm46, %v3058, 0.0
    %3062 = vadd.xlane.f32.xlu0 %v3061
    %v3063 = vpop.xlane.xlu0 %3062
    %v3064 = vmul.f32 %v3063, %v56
    %v3065 = vsub.f32 %v3058, %v3064
    %v3066 = vmul.f32 %v3065, %v3065
    %v3067 = vsel %vm46, %v3066, 0.0
    %3068 = vadd.xlane.f32.xlu0 %v3067
    %v3069 = vpop.xlane.xlu0 %3068
    %v3070 = vmul.f32 %v3069, 0.032258064
    %v3071 = vrsqrt.pop %v3070
    %v3072 = vmul.f32 %v3071, %v3070
    %v3073 = vmul.f32 %v3072, %v3071
    %v3074 = vmul.f32 0.5, %v3073
    %v3075 = vsub.f32 1.5, %v3074
    %v3076 = vmul.f32 %v3071, %v3075
    %v3077 = vmul.f32 %v3070, %v3076
    %vm3078 = vcmp.eq.f32.partialorder %v3070, inf
    %v3079 = vsel %vm3078, %v3070, %v3077
    %vm3080 = vcmp.eq.f32.partialorder %v3070, 0.0
    %v3081 = vand.u32 %v3070, 2147483648
    %v3082 = vsel %vm3080, %v3081, %v3079
    %v3083 = vadd.f32 %v3082, 1e-06
    %v3084 = vrcp.pop %v3083
    %v3085 = vmul.f32 %v3065, %v3084
    %v3086 = vperm.slane %v3059, 0
    %v3087 = vmul.f32 %v3086, %v3085
    %v3088 = vperm.slane %v3060, 0
    %v3089 = vadd.f32 %v3087, %v3088
    %s3090 = scalar_lea.vmem %s6, 96
    %v3091 = vld [vmem:[%s3090] sm:$0xff]
    %v3092 = vld [vmem:[%s3090 + $0x8] sm:$0xff]
    %v3093 = vld [vmem:[%s3090 + $0x10] sm:$0xff]
    %v3094 = vld [vmem:[%s3090 + $0x18] sm:$0xff]
    %v3095 = vld [vmem:[%s9 + $0x26] sm:$0x1]
    %s3096 = scalar_lea.vmem %s7, 192
    %v3097 = vld [vmem:[%s3096] sm:$0xff]
    %v3098 = vld [vmem:[%s3096 + $0x8] sm:$0xff]
    %v3099 = vld [vmem:[%s3096 + $0x10] sm:$0xff]
    %v3100 = vld [vmem:[%s3096 + $0x18] sm:$0xff]
    %v3101 = vld [vmem:[%s3096 + $0x20] sm:$0xff]
    %v3102 = vld [vmem:[%s3096 + $0x28] sm:$0xff]
    %v3103 = vld [vmem:[%s3096 + $0x30] sm:$0xff]
    %v3104 = vld [vmem:[%s3096 + $0x38] sm:$0xff]
    %v3105 = vld [vmem:[%s9 + $0x27] sm:$0x1]
    %v3106 = vperm.slane %v3095, 0
    %v3108 = vsel %vm46, %v3089, 0
    %3110 = vmatpush.msra.mxu0 0.0
    %3111 = vmatpush.msra.mxu0 0.0
    %3112 = vmatpush.msra.mxu0 0.0
    %3113 = vmatpush.msra.mxu0 0.0
    %3114 = vmatpush.msra.mxu0 0.0
    %3115 = vmatpush.msra.mxu0 0.0
    %3116 = vmatpush.msra.mxu0 0.0
    %3117 = vmatpush.msra.mxu0 0.0
    %3118 = vmatpush.msra.mxu0 0.0
    %3119 = vmatpush.msra.mxu0 0.0
    %3120 = vmatpush.msra.mxu0 0.0
    %3121 = vmatpush.msra.mxu0 0.0
    %3122 = vmatpush.msra.mxu0 %v3094
    %3123 = vmatpush.msra.mxu0 %v3093
    %3124 = vmatpush.msra.mxu0 %v3092
    %3125 = vmatpush.msra.mxu0 %v3091
    %3126 = vmatmul.f32.gmra.mxu0 %v3108
    %v3127 = vpop.f32.mrf.mxu0
    %v3128 = vadd.f32 %v3106, %v3127
    %3129 = vdwg.mxu0
    %v3130 = vmax.f32 %v3128, 0.0
    %v3131 = vperm.slane %v3105, 0
    %v3133 = vsel %vm561, %v3130, 0
    %3135 = vmatpush.msra.mxu0 0.0
    %3136 = vmatpush.msra.mxu0 0.0
    %3137 = vmatpush.msra.mxu0 0.0
    %3138 = vmatpush.msra.mxu0 0.0
    %3139 = vmatpush.msra.mxu0 0.0
    %3140 = vmatpush.msra.mxu0 0.0
    %3141 = vmatpush.msra.mxu0 0.0
    %3142 = vmatpush.msra.mxu0 0.0
    %3143 = vmatpush.msra.mxu0 %v3104
    %3144 = vmatpush.msra.mxu0 %v3103
    %3145 = vmatpush.msra.mxu0 %v3102
    %3146 = vmatpush.msra.mxu0 %v3101
    %3147 = vmatpush.msra.mxu0 %v3100
    %3148 = vmatpush.msra.mxu0 %v3099
    %3149 = vmatpush.msra.mxu0 %v3098
    %3150 = vmatpush.msra.mxu0 %v3097
    %3151 = vmatmul.f32.gmra.mxu0 %v3133
    %v3152 = vpop.f32.mrf.mxu0
    %v3153 = vadd.f32 %v3131, %v3152
    %3154 = vdwg.mxu0
    %v3155 = vadd.f32 %v3058, %v3153
    %v3156 = vld [vmem:[%s9 + $0x2a] sm:$0x1]
    %v3157 = vld [vmem:[%s9 + $0x2b] sm:$0x1]
    %v3158 = vsel %vm46, %v3155, 0.0
    %3159 = vadd.xlane.f32.xlu0 %v3158
    %v3160 = vpop.xlane.xlu0 %3159
    %v3161 = vmul.f32 %v3160, %v56
    %v3162 = vsub.f32 %v3155, %v3161
    %v3163 = vmul.f32 %v3162, %v3162
    %v3164 = vsel %vm46, %v3163, 0.0
    %3165 = vadd.xlane.f32.xlu0 %v3164
    %v3166 = vpop.xlane.xlu0 %3165
    %v3167 = vmul.f32 %v3166, 0.032258064
    %v3168 = vrsqrt.pop %v3167
    %v3169 = vmul.f32 %v3168, %v3167
    %v3170 = vmul.f32 %v3169, %v3168
    %v3171 = vmul.f32 0.5, %v3170
    %v3172 = vsub.f32 1.5, %v3171
    %v3173 = vmul.f32 %v3168, %v3172
    %v3174 = vmul.f32 %v3167, %v3173
    %vm3175 = vcmp.eq.f32.partialorder %v3167, inf
    %v3176 = vsel %vm3175, %v3167, %v3174
    %vm3177 = vcmp.eq.f32.partialorder %v3167, 0.0
    %v3178 = vand.u32 %v3167, 2147483648
    %v3179 = vsel %vm3177, %v3178, %v3176
    %v3180 = vadd.f32 %v3179, 1e-06
    %v3181 = vrcp.pop %v3180
    %v3182 = vmul.f32 %v3162, %v3181
    %v3183 = vperm.slane %v3156, 0
    %v3184 = vmul.f32 %v3183, %v3182
    %v3185 = vperm.slane %v3157, 0
    %v3186 = vadd.f32 %v3184, %v3185
    %v3187 = vperm.slane %v40, 0
    %v3189 = vsel %vm46, %v3186, 0
    %3191 = vmatpush.msra.mxu0 0.0
    %3192 = vmatpush.msra.mxu0 0.0
    %3193 = vmatpush.msra.mxu0 0.0
    %3194 = vmatpush.msra.mxu0 0.0
    %3195 = vmatpush.msra.mxu0 0.0
    %3196 = vmatpush.msra.mxu0 0.0
    %3197 = vmatpush.msra.mxu0 0.0
    %3198 = vmatpush.msra.mxu0 0.0
    %3199 = vmatpush.msra.mxu0 0.0
    %3200 = vmatpush.msra.mxu0 0.0
    %3201 = vmatpush.msra.mxu0 0.0
    %3202 = vmatpush.msra.mxu0 0.0
    %3203 = vmatpush.msra.mxu0 %v39
    %3204 = vmatpush.msra.mxu0 %v38
    %3205 = vmatpush.msra.mxu0 %v37
    %3206 = vmatpush.msra.mxu0 %v36
    %3207 = vmatmul.f32.gmra.mxu0 %v3189
    %v3208 = vpop.f32.mrf.mxu0
    %v3209 = vadd.f32 %v3187, %v3208
    %3210 = vdwg.mxu0
    %3211 = vmax.xlane.f32.xlu0 %v3209
    %v3212 = vpop.xlane.xlu0 %3211
    %v3213 = vsub.f32 %v3209, %v3212
    %v3214 = vmul.f32 %v3213, 1.442695
    %v3215 = vpow.pop %v3214
    %3216 = vadd.xlane.f32.xlu0 %v3215
    %v3217 = vpop.xlane.xlu0 %3216
    %v3218 = vlog2.pop %v3217
    %v3219 = vmul.f32 %v3218, 0.6931472
    %v3220 = vsub.f32 %v3213, %v3219
    %3221 = vst [vmem:[#allocation2] sm:$0xff] %v3220
    %s3222 = scalar_lea.vmem %s2, 1
    %v3223 = vld [vmem:[%s3222] sm:$0x1]
    %s3224 = scalar_lea.vmem %s3, 8
    %v3225 = vld [vmem:[%s3224] sm:$0xff]
    %s3226 = scalar_lea.vmem %s0, 8
    %v3227 = vld [vmem:[%s3226] sm:$0xff]
    %v3228 = vld [vmem:[%s9] sm:$0x1]
    %v3229 = vld [vmem:[%s9 + $0x1] sm:$0x1]
    %v3230 = vsel %vm46, %v3227, 0.0
    %3231 = vadd.xlane.f32.xlu0 %v3230
    %v3232 = vpop.xlane.xlu0 %3231
    %v3233 = vmul.f32 %v3232, %v56
    %v3234 = vsub.f32 %v3227, %v3233
    %v3235 = vmul.f32 %v3234, %v3234
    %v3236 = vsel %vm46, %v3235, 0.0
    %3237 = vadd.xlane.f32.xlu0 %v3236
    %v3238 = vpop.xlane.xlu0 %3237
    %v3239 = vmul.f32 %v3238, 0.032258064
    %v3240 = vrsqrt.pop %v3239
    %v3241 = vmul.f32 %v3240, %v3239
    %v3242 = vmul.f32 %v3241, %v3240
    %v3243 = vmul.f32 0.5, %v3242
    %v3244 = vsub.f32 1.5, %v3243
    %v3245 = vmul.f32 %v3240, %v3244
    %v3246 = vmul.f32 %v3239, %v3245
    %vm3247 = vcmp.eq.f32.partialorder %v3239, inf
    %v3248 = vsel %vm3247, %v3239, %v3246
    %vm3249 = vcmp.eq.f32.partialorder %v3239, 0.0
    %v3250 = vand.u32 %v3239, 2147483648
    %v3251 = vsel %vm3249, %v3250, %v3248
    %v3252 = vadd.f32 %v3251, 1e-06
    %v3253 = vrcp.pop %v3252
    %v3254 = vmul.f32 %v3234, %v3253
    %v3255 = vperm.slane %v3228, 0
    %v3256 = vmul.f32 %v3255, %v3254
    %v3257 = vperm.slane %v3229, 0
    %v3258 = vadd.f32 %v3256, %v3257
    %v3259 = vld [vmem:[%s4] sm:$0xff]
    %v3260 = vld [vmem:[%s4 + $0x8] sm:$0xff]
    %v3261 = vld [vmem:[%s4 + $0x10] sm:$0xff]
    %v3262 = vld [vmem:[%s4 + $0x18] sm:$0xff]
    %v3263 = vld [vmem:[%s9 + $0x2] sm:$0x1]
    %v3264 = vld [vmem:[%s5] sm:$0xff]
    %v3265 = vld [vmem:[%s5 + $0x8] sm:$0xff]
    %v3266 = vld [vmem:[%s5 + $0x10] sm:$0xff]
    %v3267 = vld [vmem:[%s5 + $0x18] sm:$0xff]
    %v3268 = vld [vmem:[%s9 + $0x3] sm:$0x1]
    %v3269 = vperm.slane %v3263, 0
    %v3271 = vsel %vm46, %v3258, 0
    %3273 = vmatpush.msra.mxu0 0.0
    %3274 = vmatpush.msra.mxu0 0.0
    %3275 = vmatpush.msra.mxu0 0.0
    %3276 = vmatpush.msra.mxu0 0.0
    %3277 = vmatpush.msra.mxu0 0.0
    %3278 = vmatpush.msra.mxu0 0.0
    %3279 = vmatpush.msra.mxu0 0.0
    %3280 = vmatpush.msra.mxu0 0.0
    %3281 = vmatpush.msra.mxu0 0.0
    %3282 = vmatpush.msra.mxu0 0.0
    %3283 = vmatpush.msra.mxu0 0.0
    %3284 = vmatpush.msra.mxu0 0.0
    %3285 = vmatpush.msra.mxu0 %v3262
    %3286 = vmatpush.msra.mxu0 %v3261
    %3287 = vmatpush.msra.mxu0 %v3260
    %3288 = vmatpush.msra.mxu0 %v3259
    %3289 = vmatmul.f32.gmra.mxu0 %v3271
    %v3290 = vpop.f32.mrf.mxu0
    %v3291 = vadd.f32 %v3269, %v3290
    %3292 = vdwg.mxu0
    %v3293 = vmul.f32 %v3291, 0.35355338
    %3295 = vrot.lane.b32.xlu0 %v3293, 120
    %v3296 = vpop.permute.xlu0 %3295
    %3297 = vrot.lane.b32.xlu0 %v3293, 112
    %v3298 = vpop.permute.xlu0 %3297
    %3299 = vrot.lane.b32.xlu0 %v3293, 104
    %v3300 = vpop.permute.xlu0 %3299
    %3302 = vrot.lane.b32.xlu0 %v3291, 120
    %v3303 = vpop.permute.xlu0 %3302
    %3304 = vrot.lane.b32.xlu0 %v3291, 112
    %v3305 = vpop.permute.xlu0 %3304
    %3306 = vrot.lane.b32.xlu0 %v3291, 104
    %v3307 = vpop.permute.xlu0 %3306
    %v3309 = vperm.slane %v3223, 0
    %3311 = vrot.lane.b32.xlu0 %v3291, 96
    %v3312 = vpop.permute.xlu0 %3311
    %v3313 = vsel %vm137, %v3293, 0
    %v3315 = vsel %vm137, %v3312, 0
    %3317 = vmatpush.xpose.msra.mxu0 0.0
    %3318 = vmatpush.xpose.msra.mxu0 0.0
    %3319 = vmatpush.xpose.msra.mxu0 0.0
    %3320 = vmatpush.xpose.msra.mxu0 0.0
    %3321 = vmatpush.xpose.msra.mxu0 0.0
    %3322 = vmatpush.xpose.msra.mxu0 0.0
    %3323 = vmatpush.xpose.msra.mxu0 0.0
    %3324 = vmatpush.xpose.msra.mxu0 0.0
    %3325 = vmatpush.xpose.msra.mxu0 0.0
    %3326 = vmatpush.xpose.msra.mxu0 0.0
    %3327 = vmatpush.xpose.msra.mxu0 0.0
    %3328 = vmatpush.xpose.msra.mxu0 0.0
    %3329 = vmatpush.xpose.msra.mxu0 0.0
    %3330 = vmatpush.xpose.msra.mxu0 0.0
    %3331 = vmatpush.xpose.msra.mxu0 0.0
    %3332 = vmatpush.xpose.msra.mxu0 %v3315
    %3333 = vmatmul.f32.gmra.mxu0 %v3313
    %v3334 = vpop.f32.mrf.mxu0
    %v3335 = vadd.f32 %v3309, %v3334
    %3336 = vdwg.mxu0
    %3337 = vrot.lane.b32.xlu0 %v3303, 96
    %v3338 = vpop.permute.xlu0 %3337
    %v3339 = vsel %vm137, %v3296, 0
    %v3341 = vsel %vm137, %v3338, 0
    %3343 = vmatpush.xpose.msra.mxu0 0.0
    %3344 = vmatpush.xpose.msra.mxu0 0.0
    %3345 = vmatpush.xpose.msra.mxu0 0.0
    %3346 = vmatpush.xpose.msra.mxu0 0.0
    %3347 = vmatpush.xpose.msra.mxu0 0.0
    %3348 = vmatpush.xpose.msra.mxu0 0.0
    %3349 = vmatpush.xpose.msra.mxu0 0.0
    %3350 = vmatpush.xpose.msra.mxu0 0.0
    %3351 = vmatpush.xpose.msra.mxu0 0.0
    %3352 = vmatpush.xpose.msra.mxu0 0.0
    %3353 = vmatpush.xpose.msra.mxu0 0.0
    %3354 = vmatpush.xpose.msra.mxu0 0.0
    %3355 = vmatpush.xpose.msra.mxu0 0.0
    %3356 = vmatpush.xpose.msra.mxu0 0.0
    %3357 = vmatpush.xpose.msra.mxu0 0.0
    %3358 = vmatpush.xpose.msra.mxu0 %v3341
    %3359 = vmatmul.f32.gmra.mxu0 %v3339
    %v3360 = vpop.f32.mrf.mxu0
    %v3361 = vadd.f32 %v3309, %v3360
    %3362 = vdwg.mxu0
    %3363 = vrot.lane.b32.xlu0 %v3305, 96
    %v3364 = vpop.permute.xlu0 %3363
    %v3365 = vsel %vm137, %v3298, 0
    %v3367 = vsel %vm137, %v3364, 0
    %3369 = vmatpush.xpose.msra.mxu0 0.0
    %3370 = vmatpush.xpose.msra.mxu0 0.0
    %3371 = vmatpush.xpose.msra.mxu0 0.0
    %3372 = vmatpush.xpose.msra.mxu0 0.0
    %3373 = vmatpush.xpose.msra.mxu0 0.0
    %3374 = vmatpush.xpose.msra.mxu0 0.0
    %3375 = vmatpush.xpose.msra.mxu0 0.0
    %3376 = vmatpush.xpose.msra.mxu0 0.0
    %3377 = vmatpush.xpose.msra.mxu0 0.0
    %3378 = vmatpush.xpose.msra.mxu0 0.0
    %3379 = vmatpush.xpose.msra.mxu0 0.0
    %3380 = vmatpush.xpose.msra.mxu0 0.0
    %3381 = vmatpush.xpose.msra.mxu0 0.0
    %3382 = vmatpush.xpose.msra.mxu0 0.0
    %3383 = vmatpush.xpose.msra.mxu0 0.0
    %3384 = vmatpush.xpose.msra.mxu0 %v3367
    %3385 = vmatmul.f32.gmra.mxu0 %v3365
    %v3386 = vpop.f32.mrf.mxu0
    %v3387 = vadd.f32 %v3309, %v3386
    %3388 = vdwg.mxu0
    %3389 = vrot.lane.b32.xlu0 %v3307, 96
    %v3390 = vpop.permute.xlu0 %3389
    %v3391 = vsel %vm137, %v3300, 0
    %v3393 = vsel %vm137, %v3390, 0
    %3395 = vmatpush.xpose.msra.mxu0 0.0
    %3396 = vmatpush.xpose.msra.mxu0 0.0
    %3397 = vmatpush.xpose.msra.mxu0 0.0
    %3398 = vmatpush.xpose.msra.mxu0 0.0
    %3399 = vmatpush.xpose.msra.mxu0 0.0
    %3400 = vmatpush.xpose.msra.mxu0 0.0
    %3401 = vmatpush.xpose.msra.mxu0 0.0
    %3402 = vmatpush.xpose.msra.mxu0 0.0
    %3403 = vmatpush.xpose.msra.mxu0 0.0
    %3404 = vmatpush.xpose.msra.mxu0 0.0
    %3405 = vmatpush.xpose.msra.mxu0 0.0
    %3406 = vmatpush.xpose.msra.mxu0 0.0
    %3407 = vmatpush.xpose.msra.mxu0 0.0
    %3408 = vmatpush.xpose.msra.mxu0 0.0
    %3409 = vmatpush.xpose.msra.mxu0 0.0
    %3410 = vmatpush.xpose.msra.mxu0 %v3393
    %3411 = vmatmul.f32.gmra.mxu0 %v3391
    %v3412 = vpop.f32.mrf.mxu0
    %v3413 = vadd.f32 %v3309, %v3412
    %3414 = vdwg.mxu0
    %v3415 = vsel %vm137, %v3335, -inf
    %3416 = vmax.xlane.f32.xlu0 %v3415
    %v3417 = vpop.xlane.xlu0 %3416
    %v3418 = vsel %vm137, %v3361, -inf
    %3419 = vmax.xlane.f32.xlu0 %v3418
    %v3420 = vpop.xlane.xlu0 %3419
    %v3421 = vsel %vm137, %v3387, -inf
    %3422 = vmax.xlane.f32.xlu0 %v3421
    %v3423 = vpop.xlane.xlu0 %3422
    %v3424 = vsel %vm137, %v3413, -inf
    %3425 = vmax.xlane.f32.xlu0 %v3424
    %v3426 = vpop.xlane.xlu0 %3425
    %v3427 = vsub.f32 %v3335, %v3417
    %v3428 = vsub.f32 %v3361, %v3420
    %v3429 = vsub.f32 %v3387, %v3423
    %v3430 = vsub.f32 %v3413, %v3426
    %v3431 = vmul.f32 %v3427, 1.442695
    %v3432 = vpow.pop %v3431
    %v3433 = vmul.f32 %v3428, 1.442695
    %v3434 = vpow.pop %v3433
    %v3435 = vmul.f32 %v3429, 1.442695
    %v3436 = vpow.pop %v3435
    %v3437 = vmul.f32 %v3430, 1.442695
    %v3438 = vpow.pop %v3437
    %v3439 = vsel %vm137, %v3432, 0.0
    %3440 = vadd.xlane.f32.xlu0 %v3439
    %v3441 = vpop.xlane.xlu0 %3440
    %v3442 = vsel %vm137, %v3434, 0.0
    %3443 = vadd.xlane.f32.xlu0 %v3442
    %v3444 = vpop.xlane.xlu0 %3443
    %v3445 = vsel %vm137, %v3436, 0.0
    %3446 = vadd.xlane.f32.xlu0 %v3445
    %v3447 = vpop.xlane.xlu0 %3446
    %v3448 = vsel %vm137, %v3438, 0.0
    %3449 = vadd.xlane.f32.xlu0 %v3448
    %v3450 = vpop.xlane.xlu0 %3449
    %v3451 = vrcp.pop %v3441
    %v3452 = vrcp.pop %v3444
    %v3453 = vrcp.pop %v3447
    %v3454 = vrcp.pop %v3450
    %v3455 = vmul.f32 %v3432, %v3451
    %v3456 = vmul.f32 %v3434, %v3452
    %v3457 = vmul.f32 %v3436, %v3453
    %v3458 = vmul.f32 %v3438, %v3454
    %3459 = vrot.lane.b32.xlu0 %v3291, 64
    %v3460 = vpop.permute.xlu0 %3459
    %v3463 = vsel %vm137, %v3455, 0
    %3465 = vmatpush.msra.mxu0 0.0
    %3466 = vmatpush.msra.mxu0 0.0
    %3467 = vmatpush.msra.mxu0 0.0
    %3468 = vmatpush.msra.mxu0 0.0
    %3469 = vmatpush.msra.mxu0 0.0
    %3470 = vmatpush.msra.mxu0 0.0
    %3471 = vmatpush.msra.mxu0 0.0
    %3472 = vmatpush.msra.mxu0 0.0
    %3473 = vmatpush.msra.mxu0 0.0
    %3474 = vmatpush.msra.mxu0 0.0
    %3475 = vmatpush.msra.mxu0 0.0
    %3476 = vmatpush.msra.mxu0 0.0
    %3477 = vmatpush.msra.mxu0 0.0
    %3478 = vmatpush.msra.mxu0 0.0
    %3479 = vmatpush.msra.mxu0 0.0
    %3480 = vmatpush.msra.mxu0 %v3460
    %3481 = vmatmul.f32.gmra.mxu0 %v3463
    %v3482 = vpop.f32.mrf.mxu0
    %v3483 = vadd.f32 0.0, %v3482
    %3484 = vdwg.mxu0
    %3485 = vrot.lane.b32.xlu0 %v3303, 64
    %v3486 = vpop.permute.xlu0 %3485
    %v3489 = vsel %vm137, %v3456, 0
    %3491 = vmatpush.msra.mxu0 0.0
    %3492 = vmatpush.msra.mxu0 0.0
    %3493 = vmatpush.msra.mxu0 0.0
    %3494 = vmatpush.msra.mxu0 0.0
    %3495 = vmatpush.msra.mxu0 0.0
    %3496 = vmatpush.msra.mxu0 0.0
    %3497 = vmatpush.msra.mxu0 0.0
    %3498 = vmatpush.msra.mxu0 0.0
    %3499 = vmatpush.msra.mxu0 0.0
    %3500 = vmatpush.msra.mxu0 0.0
    %3501 = vmatpush.msra.mxu0 0.0
    %3502 = vmatpush.msra.mxu0 0.0
    %3503 = vmatpush.msra.mxu0 0.0
    %3504 = vmatpush.msra.mxu0 0.0
    %3505 = vmatpush.msra.mxu0 0.0
    %3506 = vmatpush.msra.mxu0 %v3486
    %3507 = vmatmul.f32.gmra.mxu0 %v3489
    %v3508 = vpop.f32.mrf.mxu0
    %v3509 = vadd.f32 0.0, %v3508
    %3510 = vdwg.mxu0
    %3511 = vrot.lane.b32.xlu0 %v3305, 64
    %v3512 = vpop.permute.xlu0 %3511
    %v3515 = vsel %vm137, %v3457, 0
    %3517 = vmatpush.msra.mxu0 0.0
    %3518 = vmatpush.msra.mxu0 0.0
    %3519 = vmatpush.msra.mxu0 0.0
    %3520 = vmatpush.msra.mxu0 0.0
    %3521 = vmatpush.msra.mxu0 0.0
    %3522 = vmatpush.msra.mxu0 0.0
    %3523 = vmatpush.msra.mxu0 0.0
    %3524 = vmatpush.msra.mxu0 0.0
    %3525 = vmatpush.msra.mxu0 0.0
    %3526 = vmatpush.msra.mxu0 0.0
    %3527 = vmatpush.msra.mxu0 0.0
    %3528 = vmatpush.msra.mxu0 0.0
    %3529 = vmatpush.msra.mxu0 0.0
    %3530 = vmatpush.msra.mxu0 0.0
    %3531 = vmatpush.msra.mxu0 0.0
    %3532 = vmatpush.msra.mxu0 %v3512
    %3533 = vmatmul.f32.gmra.mxu0 %v3515
    %v3534 = vpop.f32.mrf.mxu0
    %v3535 = vadd.f32 0.0, %v3534
    %3536 = vdwg.mxu0
    %3537 = vrot.lane.b32.xlu0 %v3307, 64
    %v3538 = vpop.permute.xlu0 %3537
    %v3541 = vsel %vm137, %v3458, 0
    %3543 = vmatpush.msra.mxu0 0.0
    %3544 = vmatpush.msra.mxu0 0.0
    %3545 = vmatpush.msra.mxu0 0.0
    %3546 = vmatpush.msra.mxu0 0.0
    %3547 = vmatpush.msra.mxu0 0.0
    %3548 = vmatpush.msra.mxu0 0.0
    %3549 = vmatpush.msra.mxu0 0.0
    %3550 = vmatpush.msra.mxu0 0.0
    %3551 = vmatpush.msra.mxu0 0.0
    %3552 = vmatpush.msra.mxu0 0.0
    %3553 = vmatpush.msra.mxu0 0.0
    %3554 = vmatpush.msra.mxu0 0.0
    %3555 = vmatpush.msra.mxu0 0.0
    %3556 = vmatpush.msra.mxu0 0.0
    %3557 = vmatpush.msra.mxu0 0.0
    %3558 = vmatpush.msra.mxu0 %v3538
    %3559 = vmatmul.f32.gmra.mxu0 %v3541
    %v3560 = vpop.f32.mrf.mxu0
    %v3561 = vadd.f32 0.0, %v3560
    %3562 = vdwg.mxu0
    %v3564 = vsel %vm137, %v3483, 0
    %3566 = vmatpush.msra.mxu0 0.0
    %3567 = vmatpush.msra.mxu0 0.0
    %3568 = vmatpush.msra.mxu0 0.0
    %3569 = vmatpush.msra.mxu0 0.0
    %3570 = vmatpush.msra.mxu0 0.0
    %3571 = vmatpush.msra.mxu0 0.0
    %3572 = vmatpush.msra.mxu0 0.0
    %3573 = vmatpush.msra.mxu0 0.0
    %3574 = vmatpush.msra.mxu0 0.0
    %3575 = vmatpush.msra.mxu0 0.0
    %3576 = vmatpush.msra.mxu0 0.0
    %3577 = vmatpush.msra.mxu0 0.0
    %3578 = vmatpush.msra.mxu0 0.0
    %3579 = vmatpush.msra.mxu0 0.0
    %3580 = vmatpush.msra.mxu0 0.0
    %3581 = vmatpush.msra.mxu0 %v3264
    %3582 = vmatmul.f32.gmra.mxu0 %v3564
    %v3583 = vpop.f32.mrf.mxu0
    %v3584 = vadd.f32 0.0, %v3583
    %3585 = vdwg.mxu0
    %v3587 = vsel %vm137, %v3509, 0
    %3589 = vmatpush.msra.mxu0 0.0
    %3590 = vmatpush.msra.mxu0 0.0
    %3591 = vmatpush.msra.mxu0 0.0
    %3592 = vmatpush.msra.mxu0 0.0
    %3593 = vmatpush.msra.mxu0 0.0
    %3594 = vmatpush.msra.mxu0 0.0
    %3595 = vmatpush.msra.mxu0 0.0
    %3596 = vmatpush.msra.mxu0 0.0
    %3597 = vmatpush.msra.mxu0 0.0
    %3598 = vmatpush.msra.mxu0 0.0
    %3599 = vmatpush.msra.mxu0 0.0
    %3600 = vmatpush.msra.mxu0 0.0
    %3601 = vmatpush.msra.mxu0 0.0
    %3602 = vmatpush.msra.mxu0 0.0
    %3603 = vmatpush.msra.mxu0 0.0
    %3604 = vmatpush.msra.mxu0 %v3265
    %3605 = vmatmul.f32.gmra.mxu0 %v3587
    %v3606 = vpop.f32.mrf.mxu0
    %v3607 = vadd.f32 0.0, %v3606
    %3608 = vdwg.mxu0
    %v3610 = vsel %vm137, %v3535, 0
    %3612 = vmatpush.msra.mxu0 0.0
    %3613 = vmatpush.msra.mxu0 0.0
    %3614 = vmatpush.msra.mxu0 0.0
    %3615 = vmatpush.msra.mxu0 0.0
    %3616 = vmatpush.msra.mxu0 0.0
    %3617 = vmatpush.msra.mxu0 0.0
    %3618 = vmatpush.msra.mxu0 0.0
    %3619 = vmatpush.msra.mxu0 0.0
    %3620 = vmatpush.msra.mxu0 0.0
    %3621 = vmatpush.msra.mxu0 0.0
    %3622 = vmatpush.msra.mxu0 0.0
    %3623 = vmatpush.msra.mxu0 0.0
    %3624 = vmatpush.msra.mxu0 0.0
    %3625 = vmatpush.msra.mxu0 0.0
    %3626 = vmatpush.msra.mxu0 0.0
    %3627 = vmatpush.msra.mxu0 %v3266
    %3628 = vmatmul.f32.gmra.mxu0 %v3610
    %v3629 = vpop.f32.mrf.mxu0
    %v3630 = vadd.f32 0.0, %v3629
    %3631 = vdwg.mxu0
    %v3633 = vsel %vm137, %v3561, 0
    %3635 = vmatpush.msra.mxu0 0.0
    %3636 = vmatpush.msra.mxu0 0.0
    %3637 = vmatpush.msra.mxu0 0.0
    %3638 = vmatpush.msra.mxu0 0.0
    %3639 = vmatpush.msra.mxu0 0.0
    %3640 = vmatpush.msra.mxu0 0.0
    %3641 = vmatpush.msra.mxu0 0.0
    %3642 = vmatpush.msra.mxu0 0.0
    %3643 = vmatpush.msra.mxu0 0.0
    %3644 = vmatpush.msra.mxu0 0.0
    %3645 = vmatpush.msra.mxu0 0.0
    %3646 = vmatpush.msra.mxu0 0.0
    %3647 = vmatpush.msra.mxu0 0.0
    %3648 = vmatpush.msra.mxu0 0.0
    %3649 = vmatpush.msra.mxu0 0.0
    %3650 = vmatpush.msra.mxu0 %v3267
    %3651 = vmatmul.f32.gmra.mxu0 %v3633
    %v3652 = vpop.f32.mrf.mxu0
    %v3653 = vadd.f32 0.0, %v3652
    %3654 = vdwg.mxu0
    %v3655 = vsel %vm46, %v3584, 0.0
    %v3656 = vsel %vm46, %v3607, 0.0
    %v3657 = vadd.f32 %v3655, %v3656
    %v3658 = vsel %vm46, %v3630, 0.0
    %v3659 = vadd.f32 %v3657, %v3658
    %v3660 = vsel %vm46, %v3653, 0.0
    %v3661 = vadd.f32 %v3659, %v3660
    %v3662 = vperm.slane %v3268, 0
    %v3663 = vadd.f32 %v3661, %v3662
    %v3664 = vadd.f32 %v3227, %v3663
    %v3665 = vld [vmem:[%s9 + $0x4] sm:$0x1]
    %v3666 = vld [vmem:[%s9 + $0x5] sm:$0x1]
    %v3667 = vsel %vm46, %v3664, 0.0
    %3668 = vadd.xlane.f32.xlu0 %v3667
    %v3669 = vpop.xlane.xlu0 %3668
    %v3670 = vmul.f32 %v3669, %v56
    %v3671 = vsub.f32 %v3664, %v3670
    %v3672 = vmul.f32 %v3671, %v3671
    %v3673 = vsel %vm46, %v3672, 0.0
    %3674 = vadd.xlane.f32.xlu0 %v3673
    %v3675 = vpop.xlane.xlu0 %3674
    %v3676 = vmul.f32 %v3675, 0.032258064
    %v3677 = vrsqrt.pop %v3676
    %v3678 = vmul.f32 %v3677, %v3676
    %v3679 = vmul.f32 %v3678, %v3677
    %v3680 = vmul.f32 0.5, %v3679
    %v3681 = vsub.f32 1.5, %v3680
    %v3682 = vmul.f32 %v3677, %v3681
    %v3683 = vmul.f32 %v3676, %v3682
    %vm3684 = vcmp.eq.f32.partialorder %v3676, inf
    %v3685 = vsel %vm3684, %v3676, %v3683
    %vm3686 = vcmp.eq.f32.partialorder %v3676, 0.0
    %v3687 = vand.u32 %v3676, 2147483648
    %v3688 = vsel %vm3686, %v3687, %v3685
    %v3689 = vadd.f32 %v3688, 1e-06
    %v3690 = vrcp.pop %v3689
    %v3691 = vmul.f32 %v3671, %v3690
    %v3692 = vperm.slane %v3665, 0
    %v3693 = vmul.f32 %v3692, %v3691
    %v3694 = vperm.slane %v3666, 0
    %v3695 = vadd.f32 %v3693, %v3694
    %v3696 = vld [vmem:[%s6] sm:$0xff]
    %v3697 = vld [vmem:[%s6 + $0x8] sm:$0xff]
    %v3698 = vld [vmem:[%s6 + $0x10] sm:$0xff]
    %v3699 = vld [vmem:[%s6 + $0x18] sm:$0xff]
    %v3700 = vld [vmem:[%s9 + $0x6] sm:$0x1]
    %v3701 = vld [vmem:[%s7] sm:$0xff]
    %v3702 = vld [vmem:[%s7 + $0x8] sm:$0xff]
    %v3703 = vld [vmem:[%s7 + $0x10] sm:$0xff]
    %v3704 = vld [vmem:[%s7 + $0x18] sm:$0xff]
    %v3705 = vld [vmem:[%s7 + $0x20] sm:$0xff]
    %v3706 = vld [vmem:[%s7 + $0x28] sm:$0xff]
    %v3707 = vld [vmem:[%s7 + $0x30] sm:$0xff]
    %v3708 = vld [vmem:[%s7 + $0x38] sm:$0xff]
    %v3709 = vld [vmem:[%s9 + $0x7] sm:$0x1]
    %v3710 = vperm.slane %v3700, 0
    %v3712 = vsel %vm46, %v3695, 0
    %3714 = vmatpush.msra.mxu0 0.0
    %3715 = vmatpush.msra.mxu0 0.0
    %3716 = vmatpush.msra.mxu0 0.0
    %3717 = vmatpush.msra.mxu0 0.0
    %3718 = vmatpush.msra.mxu0 0.0
    %3719 = vmatpush.msra.mxu0 0.0
    %3720 = vmatpush.msra.mxu0 0.0
    %3721 = vmatpush.msra.mxu0 0.0
    %3722 = vmatpush.msra.mxu0 0.0
    %3723 = vmatpush.msra.mxu0 0.0
    %3724 = vmatpush.msra.mxu0 0.0
    %3725 = vmatpush.msra.mxu0 0.0
    %3726 = vmatpush.msra.mxu0 %v3699
    %3727 = vmatpush.msra.mxu0 %v3698
    %3728 = vmatpush.msra.mxu0 %v3697
    %3729 = vmatpush.msra.mxu0 %v3696
    %3730 = vmatmul.f32.gmra.mxu0 %v3712
    %v3731 = vpop.f32.mrf.mxu0
    %v3732 = vadd.f32 %v3710, %v3731
    %3733 = vdwg.mxu0
    %v3734 = vmax.f32 %v3732, 0.0
    %v3735 = vperm.slane %v3709, 0
    %v3737 = vsel %vm561, %v3734, 0
    %3739 = vmatpush.msra.mxu0 0.0
    %3740 = vmatpush.msra.mxu0 0.0
    %3741 = vmatpush.msra.mxu0 0.0
    %3742 = vmatpush.msra.mxu0 0.0
    %3743 = vmatpush.msra.mxu0 0.0
    %3744 = vmatpush.msra.mxu0 0.0
    %3745 = vmatpush.msra.mxu0 0.0
    %3746 = vmatpush.msra.mxu0 0.0
    %3747 = vmatpush.msra.mxu0 %v3708
    %3748 = vmatpush.msra.mxu0 %v3707
    %3749 = vmatpush.msra.mxu0 %v3706
    %3750 = vmatpush.msra.mxu0 %v3705
    %3751 = vmatpush.msra.mxu0 %v3704
    %3752 = vmatpush.msra.mxu0 %v3703
    %3753 = vmatpush.msra.mxu0 %v3702
    %3754 = vmatpush.msra.mxu0 %v3701
    %3755 = vmatmul.f32.gmra.mxu0 %v3737
    %v3756 = vpop.f32.mrf.mxu0
    %v3757 = vadd.f32 %v3735, %v3756
    %3758 = vdwg.mxu0
    %v3759 = vadd.f32 %v3664, %v3757
    %v3760 = vld [vmem:[%s9 + $0x8] sm:$0x1]
    %v3761 = vld [vmem:[%s9 + $0x9] sm:$0x1]
    %v3762 = vsel %vm46, %v3759, 0.0
    %3763 = vadd.xlane.f32.xlu0 %v3762
    %v3764 = vpop.xlane.xlu0 %3763
    %v3765 = vmul.f32 %v3764, %v56
    %v3766 = vsub.f32 %v3759, %v3765
    %v3767 = vmul.f32 %v3766, %v3766
    %v3768 = vsel %vm46, %v3767, 0.0
    %3769 = vadd.xlane.f32.xlu0 %v3768
    %v3770 = vpop.xlane.xlu0 %3769
    %v3771 = vmul.f32 %v3770, 0.032258064
    %v3772 = vrsqrt.pop %v3771
    %v3773 = vmul.f32 %v3772, %v3771
    %v3774 = vmul.f32 %v3773, %v3772
    %v3775 = vmul.f32 0.5, %v3774
    %v3776 = vsub.f32 1.5, %v3775
    %v3777 = vmul.f32 %v3772, %v3776
    %v3778 = vmul.f32 %v3771, %v3777
    %vm3779 = vcmp.eq.f32.partialorder %v3771, inf
    %v3780 = vsel %vm3779, %v3771, %v3778
    %vm3781 = vcmp.eq.f32.partialorder %v3771, 0.0
    %v3782 = vand.u32 %v3771, 2147483648
    %v3783 = vsel %vm3781, %v3782, %v3780
    %v3784 = vadd.f32 %v3783, 1e-06
    %v3785 = vrcp.pop %v3784
    %v3786 = vmul.f32 %v3766, %v3785
    %v3787 = vperm.slane %v3760, 0
    %v3788 = vmul.f32 %v3787, %v3786
    %v3789 = vperm.slane %v3761, 0
    %v3790 = vadd.f32 %v3788, %v3789
    %v3791 = vld [vmem:[%s617] sm:$0xff]
    %v3792 = vld [vmem:[%s617 + $0x8] sm:$0xff]
    %v3793 = vld [vmem:[%s617 + $0x10] sm:$0xff]
    %v3794 = vld [vmem:[%s617 + $0x18] sm:$0xff]
    %v3795 = vld [vmem:[%s9 + $0xa] sm:$0x1]
    %v3796 = vld [vmem:[%s623] sm:$0xff]
    %v3797 = vld [vmem:[%s623 + $0x8] sm:$0xff]
    %v3798 = vld [vmem:[%s623 + $0x10] sm:$0xff]
    %v3799 = vld [vmem:[%s623 + $0x18] sm:$0xff]
    %v3800 = vld [vmem:[%s9 + $0xb] sm:$0x1]
    %v3801 = vperm.slane %v3795, 0
    %v3803 = vsel %vm46, %v3790, 0
    %3805 = vmatpush.msra.mxu0 0.0
    %3806 = vmatpush.msra.mxu0 0.0
    %3807 = vmatpush.msra.mxu0 0.0
    %3808 = vmatpush.msra.mxu0 0.0
    %3809 = vmatpush.msra.mxu0 0.0
    %3810 = vmatpush.msra.mxu0 0.0
    %3811 = vmatpush.msra.mxu0 0.0
    %3812 = vmatpush.msra.mxu0 0.0
    %3813 = vmatpush.msra.mxu0 0.0
    %3814 = vmatpush.msra.mxu0 0.0
    %3815 = vmatpush.msra.mxu0 0.0
    %3816 = vmatpush.msra.mxu0 0.0
    %3817 = vmatpush.msra.mxu0 %v3794
    %3818 = vmatpush.msra.mxu0 %v3793
    %3819 = vmatpush.msra.mxu0 %v3792
    %3820 = vmatpush.msra.mxu0 %v3791
    %3821 = vmatmul.f32.gmra.mxu0 %v3803
    %v3822 = vpop.f32.mrf.mxu0
    %v3823 = vadd.f32 %v3801, %v3822
    %3824 = vdwg.mxu0
    %v3825 = vmul.f32 %v3823, 0.35355338
    %3827 = vrot.lane.b32.xlu0 %v3825, 120
    %v3828 = vpop.permute.xlu0 %3827
    %3829 = vrot.lane.b32.xlu0 %v3825, 112
    %v3830 = vpop.permute.xlu0 %3829
    %3831 = vrot.lane.b32.xlu0 %v3825, 104
    %v3832 = vpop.permute.xlu0 %3831
    %3834 = vrot.lane.b32.xlu0 %v3823, 120
    %v3835 = vpop.permute.xlu0 %3834
    %3836 = vrot.lane.b32.xlu0 %v3823, 112
    %v3837 = vpop.permute.xlu0 %3836
    %3838 = vrot.lane.b32.xlu0 %v3823, 104
    %v3839 = vpop.permute.xlu0 %3838
    %3840 = vrot.lane.b32.xlu0 %v3823, 96
    %v3841 = vpop.permute.xlu0 %3840
    %v3842 = vsel %vm137, %v3825, 0
    %v3844 = vsel %vm137, %v3841, 0
    %3846 = vmatpush.xpose.msra.mxu0 0.0
    %3847 = vmatpush.xpose.msra.mxu0 0.0
    %3848 = vmatpush.xpose.msra.mxu0 0.0
    %3849 = vmatpush.xpose.msra.mxu0 0.0
    %3850 = vmatpush.xpose.msra.mxu0 0.0
    %3851 = vmatpush.xpose.msra.mxu0 0.0
    %3852 = vmatpush.xpose.msra.mxu0 0.0
    %3853 = vmatpush.xpose.msra.mxu0 0.0
    %3854 = vmatpush.xpose.msra.mxu0 0.0
    %3855 = vmatpush.xpose.msra.mxu0 0.0
    %3856 = vmatpush.xpose.msra.mxu0 0.0
    %3857 = vmatpush.xpose.msra.mxu0 0.0
    %3858 = vmatpush.xpose.msra.mxu0 0.0
    %3859 = vmatpush.xpose.msra.mxu0 0.0
    %3860 = vmatpush.xpose.msra.mxu0 0.0
    %3861 = vmatpush.xpose.msra.mxu0 %v3844
    %3862 = vmatmul.f32.gmra.mxu0 %v3842
    %v3863 = vpop.f32.mrf.mxu0
    %v3864 = vadd.f32 %v3309, %v3863
    %3865 = vdwg.mxu0
    %3866 = vrot.lane.b32.xlu0 %v3835, 96
    %v3867 = vpop.permute.xlu0 %3866
    %v3868 = vsel %vm137, %v3828, 0
    %v3870 = vsel %vm137, %v3867, 0
    %3872 = vmatpush.xpose.msra.mxu0 0.0
    %3873 = vmatpush.xpose.msra.mxu0 0.0
    %3874 = vmatpush.xpose.msra.mxu0 0.0
    %3875 = vmatpush.xpose.msra.mxu0 0.0
    %3876 = vmatpush.xpose.msra.mxu0 0.0
    %3877 = vmatpush.xpose.msra.mxu0 0.0
    %3878 = vmatpush.xpose.msra.mxu0 0.0
    %3879 = vmatpush.xpose.msra.mxu0 0.0
    %3880 = vmatpush.xpose.msra.mxu0 0.0
    %3881 = vmatpush.xpose.msra.mxu0 0.0
    %3882 = vmatpush.xpose.msra.mxu0 0.0
    %3883 = vmatpush.xpose.msra.mxu0 0.0
    %3884 = vmatpush.xpose.msra.mxu0 0.0
    %3885 = vmatpush.xpose.msra.mxu0 0.0
    %3886 = vmatpush.xpose.msra.mxu0 0.0
    %3887 = vmatpush.xpose.msra.mxu0 %v3870
    %3888 = vmatmul.f32.gmra.mxu0 %v3868
    %v3889 = vpop.f32.mrf.mxu0
    %v3890 = vadd.f32 %v3309, %v3889
    %3891 = vdwg.mxu0
    %3892 = vrot.lane.b32.xlu0 %v3837, 96
    %v3893 = vpop.permute.xlu0 %3892
    %v3894 = vsel %vm137, %v3830, 0
    %v3896 = vsel %vm137, %v3893, 0
    %3898 = vmatpush.xpose.msra.mxu0 0.0
    %3899 = vmatpush.xpose.msra.mxu0 0.0
    %3900 = vmatpush.xpose.msra.mxu0 0.0
    %3901 = vmatpush.xpose.msra.mxu0 0.0
    %3902 = vmatpush.xpose.msra.mxu0 0.0
    %3903 = vmatpush.xpose.msra.mxu0 0.0
    %3904 = vmatpush.xpose.msra.mxu0 0.0
    %3905 = vmatpush.xpose.msra.mxu0 0.0
    %3906 = vmatpush.xpose.msra.mxu0 0.0
    %3907 = vmatpush.xpose.msra.mxu0 0.0
    %3908 = vmatpush.xpose.msra.mxu0 0.0
    %3909 = vmatpush.xpose.msra.mxu0 0.0
    %3910 = vmatpush.xpose.msra.mxu0 0.0
    %3911 = vmatpush.xpose.msra.mxu0 0.0
    %3912 = vmatpush.xpose.msra.mxu0 0.0
    %3913 = vmatpush.xpose.msra.mxu0 %v3896
    %3914 = vmatmul.f32.gmra.mxu0 %v3894
    %v3915 = vpop.f32.mrf.mxu0
    %v3916 = vadd.f32 %v3309, %v3915
    %3917 = vdwg.mxu0
    %3918 = vrot.lane.b32.xlu0 %v3839, 96
    %v3919 = vpop.permute.xlu0 %3918
    %v3920 = vsel %vm137, %v3832, 0
    %v3922 = vsel %vm137, %v3919, 0
    %3924 = vmatpush.xpose.msra.mxu0 0.0
    %3925 = vmatpush.xpose.msra.mxu0 0.0
    %3926 = vmatpush.xpose.msra.mxu0 0.0
    %3927 = vmatpush.xpose.msra.mxu0 0.0
    %3928 = vmatpush.xpose.msra.mxu0 0.0
    %3929 = vmatpush.xpose.msra.mxu0 0.0
    %3930 = vmatpush.xpose.msra.mxu0 0.0
    %3931 = vmatpush.xpose.msra.mxu0 0.0
    %3932 = vmatpush.xpose.msra.mxu0 0.0
    %3933 = vmatpush.xpose.msra.mxu0 0.0
    %3934 = vmatpush.xpose.msra.mxu0 0.0
    %3935 = vmatpush.xpose.msra.mxu0 0.0
    %3936 = vmatpush.xpose.msra.mxu0 0.0
    %3937 = vmatpush.xpose.msra.mxu0 0.0
    %3938 = vmatpush.xpose.msra.mxu0 0.0
    %3939 = vmatpush.xpose.msra.mxu0 %v3922
    %3940 = vmatmul.f32.gmra.mxu0 %v3920
    %v3941 = vpop.f32.mrf.mxu0
    %v3942 = vadd.f32 %v3309, %v3941
    %3943 = vdwg.mxu0
    %v3944 = vsel %vm137, %v3864, -inf
    %3945 = vmax.xlane.f32.xlu0 %v3944
    %v3946 = vpop.xlane.xlu0 %3945
    %v3947 = vsel %vm137, %v3890, -inf
    %3948 = vmax.xlane.f32.xlu0 %v3947
    %v3949 = vpop.xlane.xlu0 %3948
    %v3950 = vsel %vm137, %v3916, -inf
    %3951 = vmax.xlane.f32.xlu0 %v3950
    %v3952 = vpop.xlane.xlu0 %3951
    %v3953 = vsel %vm137, %v3942, -inf
    %3954 = vmax.xlane.f32.xlu0 %v3953
    %v3955 = vpop.xlane.xlu0 %3954
    %v3956 = vsub.f32 %v3864, %v3946
    %v3957 = vsub.f32 %v3890, %v3949
    %v3958 = vsub.f32 %v3916, %v3952
    %v3959 = vsub.f32 %v3942, %v3955
    %v3960 = vmul.f32 %v3956, 1.442695
    %v3961 = vpow.pop %v3960
    %v3962 = vmul.f32 %v3957, 1.442695
    %v3963 = vpow.pop %v3962
    %v3964 = vmul.f32 %v3958, 1.442695
    %v3965 = vpow.pop %v3964
    %v3966 = vmul.f32 %v3959, 1.442695
    %v3967 = vpow.pop %v3966
    %v3968 = vsel %vm137, %v3961, 0.0
    %3969 = vadd.xlane.f32.xlu0 %v3968
    %v3970 = vpop.xlane.xlu0 %3969
    %v3971 = vsel %vm137, %v3963, 0.0
    %3972 = vadd.xlane.f32.xlu0 %v3971
    %v3973 = vpop.xlane.xlu0 %3972
    %v3974 = vsel %vm137, %v3965, 0.0
    %3975 = vadd.xlane.f32.xlu0 %v3974
    %v3976 = vpop.xlane.xlu0 %3975
    %v3977 = vsel %vm137, %v3967, 0.0
    %3978 = vadd.xlane.f32.xlu0 %v3977
    %v3979 = vpop.xlane.xlu0 %3978
    %v3980 = vrcp.pop %v3970
    %v3981 = vrcp.pop %v3973
    %v3982 = vrcp.pop %v3976
    %v3983 = vrcp.pop %v3979
    %v3984 = vmul.f32 %v3961, %v3980
    %v3985 = vmul.f32 %v3963, %v3981
    %v3986 = vmul.f32 %v3965, %v3982
    %v3987 = vmul.f32 %v3967, %v3983
    %3988 = vrot.lane.b32.xlu0 %v3823, 64
    %v3989 = vpop.permute.xlu0 %3988
    %v3992 = vsel %vm137, %v3984, 0
    %3994 = vmatpush.msra.mxu0 0.0
    %3995 = vmatpush.msra.mxu0 0.0
    %3996 = vmatpush.msra.mxu0 0.0
    %3997 = vmatpush.msra.mxu0 0.0
    %3998 = vmatpush.msra.mxu0 0.0
    %3999 = vmatpush.msra.mxu0 0.0
    %4000 = vmatpush.msra.mxu0 0.0
    %4001 = vmatpush.msra.mxu0 0.0
    %4002 = vmatpush.msra.mxu0 0.0
    %4003 = vmatpush.msra.mxu0 0.0
    %4004 = vmatpush.msra.mxu0 0.0
    %4005 = vmatpush.msra.mxu0 0.0
    %4006 = vmatpush.msra.mxu0 0.0
    %4007 = vmatpush.msra.mxu0 0.0
    %4008 = vmatpush.msra.mxu0 0.0
    %4009 = vmatpush.msra.mxu0 %v3989
    %4010 = vmatmul.f32.gmra.mxu0 %v3992
    %v4011 = vpop.f32.mrf.mxu0
    %v4012 = vadd.f32 0.0, %v4011
    %4013 = vdwg.mxu0
    %4014 = vrot.lane.b32.xlu0 %v3835, 64
    %v4015 = vpop.permute.xlu0 %4014
    %v4018 = vsel %vm137, %v3985, 0
    %4020 = vmatpush.msra.mxu0 0.0
    %4021 = vmatpush.msra.mxu0 0.0
    %4022 = vmatpush.msra.mxu0 0.0
    %4023 = vmatpush.msra.mxu0 0.0
    %4024 = vmatpush.msra.mxu0 0.0
    %4025 = vmatpush.msra.mxu0 0.0
    %4026 = vmatpush.msra.mxu0 0.0
    %4027 = vmatpush.msra.mxu0 0.0
    %4028 = vmatpush.msra.mxu0 0.0
    %4029 = vmatpush.msra.mxu0 0.0
    %4030 = vmatpush.msra.mxu0 0.0
    %4031 = vmatpush.msra.mxu0 0.0
    %4032 = vmatpush.msra.mxu0 0.0
    %4033 = vmatpush.msra.mxu0 0.0
    %4034 = vmatpush.msra.mxu0 0.0
    %4035 = vmatpush.msra.mxu0 %v4015
    %4036 = vmatmul.f32.gmra.mxu0 %v4018
    %v4037 = vpop.f32.mrf.mxu0
    %v4038 = vadd.f32 0.0, %v4037
    %4039 = vdwg.mxu0
    %4040 = vrot.lane.b32.xlu0 %v3837, 64
    %v4041 = vpop.permute.xlu0 %4040
    %v4044 = vsel %vm137, %v3986, 0
    %4046 = vmatpush.msra.mxu0 0.0
    %4047 = vmatpush.msra.mxu0 0.0
    %4048 = vmatpush.msra.mxu0 0.0
    %4049 = vmatpush.msra.mxu0 0.0
    %4050 = vmatpush.msra.mxu0 0.0
    %4051 = vmatpush.msra.mxu0 0.0
    %4052 = vmatpush.msra.mxu0 0.0
    %4053 = vmatpush.msra.mxu0 0.0
    %4054 = vmatpush.msra.mxu0 0.0
    %4055 = vmatpush.msra.mxu0 0.0
    %4056 = vmatpush.msra.mxu0 0.0
    %4057 = vmatpush.msra.mxu0 0.0
    %4058 = vmatpush.msra.mxu0 0.0
    %4059 = vmatpush.msra.mxu0 0.0
    %4060 = vmatpush.msra.mxu0 0.0
    %4061 = vmatpush.msra.mxu0 %v4041
    %4062 = vmatmul.f32.gmra.mxu0 %v4044
    %v4063 = vpop.f32.mrf.mxu0
    %v4064 = vadd.f32 0.0, %v4063
    %4065 = vdwg.mxu0
    %4066 = vrot.lane.b32.xlu0 %v3839, 64
    %v4067 = vpop.permute.xlu0 %4066
    %v4070 = vsel %vm137, %v3987, 0
    %4072 = vmatpush.msra.mxu0 0.0
    %4073 = vmatpush.msra.mxu0 0.0
    %4074 = vmatpush.msra.mxu0 0.0
    %4075 = vmatpush.msra.mxu0 0.0
    %4076 = vmatpush.msra.mxu0 0.0
    %4077 = vmatpush.msra.mxu0 0.0
    %4078 = vmatpush.msra.mxu0 0.0
    %4079 = vmatpush.msra.mxu0 0.0
    %4080 = vmatpush.msra.mxu0 0.0
    %4081 = vmatpush.msra.mxu0 0.0
    %4082 = vmatpush.msra.mxu0 0.0
    %4083 = vmatpush.msra.mxu0 0.0
    %4084 = vmatpush.msra.mxu0 0.0
    %4085 = vmatpush.msra.mxu0 0.0
    %4086 = vmatpush.msra.mxu0 0.0
    %4087 = vmatpush.msra.mxu0 %v4067
    %4088 = vmatmul.f32.gmra.mxu0 %v4070
    %v4089 = vpop.f32.mrf.mxu0
    %v4090 = vadd.f32 0.0, %v4089
    %4091 = vdwg.mxu0
    %v4093 = vsel %vm137, %v4012, 0
    %4095 = vmatpush.msra.mxu0 0.0
    %4096 = vmatpush.msra.mxu0 0.0
    %4097 = vmatpush.msra.mxu0 0.0
    %4098 = vmatpush.msra.mxu0 0.0
    %4099 = vmatpush.msra.mxu0 0.0
    %4100 = vmatpush.msra.mxu0 0.0
    %4101 = vmatpush.msra.mxu0 0.0
    %4102 = vmatpush.msra.mxu0 0.0
    %4103 = vmatpush.msra.mxu0 0.0
    %4104 = vmatpush.msra.mxu0 0.0
    %4105 = vmatpush.msra.mxu0 0.0
    %4106 = vmatpush.msra.mxu0 0.0
    %4107 = vmatpush.msra.mxu0 0.0
    %4108 = vmatpush.msra.mxu0 0.0
    %4109 = vmatpush.msra.mxu0 0.0
    %4110 = vmatpush.msra.mxu0 %v3796
    %4111 = vmatmul.f32.gmra.mxu0 %v4093
    %v4112 = vpop.f32.mrf.mxu0
    %v4113 = vadd.f32 0.0, %v4112
    %4114 = vdwg.mxu0
    %v4116 = vsel %vm137, %v4038, 0
    %4118 = vmatpush.msra.mxu0 0.0
    %4119 = vmatpush.msra.mxu0 0.0
    %4120 = vmatpush.msra.mxu0 0.0
    %4121 = vmatpush.msra.mxu0 0.0
    %4122 = vmatpush.msra.mxu0 0.0
    %4123 = vmatpush.msra.mxu0 0.0
    %4124 = vmatpush.msra.mxu0 0.0
    %4125 = vmatpush.msra.mxu0 0.0
    %4126 = vmatpush.msra.mxu0 0.0
    %4127 = vmatpush.msra.mxu0 0.0
    %4128 = vmatpush.msra.mxu0 0.0
    %4129 = vmatpush.msra.mxu0 0.0
    %4130 = vmatpush.msra.mxu0 0.0
    %4131 = vmatpush.msra.mxu0 0.0
    %4132 = vmatpush.msra.mxu0 0.0
    %4133 = vmatpush.msra.mxu0 %v3797
    %4134 = vmatmul.f32.gmra.mxu0 %v4116
    %v4135 = vpop.f32.mrf.mxu0
    %v4136 = vadd.f32 0.0, %v4135
    %4137 = vdwg.mxu0
    %v4139 = vsel %vm137, %v4064, 0
    %4141 = vmatpush.msra.mxu0 0.0
    %4142 = vmatpush.msra.mxu0 0.0
    %4143 = vmatpush.msra.mxu0 0.0
    %4144 = vmatpush.msra.mxu0 0.0
    %4145 = vmatpush.msra.mxu0 0.0
    %4146 = vmatpush.msra.mxu0 0.0
    %4147 = vmatpush.msra.mxu0 0.0
    %4148 = vmatpush.msra.mxu0 0.0
    %4149 = vmatpush.msra.mxu0 0.0
    %4150 = vmatpush.msra.mxu0 0.0
    %4151 = vmatpush.msra.mxu0 0.0
    %4152 = vmatpush.msra.mxu0 0.0
    %4153 = vmatpush.msra.mxu0 0.0
    %4154 = vmatpush.msra.mxu0 0.0
    %4155 = vmatpush.msra.mxu0 0.0
    %4156 = vmatpush.msra.mxu0 %v3798
    %4157 = vmatmul.f32.gmra.mxu0 %v4139
    %v4158 = vpop.f32.mrf.mxu0
    %v4159 = vadd.f32 0.0, %v4158
    %4160 = vdwg.mxu0
    %v4162 = vsel %vm137, %v4090, 0
    %4164 = vmatpush.msra.mxu0 0.0
    %4165 = vmatpush.msra.mxu0 0.0
    %4166 = vmatpush.msra.mxu0 0.0
    %4167 = vmatpush.msra.mxu0 0.0
    %4168 = vmatpush.msra.mxu0 0.0
    %4169 = vmatpush.msra.mxu0 0.0
    %4170 = vmatpush.msra.mxu0 0.0
    %4171 = vmatpush.msra.mxu0 0.0
    %4172 = vmatpush.msra.mxu0 0.0
    %4173 = vmatpush.msra.mxu0 0.0
    %4174 = vmatpush.msra.mxu0 0.0
    %4175 = vmatpush.msra.mxu0 0.0
    %4176 = vmatpush.msra.mxu0 0.0
    %4177 = vmatpush.msra.mxu0 0.0
    %4178 = vmatpush.msra.mxu0 0.0
    %4179 = vmatpush.msra.mxu0 %v3799
    %4180 = vmatmul.f32.gmra.mxu0 %v4162
    %v4181 = vpop.f32.mrf.mxu0
    %v4182 = vadd.f32 0.0, %v4181
    %4183 = vdwg.mxu0
    %v4184 = vsel %vm46, %v4113, 0.0
    %v4185 = vsel %vm46, %v4136, 0.0
    %v4186 = vadd.f32 %v4184, %v4185
    %v4187 = vsel %vm46, %v4159, 0.0
    %v4188 = vadd.f32 %v4186, %v4187
    %v4189 = vsel %vm46, %v4182, 0.0
    %v4190 = vadd.f32 %v4188, %v4189
    %v4191 = vperm.slane %v3800, 0
    %v4192 = vadd.f32 %v4190, %v4191
    %v4193 = vadd.f32 %v3759, %v4192
    %v4194 = vld [vmem:[%s9 + $0xc] sm:$0x1]
    %v4195 = vld [vmem:[%s9 + $0xd] sm:$0x1]
    %v4196 = vsel %vm46, %v4193, 0.0
    %4197 = vadd.xlane.f32.xlu0 %v4196
    %v4198 = vpop.xlane.xlu0 %4197
    %v4199 = vmul.f32 %v4198, %v56
    %v4200 = vsub.f32 %v4193, %v4199
    %v4201 = vmul.f32 %v4200, %v4200
    %v4202 = vsel %vm46, %v4201, 0.0
    %4203 = vadd.xlane.f32.xlu0 %v4202
    %v4204 = vpop.xlane.xlu0 %4203
    %v4205 = vmul.f32 %v4204, 0.032258064
    %v4206 = vrsqrt.pop %v4205
    %v4207 = vmul.f32 %v4206, %v4205
    %v4208 = vmul.f32 %v4207, %v4206
    %v4209 = vmul.f32 0.5, %v4208
    %v4210 = vsub.f32 1.5, %v4209
    %v4211 = vmul.f32 %v4206, %v4210
    %v4212 = vmul.f32 %v4205, %v4211
    %vm4213 = vcmp.eq.f32.partialorder %v4205, inf
    %v4214 = vsel %vm4213, %v4205, %v4212
    %vm4215 = vcmp.eq.f32.partialorder %v4205, 0.0
    %v4216 = vand.u32 %v4205, 2147483648
    %v4217 = vsel %vm4215, %v4216, %v4214
    %v4218 = vadd.f32 %v4217, 1e-06
    %v4219 = vrcp.pop %v4218
    %v4220 = vmul.f32 %v4200, %v4219
    %v4221 = vperm.slane %v4194, 0
    %v4222 = vmul.f32 %v4221, %v4220
    %v4223 = vperm.slane %v4195, 0
    %v4224 = vadd.f32 %v4222, %v4223
    %v4225 = vld [vmem:[%s1053] sm:$0xff]
    %v4226 = vld [vmem:[%s1053 + $0x8] sm:$0xff]
    %v4227 = vld [vmem:[%s1053 + $0x10] sm:$0xff]
    %v4228 = vld [vmem:[%s1053 + $0x18] sm:$0xff]
    %v4229 = vld [vmem:[%s9 + $0xe] sm:$0x1]
    %v4230 = vld [vmem:[%s1059] sm:$0xff]
    %v4231 = vld [vmem:[%s1059 + $0x8] sm:$0xff]
    %v4232 = vld [vmem:[%s1059 + $0x10] sm:$0xff]
    %v4233 = vld [vmem:[%s1059 + $0x18] sm:$0xff]
    %v4234 = vld [vmem:[%s1059 + $0x20] sm:$0xff]
    %v4235 = vld [vmem:[%s1059 + $0x28] sm:$0xff]
    %v4236 = vld [vmem:[%s1059 + $0x30] sm:$0xff]
    %v4237 = vld [vmem:[%s1059 + $0x38] sm:$0xff]
    %v4238 = vld [vmem:[%s9 + $0xf] sm:$0x1]
    %v4239 = vperm.slane %v4229, 0
    %v4241 = vsel %vm46, %v4224, 0
    %4243 = vmatpush.msra.mxu0 0.0
    %4244 = vmatpush.msra.mxu0 0.0
    %4245 = vmatpush.msra.mxu0 0.0
    %4246 = vmatpush.msra.mxu0 0.0
    %4247 = vmatpush.msra.mxu0 0.0
    %4248 = vmatpush.msra.mxu0 0.0
    %4249 = vmatpush.msra.mxu0 0.0
    %4250 = vmatpush.msra.mxu0 0.0
    %4251 = vmatpush.msra.mxu0 0.0
    %4252 = vmatpush.msra.mxu0 0.0
    %4253 = vmatpush.msra.mxu0 0.0
    %4254 = vmatpush.msra.mxu0 0.0
    %4255 = vmatpush.msra.mxu0 %v4228
    %4256 = vmatpush.msra.mxu0 %v4227
    %4257 = vmatpush.msra.mxu0 %v4226
    %4258 = vmatpush.msra.mxu0 %v4225
    %4259 = vmatmul.f32.gmra.mxu0 %v4241
    %v4260 = vpop.f32.mrf.mxu0
    %v4261 = vadd.f32 %v4239, %v4260
    %4262 = vdwg.mxu0
    %v4263 = vmax.f32 %v4261, 0.0
    %v4264 = vperm.slane %v4238, 0
    %v4266 = vsel %vm561, %v4263, 0
    %4268 = vmatpush.msra.mxu0 0.0
    %4269 = vmatpush.msra.mxu0 0.0
    %4270 = vmatpush.msra.mxu0 0.0
    %4271 = vmatpush.msra.mxu0 0.0
    %4272 = vmatpush.msra.mxu0 0.0
    %4273 = vmatpush.msra.mxu0 0.0
    %4274 = vmatpush.msra.mxu0 0.0
    %4275 = vmatpush.msra.mxu0 0.0
    %4276 = vmatpush.msra.mxu0 %v4237
    %4277 = vmatpush.msra.mxu0 %v4236
    %4278 = vmatpush.msra.mxu0 %v4235
    %4279 = vmatpush.msra.mxu0 %v4234
    %4280 = vmatpush.msra.mxu0 %v4233
    %4281 = vmatpush.msra.mxu0 %v4232
    %4282 = vmatpush.msra.mxu0 %v4231
    %4283 = vmatpush.msra.mxu0 %v4230
    %4284 = vmatmul.f32.gmra.mxu0 %v4266
    %v4285 = vpop.f32.mrf.mxu0
    %v4286 = vadd.f32 %v4264, %v4285
    %4287 = vdwg.mxu0
    %v4288 = vadd.f32 %v4193, %v4286
    %v4289 = vld [vmem:[%s9 + $0x28] sm:$0x1]
    %v4290 = vld [vmem:[%s9 + $0x29] sm:$0x1]
    %v4291 = vsel %vm46, %v4288, 0.0
    %4292 = vadd.xlane.f32.xlu0 %v4291
    %v4293 = vpop.xlane.xlu0 %4292
    %v4294 = vmul.f32 %v4293, %v56
    %v4295 = vsub.f32 %v4288, %v4294
    %v4296 = vmul.f32 %v4295, %v4295
    %v4297 = vsel %vm46, %v4296, 0.0
    %4298 = vadd.xlane.f32.xlu0 %v4297
    %v4299 = vpop.xlane.xlu0 %4298
    %v4300 = vmul.f32 %v4299, 0.032258064
    %v4301 = vrsqrt.pop %v4300
    %v4302 = vmul.f32 %v4301, %v4300
    %v4303 = vmul.f32 %v4302, %v4301
    %v4304 = vmul.f32 0.5, %v4303
    %v4305 = vsub.f32 1.5, %v4304
    %v4306 = vmul.f32 %v4301, %v4305
    %v4307 = vmul.f32 %v4300, %v4306
    %vm4308 = vcmp.eq.f32.partialorder %v4300, inf
    %v4309 = vsel %vm4308, %v4300, %v4307
    %vm4310 = vcmp.eq.f32.partialorder %v4300, 0.0
    %v4311 = vand.u32 %v4300, 2147483648
    %v4312 = vsel %vm4310, %v4311, %v4309
    %v4313 = vadd.f32 %v4312, 1e-06
    %v4314 = vrcp.pop %v4313
    %v4315 = vmul.f32 %v4295, %v4314
    %v4316 = vperm.slane %v4289, 0
    %v4317 = vmul.f32 %v4316, %v4315
    %v4318 = vperm.slane %v4290, 0
    %v4319 = vadd.f32 %v4317, %v4318
    %s4320 = scalar_lea.vmem %s1, 8
    %v4321 = vld [vmem:[%s4320] sm:$0xff]
    %v4322 = vld [vmem:[%s9 + $0x10] sm:$0x1]
    %v4323 = vld [vmem:[%s9 + $0x11] sm:$0x1]
    %v4324 = vsel %vm46, %v4321, 0.0
    %4325 = vadd.xlane.f32.xlu0 %v4324
    %v4326 = vpop.xlane.xlu0 %4325
    %v4327 = vmul.f32 %v4326, %v56
    %v4328 = vsub.f32 %v4321, %v4327
    %v4329 = vmul.f32 %v4328, %v4328
    %v4330 = vsel %vm46, %v4329, 0.0
    %4331 = vadd.xlane.f32.xlu0 %v4330
    %v4332 = vpop.xlane.xlu0 %4331
    %v4333 = vmul.f32 %v4332, 0.032258064
    %v4334 = vrsqrt.pop %v4333
    %v4335 = vmul.f32 %v4334, %v4333
    %v4336 = vmul.f32 %v4335, %v4334
    %v4337 = vmul.f32 0.5, %v4336
    %v4338 = vsub.f32 1.5, %v4337
    %v4339 = vmul.f32 %v4334, %v4338
    %v4340 = vmul.f32 %v4333, %v4339
    %vm4341 = vcmp.eq.f32.partialorder %v4333, inf
    %v4342 = vsel %vm4341, %v4333, %v4340
    %vm4343 = vcmp.eq.f32.partialorder %v4333, 0.0
    %v4344 = vand.u32 %v4333, 2147483648
    %v4345 = vsel %vm4343, %v4344, %v4342
    %v4346 = vadd.f32 %v4345, 1e-06
    %v4347 = vrcp.pop %v4346
    %v4348 = vmul.f32 %v4328, %v4347
    %v4349 = vperm.slane %v4322, 0
    %v4350 = vmul.f32 %v4349, %v4348
    %v4351 = vperm.slane %v4323, 0
    %v4352 = vadd.f32 %v4350, %v4351
    %v4353 = vld [vmem:[%s1182] sm:$0xff]
    %v4354 = vld [vmem:[%s1182 + $0x8] sm:$0xff]
    %v4355 = vld [vmem:[%s1182 + $0x10] sm:$0xff]
    %v4356 = vld [vmem:[%s1182 + $0x18] sm:$0xff]
    %v4357 = vld [vmem:[%s9 + $0x12] sm:$0x1]
    %v4358 = vld [vmem:[%s1188] sm:$0xff]
    %v4359 = vld [vmem:[%s1188 + $0x8] sm:$0xff]
    %v4360 = vld [vmem:[%s1188 + $0x10] sm:$0xff]
    %v4361 = vld [vmem:[%s1188 + $0x18] sm:$0xff]
    %v4362 = vld [vmem:[%s9 + $0x13] sm:$0x1]
    %v4363 = vperm.slane %v4357, 0
    %v4365 = vsel %vm46, %v4352, 0
    %4367 = vmatpush.msra.mxu0 0.0
    %4368 = vmatpush.msra.mxu0 0.0
    %4369 = vmatpush.msra.mxu0 0.0
    %4370 = vmatpush.msra.mxu0 0.0
    %4371 = vmatpush.msra.mxu0 0.0
    %4372 = vmatpush.msra.mxu0 0.0
    %4373 = vmatpush.msra.mxu0 0.0
    %4374 = vmatpush.msra.mxu0 0.0
    %4375 = vmatpush.msra.mxu0 0.0
    %4376 = vmatpush.msra.mxu0 0.0
    %4377 = vmatpush.msra.mxu0 0.0
    %4378 = vmatpush.msra.mxu0 0.0
    %4379 = vmatpush.msra.mxu0 %v4356
    %4380 = vmatpush.msra.mxu0 %v4355
    %4381 = vmatpush.msra.mxu0 %v4354
    %4382 = vmatpush.msra.mxu0 %v4353
    %4383 = vmatmul.f32.gmra.mxu0 %v4365
    %v4384 = vpop.f32.mrf.mxu0
    %v4385 = vadd.f32 %v4363, %v4384
    %4386 = vdwg.mxu0
    %v4387 = vmul.f32 %v4385, 0.35355338
    %4389 = vrot.lane.b32.xlu0 %v4387, 120
    %v4390 = vpop.permute.xlu0 %4389
    %4391 = vrot.lane.b32.xlu0 %v4387, 112
    %v4392 = vpop.permute.xlu0 %4391
    %4393 = vrot.lane.b32.xlu0 %v4387, 104
    %v4394 = vpop.permute.xlu0 %4393
    %4396 = vrot.lane.b32.xlu0 %v4385, 120
    %v4397 = vpop.permute.xlu0 %4396
    %4398 = vrot.lane.b32.xlu0 %v4385, 112
    %v4399 = vpop.permute.xlu0 %4398
    %4400 = vrot.lane.b32.xlu0 %v4385, 104
    %v4401 = vpop.permute.xlu0 %4400
    %4402 = vrot.lane.b32.xlu0 %v4385, 96
    %v4403 = vpop.permute.xlu0 %4402
    %v4404 = vsel %vm137, %v4387, 0
    %v4406 = vsel %vm137, %v4403, 0
    %4408 = vmatpush.xpose.msra.mxu0 0.0
    %4409 = vmatpush.xpose.msra.mxu0 0.0
    %4410 = vmatpush.xpose.msra.mxu0 0.0
    %4411 = vmatpush.xpose.msra.mxu0 0.0
    %4412 = vmatpush.xpose.msra.mxu0 0.0
    %4413 = vmatpush.xpose.msra.mxu0 0.0
    %4414 = vmatpush.xpose.msra.mxu0 0.0
    %4415 = vmatpush.xpose.msra.mxu0 0.0
    %4416 = vmatpush.xpose.msra.mxu0 0.0
    %4417 = vmatpush.xpose.msra.mxu0 0.0
    %4418 = vmatpush.xpose.msra.mxu0 0.0
    %4419 = vmatpush.xpose.msra.mxu0 0.0
    %4420 = vmatpush.xpose.msra.mxu0 0.0
    %4421 = vmatpush.xpose.msra.mxu0 0.0
    %4422 = vmatpush.xpose.msra.mxu0 0.0
    %4423 = vmatpush.xpose.msra.mxu0 %v4406
    %4424 = vmatmul.f32.gmra.mxu0 %v4404
    %v4425 = vpop.f32.mrf.mxu0
    %v4426 = vadd.f32 %v3225, %v4425
    %4427 = vdwg.mxu0
    %4428 = vrot.lane.b32.xlu0 %v4397, 96
    %v4429 = vpop.permute.xlu0 %4428
    %v4430 = vsel %vm137, %v4390, 0
    %v4432 = vsel %vm137, %v4429, 0
    %4434 = vmatpush.xpose.msra.mxu0 0.0
    %4435 = vmatpush.xpose.msra.mxu0 0.0
    %4436 = vmatpush.xpose.msra.mxu0 0.0
    %4437 = vmatpush.xpose.msra.mxu0 0.0
    %4438 = vmatpush.xpose.msra.mxu0 0.0
    %4439 = vmatpush.xpose.msra.mxu0 0.0
    %4440 = vmatpush.xpose.msra.mxu0 0.0
    %4441 = vmatpush.xpose.msra.mxu0 0.0
    %4442 = vmatpush.xpose.msra.mxu0 0.0
    %4443 = vmatpush.xpose.msra.mxu0 0.0
    %4444 = vmatpush.xpose.msra.mxu0 0.0
    %4445 = vmatpush.xpose.msra.mxu0 0.0
    %4446 = vmatpush.xpose.msra.mxu0 0.0
    %4447 = vmatpush.xpose.msra.mxu0 0.0
    %4448 = vmatpush.xpose.msra.mxu0 0.0
    %4449 = vmatpush.xpose.msra.mxu0 %v4432
    %4450 = vmatmul.f32.gmra.mxu0 %v4430
    %v4451 = vpop.f32.mrf.mxu0
    %v4452 = vadd.f32 %v3225, %v4451
    %4453 = vdwg.mxu0
    %4454 = vrot.lane.b32.xlu0 %v4399, 96
    %v4455 = vpop.permute.xlu0 %4454
    %v4456 = vsel %vm137, %v4392, 0
    %v4458 = vsel %vm137, %v4455, 0
    %4460 = vmatpush.xpose.msra.mxu0 0.0
    %4461 = vmatpush.xpose.msra.mxu0 0.0
    %4462 = vmatpush.xpose.msra.mxu0 0.0
    %4463 = vmatpush.xpose.msra.mxu0 0.0
    %4464 = vmatpush.xpose.msra.mxu0 0.0
    %4465 = vmatpush.xpose.msra.mxu0 0.0
    %4466 = vmatpush.xpose.msra.mxu0 0.0
    %4467 = vmatpush.xpose.msra.mxu0 0.0
    %4468 = vmatpush.xpose.msra.mxu0 0.0
    %4469 = vmatpush.xpose.msra.mxu0 0.0
    %4470 = vmatpush.xpose.msra.mxu0 0.0
    %4471 = vmatpush.xpose.msra.mxu0 0.0
    %4472 = vmatpush.xpose.msra.mxu0 0.0
    %4473 = vmatpush.xpose.msra.mxu0 0.0
    %4474 = vmatpush.xpose.msra.mxu0 0.0
    %4475 = vmatpush.xpose.msra.mxu0 %v4458
    %4476 = vmatmul.f32.gmra.mxu0 %v4456
    %v4477 = vpop.f32.mrf.mxu0
    %v4478 = vadd.f32 %v3225, %v4477
    %4479 = vdwg.mxu0
    %4480 = vrot.lane.b32.xlu0 %v4401, 96
    %v4481 = vpop.permute.xlu0 %4480
    %v4482 = vsel %vm137, %v4394, 0
    %v4484 = vsel %vm137, %v4481, 0
    %4486 = vmatpush.xpose.msra.mxu0 0.0
    %4487 = vmatpush.xpose.msra.mxu0 0.0
    %4488 = vmatpush.xpose.msra.mxu0 0.0
    %4489 = vmatpush.xpose.msra.mxu0 0.0
    %4490 = vmatpush.xpose.msra.mxu0 0.0
    %4491 = vmatpush.xpose.msra.mxu0 0.0
    %4492 = vmatpush.xpose.msra.mxu0 0.0
    %4493 = vmatpush.xpose.msra.mxu0 0.0
    %4494 = vmatpush.xpose.msra.mxu0 0.0
    %4495 = vmatpush.xpose.msra.mxu0 0.0
    %4496 = vmatpush.xpose.msra.mxu0 0.0
    %4497 = vmatpush.xpose.msra.mxu0 0.0
    %4498 = vmatpush.xpose.msra.mxu0 0.0
    %4499 = vmatpush.xpose.msra.mxu0 0.0
    %4500 = vmatpush.xpose.msra.mxu0 0.0
    %4501 = vmatpush.xpose.msra.mxu0 %v4484
    %4502 = vmatmul.f32.gmra.mxu0 %v4482
    %v4503 = vpop.f32.mrf.mxu0
    %v4504 = vadd.f32 %v3225, %v4503
    %4505 = vdwg.mxu0
    %v4506 = vsel %vm137, %v4426, -inf
    %4507 = vmax.xlane.f32.xlu0 %v4506
    %v4508 = vpop.xlane.xlu0 %4507
    %v4509 = vsel %vm137, %v4452, -inf
    %4510 = vmax.xlane.f32.xlu0 %v4509
    %v4511 = vpop.xlane.xlu0 %4510
    %v4512 = vsel %vm137, %v4478, -inf
    %4513 = vmax.xlane.f32.xlu0 %v4512
    %v4514 = vpop.xlane.xlu0 %4513
    %v4515 = vsel %vm137, %v4504, -inf
    %4516 = vmax.xlane.f32.xlu0 %v4515
    %v4517 = vpop.xlane.xlu0 %4516
    %v4518 = vsub.f32 %v4426, %v4508
    %v4519 = vsub.f32 %v4452, %v4511
    %v4520 = vsub.f32 %v4478, %v4514
    %v4521 = vsub.f32 %v4504, %v4517
    %v4522 = vmul.f32 %v4518, 1.442695
    %v4523 = vpow.pop %v4522
    %v4524 = vmul.f32 %v4519, 1.442695
    %v4525 = vpow.pop %v4524
    %v4526 = vmul.f32 %v4520, 1.442695
    %v4527 = vpow.pop %v4526
    %v4528 = vmul.f32 %v4521, 1.442695
    %v4529 = vpow.pop %v4528
    %v4530 = vsel %vm137, %v4523, 0.0
    %4531 = vadd.xlane.f32.xlu0 %v4530
    %v4532 = vpop.xlane.xlu0 %4531
    %v4533 = vsel %vm137, %v4525, 0.0
    %4534 = vadd.xlane.f32.xlu0 %v4533
    %v4535 = vpop.xlane.xlu0 %4534
    %v4536 = vsel %vm137, %v4527, 0.0
    %4537 = vadd.xlane.f32.xlu0 %v4536
    %v4538 = vpop.xlane.xlu0 %4537
    %v4539 = vsel %vm137, %v4529, 0.0
    %4540 = vadd.xlane.f32.xlu0 %v4539
    %v4541 = vpop.xlane.xlu0 %4540
    %v4542 = vrcp.pop %v4532
    %v4543 = vrcp.pop %v4535
    %v4544 = vrcp.pop %v4538
    %v4545 = vrcp.pop %v4541
    %v4546 = vmul.f32 %v4523, %v4542
    %v4547 = vmul.f32 %v4525, %v4543
    %v4548 = vmul.f32 %v4527, %v4544
    %v4549 = vmul.f32 %v4529, %v4545
    %4550 = vrot.lane.b32.xlu0 %v4385, 64
    %v4551 = vpop.permute.xlu0 %4550
    %v4554 = vsel %vm137, %v4546, 0
    %4556 = vmatpush.msra.mxu0 0.0
    %4557 = vmatpush.msra.mxu0 0.0
    %4558 = vmatpush.msra.mxu0 0.0
    %4559 = vmatpush.msra.mxu0 0.0
    %4560 = vmatpush.msra.mxu0 0.0
    %4561 = vmatpush.msra.mxu0 0.0
    %4562 = vmatpush.msra.mxu0 0.0
    %4563 = vmatpush.msra.mxu0 0.0
    %4564 = vmatpush.msra.mxu0 0.0
    %4565 = vmatpush.msra.mxu0 0.0
    %4566 = vmatpush.msra.mxu0 0.0
    %4567 = vmatpush.msra.mxu0 0.0
    %4568 = vmatpush.msra.mxu0 0.0
    %4569 = vmatpush.msra.mxu0 0.0
    %4570 = vmatpush.msra.mxu0 0.0
    %4571 = vmatpush.msra.mxu0 %v4551
    %4572 = vmatmul.f32.gmra.mxu0 %v4554
    %v4573 = vpop.f32.mrf.mxu0
    %v4574 = vadd.f32 0.0, %v4573
    %4575 = vdwg.mxu0
    %4576 = vrot.lane.b32.xlu0 %v4397, 64
    %v4577 = vpop.permute.xlu0 %4576
    %v4580 = vsel %vm137, %v4547, 0
    %4582 = vmatpush.msra.mxu0 0.0
    %4583 = vmatpush.msra.mxu0 0.0
    %4584 = vmatpush.msra.mxu0 0.0
    %4585 = vmatpush.msra.mxu0 0.0
    %4586 = vmatpush.msra.mxu0 0.0
    %4587 = vmatpush.msra.mxu0 0.0
    %4588 = vmatpush.msra.mxu0 0.0
    %4589 = vmatpush.msra.mxu0 0.0
    %4590 = vmatpush.msra.mxu0 0.0
    %4591 = vmatpush.msra.mxu0 0.0
    %4592 = vmatpush.msra.mxu0 0.0
    %4593 = vmatpush.msra.mxu0 0.0
    %4594 = vmatpush.msra.mxu0 0.0
    %4595 = vmatpush.msra.mxu0 0.0
    %4596 = vmatpush.msra.mxu0 0.0
    %4597 = vmatpush.msra.mxu0 %v4577
    %4598 = vmatmul.f32.gmra.mxu0 %v4580
    %v4599 = vpop.f32.mrf.mxu0
    %v4600 = vadd.f32 0.0, %v4599
    %4601 = vdwg.mxu0
    %4602 = vrot.lane.b32.xlu0 %v4399, 64
    %v4603 = vpop.permute.xlu0 %4602
    %v4606 = vsel %vm137, %v4548, 0
    %4608 = vmatpush.msra.mxu0 0.0
    %4609 = vmatpush.msra.mxu0 0.0
    %4610 = vmatpush.msra.mxu0 0.0
    %4611 = vmatpush.msra.mxu0 0.0
    %4612 = vmatpush.msra.mxu0 0.0
    %4613 = vmatpush.msra.mxu0 0.0
    %4614 = vmatpush.msra.mxu0 0.0
    %4615 = vmatpush.msra.mxu0 0.0
    %4616 = vmatpush.msra.mxu0 0.0
    %4617 = vmatpush.msra.mxu0 0.0
    %4618 = vmatpush.msra.mxu0 0.0
    %4619 = vmatpush.msra.mxu0 0.0
    %4620 = vmatpush.msra.mxu0 0.0
    %4621 = vmatpush.msra.mxu0 0.0
    %4622 = vmatpush.msra.mxu0 0.0
    %4623 = vmatpush.msra.mxu0 %v4603
    %4624 = vmatmul.f32.gmra.mxu0 %v4606
    %v4625 = vpop.f32.mrf.mxu0
    %v4626 = vadd.f32 0.0, %v4625
    %4627 = vdwg.mxu0
    %4628 = vrot.lane.b32.xlu0 %v4401, 64
    %v4629 = vpop.permute.xlu0 %4628
    %v4632 = vsel %vm137, %v4549, 0
    %4634 = vmatpush.msra.mxu0 0.0
    %4635 = vmatpush.msra.mxu0 0.0
    %4636 = vmatpush.msra.mxu0 0.0
    %4637 = vmatpush.msra.mxu0 0.0
    %4638 = vmatpush.msra.mxu0 0.0
    %4639 = vmatpush.msra.mxu0 0.0
    %4640 = vmatpush.msra.mxu0 0.0
    %4641 = vmatpush.msra.mxu0 0.0
    %4642 = vmatpush.msra.mxu0 0.0
    %4643 = vmatpush.msra.mxu0 0.0
    %4644 = vmatpush.msra.mxu0 0.0
    %4645 = vmatpush.msra.mxu0 0.0
    %4646 = vmatpush.msra.mxu0 0.0
    %4647 = vmatpush.msra.mxu0 0.0
    %4648 = vmatpush.msra.mxu0 0.0
    %4649 = vmatpush.msra.mxu0 %v4629
    %4650 = vmatmul.f32.gmra.mxu0 %v4632
    %v4651 = vpop.f32.mrf.mxu0
    %v4652 = vadd.f32 0.0, %v4651
    %4653 = vdwg.mxu0
    %v4655 = vsel %vm137, %v4574, 0
    %4657 = vmatpush.msra.mxu0 0.0
    %4658 = vmatpush.msra.mxu0 0.0
    %4659 = vmatpush.msra.mxu0 0.0
    %4660 = vmatpush.msra.mxu0 0.0
    %4661 = vmatpush.msra.mxu0 0.0
    %4662 = vmatpush.msra.mxu0 0.0
    %4663 = vmatpush.msra.mxu0 0.0
    %4664 = vmatpush.msra.mxu0 0.0
    %4665 = vmatpush.msra.mxu0 0.0
    %4666 = vmatpush.msra.mxu0 0.0
    %4667 = vmatpush.msra.mxu0 0.0
    %4668 = vmatpush.msra.mxu0 0.0
    %4669 = vmatpush.msra.mxu0 0.0
    %4670 = vmatpush.msra.mxu0 0.0
    %4671 = vmatpush.msra.mxu0 0.0
    %4672 = vmatpush.msra.mxu0 %v4358
    %4673 = vmatmul.f32.gmra.mxu0 %v4655
    %v4674 = vpop.f32.mrf.mxu0
    %v4675 = vadd.f32 0.0, %v4674
    %4676 = vdwg.mxu0
    %v4678 = vsel %vm137, %v4600, 0
    %4680 = vmatpush.msra.mxu0 0.0
    %4681 = vmatpush.msra.mxu0 0.0
    %4682 = vmatpush.msra.mxu0 0.0
    %4683 = vmatpush.msra.mxu0 0.0
    %4684 = vmatpush.msra.mxu0 0.0
    %4685 = vmatpush.msra.mxu0 0.0
    %4686 = vmatpush.msra.mxu0 0.0
    %4687 = vmatpush.msra.mxu0 0.0
    %4688 = vmatpush.msra.mxu0 0.0
    %4689 = vmatpush.msra.mxu0 0.0
    %4690 = vmatpush.msra.mxu0 0.0
    %4691 = vmatpush.msra.mxu0 0.0
    %4692 = vmatpush.msra.mxu0 0.0
    %4693 = vmatpush.msra.mxu0 0.0
    %4694 = vmatpush.msra.mxu0 0.0
    %4695 = vmatpush.msra.mxu0 %v4359
    %4696 = vmatmul.f32.gmra.mxu0 %v4678
    %v4697 = vpop.f32.mrf.mxu0
    %v4698 = vadd.f32 0.0, %v4697
    %4699 = vdwg.mxu0
    %v4701 = vsel %vm137, %v4626, 0
    %4703 = vmatpush.msra.mxu0 0.0
    %4704 = vmatpush.msra.mxu0 0.0
    %4705 = vmatpush.msra.mxu0 0.0
    %4706 = vmatpush.msra.mxu0 0.0
    %4707 = vmatpush.msra.mxu0 0.0
    %4708 = vmatpush.msra.mxu0 0.0
    %4709 = vmatpush.msra.mxu0 0.0
    %4710 = vmatpush.msra.mxu0 0.0
    %4711 = vmatpush.msra.mxu0 0.0
    %4712 = vmatpush.msra.mxu0 0.0
    %4713 = vmatpush.msra.mxu0 0.0
    %4714 = vmatpush.msra.mxu0 0.0
    %4715 = vmatpush.msra.mxu0 0.0
    %4716 = vmatpush.msra.mxu0 0.0
    %4717 = vmatpush.msra.mxu0 0.0
    %4718 = vmatpush.msra.mxu0 %v4360
    %4719 = vmatmul.f32.gmra.mxu0 %v4701
    %v4720 = vpop.f32.mrf.mxu0
    %v4721 = vadd.f32 0.0, %v4720
    %4722 = vdwg.mxu0
    %v4724 = vsel %vm137, %v4652, 0
    %4726 = vmatpush.msra.mxu0 0.0
    %4727 = vmatpush.msra.mxu0 0.0
    %4728 = vmatpush.msra.mxu0 0.0
    %4729 = vmatpush.msra.mxu0 0.0
    %4730 = vmatpush.msra.mxu0 0.0
    %4731 = vmatpush.msra.mxu0 0.0
    %4732 = vmatpush.msra.mxu0 0.0
    %4733 = vmatpush.msra.mxu0 0.0
    %4734 = vmatpush.msra.mxu0 0.0
    %4735 = vmatpush.msra.mxu0 0.0
    %4736 = vmatpush.msra.mxu0 0.0
    %4737 = vmatpush.msra.mxu0 0.0
    %4738 = vmatpush.msra.mxu0 0.0
    %4739 = vmatpush.msra.mxu0 0.0
    %4740 = vmatpush.msra.mxu0 0.0
    %4741 = vmatpush.msra.mxu0 %v4361
    %4742 = vmatmul.f32.gmra.mxu0 %v4724
    %v4743 = vpop.f32.mrf.mxu0
    %v4744 = vadd.f32 0.0, %v4743
    %4745 = vdwg.mxu0
    %v4746 = vsel %vm46, %v4675, 0.0
    %v4747 = vsel %vm46, %v4698, 0.0
    %v4748 = vadd.f32 %v4746, %v4747
    %v4749 = vsel %vm46, %v4721, 0.0
    %v4750 = vadd.f32 %v4748, %v4749
    %v4751 = vsel %vm46, %v4744, 0.0
    %v4752 = vadd.f32 %v4750, %v4751
    %v4753 = vperm.slane %v4362, 0
    %v4754 = vadd.f32 %v4752, %v4753
    %v4755 = vadd.f32 %v4321, %v4754
    %v4756 = vld [vmem:[%s9 + $0x14] sm:$0x1]
    %v4757 = vld [vmem:[%s9 + $0x15] sm:$0x1]
    %v4758 = vsel %vm46, %v4755, 0.0
    %4759 = vadd.xlane.f32.xlu0 %v4758
    %v4760 = vpop.xlane.xlu0 %4759
    %v4761 = vmul.f32 %v4760, %v56
    %v4762 = vsub.f32 %v4755, %v4761
    %v4763 = vmul.f32 %v4762, %v4762
    %v4764 = vsel %vm46, %v4763, 0.0
    %4765 = vadd.xlane.f32.xlu0 %v4764
    %v4766 = vpop.xlane.xlu0 %4765
    %v4767 = vmul.f32 %v4766, 0.032258064
    %v4768 = vrsqrt.pop %v4767
    %v4769 = vmul.f32 %v4768, %v4767
    %v4770 = vmul.f32 %v4769, %v4768
    %v4771 = vmul.f32 0.5, %v4770
    %v4772 = vsub.f32 1.5, %v4771
    %v4773 = vmul.f32 %v4768, %v4772
    %v4774 = vmul.f32 %v4767, %v4773
    %vm4775 = vcmp.eq.f32.partialorder %v4767, inf
    %v4776 = vsel %vm4775, %v4767, %v4774
    %vm4777 = vcmp.eq.f32.partialorder %v4767, 0.0
    %v4778 = vand.u32 %v4767, 2147483648
    %v4779 = vsel %vm4777, %v4778, %v4776
    %v4780 = vadd.f32 %v4779, 1e-06
    %v4781 = vrcp.pop %v4780
    %v4782 = vmul.f32 %v4762, %v4781
    %v4783 = vperm.slane %v4756, 0
    %v4784 = vmul.f32 %v4783, %v4782
    %v4785 = vperm.slane %v4757, 0
    %v4786 = vadd.f32 %v4784, %v4785
    %v4787 = vld [vmem:[%s1618] sm:$0xff]
    %v4788 = vld [vmem:[%s1618 + $0x8] sm:$0xff]
    %v4789 = vld [vmem:[%s1618 + $0x10] sm:$0xff]
    %v4790 = vld [vmem:[%s1618 + $0x18] sm:$0xff]
    %v4791 = vld [vmem:[%s9 + $0x16] sm:$0x1]
    %v4792 = vld [vmem:[%s1624] sm:$0xff]
    %v4793 = vld [vmem:[%s1624 + $0x8] sm:$0xff]
    %v4794 = vld [vmem:[%s1624 + $0x10] sm:$0xff]
    %v4795 = vld [vmem:[%s1624 + $0x18] sm:$0xff]
    %v4796 = vld [vmem:[%s9 + $0x17] sm:$0x1]
    %v4797 = vperm.slane %v4791, 0
    %v4799 = vsel %vm46, %v4786, 0
    %4801 = vmatpush.msra.mxu0 0.0
    %4802 = vmatpush.msra.mxu0 0.0
    %4803 = vmatpush.msra.mxu0 0.0
    %4804 = vmatpush.msra.mxu0 0.0
    %4805 = vmatpush.msra.mxu0 0.0
    %4806 = vmatpush.msra.mxu0 0.0
    %4807 = vmatpush.msra.mxu0 0.0
    %4808 = vmatpush.msra.mxu0 0.0
    %4809 = vmatpush.msra.mxu0 0.0
    %4810 = vmatpush.msra.mxu0 0.0
    %4811 = vmatpush.msra.mxu0 0.0
    %4812 = vmatpush.msra.mxu0 0.0
    %4813 = vmatpush.msra.mxu0 %v4790
    %4814 = vmatpush.msra.mxu0 %v4789
    %4815 = vmatpush.msra.mxu0 %v4788
    %4816 = vmatpush.msra.mxu0 %v4787
    %4817 = vmatmul.f32.gmra.mxu0 %v4799
    %v4818 = vpop.f32.mrf.mxu0
    %v4819 = vadd.f32 %v4797, %v4818
    %4820 = vdwg.mxu0
    %4825 = vrot.lane.b32.xlu0 %v4787, 96
    %v4826 = vpop.permute.xlu0 %4825
    %4827 = vrot.lane.b32.xlu0 %v4788, 96
    %v4828 = vpop.permute.xlu0 %4827
    %4829 = vrot.lane.b32.xlu0 %v4789, 96
    %v4830 = vpop.permute.xlu0 %4829
    %4831 = vrot.lane.b32.xlu0 %v4790, 96
    %v4832 = vpop.permute.xlu0 %4831
    %4838 = vrot.lane.b32.xlu0 %v4797, 96
    %v4839 = vpop.permute.xlu0 %4838
    %v4842 = vsel %vm46, %v4319, 0
    %4844 = vmatpush.msra.mxu0 0.0
    %4845 = vmatpush.msra.mxu0 0.0
    %4846 = vmatpush.msra.mxu0 0.0
    %4847 = vmatpush.msra.mxu0 0.0
    %4848 = vmatpush.msra.mxu0 0.0
    %4849 = vmatpush.msra.mxu0 0.0
    %4850 = vmatpush.msra.mxu0 0.0
    %4851 = vmatpush.msra.mxu0 0.0
    %4852 = vmatpush.msra.mxu0 0.0
    %4853 = vmatpush.msra.mxu0 0.0
    %4854 = vmatpush.msra.mxu0 0.0
    %4855 = vmatpush.msra.mxu0 0.0
    %4856 = vmatpush.msra.mxu0 %v4832
    %4857 = vmatpush.msra.mxu0 %v4830
    %4858 = vmatpush.msra.mxu0 %v4828
    %4859 = vmatpush.msra.mxu0 %v4826
    %4860 = vmatmul.f32.gmra.mxu0 %v4842
    %v4861 = vpop.f32.mrf.mxu0
    %v4862 = vadd.f32 %v4839, %v4861
    %4863 = vdwg.mxu0
    %v4864 = vmul.f32 %v4819, 0.35355338
    %4866 = vrot.lane.b32.xlu0 %v4864, 120
    %v4867 = vpop.permute.xlu0 %4866
    %4868 = vrot.lane.b32.xlu0 %v4864, 112
    %v4869 = vpop.permute.xlu0 %4868
    %4870 = vrot.lane.b32.xlu0 %v4864, 104
    %v4871 = vpop.permute.xlu0 %4870
    %4873 = vrot.lane.b32.xlu0 %v4862, 120
    %v4874 = vpop.permute.xlu0 %4873
    %4875 = vrot.lane.b32.xlu0 %v4862, 112
    %v4876 = vpop.permute.xlu0 %4875
    %4877 = vrot.lane.b32.xlu0 %v4862, 104
    %v4878 = vpop.permute.xlu0 %4877
    %v4879 = vsel %vm137, %v4864, 0
    %v4881 = vsel %vm137, %v4862, 0
    %4883 = vmatpush.xpose.msra.mxu0 0.0
    %4884 = vmatpush.xpose.msra.mxu0 0.0
    %4885 = vmatpush.xpose.msra.mxu0 0.0
    %4886 = vmatpush.xpose.msra.mxu0 0.0
    %4887 = vmatpush.xpose.msra.mxu0 0.0
    %4888 = vmatpush.xpose.msra.mxu0 0.0
    %4889 = vmatpush.xpose.msra.mxu0 0.0
    %4890 = vmatpush.xpose.msra.mxu0 0.0
    %4891 = vmatpush.xpose.msra.mxu0 0.0
    %4892 = vmatpush.xpose.msra.mxu0 0.0
    %4893 = vmatpush.xpose.msra.mxu0 0.0
    %4894 = vmatpush.xpose.msra.mxu0 0.0
    %4895 = vmatpush.xpose.msra.mxu0 0.0
    %4896 = vmatpush.xpose.msra.mxu0 0.0
    %4897 = vmatpush.xpose.msra.mxu0 0.0
    %4898 = vmatpush.xpose.msra.mxu0 %v4881
    %4899 = vmatmul.f32.gmra.mxu0 %v4879
    %v4900 = vpop.f32.mrf.mxu0
    %v4901 = vadd.f32 %v3309, %v4900
    %4902 = vdwg.mxu0
    %v4903 = vsel %vm137, %v4867, 0
    %v4905 = vsel %vm137, %v4874, 0
    %4907 = vmatpush.xpose.msra.mxu0 0.0
    %4908 = vmatpush.xpose.msra.mxu0 0.0
    %4909 = vmatpush.xpose.msra.mxu0 0.0
    %4910 = vmatpush.xpose.msra.mxu0 0.0
    %4911 = vmatpush.xpose.msra.mxu0 0.0
    %4912 = vmatpush.xpose.msra.mxu0 0.0
    %4913 = vmatpush.xpose.msra.mxu0 0.0
    %4914 = vmatpush.xpose.msra.mxu0 0.0
    %4915 = vmatpush.xpose.msra.mxu0 0.0
    %4916 = vmatpush.xpose.msra.mxu0 0.0
    %4917 = vmatpush.xpose.msra.mxu0 0.0
    %4918 = vmatpush.xpose.msra.mxu0 0.0
    %4919 = vmatpush.xpose.msra.mxu0 0.0
    %4920 = vmatpush.xpose.msra.mxu0 0.0
    %4921 = vmatpush.xpose.msra.mxu0 0.0
    %4922 = vmatpush.xpose.msra.mxu0 %v4905
    %4923 = vmatmul.f32.gmra.mxu0 %v4903
    %v4924 = vpop.f32.mrf.mxu0
    %v4925 = vadd.f32 %v3309, %v4924
    %4926 = vdwg.mxu0
    %v4927 = vsel %vm137, %v4869, 0
    %v4929 = vsel %vm137, %v4876, 0
    %4931 = vmatpush.xpose.msra.mxu0 0.0
    %4932 = vmatpush.xpose.msra.mxu0 0.0
    %4933 = vmatpush.xpose.msra.mxu0 0.0
    %4934 = vmatpush.xpose.msra.mxu0 0.0
    %4935 = vmatpush.xpose.msra.mxu0 0.0
    %4936 = vmatpush.xpose.msra.mxu0 0.0
    %4937 = vmatpush.xpose.msra.mxu0 0.0
    %4938 = vmatpush.xpose.msra.mxu0 0.0
    %4939 = vmatpush.xpose.msra.mxu0 0.0
    %4940 = vmatpush.xpose.msra.mxu0 0.0
    %4941 = vmatpush.xpose.msra.mxu0 0.0
    %4942 = vmatpush.xpose.msra.mxu0 0.0
    %4943 = vmatpush.xpose.msra.mxu0 0.0
    %4944 = vmatpush.xpose.msra.mxu0 0.0
    %4945 = vmatpush.xpose.msra.mxu0 0.0
    %4946 = vmatpush.xpose.msra.mxu0 %v4929
    %4947 = vmatmul.f32.gmra.mxu0 %v4927
    %v4948 = vpop.f32.mrf.mxu0
    %v4949 = vadd.f32 %v3309, %v4948
    %4950 = vdwg.mxu0
    %v4951 = vsel %vm137, %v4871, 0
    %v4953 = vsel %vm137, %v4878, 0
    %4955 = vmatpush.xpose.msra.mxu0 0.0
    %4956 = vmatpush.xpose.msra.mxu0 0.0
    %4957 = vmatpush.xpose.msra.mxu0 0.0
    %4958 = vmatpush.xpose.msra.mxu0 0.0
    %4959 = vmatpush.xpose.msra.mxu0 0.0
    %4960 = vmatpush.xpose.msra.mxu0 0.0
    %4961 = vmatpush.xpose.msra.mxu0 0.0
    %4962 = vmatpush.xpose.msra.mxu0 0.0
    %4963 = vmatpush.xpose.msra.mxu0 0.0
    %4964 = vmatpush.xpose.msra.mxu0 0.0
    %4965 = vmatpush.xpose.msra.mxu0 0.0
    %4966 = vmatpush.xpose.msra.mxu0 0.0
    %4967 = vmatpush.xpose.msra.mxu0 0.0
    %4968 = vmatpush.xpose.msra.mxu0 0.0
    %4969 = vmatpush.xpose.msra.mxu0 0.0
    %4970 = vmatpush.xpose.msra.mxu0 %v4953
    %4971 = vmatmul.f32.gmra.mxu0 %v4951
    %v4972 = vpop.f32.mrf.mxu0
    %v4973 = vadd.f32 %v3309, %v4972
    %4974 = vdwg.mxu0
    %v4975 = vsel %vm137, %v4901, -inf
    %4976 = vmax.xlane.f32.xlu0 %v4975
    %v4977 = vpop.xlane.xlu0 %4976
    %v4978 = vsel %vm137, %v4925, -inf
    %4979 = vmax.xlane.f32.xlu0 %v4978
    %v4980 = vpop.xlane.xlu0 %4979
    %v4981 = vsel %vm137, %v4949, -inf
    %4982 = vmax.xlane.f32.xlu0 %v4981
    %v4983 = vpop.xlane.xlu0 %4982
    %v4984 = vsel %vm137, %v4973, -inf
    %4985 = vmax.xlane.f32.xlu0 %v4984
    %v4986 = vpop.xlane.xlu0 %4985
    %v4987 = vsub.f32 %v4901, %v4977
    %v4988 = vsub.f32 %v4925, %v4980
    %v4989 = vsub.f32 %v4949, %v4983
    %v4990 = vsub.f32 %v4973, %v4986
    %v4991 = vmul.f32 %v4987, 1.442695
    %v4992 = vpow.pop %v4991
    %v4993 = vmul.f32 %v4988, 1.442695
    %v4994 = vpow.pop %v4993
    %v4995 = vmul.f32 %v4989, 1.442695
    %v4996 = vpow.pop %v4995
    %v4997 = vmul.f32 %v4990, 1.442695
    %v4998 = vpow.pop %v4997
    %v4999 = vsel %vm137, %v4992, 0.0
    %5000 = vadd.xlane.f32.xlu0 %v4999
    %v5001 = vpop.xlane.xlu0 %5000
    %v5002 = vsel %vm137, %v4994, 0.0
    %5003 = vadd.xlane.f32.xlu0 %v5002
    %v5004 = vpop.xlane.xlu0 %5003
    %v5005 = vsel %vm137, %v4996, 0.0
    %5006 = vadd.xlane.f32.xlu0 %v5005
    %v5007 = vpop.xlane.xlu0 %5006
    %v5008 = vsel %vm137, %v4998, 0.0
    %5009 = vadd.xlane.f32.xlu0 %v5008
    %v5010 = vpop.xlane.xlu0 %5009
    %v5011 = vrcp.pop %v5001
    %v5012 = vrcp.pop %v5004
    %v5013 = vrcp.pop %v5007
    %v5014 = vrcp.pop %v5010
    %v5015 = vmul.f32 %v4992, %v5011
    %v5016 = vmul.f32 %v4994, %v5012
    %v5017 = vmul.f32 %v4996, %v5013
    %v5018 = vmul.f32 %v4998, %v5014
    %5019 = vrot.lane.b32.xlu0 %v4862, 96
    %v5020 = vpop.permute.xlu0 %5019
    %v5023 = vsel %vm137, %v5015, 0
    %5025 = vmatpush.msra.mxu0 0.0
    %5026 = vmatpush.msra.mxu0 0.0
    %5027 = vmatpush.msra.mxu0 0.0
    %5028 = vmatpush.msra.mxu0 0.0
    %5029 = vmatpush.msra.mxu0 0.0
    %5030 = vmatpush.msra.mxu0 0.0
    %5031 = vmatpush.msra.mxu0 0.0
    %5032 = vmatpush.msra.mxu0 0.0
    %5033 = vmatpush.msra.mxu0 0.0
    %5034 = vmatpush.msra.mxu0 0.0
    %5035 = vmatpush.msra.mxu0 0.0
    %5036 = vmatpush.msra.mxu0 0.0
    %5037 = vmatpush.msra.mxu0 0.0
    %5038 = vmatpush.msra.mxu0 0.0
    %5039 = vmatpush.msra.mxu0 0.0
    %5040 = vmatpush.msra.mxu0 %v5020
    %5041 = vmatmul.f32.gmra.mxu0 %v5023
    %v5042 = vpop.f32.mrf.mxu0
    %v5043 = vadd.f32 0.0, %v5042
    %5044 = vdwg.mxu0
    %5045 = vrot.lane.b32.xlu0 %v4874, 96
    %v5046 = vpop.permute.xlu0 %5045
    %v5049 = vsel %vm137, %v5016, 0
    %5051 = vmatpush.msra.mxu0 0.0
    %5052 = vmatpush.msra.mxu0 0.0
    %5053 = vmatpush.msra.mxu0 0.0
    %5054 = vmatpush.msra.mxu0 0.0
    %5055 = vmatpush.msra.mxu0 0.0
    %5056 = vmatpush.msra.mxu0 0.0
    %5057 = vmatpush.msra.mxu0 0.0
    %5058 = vmatpush.msra.mxu0 0.0
    %5059 = vmatpush.msra.mxu0 0.0
    %5060 = vmatpush.msra.mxu0 0.0
    %5061 = vmatpush.msra.mxu0 0.0
    %5062 = vmatpush.msra.mxu0 0.0
    %5063 = vmatpush.msra.mxu0 0.0
    %5064 = vmatpush.msra.mxu0 0.0
    %5065 = vmatpush.msra.mxu0 0.0
    %5066 = vmatpush.msra.mxu0 %v5046
    %5067 = vmatmul.f32.gmra.mxu0 %v5049
    %v5068 = vpop.f32.mrf.mxu0
    %v5069 = vadd.f32 0.0, %v5068
    %5070 = vdwg.mxu0
    %5071 = vrot.lane.b32.xlu0 %v4876, 96
    %v5072 = vpop.permute.xlu0 %5071
    %v5075 = vsel %vm137, %v5017, 0
    %5077 = vmatpush.msra.mxu0 0.0
    %5078 = vmatpush.msra.mxu0 0.0
    %5079 = vmatpush.msra.mxu0 0.0
    %5080 = vmatpush.msra.mxu0 0.0
    %5081 = vmatpush.msra.mxu0 0.0
    %5082 = vmatpush.msra.mxu0 0.0
    %5083 = vmatpush.msra.mxu0 0.0
    %5084 = vmatpush.msra.mxu0 0.0
    %5085 = vmatpush.msra.mxu0 0.0
    %5086 = vmatpush.msra.mxu0 0.0
    %5087 = vmatpush.msra.mxu0 0.0
    %5088 = vmatpush.msra.mxu0 0.0
    %5089 = vmatpush.msra.mxu0 0.0
    %5090 = vmatpush.msra.mxu0 0.0
    %5091 = vmatpush.msra.mxu0 0.0
    %5092 = vmatpush.msra.mxu0 %v5072
    %5093 = vmatmul.f32.gmra.mxu0 %v5075
    %v5094 = vpop.f32.mrf.mxu0
    %v5095 = vadd.f32 0.0, %v5094
    %5096 = vdwg.mxu0
    %5097 = vrot.lane.b32.xlu0 %v4878, 96
    %v5098 = vpop.permute.xlu0 %5097
    %v5101 = vsel %vm137, %v5018, 0
    %5103 = vmatpush.msra.mxu0 0.0
    %5104 = vmatpush.msra.mxu0 0.0
    %5105 = vmatpush.msra.mxu0 0.0
    %5106 = vmatpush.msra.mxu0 0.0
    %5107 = vmatpush.msra.mxu0 0.0
    %5108 = vmatpush.msra.mxu0 0.0
    %5109 = vmatpush.msra.mxu0 0.0
    %5110 = vmatpush.msra.mxu0 0.0
    %5111 = vmatpush.msra.mxu0 0.0
    %5112 = vmatpush.msra.mxu0 0.0
    %5113 = vmatpush.msra.mxu0 0.0
    %5114 = vmatpush.msra.mxu0 0.0
    %5115 = vmatpush.msra.mxu0 0.0
    %5116 = vmatpush.msra.mxu0 0.0
    %5117 = vmatpush.msra.mxu0 0.0
    %5118 = vmatpush.msra.mxu0 %v5098
    %5119 = vmatmul.f32.gmra.mxu0 %v5101
    %v5120 = vpop.f32.mrf.mxu0
    %v5121 = vadd.f32 0.0, %v5120
    %5122 = vdwg.mxu0
    %v5124 = vsel %vm137, %v5043, 0
    %5126 = vmatpush.msra.mxu0 0.0
    %5127 = vmatpush.msra.mxu0 0.0
    %5128 = vmatpush.msra.mxu0 0.0
    %5129 = vmatpush.msra.mxu0 0.0
    %5130 = vmatpush.msra.mxu0 0.0
    %5131 = vmatpush.msra.mxu0 0.0
    %5132 = vmatpush.msra.mxu0 0.0
    %5133 = vmatpush.msra.mxu0 0.0
    %5134 = vmatpush.msra.mxu0 0.0
    %5135 = vmatpush.msra.mxu0 0.0
    %5136 = vmatpush.msra.mxu0 0.0
    %5137 = vmatpush.msra.mxu0 0.0
    %5138 = vmatpush.msra.mxu0 0.0
    %5139 = vmatpush.msra.mxu0 0.0
    %5140 = vmatpush.msra.mxu0 0.0
    %5141 = vmatpush.msra.mxu0 %v4792
    %5142 = vmatmul.f32.gmra.mxu0 %v5124
    %v5143 = vpop.f32.mrf.mxu0
    %v5144 = vadd.f32 0.0, %v5143
    %5145 = vdwg.mxu0
    %v5147 = vsel %vm137, %v5069, 0
    %5149 = vmatpush.msra.mxu0 0.0
    %5150 = vmatpush.msra.mxu0 0.0
    %5151 = vmatpush.msra.mxu0 0.0
    %5152 = vmatpush.msra.mxu0 0.0
    %5153 = vmatpush.msra.mxu0 0.0
    %5154 = vmatpush.msra.mxu0 0.0
    %5155 = vmatpush.msra.mxu0 0.0
    %5156 = vmatpush.msra.mxu0 0.0
    %5157 = vmatpush.msra.mxu0 0.0
    %5158 = vmatpush.msra.mxu0 0.0
    %5159 = vmatpush.msra.mxu0 0.0
    %5160 = vmatpush.msra.mxu0 0.0
    %5161 = vmatpush.msra.mxu0 0.0
    %5162 = vmatpush.msra.mxu0 0.0
    %5163 = vmatpush.msra.mxu0 0.0
    %5164 = vmatpush.msra.mxu0 %v4793
    %5165 = vmatmul.f32.gmra.mxu0 %v5147
    %v5166 = vpop.f32.mrf.mxu0
    %v5167 = vadd.f32 0.0, %v5166
    %5168 = vdwg.mxu0
    %v5170 = vsel %vm137, %v5095, 0
    %5172 = vmatpush.msra.mxu0 0.0
    %5173 = vmatpush.msra.mxu0 0.0
    %5174 = vmatpush.msra.mxu0 0.0
    %5175 = vmatpush.msra.mxu0 0.0
    %5176 = vmatpush.msra.mxu0 0.0
    %5177 = vmatpush.msra.mxu0 0.0
    %5178 = vmatpush.msra.mxu0 0.0
    %5179 = vmatpush.msra.mxu0 0.0
    %5180 = vmatpush.msra.mxu0 0.0
    %5181 = vmatpush.msra.mxu0 0.0
    %5182 = vmatpush.msra.mxu0 0.0
    %5183 = vmatpush.msra.mxu0 0.0
    %5184 = vmatpush.msra.mxu0 0.0
    %5185 = vmatpush.msra.mxu0 0.0
    %5186 = vmatpush.msra.mxu0 0.0
    %5187 = vmatpush.msra.mxu0 %v4794
    %5188 = vmatmul.f32.gmra.mxu0 %v5170
    %v5189 = vpop.f32.mrf.mxu0
    %v5190 = vadd.f32 0.0, %v5189
    %5191 = vdwg.mxu0
    %v5193 = vsel %vm137, %v5121, 0
    %5195 = vmatpush.msra.mxu0 0.0
    %5196 = vmatpush.msra.mxu0 0.0
    %5197 = vmatpush.msra.mxu0 0.0
    %5198 = vmatpush.msra.mxu0 0.0
    %5199 = vmatpush.msra.mxu0 0.0
    %5200 = vmatpush.msra.mxu0 0.0
    %5201 = vmatpush.msra.mxu0 0.0
    %5202 = vmatpush.msra.mxu0 0.0
    %5203 = vmatpush.msra.mxu0 0.0
    %5204 = vmatpush.msra.mxu0 0.0
    %5205 = vmatpush.msra.mxu0 0.0
    %5206 = vmatpush.msra.mxu0 0.0
    %5207 = vmatpush.msra.mxu0 0.0
    %5208 = vmatpush.msra.mxu0 0.0
    %5209 = vmatpush.msra.mxu0 0.0
    %5210 = vmatpush.msra.mxu0 %v4795
    %5211 = vmatmul.f32.gmra.mxu0 %v5193
    %v5212 = vpop.f32.mrf.mxu0
    %v5213 = vadd.f32 0.0, %v5212
    %5214 = vdwg.mxu0
    %v5215 = vsel %vm46, %v5144, 0.0
    %v5216 = vsel %vm46, %v5167, 0.0
    %v5217 = vadd.f32 %v5215, %v5216
    %v5218 = vsel %vm46, %v5190, 0.0
    %v5219 = vadd.f32 %v5217, %v5218
    %v5220 = vsel %vm46, %v5213, 0.0
    %v5221 = vadd.f32 %v5219, %v5220
    %v5222 = vperm.slane %v4796, 0
    %v5223 = vadd.f32 %v5221, %v5222
    %v5224 = vadd.f32 %v4755, %v5223
    %v5225 = vld [vmem:[%s9 + $0x18] sm:$0x1]
    %v5226 = vld [vmem:[%s9 + $0x19] sm:$0x1]
    %v5227 = vsel %vm46, %v5224, 0.0
    %5228 = vadd.xlane.f32.xlu0 %v5227
    %v5229 = vpop.xlane.xlu0 %5228
    %v5230 = vmul.f32 %v5229, %v56
    %v5231 = vsub.f32 %v5224, %v5230
    %v5232 = vmul.f32 %v5231, %v5231
    %v5233 = vsel %vm46, %v5232, 0.0
    %5234 = vadd.xlane.f32.xlu0 %v5233
    %v5235 = vpop.xlane.xlu0 %5234
    %v5236 = vmul.f32 %v5235, 0.032258064
    %v5237 = vrsqrt.pop %v5236
    %v5238 = vmul.f32 %v5237, %v5236
    %v5239 = vmul.f32 %v5238, %v5237
    %v5240 = vmul.f32 0.5, %v5239
    %v5241 = vsub.f32 1.5, %v5240
    %v5242 = vmul.f32 %v5237, %v5241
    %v5243 = vmul.f32 %v5236, %v5242
    %vm5244 = vcmp.eq.f32.partialorder %v5236, inf
    %v5245 = vsel %vm5244, %v5236, %v5243
    %vm5246 = vcmp.eq.f32.partialorder %v5236, 0.0
    %v5247 = vand.u32 %v5236, 2147483648
    %v5248 = vsel %vm5246, %v5247, %v5245
    %v5249 = vadd.f32 %v5248, 1e-06
    %v5250 = vrcp.pop %v5249
    %v5251 = vmul.f32 %v5231, %v5250
    %v5252 = vperm.slane %v5225, 0
    %v5253 = vmul.f32 %v5252, %v5251
    %v5254 = vperm.slane %v5226, 0
    %v5255 = vadd.f32 %v5253, %v5254
    %v5256 = vld [vmem:[%s2089] sm:$0xff]
    %v5257 = vld [vmem:[%s2089 + $0x8] sm:$0xff]
    %v5258 = vld [vmem:[%s2089 + $0x10] sm:$0xff]
    %v5259 = vld [vmem:[%s2089 + $0x18] sm:$0xff]
    %v5260 = vld [vmem:[%s9 + $0x1a] sm:$0x1]
    %v5261 = vld [vmem:[%s2095] sm:$0xff]
    %v5262 = vld [vmem:[%s2095 + $0x8] sm:$0xff]
    %v5263 = vld [vmem:[%s2095 + $0x10] sm:$0xff]
    %v5264 = vld [vmem:[%s2095 + $0x18] sm:$0xff]
    %v5265 = vld [vmem:[%s2095 + $0x20] sm:$0xff]
    %v5266 = vld [vmem:[%s2095 + $0x28] sm:$0xff]
    %v5267 = vld [vmem:[%s2095 + $0x30] sm:$0xff]
    %v5268 = vld [vmem:[%s2095 + $0x38] sm:$0xff]
    %v5269 = vld [vmem:[%s9 + $0x1b] sm:$0x1]
    %v5270 = vperm.slane %v5260, 0
    %v5272 = vsel %vm46, %v5255, 0
    %5274 = vmatpush.msra.mxu0 0.0
    %5275 = vmatpush.msra.mxu0 0.0
    %5276 = vmatpush.msra.mxu0 0.0
    %5277 = vmatpush.msra.mxu0 0.0
    %5278 = vmatpush.msra.mxu0 0.0
    %5279 = vmatpush.msra.mxu0 0.0
    %5280 = vmatpush.msra.mxu0 0.0
    %5281 = vmatpush.msra.mxu0 0.0
    %5282 = vmatpush.msra.mxu0 0.0
    %5283 = vmatpush.msra.mxu0 0.0
    %5284 = vmatpush.msra.mxu0 0.0
    %5285 = vmatpush.msra.mxu0 0.0
    %5286 = vmatpush.msra.mxu0 %v5259
    %5287 = vmatpush.msra.mxu0 %v5258
    %5288 = vmatpush.msra.mxu0 %v5257
    %5289 = vmatpush.msra.mxu0 %v5256
    %5290 = vmatmul.f32.gmra.mxu0 %v5272
    %v5291 = vpop.f32.mrf.mxu0
    %v5292 = vadd.f32 %v5270, %v5291
    %5293 = vdwg.mxu0
    %v5294 = vmax.f32 %v5292, 0.0
    %v5295 = vperm.slane %v5269, 0
    %v5297 = vsel %vm561, %v5294, 0
    %5299 = vmatpush.msra.mxu0 0.0
    %5300 = vmatpush.msra.mxu0 0.0
    %5301 = vmatpush.msra.mxu0 0.0
    %5302 = vmatpush.msra.mxu0 0.0
    %5303 = vmatpush.msra.mxu0 0.0
    %5304 = vmatpush.msra.mxu0 0.0
    %5305 = vmatpush.msra.mxu0 0.0
    %5306 = vmatpush.msra.mxu0 0.0
    %5307 = vmatpush.msra.mxu0 %v5268
    %5308 = vmatpush.msra.mxu0 %v5267
    %5309 = vmatpush.msra.mxu0 %v5266
    %5310 = vmatpush.msra.mxu0 %v5265
    %5311 = vmatpush.msra.mxu0 %v5264
    %5312 = vmatpush.msra.mxu0 %v5263
    %5313 = vmatpush.msra.mxu0 %v5262
    %5314 = vmatpush.msra.mxu0 %v5261
    %5315 = vmatmul.f32.gmra.mxu0 %v5297
    %v5316 = vpop.f32.mrf.mxu0
    %v5317 = vadd.f32 %v5295, %v5316
    %5318 = vdwg.mxu0
    %v5319 = vadd.f32 %v5224, %v5317
    %v5320 = vld [vmem:[%s9 + $0x1c] sm:$0x1]
    %v5321 = vld [vmem:[%s9 + $0x1d] sm:$0x1]
    %v5322 = vsel %vm46, %v5319, 0.0
    %5323 = vadd.xlane.f32.xlu0 %v5322
    %v5324 = vpop.xlane.xlu0 %5323
    %v5325 = vmul.f32 %v5324, %v56
    %v5326 = vsub.f32 %v5319, %v5325
    %v5327 = vmul.f32 %v5326, %v5326
    %v5328 = vsel %vm46, %v5327, 0.0
    %5329 = vadd.xlane.f32.xlu0 %v5328
    %v5330 = vpop.xlane.xlu0 %5329
    %v5331 = vmul.f32 %v5330, 0.032258064
    %v5332 = vrsqrt.pop %v5331
    %v5333 = vmul.f32 %v5332, %v5331
    %v5334 = vmul.f32 %v5333, %v5332
    %v5335 = vmul.f32 0.5, %v5334
    %v5336 = vsub.f32 1.5, %v5335
    %v5337 = vmul.f32 %v5332, %v5336
    %v5338 = vmul.f32 %v5331, %v5337
    %vm5339 = vcmp.eq.f32.partialorder %v5331, inf
    %v5340 = vsel %vm5339, %v5331, %v5338
    %vm5341 = vcmp.eq.f32.partialorder %v5331, 0.0
    %v5342 = vand.u32 %v5331, 2147483648
    %v5343 = vsel %vm5341, %v5342, %v5340
    %v5344 = vadd.f32 %v5343, 1e-06
    %v5345 = vrcp.pop %v5344
    %v5346 = vmul.f32 %v5326, %v5345
    %v5347 = vperm.slane %v5320, 0
    %v5348 = vmul.f32 %v5347, %v5346
    %v5349 = vperm.slane %v5321, 0
    %v5350 = vadd.f32 %v5348, %v5349
    %v5351 = vld [vmem:[%s2186] sm:$0xff]
    %v5352 = vld [vmem:[%s2186 + $0x8] sm:$0xff]
    %v5353 = vld [vmem:[%s2186 + $0x10] sm:$0xff]
    %v5354 = vld [vmem:[%s2186 + $0x18] sm:$0xff]
    %v5355 = vld [vmem:[%s9 + $0x1e] sm:$0x1]
    %v5356 = vld [vmem:[%s2192] sm:$0xff]
    %v5357 = vld [vmem:[%s2192 + $0x8] sm:$0xff]
    %v5358 = vld [vmem:[%s2192 + $0x10] sm:$0xff]
    %v5359 = vld [vmem:[%s2192 + $0x18] sm:$0xff]
    %v5360 = vld [vmem:[%s9 + $0x1f] sm:$0x1]
    %v5361 = vperm.slane %v5355, 0
    %v5363 = vsel %vm46, %v5350, 0
    %5365 = vmatpush.msra.mxu0 0.0
    %5366 = vmatpush.msra.mxu0 0.0
    %5367 = vmatpush.msra.mxu0 0.0
    %5368 = vmatpush.msra.mxu0 0.0
    %5369 = vmatpush.msra.mxu0 0.0
    %5370 = vmatpush.msra.mxu0 0.0
    %5371 = vmatpush.msra.mxu0 0.0
    %5372 = vmatpush.msra.mxu0 0.0
    %5373 = vmatpush.msra.mxu0 0.0
    %5374 = vmatpush.msra.mxu0 0.0
    %5375 = vmatpush.msra.mxu0 0.0
    %5376 = vmatpush.msra.mxu0 0.0
    %5377 = vmatpush.msra.mxu0 %v5354
    %5378 = vmatpush.msra.mxu0 %v5353
    %5379 = vmatpush.msra.mxu0 %v5352
    %5380 = vmatpush.msra.mxu0 %v5351
    %5381 = vmatmul.f32.gmra.mxu0 %v5363
    %v5382 = vpop.f32.mrf.mxu0
    %v5383 = vadd.f32 %v5361, %v5382
    %5384 = vdwg.mxu0
    %v5385 = vmul.f32 %v5383, 0.35355338
    %5387 = vrot.lane.b32.xlu0 %v5385, 120
    %v5388 = vpop.permute.xlu0 %5387
    %5389 = vrot.lane.b32.xlu0 %v5385, 112
    %v5390 = vpop.permute.xlu0 %5389
    %5391 = vrot.lane.b32.xlu0 %v5385, 104
    %v5392 = vpop.permute.xlu0 %5391
    %5394 = vrot.lane.b32.xlu0 %v5383, 120
    %v5395 = vpop.permute.xlu0 %5394
    %5396 = vrot.lane.b32.xlu0 %v5383, 112
    %v5397 = vpop.permute.xlu0 %5396
    %5398 = vrot.lane.b32.xlu0 %v5383, 104
    %v5399 = vpop.permute.xlu0 %5398
    %5400 = vrot.lane.b32.xlu0 %v5383, 96
    %v5401 = vpop.permute.xlu0 %5400
    %v5402 = vsel %vm137, %v5385, 0
    %v5404 = vsel %vm137, %v5401, 0
    %5406 = vmatpush.xpose.msra.mxu0 0.0
    %5407 = vmatpush.xpose.msra.mxu0 0.0
    %5408 = vmatpush.xpose.msra.mxu0 0.0
    %5409 = vmatpush.xpose.msra.mxu0 0.0
    %5410 = vmatpush.xpose.msra.mxu0 0.0
    %5411 = vmatpush.xpose.msra.mxu0 0.0
    %5412 = vmatpush.xpose.msra.mxu0 0.0
    %5413 = vmatpush.xpose.msra.mxu0 0.0
    %5414 = vmatpush.xpose.msra.mxu0 0.0
    %5415 = vmatpush.xpose.msra.mxu0 0.0
    %5416 = vmatpush.xpose.msra.mxu0 0.0
    %5417 = vmatpush.xpose.msra.mxu0 0.0
    %5418 = vmatpush.xpose.msra.mxu0 0.0
    %5419 = vmatpush.xpose.msra.mxu0 0.0
    %5420 = vmatpush.xpose.msra.mxu0 0.0
    %5421 = vmatpush.xpose.msra.mxu0 %v5404
    %5422 = vmatmul.f32.gmra.mxu0 %v5402
    %v5423 = vpop.f32.mrf.mxu0
    %v5424 = vadd.f32 %v3225, %v5423
    %5425 = vdwg.mxu0
    %5426 = vrot.lane.b32.xlu0 %v5395, 96
    %v5427 = vpop.permute.xlu0 %5426
    %v5428 = vsel %vm137, %v5388, 0
    %v5430 = vsel %vm137, %v5427, 0
    %5432 = vmatpush.xpose.msra.mxu0 0.0
    %5433 = vmatpush.xpose.msra.mxu0 0.0
    %5434 = vmatpush.xpose.msra.mxu0 0.0
    %5435 = vmatpush.xpose.msra.mxu0 0.0
    %5436 = vmatpush.xpose.msra.mxu0 0.0
    %5437 = vmatpush.xpose.msra.mxu0 0.0
    %5438 = vmatpush.xpose.msra.mxu0 0.0
    %5439 = vmatpush.xpose.msra.mxu0 0.0
    %5440 = vmatpush.xpose.msra.mxu0 0.0
    %5441 = vmatpush.xpose.msra.mxu0 0.0
    %5442 = vmatpush.xpose.msra.mxu0 0.0
    %5443 = vmatpush.xpose.msra.mxu0 0.0
    %5444 = vmatpush.xpose.msra.mxu0 0.0
    %5445 = vmatpush.xpose.msra.mxu0 0.0
    %5446 = vmatpush.xpose.msra.mxu0 0.0
    %5447 = vmatpush.xpose.msra.mxu0 %v5430
    %5448 = vmatmul.f32.gmra.mxu0 %v5428
    %v5449 = vpop.f32.mrf.mxu0
    %v5450 = vadd.f32 %v3225, %v5449
    %5451 = vdwg.mxu0
    %5452 = vrot.lane.b32.xlu0 %v5397, 96
    %v5453 = vpop.permute.xlu0 %5452
    %v5454 = vsel %vm137, %v5390, 0
    %v5456 = vsel %vm137, %v5453, 0
    %5458 = vmatpush.xpose.msra.mxu0 0.0
    %5459 = vmatpush.xpose.msra.mxu0 0.0
    %5460 = vmatpush.xpose.msra.mxu0 0.0
    %5461 = vmatpush.xpose.msra.mxu0 0.0
    %5462 = vmatpush.xpose.msra.mxu0 0.0
    %5463 = vmatpush.xpose.msra.mxu0 0.0
    %5464 = vmatpush.xpose.msra.mxu0 0.0
    %5465 = vmatpush.xpose.msra.mxu0 0.0
    %5466 = vmatpush.xpose.msra.mxu0 0.0
    %5467 = vmatpush.xpose.msra.mxu0 0.0
    %5468 = vmatpush.xpose.msra.mxu0 0.0
    %5469 = vmatpush.xpose.msra.mxu0 0.0
    %5470 = vmatpush.xpose.msra.mxu0 0.0
    %5471 = vmatpush.xpose.msra.mxu0 0.0
    %5472 = vmatpush.xpose.msra.mxu0 0.0
    %5473 = vmatpush.xpose.msra.mxu0 %v5456
    %5474 = vmatmul.f32.gmra.mxu0 %v5454
    %v5475 = vpop.f32.mrf.mxu0
    %v5476 = vadd.f32 %v3225, %v5475
    %5477 = vdwg.mxu0
    %5478 = vrot.lane.b32.xlu0 %v5399, 96
    %v5479 = vpop.permute.xlu0 %5478
    %v5480 = vsel %vm137, %v5392, 0
    %v5482 = vsel %vm137, %v5479, 0
    %5484 = vmatpush.xpose.msra.mxu0 0.0
    %5485 = vmatpush.xpose.msra.mxu0 0.0
    %5486 = vmatpush.xpose.msra.mxu0 0.0
    %5487 = vmatpush.xpose.msra.mxu0 0.0
    %5488 = vmatpush.xpose.msra.mxu0 0.0
    %5489 = vmatpush.xpose.msra.mxu0 0.0
    %5490 = vmatpush.xpose.msra.mxu0 0.0
    %5491 = vmatpush.xpose.msra.mxu0 0.0
    %5492 = vmatpush.xpose.msra.mxu0 0.0
    %5493 = vmatpush.xpose.msra.mxu0 0.0
    %5494 = vmatpush.xpose.msra.mxu0 0.0
    %5495 = vmatpush.xpose.msra.mxu0 0.0
    %5496 = vmatpush.xpose.msra.mxu0 0.0
    %5497 = vmatpush.xpose.msra.mxu0 0.0
    %5498 = vmatpush.xpose.msra.mxu0 0.0
    %5499 = vmatpush.xpose.msra.mxu0 %v5482
    %5500 = vmatmul.f32.gmra.mxu0 %v5480
    %v5501 = vpop.f32.mrf.mxu0
    %v5502 = vadd.f32 %v3225, %v5501
    %5503 = vdwg.mxu0
    %v5504 = vsel %vm137, %v5424, -inf
    %5505 = vmax.xlane.f32.xlu0 %v5504
    %v5506 = vpop.xlane.xlu0 %5505
    %v5507 = vsel %vm137, %v5450, -inf
    %5508 = vmax.xlane.f32.xlu0 %v5507
    %v5509 = vpop.xlane.xlu0 %5508
    %v5510 = vsel %vm137, %v5476, -inf
    %5511 = vmax.xlane.f32.xlu0 %v5510
    %v5512 = vpop.xlane.xlu0 %5511
    %v5513 = vsel %vm137, %v5502, -inf
    %5514 = vmax.xlane.f32.xlu0 %v5513
    %v5515 = vpop.xlane.xlu0 %5514
    %v5516 = vsub.f32 %v5424, %v5506
    %v5517 = vsub.f32 %v5450, %v5509
    %v5518 = vsub.f32 %v5476, %v5512
    %v5519 = vsub.f32 %v5502, %v5515
    %v5520 = vmul.f32 %v5516, 1.442695
    %v5521 = vpow.pop %v5520
    %v5522 = vmul.f32 %v5517, 1.442695
    %v5523 = vpow.pop %v5522
    %v5524 = vmul.f32 %v5518, 1.442695
    %v5525 = vpow.pop %v5524
    %v5526 = vmul.f32 %v5519, 1.442695
    %v5527 = vpow.pop %v5526
    %v5528 = vsel %vm137, %v5521, 0.0
    %5529 = vadd.xlane.f32.xlu0 %v5528
    %v5530 = vpop.xlane.xlu0 %5529
    %v5531 = vsel %vm137, %v5523, 0.0
    %5532 = vadd.xlane.f32.xlu0 %v5531
    %v5533 = vpop.xlane.xlu0 %5532
    %v5534 = vsel %vm137, %v5525, 0.0
    %5535 = vadd.xlane.f32.xlu0 %v5534
    %v5536 = vpop.xlane.xlu0 %5535
    %v5537 = vsel %vm137, %v5527, 0.0
    %5538 = vadd.xlane.f32.xlu0 %v5537
    %v5539 = vpop.xlane.xlu0 %5538
    %v5540 = vrcp.pop %v5530
    %v5541 = vrcp.pop %v5533
    %v5542 = vrcp.pop %v5536
    %v5543 = vrcp.pop %v5539
    %v5544 = vmul.f32 %v5521, %v5540
    %v5545 = vmul.f32 %v5523, %v5541
    %v5546 = vmul.f32 %v5525, %v5542
    %v5547 = vmul.f32 %v5527, %v5543
    %5548 = vrot.lane.b32.xlu0 %v5383, 64
    %v5549 = vpop.permute.xlu0 %5548
    %v5552 = vsel %vm137, %v5544, 0
    %5554 = vmatpush.msra.mxu0 0.0
    %5555 = vmatpush.msra.mxu0 0.0
    %5556 = vmatpush.msra.mxu0 0.0
    %5557 = vmatpush.msra.mxu0 0.0
    %5558 = vmatpush.msra.mxu0 0.0
    %5559 = vmatpush.msra.mxu0 0.0
    %5560 = vmatpush.msra.mxu0 0.0
    %5561 = vmatpush.msra.mxu0 0.0
    %5562 = vmatpush.msra.mxu0 0.0
    %5563 = vmatpush.msra.mxu0 0.0
    %5564 = vmatpush.msra.mxu0 0.0
    %5565 = vmatpush.msra.mxu0 0.0
    %5566 = vmatpush.msra.mxu0 0.0
    %5567 = vmatpush.msra.mxu0 0.0
    %5568 = vmatpush.msra.mxu0 0.0
    %5569 = vmatpush.msra.mxu0 %v5549
    %5570 = vmatmul.f32.gmra.mxu0 %v5552
    %v5571 = vpop.f32.mrf.mxu0
    %v5572 = vadd.f32 0.0, %v5571
    %5573 = vdwg.mxu0
    %5574 = vrot.lane.b32.xlu0 %v5395, 64
    %v5575 = vpop.permute.xlu0 %5574
    %v5578 = vsel %vm137, %v5545, 0
    %5580 = vmatpush.msra.mxu0 0.0
    %5581 = vmatpush.msra.mxu0 0.0
    %5582 = vmatpush.msra.mxu0 0.0
    %5583 = vmatpush.msra.mxu0 0.0
    %5584 = vmatpush.msra.mxu0 0.0
    %5585 = vmatpush.msra.mxu0 0.0
    %5586 = vmatpush.msra.mxu0 0.0
    %5587 = vmatpush.msra.mxu0 0.0
    %5588 = vmatpush.msra.mxu0 0.0
    %5589 = vmatpush.msra.mxu0 0.0
    %5590 = vmatpush.msra.mxu0 0.0
    %5591 = vmatpush.msra.mxu0 0.0
    %5592 = vmatpush.msra.mxu0 0.0
    %5593 = vmatpush.msra.mxu0 0.0
    %5594 = vmatpush.msra.mxu0 0.0
    %5595 = vmatpush.msra.mxu0 %v5575
    %5596 = vmatmul.f32.gmra.mxu0 %v5578
    %v5597 = vpop.f32.mrf.mxu0
    %v5598 = vadd.f32 0.0, %v5597
    %5599 = vdwg.mxu0
    %5600 = vrot.lane.b32.xlu0 %v5397, 64
    %v5601 = vpop.permute.xlu0 %5600
    %v5604 = vsel %vm137, %v5546, 0
    %5606 = vmatpush.msra.mxu0 0.0
    %5607 = vmatpush.msra.mxu0 0.0
    %5608 = vmatpush.msra.mxu0 0.0
    %5609 = vmatpush.msra.mxu0 0.0
    %5610 = vmatpush.msra.mxu0 0.0
    %5611 = vmatpush.msra.mxu0 0.0
    %5612 = vmatpush.msra.mxu0 0.0
    %5613 = vmatpush.msra.mxu0 0.0
    %5614 = vmatpush.msra.mxu0 0.0
    %5615 = vmatpush.msra.mxu0 0.0
    %5616 = vmatpush.msra.mxu0 0.0
    %5617 = vmatpush.msra.mxu0 0.0
    %5618 = vmatpush.msra.mxu0 0.0
    %5619 = vmatpush.msra.mxu0 0.0
    %5620 = vmatpush.msra.mxu0 0.0
    %5621 = vmatpush.msra.mxu0 %v5601
    %5622 = vmatmul.f32.gmra.mxu0 %v5604
    %v5623 = vpop.f32.mrf.mxu0
    %v5624 = vadd.f32 0.0, %v5623
    %5625 = vdwg.mxu0
    %5626 = vrot.lane.b32.xlu0 %v5399, 64
    %v5627 = vpop.permute.xlu0 %5626
    %v5630 = vsel %vm137, %v5547, 0
    %5632 = vmatpush.msra.mxu0 0.0
    %5633 = vmatpush.msra.mxu0 0.0
    %5634 = vmatpush.msra.mxu0 0.0
    %5635 = vmatpush.msra.mxu0 0.0
    %5636 = vmatpush.msra.mxu0 0.0
    %5637 = vmatpush.msra.mxu0 0.0
    %5638 = vmatpush.msra.mxu0 0.0
    %5639 = vmatpush.msra.mxu0 0.0
    %5640 = vmatpush.msra.mxu0 0.0
    %5641 = vmatpush.msra.mxu0 0.0
    %5642 = vmatpush.msra.mxu0 0.0
    %5643 = vmatpush.msra.mxu0 0.0
    %5644 = vmatpush.msra.mxu0 0.0
    %5645 = vmatpush.msra.mxu0 0.0
    %5646 = vmatpush.msra.mxu0 0.0
    %5647 = vmatpush.msra.mxu0 %v5627
    %5648 = vmatmul.f32.gmra.mxu0 %v5630
    %v5649 = vpop.f32.mrf.mxu0
    %v5650 = vadd.f32 0.0, %v5649
    %5651 = vdwg.mxu0
    %v5653 = vsel %vm137, %v5572, 0
    %5655 = vmatpush.msra.mxu0 0.0
    %5656 = vmatpush.msra.mxu0 0.0
    %5657 = vmatpush.msra.mxu0 0.0
    %5658 = vmatpush.msra.mxu0 0.0
    %5659 = vmatpush.msra.mxu0 0.0
    %5660 = vmatpush.msra.mxu0 0.0
    %5661 = vmatpush.msra.mxu0 0.0
    %5662 = vmatpush.msra.mxu0 0.0
    %5663 = vmatpush.msra.mxu0 0.0
    %5664 = vmatpush.msra.mxu0 0.0
    %5665 = vmatpush.msra.mxu0 0.0
    %5666 = vmatpush.msra.mxu0 0.0
    %5667 = vmatpush.msra.mxu0 0.0
    %5668 = vmatpush.msra.mxu0 0.0
    %5669 = vmatpush.msra.mxu0 0.0
    %5670 = vmatpush.msra.mxu0 %v5356
    %5671 = vmatmul.f32.gmra.mxu0 %v5653
    %v5672 = vpop.f32.mrf.mxu0
    %v5673 = vadd.f32 0.0, %v5672
    %5674 = vdwg.mxu0
    %v5676 = vsel %vm137, %v5598, 0
    %5678 = vmatpush.msra.mxu0 0.0
    %5679 = vmatpush.msra.mxu0 0.0
    %5680 = vmatpush.msra.mxu0 0.0
    %5681 = vmatpush.msra.mxu0 0.0
    %5682 = vmatpush.msra.mxu0 0.0
    %5683 = vmatpush.msra.mxu0 0.0
    %5684 = vmatpush.msra.mxu0 0.0
    %5685 = vmatpush.msra.mxu0 0.0
    %5686 = vmatpush.msra.mxu0 0.0
    %5687 = vmatpush.msra.mxu0 0.0
    %5688 = vmatpush.msra.mxu0 0.0
    %5689 = vmatpush.msra.mxu0 0.0
    %5690 = vmatpush.msra.mxu0 0.0
    %5691 = vmatpush.msra.mxu0 0.0
    %5692 = vmatpush.msra.mxu0 0.0
    %5693 = vmatpush.msra.mxu0 %v5357
    %5694 = vmatmul.f32.gmra.mxu0 %v5676
    %v5695 = vpop.f32.mrf.mxu0
    %v5696 = vadd.f32 0.0, %v5695
    %5697 = vdwg.mxu0
    %v5699 = vsel %vm137, %v5624, 0
    %5701 = vmatpush.msra.mxu0 0.0
    %5702 = vmatpush.msra.mxu0 0.0
    %5703 = vmatpush.msra.mxu0 0.0
    %5704 = vmatpush.msra.mxu0 0.0
    %5705 = vmatpush.msra.mxu0 0.0
    %5706 = vmatpush.msra.mxu0 0.0
    %5707 = vmatpush.msra.mxu0 0.0
    %5708 = vmatpush.msra.mxu0 0.0
    %5709 = vmatpush.msra.mxu0 0.0
    %5710 = vmatpush.msra.mxu0 0.0
    %5711 = vmatpush.msra.mxu0 0.0
    %5712 = vmatpush.msra.mxu0 0.0
    %5713 = vmatpush.msra.mxu0 0.0
    %5714 = vmatpush.msra.mxu0 0.0
    %5715 = vmatpush.msra.mxu0 0.0
    %5716 = vmatpush.msra.mxu0 %v5358
    %5717 = vmatmul.f32.gmra.mxu0 %v5699
    %v5718 = vpop.f32.mrf.mxu0
    %v5719 = vadd.f32 0.0, %v5718
    %5720 = vdwg.mxu0
    %v5722 = vsel %vm137, %v5650, 0
    %5724 = vmatpush.msra.mxu0 0.0
    %5725 = vmatpush.msra.mxu0 0.0
    %5726 = vmatpush.msra.mxu0 0.0
    %5727 = vmatpush.msra.mxu0 0.0
    %5728 = vmatpush.msra.mxu0 0.0
    %5729 = vmatpush.msra.mxu0 0.0
    %5730 = vmatpush.msra.mxu0 0.0
    %5731 = vmatpush.msra.mxu0 0.0
    %5732 = vmatpush.msra.mxu0 0.0
    %5733 = vmatpush.msra.mxu0 0.0
    %5734 = vmatpush.msra.mxu0 0.0
    %5735 = vmatpush.msra.mxu0 0.0
    %5736 = vmatpush.msra.mxu0 0.0
    %5737 = vmatpush.msra.mxu0 0.0
    %5738 = vmatpush.msra.mxu0 0.0
    %5739 = vmatpush.msra.mxu0 %v5359
    %5740 = vmatmul.f32.gmra.mxu0 %v5722
    %v5741 = vpop.f32.mrf.mxu0
    %v5742 = vadd.f32 0.0, %v5741
    %5743 = vdwg.mxu0
    %v5744 = vsel %vm46, %v5673, 0.0
    %v5745 = vsel %vm46, %v5696, 0.0
    %v5746 = vadd.f32 %v5744, %v5745
    %v5747 = vsel %vm46, %v5719, 0.0
    %v5748 = vadd.f32 %v5746, %v5747
    %v5749 = vsel %vm46, %v5742, 0.0
    %v5750 = vadd.f32 %v5748, %v5749
    %v5751 = vperm.slane %v5360, 0
    %v5752 = vadd.f32 %v5750, %v5751
    %v5753 = vadd.f32 %v5319, %v5752
    %v5754 = vld [vmem:[%s9 + $0x20] sm:$0x1]
    %v5755 = vld [vmem:[%s9 + $0x21] sm:$0x1]
    %v5756 = vsel %vm46, %v5753, 0.0
    %5757 = vadd.xlane.f32.xlu0 %v5756
    %v5758 = vpop.xlane.xlu0 %5757
    %v5759 = vmul.f32 %v5758, %v56
    %v5760 = vsub.f32 %v5753, %v5759
    %v5761 = vmul.f32 %v5760, %v5760
    %v5762 = vsel %vm46, %v5761, 0.0
    %5763 = vadd.xlane.f32.xlu0 %v5762
    %v5764 = vpop.xlane.xlu0 %5763
    %v5765 = vmul.f32 %v5764, 0.032258064
    %v5766 = vrsqrt.pop %v5765
    %v5767 = vmul.f32 %v5766, %v5765
    %v5768 = vmul.f32 %v5767, %v5766
    %v5769 = vmul.f32 0.5, %v5768
    %v5770 = vsub.f32 1.5, %v5769
    %v5771 = vmul.f32 %v5766, %v5770
    %v5772 = vmul.f32 %v5765, %v5771
    %vm5773 = vcmp.eq.f32.partialorder %v5765, inf
    %v5774 = vsel %vm5773, %v5765, %v5772
    %vm5775 = vcmp.eq.f32.partialorder %v5765, 0.0
    %v5776 = vand.u32 %v5765, 2147483648
    %v5777 = vsel %vm5775, %v5776, %v5774
    %v5778 = vadd.f32 %v5777, 1e-06
    %v5779 = vrcp.pop %v5778
    %v5780 = vmul.f32 %v5760, %v5779
    %v5781 = vperm.slane %v5754, 0
    %v5782 = vmul.f32 %v5781, %v5780
    %v5783 = vperm.slane %v5755, 0
    %v5784 = vadd.f32 %v5782, %v5783
    %v5785 = vld [vmem:[%s2622] sm:$0xff]
    %v5786 = vld [vmem:[%s2622 + $0x8] sm:$0xff]
    %v5787 = vld [vmem:[%s2622 + $0x10] sm:$0xff]
    %v5788 = vld [vmem:[%s2622 + $0x18] sm:$0xff]
    %v5789 = vld [vmem:[%s9 + $0x22] sm:$0x1]
    %v5790 = vld [vmem:[%s2628] sm:$0xff]
    %v5791 = vld [vmem:[%s2628 + $0x8] sm:$0xff]
    %v5792 = vld [vmem:[%s2628 + $0x10] sm:$0xff]
    %v5793 = vld [vmem:[%s2628 + $0x18] sm:$0xff]
    %v5794 = vld [vmem:[%s9 + $0x23] sm:$0x1]
    %v5795 = vperm.slane %v5789, 0
    %v5797 = vsel %vm46, %v5784, 0
    %5799 = vmatpush.msra.mxu0 0.0
    %5800 = vmatpush.msra.mxu0 0.0
    %5801 = vmatpush.msra.mxu0 0.0
    %5802 = vmatpush.msra.mxu0 0.0
    %5803 = vmatpush.msra.mxu0 0.0
    %5804 = vmatpush.msra.mxu0 0.0
    %5805 = vmatpush.msra.mxu0 0.0
    %5806 = vmatpush.msra.mxu0 0.0
    %5807 = vmatpush.msra.mxu0 0.0
    %5808 = vmatpush.msra.mxu0 0.0
    %5809 = vmatpush.msra.mxu0 0.0
    %5810 = vmatpush.msra.mxu0 0.0
    %5811 = vmatpush.msra.mxu0 %v5788
    %5812 = vmatpush.msra.mxu0 %v5787
    %5813 = vmatpush.msra.mxu0 %v5786
    %5814 = vmatpush.msra.mxu0 %v5785
    %5815 = vmatmul.f32.gmra.mxu0 %v5797
    %v5816 = vpop.f32.mrf.mxu0
    %v5817 = vadd.f32 %v5795, %v5816
    %5818 = vdwg.mxu0
    %5823 = vrot.lane.b32.xlu0 %v5785, 96
    %v5824 = vpop.permute.xlu0 %5823
    %5825 = vrot.lane.b32.xlu0 %v5786, 96
    %v5826 = vpop.permute.xlu0 %5825
    %5827 = vrot.lane.b32.xlu0 %v5787, 96
    %v5828 = vpop.permute.xlu0 %5827
    %5829 = vrot.lane.b32.xlu0 %v5788, 96
    %v5830 = vpop.permute.xlu0 %5829
    %5836 = vrot.lane.b32.xlu0 %v5795, 96
    %v5837 = vpop.permute.xlu0 %5836
    %5839 = vmatpush.msra.mxu0 0.0
    %5840 = vmatpush.msra.mxu0 0.0
    %5841 = vmatpush.msra.mxu0 0.0
    %5842 = vmatpush.msra.mxu0 0.0
    %5843 = vmatpush.msra.mxu0 0.0
    %5844 = vmatpush.msra.mxu0 0.0
    %5845 = vmatpush.msra.mxu0 0.0
    %5846 = vmatpush.msra.mxu0 0.0
    %5847 = vmatpush.msra.mxu0 0.0
    %5848 = vmatpush.msra.mxu0 0.0
    %5849 = vmatpush.msra.mxu0 0.0
    %5850 = vmatpush.msra.mxu0 0.0
    %5851 = vmatpush.msra.mxu0 %v5830
    %5852 = vmatpush.msra.mxu0 %v5828
    %5853 = vmatpush.msra.mxu0 %v5826
    %5854 = vmatpush.msra.mxu0 %v5824
    %5855 = vmatmul.f32.gmra.mxu0 %v4842
    %v5856 = vpop.f32.mrf.mxu0
    %v5857 = vadd.f32 %v5837, %v5856
    %5858 = vdwg.mxu0
    %v5859 = vmul.f32 %v5817, 0.35355338
    %5861 = vrot.lane.b32.xlu0 %v5859, 120
    %v5862 = vpop.permute.xlu0 %5861
    %5863 = vrot.lane.b32.xlu0 %v5859, 112
    %v5864 = vpop.permute.xlu0 %5863
    %5865 = vrot.lane.b32.xlu0 %v5859, 104
    %v5866 = vpop.permute.xlu0 %5865
    %5868 = vrot.lane.b32.xlu0 %v5857, 120
    %v5869 = vpop.permute.xlu0 %5868
    %5870 = vrot.lane.b32.xlu0 %v5857, 112
    %v5871 = vpop.permute.xlu0 %5870
    %5872 = vrot.lane.b32.xlu0 %v5857, 104
    %v5873 = vpop.permute.xlu0 %5872
    %v5874 = vsel %vm137, %v5859, 0
    %v5876 = vsel %vm137, %v5857, 0
    %5878 = vmatpush.xpose.msra.mxu0 0.0
    %5879 = vmatpush.xpose.msra.mxu0 0.0
    %5880 = vmatpush.xpose.msra.mxu0 0.0
    %5881 = vmatpush.xpose.msra.mxu0 0.0
    %5882 = vmatpush.xpose.msra.mxu0 0.0
    %5883 = vmatpush.xpose.msra.mxu0 0.0
    %5884 = vmatpush.xpose.msra.mxu0 0.0
    %5885 = vmatpush.xpose.msra.mxu0 0.0
    %5886 = vmatpush.xpose.msra.mxu0 0.0
    %5887 = vmatpush.xpose.msra.mxu0 0.0
    %5888 = vmatpush.xpose.msra.mxu0 0.0
    %5889 = vmatpush.xpose.msra.mxu0 0.0
    %5890 = vmatpush.xpose.msra.mxu0 0.0
    %5891 = vmatpush.xpose.msra.mxu0 0.0
    %5892 = vmatpush.xpose.msra.mxu0 0.0
    %5893 = vmatpush.xpose.msra.mxu0 %v5876
    %5894 = vmatmul.f32.gmra.mxu0 %v5874
    %v5895 = vpop.f32.mrf.mxu0
    %v5896 = vadd.f32 %v3309, %v5895
    %5897 = vdwg.mxu0
    %v5898 = vsel %vm137, %v5862, 0
    %v5900 = vsel %vm137, %v5869, 0
    %5902 = vmatpush.xpose.msra.mxu0 0.0
    %5903 = vmatpush.xpose.msra.mxu0 0.0
    %5904 = vmatpush.xpose.msra.mxu0 0.0
    %5905 = vmatpush.xpose.msra.mxu0 0.0
    %5906 = vmatpush.xpose.msra.mxu0 0.0
    %5907 = vmatpush.xpose.msra.mxu0 0.0
    %5908 = vmatpush.xpose.msra.mxu0 0.0
    %5909 = vmatpush.xpose.msra.mxu0 0.0
    %5910 = vmatpush.xpose.msra.mxu0 0.0
    %5911 = vmatpush.xpose.msra.mxu0 0.0
    %5912 = vmatpush.xpose.msra.mxu0 0.0
    %5913 = vmatpush.xpose.msra.mxu0 0.0
    %5914 = vmatpush.xpose.msra.mxu0 0.0
    %5915 = vmatpush.xpose.msra.mxu0 0.0
    %5916 = vmatpush.xpose.msra.mxu0 0.0
    %5917 = vmatpush.xpose.msra.mxu0 %v5900
    %5918 = vmatmul.f32.gmra.mxu0 %v5898
    %v5919 = vpop.f32.mrf.mxu0
    %v5920 = vadd.f32 %v3309, %v5919
    %5921 = vdwg.mxu0
    %v5922 = vsel %vm137, %v5864, 0
    %v5924 = vsel %vm137, %v5871, 0
    %5926 = vmatpush.xpose.msra.mxu0 0.0
    %5927 = vmatpush.xpose.msra.mxu0 0.0
    %5928 = vmatpush.xpose.msra.mxu0 0.0
    %5929 = vmatpush.xpose.msra.mxu0 0.0
    %5930 = vmatpush.xpose.msra.mxu0 0.0
    %5931 = vmatpush.xpose.msra.mxu0 0.0
    %5932 = vmatpush.xpose.msra.mxu0 0.0
    %5933 = vmatpush.xpose.msra.mxu0 0.0
    %5934 = vmatpush.xpose.msra.mxu0 0.0
    %5935 = vmatpush.xpose.msra.mxu0 0.0
    %5936 = vmatpush.xpose.msra.mxu0 0.0
    %5937 = vmatpush.xpose.msra.mxu0 0.0
    %5938 = vmatpush.xpose.msra.mxu0 0.0
    %5939 = vmatpush.xpose.msra.mxu0 0.0
    %5940 = vmatpush.xpose.msra.mxu0 0.0
    %5941 = vmatpush.xpose.msra.mxu0 %v5924
    %5942 = vmatmul.f32.gmra.mxu0 %v5922
    %v5943 = vpop.f32.mrf.mxu0
    %v5944 = vadd.f32 %v3309, %v5943
    %5945 = vdwg.mxu0
    %v5946 = vsel %vm137, %v5866, 0
    %v5948 = vsel %vm137, %v5873, 0
    %5950 = vmatpush.xpose.msra.mxu0 0.0
    %5951 = vmatpush.xpose.msra.mxu0 0.0
    %5952 = vmatpush.xpose.msra.mxu0 0.0
    %5953 = vmatpush.xpose.msra.mxu0 0.0
    %5954 = vmatpush.xpose.msra.mxu0 0.0
    %5955 = vmatpush.xpose.msra.mxu0 0.0
    %5956 = vmatpush.xpose.msra.mxu0 0.0
    %5957 = vmatpush.xpose.msra.mxu0 0.0
    %5958 = vmatpush.xpose.msra.mxu0 0.0
    %5959 = vmatpush.xpose.msra.mxu0 0.0
    %5960 = vmatpush.xpose.msra.mxu0 0.0
    %5961 = vmatpush.xpose.msra.mxu0 0.0
    %5962 = vmatpush.xpose.msra.mxu0 0.0
    %5963 = vmatpush.xpose.msra.mxu0 0.0
    %5964 = vmatpush.xpose.msra.mxu0 0.0
    %5965 = vmatpush.xpose.msra.mxu0 %v5948
    %5966 = vmatmul.f32.gmra.mxu0 %v5946
    %v5967 = vpop.f32.mrf.mxu0
    %v5968 = vadd.f32 %v3309, %v5967
    %5969 = vdwg.mxu0
    %v5970 = vsel %vm137, %v5896, -inf
    %5971 = vmax.xlane.f32.xlu0 %v5970
    %v5972 = vpop.xlane.xlu0 %5971
    %v5973 = vsel %vm137, %v5920, -inf
    %5974 = vmax.xlane.f32.xlu0 %v5973
    %v5975 = vpop.xlane.xlu0 %5974
    %v5976 = vsel %vm137, %v5944, -inf
    %5977 = vmax.xlane.f32.xlu0 %v5976
    %v5978 = vpop.xlane.xlu0 %5977
    %v5979 = vsel %vm137, %v5968, -inf
    %5980 = vmax.xlane.f32.xlu0 %v5979
    %v5981 = vpop.xlane.xlu0 %5980
    %v5982 = vsub.f32 %v5896, %v5972
    %v5983 = vsub.f32 %v5920, %v5975
    %v5984 = vsub.f32 %v5944, %v5978
    %v5985 = vsub.f32 %v5968, %v5981
    %v5986 = vmul.f32 %v5982, 1.442695
    %v5987 = vpow.pop %v5986
    %v5988 = vmul.f32 %v5983, 1.442695
    %v5989 = vpow.pop %v5988
    %v5990 = vmul.f32 %v5984, 1.442695
    %v5991 = vpow.pop %v5990
    %v5992 = vmul.f32 %v5985, 1.442695
    %v5993 = vpow.pop %v5992
    %v5994 = vsel %vm137, %v5987, 0.0
    %5995 = vadd.xlane.f32.xlu0 %v5994
    %v5996 = vpop.xlane.xlu0 %5995
    %v5997 = vsel %vm137, %v5989, 0.0
    %5998 = vadd.xlane.f32.xlu0 %v5997
    %v5999 = vpop.xlane.xlu0 %5998
    %v6000 = vsel %vm137, %v5991, 0.0
    %6001 = vadd.xlane.f32.xlu0 %v6000
    %v6002 = vpop.xlane.xlu0 %6001
    %v6003 = vsel %vm137, %v5993, 0.0
    %6004 = vadd.xlane.f32.xlu0 %v6003
    %v6005 = vpop.xlane.xlu0 %6004
    %v6006 = vrcp.pop %v5996
    %v6007 = vrcp.pop %v5999
    %v6008 = vrcp.pop %v6002
    %v6009 = vrcp.pop %v6005
    %v6010 = vmul.f32 %v5987, %v6006
    %v6011 = vmul.f32 %v5989, %v6007
    %v6012 = vmul.f32 %v5991, %v6008
    %v6013 = vmul.f32 %v5993, %v6009
    %6014 = vrot.lane.b32.xlu0 %v5857, 96
    %v6015 = vpop.permute.xlu0 %6014
    %v6018 = vsel %vm137, %v6010, 0
    %6020 = vmatpush.msra.mxu0 0.0
    %6021 = vmatpush.msra.mxu0 0.0
    %6022 = vmatpush.msra.mxu0 0.0
    %6023 = vmatpush.msra.mxu0 0.0
    %6024 = vmatpush.msra.mxu0 0.0
    %6025 = vmatpush.msra.mxu0 0.0
    %6026 = vmatpush.msra.mxu0 0.0
    %6027 = vmatpush.msra.mxu0 0.0
    %6028 = vmatpush.msra.mxu0 0.0
    %6029 = vmatpush.msra.mxu0 0.0
    %6030 = vmatpush.msra.mxu0 0.0
    %6031 = vmatpush.msra.mxu0 0.0
    %6032 = vmatpush.msra.mxu0 0.0
    %6033 = vmatpush.msra.mxu0 0.0
    %6034 = vmatpush.msra.mxu0 0.0
    %6035 = vmatpush.msra.mxu0 %v6015
    %6036 = vmatmul.f32.gmra.mxu0 %v6018
    %v6037 = vpop.f32.mrf.mxu0
    %v6038 = vadd.f32 0.0, %v6037
    %6039 = vdwg.mxu0
    %6040 = vrot.lane.b32.xlu0 %v5869, 96
    %v6041 = vpop.permute.xlu0 %6040
    %v6044 = vsel %vm137, %v6011, 0
    %6046 = vmatpush.msra.mxu0 0.0
    %6047 = vmatpush.msra.mxu0 0.0
    %6048 = vmatpush.msra.mxu0 0.0
    %6049 = vmatpush.msra.mxu0 0.0
    %6050 = vmatpush.msra.mxu0 0.0
    %6051 = vmatpush.msra.mxu0 0.0
    %6052 = vmatpush.msra.mxu0 0.0
    %6053 = vmatpush.msra.mxu0 0.0
    %6054 = vmatpush.msra.mxu0 0.0
    %6055 = vmatpush.msra.mxu0 0.0
    %6056 = vmatpush.msra.mxu0 0.0
    %6057 = vmatpush.msra.mxu0 0.0
    %6058 = vmatpush.msra.mxu0 0.0
    %6059 = vmatpush.msra.mxu0 0.0
    %6060 = vmatpush.msra.mxu0 0.0
    %6061 = vmatpush.msra.mxu0 %v6041
    %6062 = vmatmul.f32.gmra.mxu0 %v6044
    %v6063 = vpop.f32.mrf.mxu0
    %v6064 = vadd.f32 0.0, %v6063
    %6065 = vdwg.mxu0
    %6066 = vrot.lane.b32.xlu0 %v5871, 96
    %v6067 = vpop.permute.xlu0 %6066
    %v6070 = vsel %vm137, %v6012, 0
    %6072 = vmatpush.msra.mxu0 0.0
    %6073 = vmatpush.msra.mxu0 0.0
    %6074 = vmatpush.msra.mxu0 0.0
    %6075 = vmatpush.msra.mxu0 0.0
    %6076 = vmatpush.msra.mxu0 0.0
    %6077 = vmatpush.msra.mxu0 0.0
    %6078 = vmatpush.msra.mxu0 0.0
    %6079 = vmatpush.msra.mxu0 0.0
    %6080 = vmatpush.msra.mxu0 0.0
    %6081 = vmatpush.msra.mxu0 0.0
    %6082 = vmatpush.msra.mxu0 0.0
    %6083 = vmatpush.msra.mxu0 0.0
    %6084 = vmatpush.msra.mxu0 0.0
    %6085 = vmatpush.msra.mxu0 0.0
    %6086 = vmatpush.msra.mxu0 0.0
    %6087 = vmatpush.msra.mxu0 %v6067
    %6088 = vmatmul.f32.gmra.mxu0 %v6070
    %v6089 = vpop.f32.mrf.mxu0
    %v6090 = vadd.f32 0.0, %v6089
    %6091 = vdwg.mxu0
    %6092 = vrot.lane.b32.xlu0 %v5873, 96
    %v6093 = vpop.permute.xlu0 %6092
    %v6096 = vsel %vm137, %v6013, 0
    %6098 = vmatpush.msra.mxu0 0.0
    %6099 = vmatpush.msra.mxu0 0.0
    %6100 = vmatpush.msra.mxu0 0.0
    %6101 = vmatpush.msra.mxu0 0.0
    %6102 = vmatpush.msra.mxu0 0.0
    %6103 = vmatpush.msra.mxu0 0.0
    %6104 = vmatpush.msra.mxu0 0.0
    %6105 = vmatpush.msra.mxu0 0.0
    %6106 = vmatpush.msra.mxu0 0.0
    %6107 = vmatpush.msra.mxu0 0.0
    %6108 = vmatpush.msra.mxu0 0.0
    %6109 = vmatpush.msra.mxu0 0.0
    %6110 = vmatpush.msra.mxu0 0.0
    %6111 = vmatpush.msra.mxu0 0.0
    %6112 = vmatpush.msra.mxu0 0.0
    %6113 = vmatpush.msra.mxu0 %v6093
    %6114 = vmatmul.f32.gmra.mxu0 %v6096
    %v6115 = vpop.f32.mrf.mxu0
    %v6116 = vadd.f32 0.0, %v6115
    %6117 = vdwg.mxu0
    %v6119 = vsel %vm137, %v6038, 0
    %6121 = vmatpush.msra.mxu0 0.0
    %6122 = vmatpush.msra.mxu0 0.0
    %6123 = vmatpush.msra.mxu0 0.0
    %6124 = vmatpush.msra.mxu0 0.0
    %6125 = vmatpush.msra.mxu0 0.0
    %6126 = vmatpush.msra.mxu0 0.0
    %6127 = vmatpush.msra.mxu0 0.0
    %6128 = vmatpush.msra.mxu0 0.0
    %6129 = vmatpush.msra.mxu0 0.0
    %6130 = vmatpush.msra.mxu0 0.0
    %6131 = vmatpush.msra.mxu0 0.0
    %6132 = vmatpush.msra.mxu0 0.0
    %6133 = vmatpush.msra.mxu0 0.0
    %6134 = vmatpush.msra.mxu0 0.0
    %6135 = vmatpush.msra.mxu0 0.0
    %6136 = vmatpush.msra.mxu0 %v5790
    %6137 = vmatmul.f32.gmra.mxu0 %v6119
    %v6138 = vpop.f32.mrf.mxu0
    %v6139 = vadd.f32 0.0, %v6138
    %6140 = vdwg.mxu0
    %v6142 = vsel %vm137, %v6064, 0
    %6144 = vmatpush.msra.mxu0 0.0
    %6145 = vmatpush.msra.mxu0 0.0
    %6146 = vmatpush.msra.mxu0 0.0
    %6147 = vmatpush.msra.mxu0 0.0
    %6148 = vmatpush.msra.mxu0 0.0
    %6149 = vmatpush.msra.mxu0 0.0
    %6150 = vmatpush.msra.mxu0 0.0
    %6151 = vmatpush.msra.mxu0 0.0
    %6152 = vmatpush.msra.mxu0 0.0
    %6153 = vmatpush.msra.mxu0 0.0
    %6154 = vmatpush.msra.mxu0 0.0
    %6155 = vmatpush.msra.mxu0 0.0
    %6156 = vmatpush.msra.mxu0 0.0
    %6157 = vmatpush.msra.mxu0 0.0
    %6158 = vmatpush.msra.mxu0 0.0
    %6159 = vmatpush.msra.mxu0 %v5791
    %6160 = vmatmul.f32.gmra.mxu0 %v6142
    %v6161 = vpop.f32.mrf.mxu0
    %v6162 = vadd.f32 0.0, %v6161
    %6163 = vdwg.mxu0
    %v6165 = vsel %vm137, %v6090, 0
    %6167 = vmatpush.msra.mxu0 0.0
    %6168 = vmatpush.msra.mxu0 0.0
    %6169 = vmatpush.msra.mxu0 0.0
    %6170 = vmatpush.msra.mxu0 0.0
    %6171 = vmatpush.msra.mxu0 0.0
    %6172 = vmatpush.msra.mxu0 0.0
    %6173 = vmatpush.msra.mxu0 0.0
    %6174 = vmatpush.msra.mxu0 0.0
    %6175 = vmatpush.msra.mxu0 0.0
    %6176 = vmatpush.msra.mxu0 0.0
    %6177 = vmatpush.msra.mxu0 0.0
    %6178 = vmatpush.msra.mxu0 0.0
    %6179 = vmatpush.msra.mxu0 0.0
    %6180 = vmatpush.msra.mxu0 0.0
    %6181 = vmatpush.msra.mxu0 0.0
    %6182 = vmatpush.msra.mxu0 %v5792
    %6183 = vmatmul.f32.gmra.mxu0 %v6165
    %v6184 = vpop.f32.mrf.mxu0
    %v6185 = vadd.f32 0.0, %v6184
    %6186 = vdwg.mxu0
    %v6188 = vsel %vm137, %v6116, 0
    %6190 = vmatpush.msra.mxu0 0.0
    %6191 = vmatpush.msra.mxu0 0.0
    %6192 = vmatpush.msra.mxu0 0.0
    %6193 = vmatpush.msra.mxu0 0.0
    %6194 = vmatpush.msra.mxu0 0.0
    %6195 = vmatpush.msra.mxu0 0.0
    %6196 = vmatpush.msra.mxu0 0.0
    %6197 = vmatpush.msra.mxu0 0.0
    %6198 = vmatpush.msra.mxu0 0.0
    %6199 = vmatpush.msra.mxu0 0.0
    %6200 = vmatpush.msra.mxu0 0.0
    %6201 = vmatpush.msra.mxu0 0.0
    %6202 = vmatpush.msra.mxu0 0.0
    %6203 = vmatpush.msra.mxu0 0.0
    %6204 = vmatpush.msra.mxu0 0.0
    %6205 = vmatpush.msra.mxu0 %v5793
    %6206 = vmatmul.f32.gmra.mxu0 %v6188
    %v6207 = vpop.f32.mrf.mxu0
    %v6208 = vadd.f32 0.0, %v6207
    %6209 = vdwg.mxu0
    %v6210 = vsel %vm46, %v6139, 0.0
    %v6211 = vsel %vm46, %v6162, 0.0
    %v6212 = vadd.f32 %v6210, %v6211
    %v6213 = vsel %vm46, %v6185, 0.0
    %v6214 = vadd.f32 %v6212, %v6213
    %v6215 = vsel %vm46, %v6208, 0.0
    %v6216 = vadd.f32 %v6214, %v6215
    %v6217 = vperm.slane %v5794, 0
    %v6218 = vadd.f32 %v6216, %v6217
    %v6219 = vadd.f32 %v5753, %v6218
    %v6220 = vld [vmem:[%s9 + $0x24] sm:$0x1]
    %v6221 = vld [vmem:[%s9 + $0x25] sm:$0x1]
    %v6222 = vsel %vm46, %v6219, 0.0
    %6223 = vadd.xlane.f32.xlu0 %v6222
    %v6224 = vpop.xlane.xlu0 %6223
    %v6225 = vmul.f32 %v6224, %v56
    %v6226 = vsub.f32 %v6219, %v6225
    %v6227 = vmul.f32 %v6226, %v6226
    %v6228 = vsel %vm46, %v6227, 0.0
    %6229 = vadd.xlane.f32.xlu0 %v6228
    %v6230 = vpop.xlane.xlu0 %6229
    %v6231 = vmul.f32 %v6230, 0.032258064
    %v6232 = vrsqrt.pop %v6231
    %v6233 = vmul.f32 %v6232, %v6231
    %v6234 = vmul.f32 %v6233, %v6232
    %v6235 = vmul.f32 0.5, %v6234
    %v6236 = vsub.f32 1.5, %v6235
    %v6237 = vmul.f32 %v6232, %v6236
    %v6238 = vmul.f32 %v6231, %v6237
    %vm6239 = vcmp.eq.f32.partialorder %v6231, inf
    %v6240 = vsel %vm6239, %v6231, %v6238
    %vm6241 = vcmp.eq.f32.partialorder %v6231, 0.0
    %v6242 = vand.u32 %v6231, 2147483648
    %v6243 = vsel %vm6241, %v6242, %v6240
    %v6244 = vadd.f32 %v6243, 1e-06
    %v6245 = vrcp.pop %v6244
    %v6246 = vmul.f32 %v6226, %v6245
    %v6247 = vperm.slane %v6220, 0
    %v6248 = vmul.f32 %v6247, %v6246
    %v6249 = vperm.slane %v6221, 0
    %v6250 = vadd.f32 %v6248, %v6249
    %v6251 = vld [vmem:[%s3090] sm:$0xff]
    %v6252 = vld [vmem:[%s3090 + $0x8] sm:$0xff]
    %v6253 = vld [vmem:[%s3090 + $0x10] sm:$0xff]
    %v6254 = vld [vmem:[%s3090 + $0x18] sm:$0xff]
    %v6255 = vld [vmem:[%s9 + $0x26] sm:$0x1]
    %v6256 = vld [vmem:[%s3096] sm:$0xff]
    %v6257 = vld [vmem:[%s3096 + $0x8] sm:$0xff]
    %v6258 = vld [vmem:[%s3096 + $0x10] sm:$0xff]
    %v6259 = vld [vmem:[%s3096 + $0x18] sm:$0xff]
    %v6260 = vld [vmem:[%s3096 + $0x20] sm:$0xff]
    %v6261 = vld [vmem:[%s3096 + $0x28] sm:$0xff]
    %v6262 = vld [vmem:[%s3096 + $0x30] sm:$0xff]
    %v6263 = vld [vmem:[%s3096 + $0x38] sm:$0xff]
    %v6264 = vld [vmem:[%s9 + $0x27] sm:$0x1]
    %v6265 = vperm.slane %v6255, 0
    %v6267 = vsel %vm46, %v6250, 0
    %6269 = vmatpush.msra.mxu0 0.0
    %6270 = vmatpush.msra.mxu0 0.0
    %6271 = vmatpush.msra.mxu0 0.0
    %6272 = vmatpush.msra.mxu0 0.0
    %6273 = vmatpush.msra.mxu0 0.0
    %6274 = vmatpush.msra.mxu0 0.0
    %6275 = vmatpush.msra.mxu0 0.0
    %6276 = vmatpush.msra.mxu0 0.0
    %6277 = vmatpush.msra.mxu0 0.0
    %6278 = vmatpush.msra.mxu0 0.0
    %6279 = vmatpush.msra.mxu0 0.0
    %6280 = vmatpush.msra.mxu0 0.0
    %6281 = vmatpush.msra.mxu0 %v6254
    %6282 = vmatpush.msra.mxu0 %v6253
    %6283 = vmatpush.msra.mxu0 %v6252
    %6284 = vmatpush.msra.mxu0 %v6251
    %6285 = vmatmul.f32.gmra.mxu0 %v6267
    %v6286 = vpop.f32.mrf.mxu0
    %v6287 = vadd.f32 %v6265, %v6286
    %6288 = vdwg.mxu0
    %v6289 = vmax.f32 %v6287, 0.0
    %v6290 = vperm.slane %v6264, 0
    %v6292 = vsel %vm561, %v6289, 0
    %6294 = vmatpush.msra.mxu0 0.0
    %6295 = vmatpush.msra.mxu0 0.0
    %6296 = vmatpush.msra.mxu0 0.0
    %6297 = vmatpush.msra.mxu0 0.0
    %6298 = vmatpush.msra.mxu0 0.0
    %6299 = vmatpush.msra.mxu0 0.0
    %6300 = vmatpush.msra.mxu0 0.0
    %6301 = vmatpush.msra.mxu0 0.0
    %6302 = vmatpush.msra.mxu0 %v6263
    %6303 = vmatpush.msra.mxu0 %v6262
    %6304 = vmatpush.msra.mxu0 %v6261
    %6305 = vmatpush.msra.mxu0 %v6260
    %6306 = vmatpush.msra.mxu0 %v6259
    %6307 = vmatpush.msra.mxu0 %v6258
    %6308 = vmatpush.msra.mxu0 %v6257
    %6309 = vmatpush.msra.mxu0 %v6256
    %6310 = vmatmul.f32.gmra.mxu0 %v6292
    %v6311 = vpop.f32.mrf.mxu0
    %v6312 = vadd.f32 %v6290, %v6311
    %6313 = vdwg.mxu0
    %v6314 = vadd.f32 %v6219, %v6312
    %v6315 = vld [vmem:[%s9 + $0x2a] sm:$0x1]
    %v6316 = vld [vmem:[%s9 + $0x2b] sm:$0x1]
    %v6317 = vsel %vm46, %v6314, 0.0
    %6318 = vadd.xlane.f32.xlu0 %v6317
    %v6319 = vpop.xlane.xlu0 %6318
    %v6320 = vmul.f32 %v6319, %v56
    %v6321 = vsub.f32 %v6314, %v6320
    %v6322 = vmul.f32 %v6321, %v6321
    %v6323 = vsel %vm46, %v6322, 0.0
    %6324 = vadd.xlane.f32.xlu0 %v6323
    %v6325 = vpop.xlane.xlu0 %6324
    %v6326 = vmul.f32 %v6325, 0.032258064
    %v6327 = vrsqrt.pop %v6326
    %v6328 = vmul.f32 %v6327, %v6326
    %v6329 = vmul.f32 %v6328, %v6327
    %v6330 = vmul.f32 0.5, %v6329
    %v6331 = vsub.f32 1.5, %v6330
    %v6332 = vmul.f32 %v6327, %v6331
    %v6333 = vmul.f32 %v6326, %v6332
    %vm6334 = vcmp.eq.f32.partialorder %v6326, inf
    %v6335 = vsel %vm6334, %v6326, %v6333
    %vm6336 = vcmp.eq.f32.partialorder %v6326, 0.0
    %v6337 = vand.u32 %v6326, 2147483648
    %v6338 = vsel %vm6336, %v6337, %v6335
    %v6339 = vadd.f32 %v6338, 1e-06
    %v6340 = vrcp.pop %v6339
    %v6341 = vmul.f32 %v6321, %v6340
    %v6342 = vperm.slane %v6315, 0
    %v6343 = vmul.f32 %v6342, %v6341
    %v6344 = vperm.slane %v6316, 0
    %v6345 = vadd.f32 %v6343, %v6344
    %v6347 = vsel %vm46, %v6345, 0
    %6349 = vmatpush.msra.mxu0 0.0
    %6350 = vmatpush.msra.mxu0 0.0
    %6351 = vmatpush.msra.mxu0 0.0
    %6352 = vmatpush.msra.mxu0 0.0
    %6353 = vmatpush.msra.mxu0 0.0
    %6354 = vmatpush.msra.mxu0 0.0
    %6355 = vmatpush.msra.mxu0 0.0
    %6356 = vmatpush.msra.mxu0 0.0
    %6357 = vmatpush.msra.mxu0 0.0
    %6358 = vmatpush.msra.mxu0 0.0
    %6359 = vmatpush.msra.mxu0 0.0
    %6360 = vmatpush.msra.mxu0 0.0
    %6361 = vmatpush.msra.mxu0 %v39
    %6362 = vmatpush.msra.mxu0 %v38
    %6363 = vmatpush.msra.mxu0 %v37
    %6364 = vmatpush.msra.mxu0 %v36
    %6365 = vmatmul.f32.gmra.mxu0 %v6347
    %v6366 = vpop.f32.mrf.mxu0
    %v6367 = vadd.f32 %v3187, %v6366
    %6368 = vdwg.mxu0
    %6369 = vmax.xlane.f32.xlu0 %v6367
    %v6370 = vpop.xlane.xlu0 %6369
    %v6371 = vsub.f32 %v6367, %v6370
    %v6372 = vmul.f32 %v6371, 1.442695
    %v6373 = vpow.pop %v6372
    %6374 = vadd.xlane.f32.xlu0 %v6373
    %v6375 = vpop.xlane.xlu0 %6374
    %v6376 = vlog2.pop %v6375
    %v6377 = vmul.f32 %v6376, 0.6931472
    %v6378 = vsub.f32 %v6371, %v6377
    %s6379 = scalar_lea.vmem [#allocation2], 8
    %6380 = vst [vmem:[%s6379] sm:$0xff] %v6378
    // Predicated region
    $region42: #{encoder_decoder_forward.1} parent=1 // pred_check
      _
    $region43: #{encoder_decoder_forward.1} parent=1 // pred_check_branch
      %6382 = sbr.rel (0) target = $region45
    $region44: #{encoder_decoder_forward.1} parent=1 // pred_region
      %6384 = vsyncadd [#allocation3], 0
      %s6385 = sshll.u32 [#allocation2], 4
      %s6386 = int_to_ptr.vmem [resolvable:$true] %s6385
      %s6387 = sshll.u32 %s10, 4
      %s6388 = int_to_ptr.hbm [resolvable:$true] %s6387
      %6393 = dma.vmem_to_hbm [thread:$0]  %s6386, 256, %s6388, [#allocation3], 128, 128, 8
    $region45: #{encoder_decoder_forward.1} parent=1 // pred_fallthru
      _
    // Predicated region
    $region46: #{encoder_decoder_forward.1} parent=1 // pred_check
      _
    $region47: #{encoder_decoder_forward.1} parent=1 // pred_check_branch
      %6395 = sbr.rel (0) target = $region49
    $region48: #{encoder_decoder_forward.1} parent=1 // pred_region
      %6397 = dma.done [#allocation3], 256
    $region49: #{encoder_decoder_forward.1} parent=1 // pred_fallthru
      _
    %6398 = vsyncpa [#allocation3], 1

</llo_original>
